<compile_context>
chip_gen: v7x
topology: tpu7x:2x2x1
jax: 0.10.0
libtpu: 0.0.40
codegen_flags: <defaults>
</compile_context>

<pallas_src>
import jax
import jax.numpy as jnp
from jax import lax
from jax.experimental import pallas as pl
from jax.experimental.pallas import tpu as pltpu

HIGHEST = lax.Precision.HIGHEST   # used only by the pure-JAX reference


# --------------------------------------------------------------------------
# Pallas kernels
# --------------------------------------------------------------------------
def conv_relu_pool_kernel(a_ref, w_ref, b_ref, o_ref):
    """Fused im2col conv matmul + bias + ReLU + 2x2 max-pool.

    a_ref: (4*R, K) bf16 -- rows grouped by pool-window position d (R rows per
                            position), rows within a group in (b, ph, pw) order
    w_ref: (K, C)  bf16  -- conv weight as (patch, out-channel) matrix
    b_ref: (1, C)  f32
    o_ref: (R, C)  bf16  -- pooled feature map, rows in (b, ph, pw) order
    """
    R = o_ref.shape[0]
    # Single MXU matmul for all 4 pool-window positions (one weight push).
    y = jnp.dot(a_ref[...], w_ref[...], preferred_element_type=jnp.float32)
    # 2x2 max-pool via static, sublane-aligned row-group slices (R % 8 == 0).
    m = jnp.maximum(jnp.maximum(y[0:R], y[R:2 * R]),
                    jnp.maximum(y[2 * R:3 * R], y[3 * R:4 * R]))
    # bias is identical across pool positions, so add after the max; then ReLU.
    o_ref[...] = jnp.maximum(m + b_ref[...], 0.0).astype(o_ref.dtype)


def head_kernel(flat_t_ref, wfc1_ref, bfc1_ref, wih_ref, blstm_ref,
                whh_f_ref, whh_b_ref, wfc2_ref, bfc2_ref,
                o_ref, xcf_ref, xcb_ref):
    """Fused fc1 + ReLU + bidirectional LSTM + fc2 + softmax.

    flat_t_ref: (4608, B) bf16   flattened conv features, transposed
    wfc1_ref:   (64, 4608) bf16  fc1 weight (K permuted to (h, w, c) order)
    bfc1_ref:   (64, 1)    f32
    wih_ref:    (2, 1, 4H) f32   per-direction input weights  [i|f|g|o]
    blstm_ref:  (2, 1, 4H) f32   per-direction b_ih + b_hh
    whh_f_ref:  (H, 4H)    bf16  forward  recurrent weight (W_hh_f^T)
    whh_b_ref:  (H, 4H)    bf16  backward recurrent weight (W_hh_b^T)
    wfc2_ref:   (2H, 2)    f32
    bfc2_ref:   (1, 2)     f32
    o_ref:      (B, 2)     f32   softmax probabilities
    xcf/xcb:    (T, B, 4H) f32   VMEM scratch: hoisted input-gate contributions
    """
    T, B, G = xcf_ref.shape                  # T=64, G=4H=512
    H = G // 4
    UNROLL = 4                               # T % UNROLL == 0

    # ---- fc1 + ReLU, computed transposed so the T axis is the leading dim ----
    h1t = jnp.maximum(
        jnp.dot(wfc1_ref[...], flat_t_ref[...],
                preferred_element_type=jnp.float32) + bfc1_ref[...],
        0.0)                                                     # (T, B)

    # ---- hoist the LSTM input contribution out of the recurrence ----
    # xc[d][t, b, :] = x_t(b) * W_ih[d] + (b_ih[d] + b_hh[d])
    wih_f, wih_b = wih_ref[0], wih_ref[1]                        # (1, G)
    bb_f, bb_b = blstm_ref[0], blstm_ref[1]                      # (1, G)
    for b in range(B):                                           # B tiny & static
        col = h1t[:, b:b + 1]                                    # (T, 1)
        xcf_ref[:, b, :] = col * wih_f + bb_f                    # (T, G)
        xcb_ref[:, b, :] = col * wih_b + bb_b

    whh_f = whh_f_ref[...]                                       # (H, 4H) bf16
    whh_b = whh_b_ref[...]                                       # (H, 4H) bf16

    def cell(g, c):
        i = jax.nn.sigmoid(g[:, 0:H])
        f = jax.nn.sigmoid(g[:, H:2 * H])
        gg = jnp.tanh(g[:, 2 * H:3 * H])
        o = jax.nn.sigmoid(g[:, 3 * H:4 * H])
        c = f * c + i * gg
        return o * jnp.tanh(c), c

    def one_step(t, carry):
        # Two independent per-direction recurrent matmuls (no zero blocks);
        # the forward and backward chains only couple at the end of the model,
        # so MXU and EUP work from the two directions can overlap.
        h_f, c_f, h_b, c_b = carry
        rec_f = jnp.dot(h_f.astype(jnp.bfloat16), whh_f,
                        preferred_element_type=jnp.float32)      # (B, G)
        rec_b = jnp.dot(h_b.astype(jnp.bfloat16), whh_b,
                        preferred_element_type=jnp.float32)      # (B, G)
        h_f, c_f = cell(rec_f + xcf_ref[t], c_f)                 # forward: t
        h_b, c_b = cell(rec_b + xcb_ref[T - 1 - t], c_b)         # backward
        return h_f, c_f, h_b, c_b

    def step_unrolled(tt, carry):
        t0 = tt * UNROLL
        for u in range(UNROLL):                                  # static unroll
            carry = one_step(t0 + u, carry)
        return carry

    z = jnp.zeros((B, H), jnp.float32)
    h_f, _, h_b, _ = lax.fori_loop(0, T // UNROLL, step_unrolled, (z, z, z, z))

    # ---- fc2 + softmax on the final hidden states [h_fwd | h_bwd] ----
    hcat = jnp.concatenate([h_f, h_b], axis=-1)                  # (B, 2H)
    logits = jnp.dot(hcat, wfc2_ref[...],
                     preferred_element_type=jnp.float32) + bfc2_ref[...]
    m = jnp.max(logits, axis=-1, keepdims=True)
    e = jnp.exp(logits - m)
    o_ref[...] = e / jnp.sum(e, axis=-1, keepdims=True)


# --------------------------------------------------------------------------
# pallas_call helper: whole arrays as single full-size VMEM blocks
# (shapes are tiny; full-array blocks satisfy the (8,128) rule).
# --------------------------------------------------------------------------
def _full_spec(shape):
    nd = len(shape)
    return pl.BlockSpec(shape, lambda i, _nd=nd: (0,) * _nd)


def _call_full(kernel, out_shape, *args, scratch_shapes=()):
    return pl.pallas_call(
        kernel,
        out_shape=out_shape,
        grid=(1,),
        in_specs=[_full_spec(a.shape) for a in args],
        out_specs=_full_spec(out_shape.shape),
        scratch_shapes=list(scratch_shapes),
        compiler_params=pltpu.CompilerParams(dimension_semantics=("arbitrary",)),
    )(*args)


# --------------------------------------------------------------------------
# Deterministic parameter initialization (PyTorch layouts + kernel layouts)
# --------------------------------------------------------------------------
def init_params(key):
    ks = jax.random.split(key, 16)
    rnd = lambda k, shape, s: jax.random.normal(k, shape, jnp.float32) * s
    H = 128
    raw = dict(
        w1=rnd(ks[0], (32, 1, 5, 5), 0.2),            b1=rnd(ks[1], (32,), 0.1),
        w2=rnd(ks[2], (128, 32, 3, 3), 0.05),         b2=rnd(ks[3], (128,), 0.1),
        w_fc1=rnd(ks[4], (64, 6 * 6 * 128), 0.02),    b_fc1=rnd(ks[5], (64,), 0.1),
        w_fc2=rnd(ks[6], (2, 256), 0.05),             b_fc2=rnd(ks[7], (2,), 0.1),
        wih_f=rnd(ks[8], (4 * H, 1), 0.3),            whh_f=rnd(ks[9], (4 * H, H), 0.05),
        bih_f=rnd(ks[10], (4 * H,), 0.1),             bhh_f=rnd(ks[11], (4 * H,), 0.1),
        wih_b=rnd(ks[12], (4 * H, 1), 0.3),           whh_b=rnd(ks[13], (4 * H, H), 0.05),
        bih_b=rnd(ks[14], (4 * H,), 0.1),             bhh_b=rnd(ks[15], (4 * H,), 0.1),
    )

    # fc1 weight with K reordered from PyTorch's (c, h, w) flatten to our
    # channels-last (h, w, c) flatten -> no runtime transpose of the feature map.
    w_fc1_hwc = (raw["w_fc1"].reshape(64, 128, 6, 6)
                 .transpose(0, 2, 3, 1).reshape(64, 6 * 6 * 128))

    kernel_params = dict(
        w1k=raw["w1"].reshape(32, 25).T.astype(jnp.bfloat16),               # (25, 32)
        b1=raw["b1"].reshape(1, 32),
        w2k=jnp.transpose(raw["w2"], (2, 3, 1, 0))
              .reshape(9 * 32, 128).astype(jnp.bfloat16),                   # (288, 128)
        b2=raw["b2"].reshape(1, 128),
        w_fc1k=w_fc1_hwc.astype(jnp.bfloat16),                              # (64, 4608)
        b_fc1=raw["b_fc1"].reshape(64, 1),
        lstm_wih=jnp.stack([raw["wih_f"].T, raw["wih_b"].T]),               # (2, 1, 512)
        lstm_b=jnp.stack([(raw["bih_f"] + raw["bhh_f"]).reshape(1, -1),
                          (raw["bih_b"] + raw["bhh_b"]).reshape(1, -1)]),   # (2, 1, 512)
        whh_fT=raw["whh_f"].T.astype(jnp.bfloat16),                         # (128, 512)
        whh_bT=raw["whh_b"].T.astype(jnp.bfloat16),                         # (128, 512)
        w_fc2k=raw["w_fc2"].T,                                              # (256, 2)
        b_fc2=raw["b_fc2"].reshape(1, 2),
    )
    return raw, kernel_params


# --------------------------------------------------------------------------
# Forward pass: 3 fused Pallas kernels + layout-only XLA glue
# --------------------------------------------------------------------------
@jax.jit
def model_vad_forward(x, p):
    B = x.shape[0]
    x = x.astype(jnp.float32)
    xs = x[:, 0, :, :]                                                      # (B, 32, 32)

    # ---- conv1 (1->32, k=5) + ReLU + 2x2 max-pool : one fused kernel ----
    # TODO(synk): the im2col patch gather / pool-window regroup below is pure XLA
    # layout glue; a fully in-kernel gather would need manual DMA indexing.
    p1 = jnp.stack([xs[:, kh:kh + 28, kw:kw + 28]
                    for kh in range(5) for kw in range(5)], axis=-1)        # (B,28,28,25)
    a1 = (p1.reshape(B, 14, 2, 14, 2, 25).transpose(2, 4, 0, 1, 3, 5)
            .reshape(4 * B * 14 * 14, 25).astype(jnp.bfloat16))
    y1p = _call_full(conv_relu_pool_kernel,
                     jax.ShapeDtypeStruct((B * 14 * 14, 32), jnp.bfloat16),
                     a1, p["w1k"], p["b1"]).reshape(B, 14, 14, 32)

    # ---- conv2 (32->128, k=3) + ReLU + 2x2 max-pool : one fused kernel ----
    p2 = jnp.stack([y1p[:, kh:kh + 12, kw:kw + 12, :]
                    for kh in range(3) for kw in range(3)], axis=3)         # (B,12,12,9,32)
    a2 = (p2.reshape(B, 6, 2, 6, 2, 9 * 32).transpose(2, 4, 0, 1, 3, 5)
            .reshape(4 * B * 6 * 6, 9 * 32))                               # bf16
    y2p = _call_full(conv_relu_pool_kernel,
                     jax.ShapeDtypeStruct((B * 6 * 6, 128), jnp.bfloat16),
                     a2, p["w2k"], p["b2"])                                 # (B*36, 128)

    # ---- fc1 + biLSTM + fc2 + softmax : one fused kernel ----
    flat_t = y2p.reshape(B, 6 * 6 * 128).T                                  # (4608, B) bf16
    probs = _call_full(
        head_kernel,
        jax.ShapeDtypeStruct((B, 2), jnp.float32),
        flat_t, p["w_fc1k"], p["b_fc1"], p["lstm_wih"], p["lstm_b"],
        p["whh_fT"], p["whh_bT"], p["w_fc2k"], p["b_fc2"],
        scratch_shapes=(pltpu.VMEM((64, B, 512), jnp.float32),
                        pltpu.VMEM((64, B, 512), jnp.float32)))
    return probs


# --------------------------------------------------------------------------
# Pure-JAX reference (mirrors the PyTorch forward) for verification
# --------------------------------------------------------------------------
@jax.jit
def reference_forward(x, raw):
    dn = ("NCHW", "OIHW", "NCHW")
    y = lax.conv_general_dilated(x, raw["w1"], (1, 1), "VALID",
                                 dimension_numbers=dn, precision=HIGHEST)
    y = jnp.maximum(y + raw["b1"].reshape(1, -1, 1, 1), 0.0)
    y = lax.reduce_window(y, -jnp.inf, lax.max, (1, 1, 2, 2), (1, 1, 2, 2), "VALID")
    y = lax.conv_general_dilated(y, raw["w2"], (1, 1), "VALID",
                                 dimension_numbers=dn, precision=HIGHEST)
    y = jnp.maximum(y + raw["b2"].reshape(1, -1, 1, 1), 0.0)
    y = lax.reduce_window(y, -jnp.inf, lax.max, (1, 1, 2, 2), (1, 1, 2, 2), "VALID")
    flat = y.reshape(y.shape[0], -1)
    h1 = jnp.maximum(jnp.dot(flat, raw["w_fc1"].T, precision=HIGHEST) + raw["b_fc1"], 0.0)
    seq = h1.reshape(-1, 64, 1)
    H = 128

    def run(wih, whh, bih, bhh, reverse):
        B, T, _ = seq.shape

        def step(t, carry):
            h, c = carry
            idx = (T - 1 - t) if reverse else t
            xt = lax.dynamic_slice_in_dim(seq, idx, 1, axis=1)[:, 0, :]
            gates = (jnp.dot(xt, wih.T, precision=HIGHEST) + bih
                     + jnp.dot(h, whh.T, precision=HIGHEST) + bhh)
            i = jax.nn.sigmoid(gates[:, :H]); f = jax.nn.sigmoid(gates[:, H:2 * H])
            g = jnp.tanh(gates[:, 2 * H:3 * H]); o = jax.nn.sigmoid(gates[:, 3 * H:])
            c = f * c + i * g
            h = o * jnp.tanh(c)
            return (h, c)

        init = (jnp.zeros((B, H), jnp.float32), jnp.zeros((B, H), jnp.float32))
        h, _ = lax.fori_loop(0, T, step, init)
        return h

    hf = run(raw["wih_f"], raw["whh_f"], raw["bih_f"], raw["bhh_f"], False)
    hb = run(raw["wih_b"], raw["whh_b"], raw["bih_b"], raw["bhh_b"], True)
    logits = jnp.dot(jnp.concatenate([hf, hb], axis=1), raw["w_fc2"].T,
                     precision=HIGHEST) + raw["b_fc2"]
    return jax.nn.softmax(logits, axis=-1)


if __name__ == "__main__":
    key = jax.random.PRNGKey(0)
    key_params, key_x = jax.random.split(key)
    raw_params, kernel_params = init_params(key_params)

    # Input implied by the module: fc1 expects 6*6*128 => 32x32 single-channel images.
    x = jax.random.normal(key_x, (2, 1, 32, 32), jnp.float32)

    out = jax.block_until_ready(model_vad_forward(x, kernel_params))
    ref = jax.block_until_ready(reference_forward(x, raw_params))

    assert out.shape == (2, 2), out.shape
    assert bool(jnp.all(jnp.isfinite(out)))
    assert bool(jnp.allclose(jnp.sum(out, axis=-1), 1.0, atol=1e-4))
    assert bool(jnp.allclose(out, ref, atol=2e-2)), (out, ref)
    print("KERNEL_OK")
</pallas_src>

<mosaic_0001>
module attributes {stable_mosaic.version = 11 : i64} {
  func.func @conv_relu_pool_kernel(%arg0: i32, %arg1: memref<1568x25xbf16, #tpu.memory_space<vmem>>, %arg2: memref<25x32xbf16, #tpu.memory_space<vmem>>, %arg3: memref<1x32xf32, #tpu.memory_space<vmem>>, %arg4: memref<392x32xbf16, #tpu.memory_space<vmem>>) attributes {dimension_semantics = [#tpu.dimension_semantics<arbitrary>], iteration_bounds = array<i64: 1>, scalar_prefetch = 0 : i64, scratch_operands = 0 : i64, tpu.core_type = #tpu.core_type<tc>, window_params = [{pipeline_mode = #tpu.pipeline_mode<synchronous>, transform_indices = @transform_0, window_bounds = array<i64: 1568, 25>}, {pipeline_mode = #tpu.pipeline_mode<synchronous>, transform_indices = @transform_1, window_bounds = array<i64: 25, 32>}, {pipeline_mode = #tpu.pipeline_mode<synchronous>, transform_indices = @transform_2, window_bounds = array<i64: 1, 32>}, {pipeline_mode = #tpu.pipeline_mode<synchronous>, transform_indices = @transform_3, window_bounds = array<i64: 392, 32>}]} {
    %c0 = arith.constant 0 : index
    %c0_0 = arith.constant 0 : index
    %0 = vector.load %arg1[%c0, %c0_0] : memref<1568x25xbf16, #tpu.memory_space<vmem>>, vector<1568x25xbf16>
    %c0_1 = arith.constant 0 : index
    %c0_2 = arith.constant 0 : index
    %1 = vector.load %arg2[%c0_1, %c0_2] : memref<25x32xbf16, #tpu.memory_space<vmem>>, vector<25x32xbf16>
    %cst = arith.constant dense<0.000000e+00> : vector<1568x32xf32>
    %2 = tpu.matmul %0, %1, %cst {dimension_numbers = #tpu.dot_dimension_numbers<[1], [0], [0], [1], [0, 0, 1, 1], [], []>} : vector<1568x25xbf16>, vector<25x32xbf16>, vector<1568x32xf32> -> vector<1568x32xf32>
    %3 = vector.extract_strided_slice %2 {offsets = [0, 0], sizes = [392, 32], strides = [1, 1]} : vector<1568x32xf32> to vector<392x32xf32>
    %4 = vector.extract_strided_slice %2 {offsets = [392, 0], sizes = [392, 32], strides = [1, 1]} : vector<1568x32xf32> to vector<392x32xf32>
    %5 = arith.maximumf %3, %4 : vector<392x32xf32>
    %6 = vector.extract_strided_slice %2 {offsets = [784, 0], sizes = [392, 32], strides = [1, 1]} : vector<1568x32xf32> to vector<392x32xf32>
    %7 = vector.extract_strided_slice %2 {offsets = [1176, 0], sizes = [392, 32], strides = [1, 1]} : vector<1568x32xf32> to vector<392x32xf32>
    %8 = arith.maximumf %6, %7 : vector<392x32xf32>
    %9 = arith.maximumf %5, %8 : vector<392x32xf32>
    %c0_3 = arith.constant 0 : index
    %c0_4 = arith.constant 0 : index
    %10 = vector.load %arg3[%c0_3, %c0_4] : memref<1x32xf32, #tpu.memory_space<vmem>>, vector<1x32xf32>
    %11 = vector.broadcast %10 : vector<1x32xf32> to vector<392x32xf32>
    %12 = arith.addf %9, %11 : vector<392x32xf32>
    %cst_5 = arith.constant 0.000000e+00 : f32
    %13 = vector.broadcast %cst_5 : f32 to vector<392x32xf32>
    %14 = arith.maximumf %12, %13 : vector<392x32xf32>
    %15 = arith.truncf %14 : vector<392x32xf32> to vector<392x32xbf16>
    %c0_6 = arith.constant 0 : index
    %c0_7 = arith.constant 0 : index
    %16 = vector.load %arg4[%c0_6, %c0_7] : memref<392x32xbf16, #tpu.memory_space<vmem>>, vector<392x32xbf16>
    tpu.vector_store %arg4[%c0_6, %c0_7], %15 {strides = array<i32>} : memref<392x32xbf16, #tpu.memory_space<vmem>>, vector<392x32xbf16>,
    return
  }
  func.func @transform_0(%arg0: i32) -> (i32, i32) {
    %c0_i32 = arith.constant 0 : i32
    %c0_i32_0 = arith.constant 0 : i32
    %c0_i32_1 = arith.constant 0 : i32
    return %c0_i32, %c0_i32_0 : i32, i32
  }
  func.func @transform_1(%arg0: i32) -> (i32, i32) {
    %c0_i32 = arith.constant 0 : i32
    %c0_i32_0 = arith.constant 0 : i32
    %c0_i32_1 = arith.constant 0 : i32
    return %c0_i32, %c0_i32_0 : i32, i32
  }
  func.func @transform_2(%arg0: i32) -> (i32, i32) {
    %c0_i32 = arith.constant 0 : i32
    %c0_i32_0 = arith.constant 0 : i32
    %c0_i32_1 = arith.constant 0 : i32
    return %c0_i32, %c0_i32_0 : i32, i32
  }
  func.func @transform_3(%arg0: i32) -> (i32, i32) {
    %c0_i32 = arith.constant 0 : i32
    %c0_i32_0 = arith.constant 0 : i32
    %c0_i32_1 = arith.constant 0 : i32
    return %c0_i32, %c0_i32_0 : i32, i32
  }
}

module attributes {stable_mosaic.version = 11 : i64} {
  func.func @conv_relu_pool_kernel(%arg0: i32, %arg1: memref<288x288xbf16, #tpu.memory_space<vmem>>, %arg2: memref<288x128xbf16, #tpu.memory_space<vmem>>, %arg3: memref<1x128xf32, #tpu.memory_space<vmem>>, %arg4: memref<72x128xbf16, #tpu.memory_space<vmem>>) attributes {dimension_semantics = [#tpu.dimension_semantics<arbitrary>], iteration_bounds = array<i64: 1>, scalar_prefetch = 0 : i64, scratch_operands = 0 : i64, tpu.core_type = #tpu.core_type<tc>, window_params = [{pipeline_mode = #tpu.pipeline_mode<synchronous>, transform_indices = @transform_0, window_bounds = array<i64: 288, 288>}, {pipeline_mode = #tpu.pipeline_mode<synchronous>, transform_indices = @transform_1, window_bounds = array<i64: 288, 128>}, {pipeline_mode = #tpu.pipeline_mode<synchronous>, transform_indices = @transform_2, window_bounds = array<i64: 1, 128>}, {pipeline_mode = #tpu.pipeline_mode<synchronous>, transform_indices = @transform_3, window_bounds = array<i64: 72, 128>}]} {
    %c0 = arith.constant 0 : index
    %c0_0 = arith.constant 0 : index
    %0 = vector.load %arg1[%c0, %c0_0] : memref<288x288xbf16, #tpu.memory_space<vmem>>, vector<288x288xbf16>
    %c0_1 = arith.constant 0 : index
    %c0_2 = arith.constant 0 : index
    %1 = vector.load %arg2[%c0_1, %c0_2] : memref<288x128xbf16, #tpu.memory_space<vmem>>, vector<288x128xbf16>
    %cst = arith.constant dense<0.000000e+00> : vector<288x128xf32>
    %2 = tpu.matmul %0, %1, %cst {dimension_numbers = #tpu.dot_dimension_numbers<[1], [0], [0], [1], [0, 0, 1, 1], [], []>} : vector<288x288xbf16>, vector<288x128xbf16>, vector<288x128xf32> -> vector<288x128xf32>
    %3 = vector.extract_strided_slice %2 {offsets = [0, 0], sizes = [72, 128], strides = [1, 1]} : vector<288x128xf32> to vector<72x128xf32>
    %4 = vector.extract_strided_slice %2 {offsets = [72, 0], sizes = [72, 128], strides = [1, 1]} : vector<288x128xf32> to vector<72x128xf32>
    %5 = arith.maximumf %3, %4 : vector<72x128xf32>
    %6 = vector.extract_strided_slice %2 {offsets = [144, 0], sizes = [72, 128], strides = [1, 1]} : vector<288x128xf32> to vector<72x128xf32>
    %7 = vector.extract_strided_slice %2 {offsets = [216, 0], sizes = [72, 128], strides = [1, 1]} : vector<288x128xf32> to vector<72x128xf32>
    %8 = arith.maximumf %6, %7 : vector<72x128xf32>
    %9 = arith.maximumf %5, %8 : vector<72x128xf32>
    %c0_3 = arith.constant 0 : index
    %c0_4 = arith.constant 0 : index
    %10 = vector.load %arg3[%c0_3, %c0_4] : memref<1x128xf32, #tpu.memory_space<vmem>>, vector<1x128xf32>
    %11 = vector.broadcast %10 : vector<1x128xf32> to vector<72x128xf32>
    %12 = arith.addf %9, %11 : vector<72x128xf32>
    %cst_5 = arith.constant 0.000000e+00 : f32
    %13 = vector.broadcast %cst_5 : f32 to vector<72x128xf32>
    %14 = arith.maximumf %12, %13 : vector<72x128xf32>
    %15 = arith.truncf %14 : vector<72x128xf32> to vector<72x128xbf16>
    %c0_6 = arith.constant 0 : index
    %c0_7 = arith.constant 0 : index
    %16 = vector.load %arg4[%c0_6, %c0_7] : memref<72x128xbf16, #tpu.memory_space<vmem>>, vector<72x128xbf16>
    tpu.vector_store %arg4[%c0_6, %c0_7], %15 {strides = array<i32>} : memref<72x128xbf16, #tpu.memory_space<vmem>>, vector<72x128xbf16>,
    return
  }
  func.func @transform_0(%arg0: i32) -> (i32, i32) {
    %c0_i32 = arith.constant 0 : i32
    %c0_i32_0 = arith.constant 0 : i32
    %c0_i32_1 = arith.constant 0 : i32
    return %c0_i32, %c0_i32_0 : i32, i32
  }
  func.func @transform_1(%arg0: i32) -> (i32, i32) {
    %c0_i32 = arith.constant 0 : i32
    %c0_i32_0 = arith.constant 0 : i32
    %c0_i32_1 = arith.constant 0 : i32
    return %c0_i32, %c0_i32_0 : i32, i32
  }
  func.func @transform_2(%arg0: i32) -> (i32, i32) {
    %c0_i32 = arith.constant 0 : i32
    %c0_i32_0 = arith.constant 0 : i32
    %c0_i32_1 = arith.constant 0 : i32
    return %c0_i32, %c0_i32_0 : i32, i32
  }
  func.func @transform_3(%arg0: i32) -> (i32, i32) {
    %c0_i32 = arith.constant 0 : i32
    %c0_i32_0 = arith.constant 0 : i32
    %c0_i32_1 = arith.constant 0 : i32
    return %c0_i32, %c0_i32_0 : i32, i32
  }
}

module attributes {stable_mosaic.version = 11 : i64} {
  func.func @head_kernel(%arg0: i32, %arg1: memref<4608x2xbf16, #tpu.memory_space<vmem>>, %arg2: memref<64x4608xbf16, #tpu.memory_space<vmem>>, %arg3: memref<64x1xf32, #tpu.memory_space<vmem>>, %arg4: memref<2x1x512xf32, #tpu.memory_space<vmem>>, %arg5: memref<2x1x512xf32, #tpu.memory_space<vmem>>, %arg6: memref<128x512xbf16, #tpu.memory_space<vmem>>, %arg7: memref<128x512xbf16, #tpu.memory_space<vmem>>, %arg8: memref<256x2xf32, #tpu.memory_space<vmem>>, %arg9: memref<1x2xf32, #tpu.memory_space<vmem>>, %arg10: memref<2x2xf32, #tpu.memory_space<vmem>>, %arg11: memref<64x2x512xf32, #tpu.memory_space<vmem>>, %arg12: memref<64x2x512xf32, #tpu.memory_space<vmem>>) attributes {dimension_semantics = [#tpu.dimension_semantics<arbitrary>], iteration_bounds = array<i64: 1>, scalar_prefetch = 0 : i64, scratch_operands = 2 : i64, tpu.core_type = #tpu.core_type<tc>, window_params = [{pipeline_mode = #tpu.pipeline_mode<synchronous>, transform_indices = @transform_0, window_bounds = array<i64: 4608, 2>}, {pipeline_mode = #tpu.pipeline_mode<synchronous>, transform_indices = @transform_1, window_bounds = array<i64: 64, 4608>}, {pipeline_mode = #tpu.pipeline_mode<synchronous>, transform_indices = @transform_2, window_bounds = array<i64: 64, 1>}, {pipeline_mode = #tpu.pipeline_mode<synchronous>, transform_indices = @transform_3, window_bounds = array<i64: 2, 1, 512>}, {pipeline_mode = #tpu.pipeline_mode<synchronous>, transform_indices = @transform_4, window_bounds = array<i64: 2, 1, 512>}, {pipeline_mode = #tpu.pipeline_mode<synchronous>, transform_indices = @transform_5, window_bounds = array<i64: 128, 512>}, {pipeline_mode = #tpu.pipeline_mode<synchronous>, transform_indices = @transform_6, window_bounds = array<i64: 128, 512>}, {pipeline_mode = #tpu.pipeline_mode<synchronous>, transform_indices = @transform_7, window_bounds = array<i64: 256, 2>}, {pipeline_mode = #tpu.pipeline_mode<synchronous>, transform_indices = @transform_8, window_bounds = array<i64: 1, 2>}, {pipeline_mode = #tpu.pipeline_mode<synchronous>, transform_indices = @transform_9, window_bounds = array<i64: 2, 2>}]} {
    %c0 = arith.constant 0 : index
    %c0_0 = arith.constant 0 : index
    %0 = vector.load %arg2[%c0, %c0_0] : memref<64x4608xbf16, #tpu.memory_space<vmem>>, vector<64x4608xbf16>
    %c0_1 = arith.constant 0 : index
    %c0_2 = arith.constant 0 : index
    %1 = vector.load %arg1[%c0_1, %c0_2] : memref<4608x2xbf16, #tpu.memory_space<vmem>>, vector<4608x2xbf16>
    %cst = arith.constant dense<0.000000e+00> : vector<64x2xf32>
    %2 = tpu.matmul %0, %1, %cst {dimension_numbers = #tpu.dot_dimension_numbers<[1], [0], [0], [1], [0, 0, 1, 1], [], []>} : vector<64x4608xbf16>, vector<4608x2xbf16>, vector<64x2xf32> -> vector<64x2xf32>
    %c0_3 = arith.constant 0 : index
    %c0_4 = arith.constant 0 : index
    %3 = vector.load %arg3[%c0_3, %c0_4] : memref<64x1xf32, #tpu.memory_space<vmem>>, vector<64x1xf32>
    %4 = vector.broadcast %3 : vector<64x1xf32> to vector<64x2xf32>
    %5 = arith.addf %2, %4 : vector<64x2xf32>
    %cst_5 = arith.constant 0.000000e+00 : f32
    %6 = vector.broadcast %cst_5 : f32 to vector<64x2xf32>
    %7 = arith.maximumf %5, %6 : vector<64x2xf32>
    %c0_6 = arith.constant 0 : index
    %c0_7 = arith.constant 0 : index
    %c0_8 = arith.constant 0 : index
    %8 = vector.load %arg4[%c0_6, %c0_7, %c0_8] : memref<2x1x512xf32, #tpu.memory_space<vmem>>, vector<1x1x512xf32>
    %9 = vector.shape_cast %8 : vector<1x1x512xf32> to vector<1x512xf32>
    %c1 = arith.constant 1 : index
    %c0_9 = arith.constant 0 : index
    %c0_10 = arith.constant 0 : index
    %10 = vector.load %arg4[%c1, %c0_9, %c0_10] : memref<2x1x512xf32, #tpu.memory_space<vmem>>, vector<1x1x512xf32>
    %11 = vector.shape_cast %10 : vector<1x1x512xf32> to vector<1x512xf32>
    %c0_11 = arith.constant 0 : index
    %c0_12 = arith.constant 0 : index
    %c0_13 = arith.constant 0 : index
    %12 = vector.load %arg5[%c0_11, %c0_12, %c0_13] : memref<2x1x512xf32, #tpu.memory_space<vmem>>, vector<1x1x512xf32>
    %13 = vector.shape_cast %12 : vector<1x1x512xf32> to vector<1x512xf32>
    %c1_14 = arith.constant 1 : index
    %c0_15 = arith.constant 0 : index
    %c0_16 = arith.constant 0 : index
    %14 = vector.load %arg5[%c1_14, %c0_15, %c0_16] : memref<2x1x512xf32, #tpu.memory_space<vmem>>, vector<1x1x512xf32>
    %15 = vector.shape_cast %14 : vector<1x1x512xf32> to vector<1x512xf32>
    %16 = vector.extract_strided_slice %7 {offsets = [0, 0], sizes = [64, 1], strides = [1, 1]} : vector<64x2xf32> to vector<64x1xf32>
    %17 = vector.broadcast %16 : vector<64x1xf32> to vector<64x512xf32>
    %18 = vector.broadcast %9 : vector<1x512xf32> to vector<64x512xf32>
    %19 = arith.mulf %17, %18 : vector<64x512xf32>
    %20 = vector.broadcast %13 : vector<1x512xf32> to vector<64x512xf32>
    %21 = arith.addf %19, %20 : vector<64x512xf32>
    %c0_17 = arith.constant 0 : index
    %c0_18 = arith.constant 0 : index
    %c0_19 = arith.constant 0 : index
    %22 = vector.load %arg11[%c0_17, %c0_18, %c0_19] : memref<64x2x512xf32, #tpu.memory_space<vmem>>, vector<64x1x512xf32>
    %23 = vector.shape_cast %22 : vector<64x1x512xf32> to vector<64x512xf32>
    %24 = vector.shape_cast %21 : vector<64x512xf32> to vector<64x1x512xf32>
    tpu.vector_store %arg11[%c0_17, %c0_18, %c0_19], %24 {strides = array<i32>} : memref<64x2x512xf32, #tpu.memory_space<vmem>>, vector<64x1x512xf32>,
    %25 = vector.broadcast %16 : vector<64x1xf32> to vector<64x512xf32>
    %26 = vector.broadcast %11 : vector<1x512xf32> to vector<64x512xf32>
    %27 = arith.mulf %25, %26 : vector<64x512xf32>
    %28 = vector.broadcast %15 : vector<1x512xf32> to vector<64x512xf32>
    %29 = arith.addf %27, %28 : vector<64x512xf32>
    %c0_20 = arith.constant 0 : index
    %c0_21 = arith.constant 0 : index
    %c0_22 = arith.constant 0 : index
    %30 = vector.load %arg12[%c0_20, %c0_21, %c0_22] : memref<64x2x512xf32, #tpu.memory_space<vmem>>, vector<64x1x512xf32>
    %31 = vector.shape_cast %30 : vector<64x1x512xf32> to vector<64x512xf32>
    %32 = vector.shape_cast %29 : vector<64x512xf32> to vector<64x1x512xf32>
    tpu.vector_store %arg12[%c0_20, %c0_21, %c0_22], %32 {strides = array<i32>} : memref<64x2x512xf32, #tpu.memory_space<vmem>>, vector<64x1x512xf32>,
    %33 = vector.extract_strided_slice %7 {offsets = [0, 1], sizes = [64, 1], strides = [1, 1]} : vector<64x2xf32> to vector<64x1xf32>
    %34 = vector.broadcast %33 : vector<64x1xf32> to vector<64x512xf32>
    %35 = vector.broadcast %9 : vector<1x512xf32> to vector<64x512xf32>
    %36 = arith.mulf %34, %35 : vector<64x512xf32>
    %37 = vector.broadcast %13 : vector<1x512xf32> to vector<64x512xf32>
    %38 = arith.addf %36, %37 : vector<64x512xf32>
    %c0_23 = arith.constant 0 : index
    %c1_24 = arith.constant 1 : index
    %c0_25 = arith.constant 0 : index
    %39 = vector.load %arg11[%c0_23, %c1_24, %c0_25] : memref<64x2x512xf32, #tpu.memory_space<vmem>>, vector<64x1x512xf32>
    %40 = vector.shape_cast %39 : vector<64x1x512xf32> to vector<64x512xf32>
    %41 = vector.shape_cast %38 : vector<64x512xf32> to vector<64x1x512xf32>
    tpu.vector_store %arg11[%c0_23, %c1_24, %c0_25], %41 {strides = array<i32>} : memref<64x2x512xf32, #tpu.memory_space<vmem>>, vector<64x1x512xf32>,
    %42 = vector.broadcast %33 : vector<64x1xf32> to vector<64x512xf32>
    %43 = vector.broadcast %11 : vector<1x512xf32> to vector<64x512xf32>
    %44 = arith.mulf %42, %43 : vector<64x512xf32>
    %45 = vector.broadcast %15 : vector<1x512xf32> to vector<64x512xf32>
    %46 = arith.addf %44, %45 : vector<64x512xf32>
    %c0_26 = arith.constant 0 : index
    %c1_27 = arith.constant 1 : index
    %c0_28 = arith.constant 0 : index
    %47 = vector.load %arg12[%c0_26, %c1_27, %c0_28] : memref<64x2x512xf32, #tpu.memory_space<vmem>>, vector<64x1x512xf32>
    %48 = vector.shape_cast %47 : vector<64x1x512xf32> to vector<64x512xf32>
    %49 = vector.shape_cast %46 : vector<64x512xf32> to vector<64x1x512xf32>
    tpu.vector_store %arg12[%c0_26, %c1_27, %c0_28], %49 {strides = array<i32>} : memref<64x2x512xf32, #tpu.memory_space<vmem>>, vector<64x1x512xf32>,
    %c0_29 = arith.constant 0 : index
    %c0_30 = arith.constant 0 : index
    %50 = vector.load %arg6[%c0_29, %c0_30] : memref<128x512xbf16, #tpu.memory_space<vmem>>, vector<128x512xbf16>
    %c0_31 = arith.constant 0 : index
    %c0_32 = arith.constant 0 : index
    %51 = vector.load %arg7[%c0_31, %c0_32] : memref<128x512xbf16, #tpu.memory_space<vmem>>, vector<128x512xbf16>
    %cst_33 = arith.constant 0.000000e+00 : f32
    %52 = vector.broadcast %cst_33 : f32 to vector<2x128xf32>
    %c0_i32 = arith.constant 0 : i32
    %c16_i32 = arith.constant 16 : i32
    %53 = arith.addi %c0_i32, %c16_i32 : i32
    %c1_i32 = arith.constant 1 : i32
    %54:4 = scf.for %arg13 = %c0_i32 to %53 step %c1_i32 iter_args(%arg14 = %52, %arg15 = %52, %arg16 = %52, %arg17 = %52) -> (vector<2x128xf32>, vector<2x128xf32>, vector<2x128xf32>, vector<2x128xf32>)  : i32 {
      %c4_i32 = arith.constant 4 : i32
      %71 = arith.muli %arg13, %c4_i32 : i32
      %c0_i32_44 = arith.constant 0 : i32
      %72 = arith.addi %71, %c0_i32_44 : i32
      %73 = arith.truncf %arg14 : vector<2x128xf32> to vector<2x128xbf16>
      %cst_45 = arith.constant dense<0.000000e+00> : vector<2x512xf32>
      %74 = tpu.matmul %73, %50, %cst_45 {dimension_numbers = #tpu.dot_dimension_numbers<[1], [0], [0], [1], [0, 0, 1, 1], [], []>} : vector<2x128xbf16>, vector<128x512xbf16>, vector<2x512xf32> -> vector<2x512xf32>
      %75 = arith.truncf %arg16 : vector<2x128xf32> to vector<2x128xbf16>
      %cst_46 = arith.constant dense<0.000000e+00> : vector<2x512xf32>
      %76 = tpu.matmul %75, %51, %cst_46 {dimension_numbers = #tpu.dot_dimension_numbers<[1], [0], [0], [1], [0, 0, 1, 1], [], []>} : vector<2x128xbf16>, vector<128x512xbf16>, vector<2x512xf32> -> vector<2x512xf32>
      %77 = arith.index_cast %72 : i32 to index
      %c0_47 = arith.constant 0 : index
      %c0_48 = arith.constant 0 : index
      %78 = vector.load %arg11[%77, %c0_47, %c0_48] : memref<64x2x512xf32, #tpu.memory_space<vmem>>, vector<1x2x512xf32>
      %79 = vector.shape_cast %78 : vector<1x2x512xf32> to vector<2x512xf32>
      %80 = arith.addf %74, %79 : vector<2x512xf32>
      %81 = vector.extract_strided_slice %80 {offsets = [0, 0], sizes = [2, 128], strides = [1, 1]} : vector<2x512xf32> to vector<2x128xf32>
      %82 = arith.negf %81 : vector<2x128xf32>
      %83 = math.exp %82 : vector<2x128xf32>
      %cst_49 = arith.constant 1.000000e+00 : f32
      %84 = vector.broadcast %cst_49 : f32 to vector<2x128xf32>
      %85 = arith.addf %84, %83 : vector<2x128xf32>
      %86 = arith.divf %84, %85 : vector<2x128xf32>
      %87 = vector.extract_strided_slice %80 {offsets = [0, 128], sizes = [2, 128], strides = [1, 1]} : vector<2x512xf32> to vector<2x128xf32>
      %88 = arith.negf %87 : vector<2x128xf32>
      %89 = math.exp %88 : vector<2x128xf32>
      %cst_50 = arith.constant 1.000000e+00 : f32
      %90 = vector.broadcast %cst_50 : f32 to vector<2x128xf32>
      %91 = arith.addf %90, %89 : vector<2x128xf32>
      %92 = arith.divf %90, %91 : vector<2x128xf32>
      %93 = vector.extract_strided_slice %80 {offsets = [0, 256], sizes = [2, 128], strides = [1, 1]} : vector<2x512xf32> to vector<2x128xf32>
      %94 = math.tanh %93 : vector<2x128xf32>
      %95 = vector.extract_strided_slice %80 {offsets = [0, 384], sizes = [2, 128], strides = [1, 1]} : vector<2x512xf32> to vector<2x128xf32>
      %96 = arith.negf %95 : vector<2x128xf32>
      %97 = math.exp %96 : vector<2x128xf32>
      %cst_51 = arith.constant 1.000000e+00 : f32
      %98 = vector.broadcast %cst_51 : f32 to vector<2x128xf32>
      %99 = arith.addf %98, %97 : vector<2x128xf32>
      %100 = arith.divf %98, %99 : vector<2x128xf32>
      %101 = arith.mulf %92, %arg15 : vector<2x128xf32>
      %102 = arith.mulf %86, %94 : vector<2x128xf32>
      %103 = arith.addf %101, %102 : vector<2x128xf32>
      %104 = math.tanh %103 : vector<2x128xf32>
      %105 = arith.mulf %100, %104 : vector<2x128xf32>
      %c63_i32 = arith.constant 63 : i32
      %106 = arith.subi %c63_i32, %72 : i32
      %107 = arith.index_cast %106 : i32 to index
      %c0_52 = arith.constant 0 : index
      %c0_53 = arith.constant 0 : index
      %108 = vector.load %arg12[%107, %c0_52, %c0_53] : memref<64x2x512xf32, #tpu.memory_space<vmem>>, vector<1x2x512xf32>
      %109 = vector.shape_cast %108 : vector<1x2x512xf32> to vector<2x512xf32>
      %110 = arith.addf %76, %109 : vector<2x512xf32>
      %111 = vector.extract_strided_slice %110 {offsets = [0, 0], sizes = [2, 128], strides = [1, 1]} : vector<2x512xf32> to vector<2x128xf32>
      %112 = arith.negf %111 : vector<2x128xf32>
      %113 = math.exp %112 : vector<2x128xf32>
      %cst_54 = arith.constant 1.000000e+00 : f32
      %114 = vector.broadcast %cst_54 : f32 to vector<2x128xf32>
      %115 = arith.addf %114, %113 : vector<2x128xf32>
      %116 = arith.divf %114, %115 : vector<2x128xf32>
      %117 = vector.extract_strided_slice %110 {offsets = [0, 128], sizes = [2, 128], strides = [1, 1]} : vector<2x512xf32> to vector<2x128xf32>
      %118 = arith.negf %117 : vector<2x128xf32>
      %119 = math.exp %118 : vector<2x128xf32>
      %cst_55 = arith.constant 1.000000e+00 : f32
      %120 = vector.broadcast %cst_55 : f32 to vector<2x128xf32>
      %121 = arith.addf %120, %119 : vector<2x128xf32>
      %122 = arith.divf %120, %121 : vector<2x128xf32>
      %123 = vector.extract_strided_slice %110 {offsets = [0, 256], sizes = [2, 128], strides = [1, 1]} : vector<2x512xf32> to vector<2x128xf32>
      %124 = math.tanh %123 : vector<2x128xf32>
      %125 = vector.extract_strided_slice %110 {offsets = [0, 384], sizes = [2, 128], strides = [1, 1]} : vector<2x512xf32> to vector<2x128xf32>
      %126 = arith.negf %125 : vector<2x128xf32>
      %127 = math.exp %126 : vector<2x128xf32>
      %cst_56 = arith.constant 1.000000e+00 : f32
      %128 = vector.broadcast %cst_56 : f32 to vector<2x128xf32>
      %129 = arith.addf %128, %127 : vector<2x128xf32>
      %130 = arith.divf %128, %129 : vector<2x128xf32>
      %131 = arith.mulf %122, %arg17 : vector<2x128xf32>
      %132 = arith.mulf %116, %124 : vector<2x128xf32>
      %133 = arith.addf %131, %132 : vector<2x128xf32>
      %134 = math.tanh %133 : vector<2x128xf32>
      %135 = arith.mulf %130, %134 : vector<2x128xf32>
      %c1_i32_57 = arith.constant 1 : i32
      %136 = arith.addi %71, %c1_i32_57 : i32
      %137 = arith.truncf %105 : vector<2x128xf32> to vector<2x128xbf16>
      %cst_58 = arith.constant dense<0.000000e+00> : vector<2x512xf32>
      %138 = tpu.matmul %137, %50, %cst_58 {dimension_numbers = #tpu.dot_dimension_numbers<[1], [0], [0], [1], [0, 0, 1, 1], [], []>} : vector<2x128xbf16>, vector<128x512xbf16>, vector<2x512xf32> -> vector<2x512xf32>
      %139 = arith.truncf %135 : vector<2x128xf32> to vector<2x128xbf16>
      %cst_59 = arith.constant dense<0.000000e+00> : vector<2x512xf32>
      %140 = tpu.matmul %139, %51, %cst_59 {dimension_numbers = #tpu.dot_dimension_numbers<[1], [0], [0], [1], [0, 0, 1, 1], [], []>} : vector<2x128xbf16>, vector<128x512xbf16>, vector<2x512xf32> -> vector<2x512xf32>
      %141 = arith.index_cast %136 : i32 to index
      %c0_60 = arith.constant 0 : index
      %c0_61 = arith.constant 0 : index
      %142 = vector.load %arg11[%141, %c0_60, %c0_61] : memref<64x2x512xf32, #tpu.memory_space<vmem>>, vector<1x2x512xf32>
      %143 = vector.shape_cast %142 : vector<1x2x512xf32> to vector<2x512xf32>
      %144 = arith.addf %138, %143 : vector<2x512xf32>
      %145 = vector.extract_strided_slice %144 {offsets = [0, 0], sizes = [2, 128], strides = [1, 1]} : vector<2x512xf32> to vector<2x128xf32>
      %146 = arith.negf %145 : vector<2x128xf32>
      %147 = math.exp %146 : vector<2x128xf32>
      %cst_62 = arith.constant 1.000000e+00 : f32
      %148 = vector.broadcast %cst_62 : f32 to vector<2x128xf32>
      %149 = arith.addf %148, %147 : vector<2x128xf32>
      %150 = arith.divf %148, %149 : vector<2x128xf32>
      %151 = vector.extract_strided_slice %144 {offsets = [0, 128], sizes = [2, 128], strides = [1, 1]} : vector<2x512xf32> to vector<2x128xf32>
      %152 = arith.negf %151 : vector<2x128xf32>
      %153 = math.exp %152 : vector<2x128xf32>
      %cst_63 = arith.constant 1.000000e+00 : f32
      %154 = vector.broadcast %cst_63 : f32 to vector<2x128xf32>
      %155 = arith.addf %154, %153 : vector<2x128xf32>
      %156 = arith.divf %154, %155 : vector<2x128xf32>
      %157 = vector.extract_strided_slice %144 {offsets = [0, 256], sizes = [2, 128], strides = [1, 1]} : vector<2x512xf32> to vector<2x128xf32>
      %158 = math.tanh %157 : vector<2x128xf32>
      %159 = vector.extract_strided_slice %144 {offsets = [0, 384], sizes = [2, 128], strides = [1, 1]} : vector<2x512xf32> to vector<2x128xf32>
      %160 = arith.negf %159 : vector<2x128xf32>
      %161 = math.exp %160 : vector<2x128xf32>
      %cst_64 = arith.constant 1.000000e+00 : f32
      %162 = vector.broadcast %cst_64 : f32 to vector<2x128xf32>
      %163 = arith.addf %162, %161 : vector<2x128xf32>
      %164 = arith.divf %162, %163 : vector<2x128xf32>
      %165 = arith.mulf %156, %103 : vector<2x128xf32>
      %166 = arith.mulf %150, %158 : vector<2x128xf32>
      %167 = arith.addf %165, %166 : vector<2x128xf32>
      %168 = math.tanh %167 : vector<2x128xf32>
      %169 = arith.mulf %164, %168 : vector<2x128xf32>
      %c63_i32_65 = arith.constant 63 : i32
      %170 = arith.subi %c63_i32_65, %136 : i32
      %171 = arith.index_cast %170 : i32 to index
      %c0_66 = arith.constant 0 : index
      %c0_67 = arith.constant 0 : index
      %172 = vector.load %arg12[%171, %c0_66, %c0_67] : memref<64x2x512xf32, #tpu.memory_space<vmem>>, vector<1x2x512xf32>
      %173 = vector.shape_cast %172 : vector<1x2x512xf32> to vector<2x512xf32>
      %174 = arith.addf %140, %173 : vector<2x512xf32>
      %175 = vector.extract_strided_slice %174 {offsets = [0, 0], sizes = [2, 128], strides = [1, 1]} : vector<2x512xf32> to vector<2x128xf32>
      %176 = arith.negf %175 : vector<2x128xf32>
      %177 = math.exp %176 : vector<2x128xf32>
      %cst_68 = arith.constant 1.000000e+00 : f32
      %178 = vector.broadcast %cst_68 : f32 to vector<2x128xf32>
      %179 = arith.addf %178, %177 : vector<2x128xf32>
      %180 = arith.divf %178, %179 : vector<2x128xf32>
      %181 = vector.extract_strided_slice %174 {offsets = [0, 128], sizes = [2, 128], strides = [1, 1]} : vector<2x512xf32> to vector<2x128xf32>
      %182 = arith.negf %181 : vector<2x128xf32>
      %183 = math.exp %182 : vector<2x128xf32>
      %cst_69 = arith.constant 1.000000e+00 : f32
      %184 = vector.broadcast %cst_69 : f32 to vector<2x128xf32>
      %185 = arith.addf %184, %183 : vector<2x128xf32>
      %186 = arith.divf %184, %185 : vector<2x128xf32>
      %187 = vector.extract_strided_slice %174 {offsets = [0, 256], sizes = [2, 128], strides = [1, 1]} : vector<2x512xf32> to vector<2x128xf32>
      %188 = math.tanh %187 : vector<2x128xf32>
      %189 = vector.extract_strided_slice %174 {offsets = [0, 384], sizes = [2, 128], strides = [1, 1]} : vector<2x512xf32> to vector<2x128xf32>
      %190 = arith.negf %189 : vector<2x128xf32>
      %191 = math.exp %190 : vector<2x128xf32>
      %cst_70 = arith.constant 1.000000e+00 : f32
      %192 = vector.broadcast %cst_70 : f32 to vector<2x128xf32>
      %193 = arith.addf %192, %191 : vector<2x128xf32>
      %194 = arith.divf %192, %193 : vector<2x128xf32>
      %195 = arith.mulf %186, %133 : vector<2x128xf32>
      %196 = arith.mulf %180, %188 : vector<2x128xf32>
      %197 = arith.addf %195, %196 : vector<2x128xf32>
      %198 = math.tanh %197 : vector<2x128xf32>
      %199 = arith.mulf %194, %198 : vector<2x128xf32>
      %c2_i32 = arith.constant 2 : i32
      %200 = arith.addi %71, %c2_i32 : i32
      %201 = arith.truncf %169 : vector<2x128xf32> to vector<2x128xbf16>
      %cst_71 = arith.constant dense<0.000000e+00> : vector<2x512xf32>
      %202 = tpu.matmul %201, %50, %cst_71 {dimension_numbers = #tpu.dot_dimension_numbers<[1], [0], [0], [1], [0, 0, 1, 1], [], []>} : vector<2x128xbf16>, vector<128x512xbf16>, vector<2x512xf32> -> vector<2x512xf32>
      %203 = arith.truncf %199 : vector<2x128xf32> to vector<2x128xbf16>
      %cst_72 = arith.constant dense<0.000000e+00> : vector<2x512xf32>
      %204 = tpu.matmul %203, %51, %cst_72 {dimension_numbers = #tpu.dot_dimension_numbers<[1], [0], [0], [1], [0, 0, 1, 1], [], []>} : vector<2x128xbf16>, vector<128x512xbf16>, vector<2x512xf32> -> vector<2x512xf32>
      %205 = arith.index_cast %200 : i32 to index
      %c0_73 = arith.constant 0 : index
      %c0_74 = arith.constant 0 : index
      %206 = vector.load %arg11[%205, %c0_73, %c0_74] : memref<64x2x512xf32, #tpu.memory_space<vmem>>, vector<1x2x512xf32>
      %207 = vector.shape_cast %206 : vector<1x2x512xf32> to vector<2x512xf32>
      %208 = arith.addf %202, %207 : vector<2x512xf32>
      %209 = vector.extract_strided_slice %208 {offsets = [0, 0], sizes = [2, 128], strides = [1, 1]} : vector<2x512xf32> to vector<2x128xf32>
      %210 = arith.negf %209 : vector<2x128xf32>
      %211 = math.exp %210 : vector<2x128xf32>
      %cst_75 = arith.constant 1.000000e+00 : f32
      %212 = vector.broadcast %cst_75 : f32 to vector<2x128xf32>
      %213 = arith.addf %212, %211 : vector<2x128xf32>
      %214 = arith.divf %212, %213 : vector<2x128xf32>
      %215 = vector.extract_strided_slice %208 {offsets = [0, 128], sizes = [2, 128], strides = [1, 1]} : vector<2x512xf32> to vector<2x128xf32>
      %216 = arith.negf %215 : vector<2x128xf32>
      %217 = math.exp %216 : vector<2x128xf32>
      %cst_76 = arith.constant 1.000000e+00 : f32
      %218 = vector.broadcast %cst_76 : f32 to vector<2x128xf32>
      %219 = arith.addf %218, %217 : vector<2x128xf32>
      %220 = arith.divf %218, %219 : vector<2x128xf32>
      %221 = vector.extract_strided_slice %208 {offsets = [0, 256], sizes = [2, 128], strides = [1, 1]} : vector<2x512xf32> to vector<2x128xf32>
      %222 = math.tanh %221 : vector<2x128xf32>
      %223 = vector.extract_strided_slice %208 {offsets = [0, 384], sizes = [2, 128], strides = [1, 1]} : vector<2x512xf32> to vector<2x128xf32>
      %224 = arith.negf %223 : vector<2x128xf32>
      %225 = math.exp %224 : vector<2x128xf32>
      %cst_77 = arith.constant 1.000000e+00 : f32
      %226 = vector.broadcast %cst_77 : f32 to vector<2x128xf32>
      %227 = arith.addf %226, %225 : vector<2x128xf32>
      %228 = arith.divf %226, %227 : vector<2x128xf32>
      %229 = arith.mulf %220, %167 : vector<2x128xf32>
      %230 = arith.mulf %214, %222 : vector<2x128xf32>
      %231 = arith.addf %229, %230 : vector<2x128xf32>
      %232 = math.tanh %231 : vector<2x128xf32>
      %233 = arith.mulf %228, %232 : vector<2x128xf32>
      %c63_i32_78 = arith.constant 63 : i32
      %234 = arith.subi %c63_i32_78, %200 : i32
      %235 = arith.index_cast %234 : i32 to index
      %c0_79 = arith.constant 0 : index
      %c0_80 = arith.constant 0 : index
      %236 = vector.load %arg12[%235, %c0_79, %c0_80] : memref<64x2x512xf32, #tpu.memory_space<vmem>>, vector<1x2x512xf32>
      %237 = vector.shape_cast %236 : vector<1x2x512xf32> to vector<2x512xf32>
      %238 = arith.addf %204, %237 : vector<2x512xf32>
      %239 = vector.extract_strided_slice %238 {offsets = [0, 0], sizes = [2, 128], strides = [1, 1]} : vector<2x512xf32> to vector<2x128xf32>
      %240 = arith.negf %239 : vector<2x128xf32>
      %241 = math.exp %240 : vector<2x128xf32>
      %cst_81 = arith.constant 1.000000e+00 : f32
      %242 = vector.broadcast %cst_81 : f32 to vector<2x128xf32>
      %243 = arith.addf %242, %241 : vector<2x128xf32>
      %244 = arith.divf %242, %243 : vector<2x128xf32>
      %245 = vector.extract_strided_slice %238 {offsets = [0, 128], sizes = [2, 128], strides = [1, 1]} : vector<2x512xf32> to vector<2x128xf32>
      %246 = arith.negf %245 : vector<2x128xf32>
      %247 = math.exp %246 : vector<2x128xf32>
      %cst_82 = arith.constant 1.000000e+00 : f32
      %248 = vector.broadcast %cst_82 : f32 to vector<2x128xf32>
      %249 = arith.addf %248, %247 : vector<2x128xf32>
      %250 = arith.divf %248, %249 : vector<2x128xf32>
      %251 = vector.extract_strided_slice %238 {offsets = [0, 256], sizes = [2, 128], strides = [1, 1]} : vector<2x512xf32> to vector<2x128xf32>
      %252 = math.tanh %251 : vector<2x128xf32>
      %253 = vector.extract_strided_slice %238 {offsets = [0, 384], sizes = [2, 128], strides = [1, 1]} : vector<2x512xf32> to vector<2x128xf32>
      %254 = arith.negf %253 : vector<2x128xf32>
      %255 = math.exp %254 : vector<2x128xf32>
      %cst_83 = arith.constant 1.000000e+00 : f32
      %256 = vector.broadcast %cst_83 : f32 to vector<2x128xf32>
      %257 = arith.addf %256, %255 : vector<2x128xf32>
      %258 = arith.divf %256, %257 : vector<2x128xf32>
      %259 = arith.mulf %250, %197 : vector<2x128xf32>
      %260 = arith.mulf %244, %252 : vector<2x128xf32>
      %261 = arith.addf %259, %260 : vector<2x128xf32>
      %262 = math.tanh %261 : vector<2x128xf32>
      %263 = arith.mulf %258, %262 : vector<2x128xf32>
      %c3_i32 = arith.constant 3 : i32
      %264 = arith.addi %71, %c3_i32 : i32
      %265 = arith.truncf %233 : vector<2x128xf32> to vector<2x128xbf16>
      %cst_84 = arith.constant dense<0.000000e+00> : vector<2x512xf32>
      %266 = tpu.matmul %265, %50, %cst_84 {dimension_numbers = #tpu.dot_dimension_numbers<[1], [0], [0], [1], [0, 0, 1, 1], [], []>} : vector<2x128xbf16>, vector<128x512xbf16>, vector<2x512xf32> -> vector<2x512xf32>
      %267 = arith.truncf %263 : vector<2x128xf32> to vector<2x128xbf16>
      %cst_85 = arith.constant dense<0.000000e+00> : vector<2x512xf32>
      %268 = tpu.matmul %267, %51, %cst_85 {dimension_numbers = #tpu.dot_dimension_numbers<[1], [0], [0], [1], [0, 0, 1, 1], [], []>} : vector<2x128xbf16>, vector<128x512xbf16>, vector<2x512xf32> -> vector<2x512xf32>
      %269 = arith.index_cast %264 : i32 to index
      %c0_86 = arith.constant 0 : index
      %c0_87 = arith.constant 0 : index
      %270 = vector.load %arg11[%269, %c0_86, %c0_87] : memref<64x2x512xf32, #tpu.memory_space<vmem>>, vector<1x2x512xf32>
      %271 = vector.shape_cast %270 : vector<1x2x512xf32> to vector<2x512xf32>
      %272 = arith.addf %266, %271 : vector<2x512xf32>
      %273 = vector.extract_strided_slice %272 {offsets = [0, 0], sizes = [2, 128], strides = [1, 1]} : vector<2x512xf32> to vector<2x128xf32>
      %274 = arith.negf %273 : vector<2x128xf32>
      %275 = math.exp %274 : vector<2x128xf32>
      %cst_88 = arith.constant 1.000000e+00 : f32
      %276 = vector.broadcast %cst_88 : f32 to vector<2x128xf32>
      %277 = arith.addf %276, %275 : vector<2x128xf32>
      %278 = arith.divf %276, %277 : vector<2x128xf32>
      %279 = vector.extract_strided_slice %272 {offsets = [0, 128], sizes = [2, 128], strides = [1, 1]} : vector<2x512xf32> to vector<2x128xf32>
      %280 = arith.negf %279 : vector<2x128xf32>
      %281 = math.exp %280 : vector<2x128xf32>
      %cst_89 = arith.constant 1.000000e+00 : f32
      %282 = vector.broadcast %cst_89 : f32 to vector<2x128xf32>
      %283 = arith.addf %282, %281 : vector<2x128xf32>
      %284 = arith.divf %282, %283 : vector<2x128xf32>
      %285 = vector.extract_strided_slice %272 {offsets = [0, 256], sizes = [2, 128], strides = [1, 1]} : vector<2x512xf32> to vector<2x128xf32>
      %286 = math.tanh %285 : vector<2x128xf32>
      %287 = vector.extract_strided_slice %272 {offsets = [0, 384], sizes = [2, 128], strides = [1, 1]} : vector<2x512xf32> to vector<2x128xf32>
      %288 = arith.negf %287 : vector<2x128xf32>
      %289 = math.exp %288 : vector<2x128xf32>
      %cst_90 = arith.constant 1.000000e+00 : f32
      %290 = vector.broadcast %cst_90 : f32 to vector<2x128xf32>
      %291 = arith.addf %290, %289 : vector<2x128xf32>
      %292 = arith.divf %290, %291 : vector<2x128xf32>
      %293 = arith.mulf %284, %231 : vector<2x128xf32>
      %294 = arith.mulf %278, %286 : vector<2x128xf32>
      %295 = arith.addf %293, %294 : vector<2x128xf32>
      %296 = math.tanh %295 : vector<2x128xf32>
      %297 = arith.mulf %292, %296 : vector<2x128xf32>
      %c63_i32_91 = arith.constant 63 : i32
      %298 = arith.subi %c63_i32_91, %264 : i32
      %299 = arith.index_cast %298 : i32 to index
      %c0_92 = arith.constant 0 : index
      %c0_93 = arith.constant 0 : index
      %300 = vector.load %arg12[%299, %c0_92, %c0_93] : memref<64x2x512xf32, #tpu.memory_space<vmem>>, vector<1x2x512xf32>
      %301 = vector.shape_cast %300 : vector<1x2x512xf32> to vector<2x512xf32>
      %302 = arith.addf %268, %301 : vector<2x512xf32>
      %303 = vector.extract_strided_slice %302 {offsets = [0, 0], sizes = [2, 128], strides = [1, 1]} : vector<2x512xf32> to vector<2x128xf32>
      %304 = arith.negf %303 : vector<2x128xf32>
      %305 = math.exp %304 : vector<2x128xf32>
      %cst_94 = arith.constant 1.000000e+00 : f32
      %306 = vector.broadcast %cst_94 : f32 to vector<2x128xf32>
      %307 = arith.addf %306, %305 : vector<2x128xf32>
      %308 = arith.divf %306, %307 : vector<2x128xf32>
      %309 = vector.extract_strided_slice %302 {offsets = [0, 128], sizes = [2, 128], strides = [1, 1]} : vector<2x512xf32> to vector<2x128xf32>
      %310 = arith.negf %309 : vector<2x128xf32>
      %311 = math.exp %310 : vector<2x128xf32>
      %cst_95 = arith.constant 1.000000e+00 : f32
      %312 = vector.broadcast %cst_95 : f32 to vector<2x128xf32>
      %313 = arith.addf %312, %311 : vector<2x128xf32>
      %314 = arith.divf %312, %313 : vector<2x128xf32>
      %315 = vector.extract_strided_slice %302 {offsets = [0, 256], sizes = [2, 128], strides = [1, 1]} : vector<2x512xf32> to vector<2x128xf32>
      %316 = math.tanh %315 : vector<2x128xf32>
      %317 = vector.extract_strided_slice %302 {offsets = [0, 384], sizes = [2, 128], strides = [1, 1]} : vector<2x512xf32> to vector<2x128xf32>
      %318 = arith.negf %317 : vector<2x128xf32>
      %319 = math.exp %318 : vector<2x128xf32>
      %cst_96 = arith.constant 1.000000e+00 : f32
      %320 = vector.broadcast %cst_96 : f32 to vector<2x128xf32>
      %321 = arith.addf %320, %319 : vector<2x128xf32>
      %322 = arith.divf %320, %321 : vector<2x128xf32>
      %323 = arith.mulf %314, %261 : vector<2x128xf32>
      %324 = arith.mulf %308, %316 : vector<2x128xf32>
      %325 = arith.addf %323, %324 : vector<2x128xf32>
      %326 = math.tanh %325 : vector<2x128xf32>
      %327 = arith.mulf %322, %326 : vector<2x128xf32>
      scf.yield %297, %295, %327, %325 : vector<2x128xf32>, vector<2x128xf32>, vector<2x128xf32>, vector<2x128xf32>
    }
    %c16_i32_34 = arith.constant 16 : i32
    %55 = tpu.concatenate %54#0, %54#2 in 1 : vector<2x128xf32>, vector<2x128xf32> -> vector<2x256xf32>
    %c0_35 = arith.constant 0 : index
    %c0_36 = arith.constant 0 : index
    %56 = vector.load %arg8[%c0_35, %c0_36] : memref<256x2xf32, #tpu.memory_space<vmem>>, vector<256x2xf32>
    %cst_37 = arith.constant dense<0.000000e+00> : vector<2x2xf32>
    %57 = tpu.matmul %55, %56, %cst_37 {dimension_numbers = #tpu.dot_dimension_numbers<[1], [0], [0], [1], [0, 0, 1, 1], [], []>} : vector<2x256xf32>, vector<256x2xf32>, vector<2x2xf32> -> vector<2x2xf32>
    %c0_38 = arith.constant 0 : index
    %c0_39 = arith.constant 0 : index
    %58 = vector.load %arg9[%c0_38, %c0_39] : memref<1x2xf32, #tpu.memory_space<vmem>>, vector<1x2xf32>
    %59 = vector.broadcast %58 : vector<1x2xf32> to vector<2x2xf32>
    %60 = arith.addf %57, %59 : vector<2x2xf32>
    %cst_40 = arith.constant dense<0xFF800000> : vector<2xf32>
    %61 = vector.multi_reduction <maximumf>, %60, %cst_40 [1] : vector<2x2xf32> to vector<2xf32>
    %62 = vector.shape_cast %61 : vector<2xf32> to vector<2x1xf32>
    %63 = vector.broadcast %62 : vector<2x1xf32> to vector<2x2xf32>
    %64 = arith.subf %60, %63 : vector<2x2xf32>
    %65 = math.exp %64 : vector<2x2xf32>
    %cst_41 = arith.constant dense<0.000000e+00> : vector<2xf32>
    %66 = vector.multi_reduction <add>, %65, %cst_41 [1] : vector<2x2xf32> to vector<2xf32>
    %67 = vector.shape_cast %66 : vector<2xf32> to vector<2x1xf32>
    %68 = vector.broadcast %67 : vector<2x1xf32> to vector<2x2xf32>
    %69 = arith.divf %65, %68 : vector<2x2xf32>
    %c0_42 = arith.constant 0 : index
    %c0_43 = arith.constant 0 : index
    %70 = vector.load %arg10[%c0_42, %c0_43] : memref<2x2xf32, #tpu.memory_space<vmem>>, vector<2x2xf32>
    tpu.vector_store %arg10[%c0_42, %c0_43], %69 {strides = array<i32>} : memref<2x2xf32, #tpu.memory_space<vmem>>, vector<2x2xf32>,
    return
  }
  func.func @transform_0(%arg0: i32) -> (i32, i32) {
    %c0_i32 = arith.constant 0 : i32
    %c0_i32_0 = arith.constant 0 : i32
    %c0_i32_1 = arith.constant 0 : i32
    return %c0_i32, %c0_i32_0 : i32, i32
  }
  func.func @transform_1(%arg0: i32) -> (i32, i32) {
    %c0_i32 = arith.constant 0 : i32
    %c0_i32_0 = arith.constant 0 : i32
    %c0_i32_1 = arith.constant 0 : i32
    return %c0_i32, %c0_i32_0 : i32, i32
  }
  func.func @transform_2(%arg0: i32) -> (i32, i32) {
    %c0_i32 = arith.constant 0 : i32
    %c0_i32_0 = arith.constant 0 : i32
    %c0_i32_1 = arith.constant 0 : i32
    return %c0_i32, %c0_i32_0 : i32, i32
  }
  func.func @transform_3(%arg0: i32) -> (i32, i32, i32) {
    %c0_i32 = arith.constant 0 : i32
    %c0_i32_0 = arith.constant 0 : i32
    %c0_i32_1 = arith.constant 0 : i32
    %c0_i32_2 = arith.constant 0 : i32
    return %c0_i32, %c0_i32_0, %c0_i32_1 : i32, i32, i32
  }
  func.func @transform_4(%arg0: i32) -> (i32, i32, i32) {
    %c0_i32 = arith.constant 0 : i32
    %c0_i32_0 = arith.constant 0 : i32
    %c0_i32_1 = arith.constant 0 : i32
    %c0_i32_2 = arith.constant 0 : i32
    return %c0_i32, %c0_i32_0, %c0_i32_1 : i32, i32, i32
  }
  func.func @transform_5(%arg0: i32) -> (i32, i32) {
    %c0_i32 = arith.constant 0 : i32
    %c0_i32_0 = arith.constant 0 : i32
    %c0_i32_1 = arith.constant 0 : i32
    return %c0_i32, %c0_i32_0 : i32, i32
  }
  func.func @transform_6(%arg0: i32) -> (i32, i32) {
    %c0_i32 = arith.constant 0 : i32
    %c0_i32_0 = arith.constant 0 : i32
    %c0_i32_1 = arith.constant 0 : i32
    return %c0_i32, %c0_i32_0 : i32, i32
  }
  func.func @transform_7(%arg0: i32) -> (i32, i32) {
    %c0_i32 = arith.constant 0 : i32
    %c0_i32_0 = arith.constant 0 : i32
    %c0_i32_1 = arith.constant 0 : i32
    return %c0_i32, %c0_i32_0 : i32, i32
  }
  func.func @transform_8(%arg0: i32) -> (i32, i32) {
    %c0_i32 = arith.constant 0 : i32
    %c0_i32_0 = arith.constant 0 : i32
    %c0_i32_1 = arith.constant 0 : i32
    return %c0_i32, %c0_i32_0 : i32, i32
  }
  func.func @transform_9(%arg0: i32) -> (i32, i32) {
    %c0_i32 = arith.constant 0 : i32
    %c0_i32_0 = arith.constant 0 : i32
    %c0_i32_1 = arith.constant 0 : i32
    return %c0_i32, %c0_i32_0 : i32, i32
  }
}

</mosaic_0001>

<llo_original>
// kernel: model_vad_forward.3
$region0: #{model_vad_forward.3}
  #allocation0 [shape = 'u32[]', space=smem, size = 0x4, offset = 0x4, fixed_abs, tag = 'smem constant byte address 0x4 - core index']
  #allocation1 [shape = 'u32[144,128]{1,0:T(1,128)}', space=vmem, size = 0x12000, scoped, tag = 'internal scratch']
  %s0 = inlined_call_operand.vmem [shape: bf16[1568,25], index: 0, kind: input, shape index: {}]
  %s1 = inlined_call_operand.vmem [shape: bf16[25,32], index: 1, kind: input, shape index: {}]
  %s2 = inlined_call_operand.vmem [shape: f32[1,32], index: 2, kind: input, shape index: {}]
  %s3 = inlined_call_operand.vmem [shape: bf16[392,32], index: 3, kind: output, shape index: {}]
  %s4 = sld [smem:[#allocation0]]
  $region22: #{model_vad_forward.3} parent=0
    _
  %s6 = ssub.s32 1, %s4
  %s7 = scalar_select 0, %s6, %s4
  // Predicated region
  $region2: #{model_vad_forward.3} parent=0 // pred_check
    _
  $region3: #{model_vad_forward.3} parent=0 // pred_check_branch
    %9 = sbr.rel (0) target = $region5
  $region4: #{model_vad_forward.3} parent=0 // pred_region
    _
  $region5: #{model_vad_forward.3} parent=0 // pred_fallthru
    _
  // Predicated region
  $region6: #{model_vad_forward.3} parent=0 // pred_check
    _
  $region7: #{model_vad_forward.3} parent=0 // pred_check_branch
    %11 = sbr.rel (0) target = $region9
  $region8: #{model_vad_forward.3} parent=0 // pred_region
    _
  $region9: #{model_vad_forward.3} parent=0 // pred_fallthru
    _
  // Predicated region
  $region10: #{model_vad_forward.3} parent=0 // pred_check
    _
  $region11: #{model_vad_forward.3} parent=0 // pred_check_branch
    %13 = sbr.rel (0) target = $region13
  $region12: #{model_vad_forward.3} parent=0 // pred_region
    _
  $region13: #{model_vad_forward.3} parent=0 // pred_fallthru
    _
  %v15 = vld [vmem:[%s0] sm:$0xf]
  %v16 = vld [vmem:[%s0 + $0x4] sm:$0xf]
  %v17 = vld [vmem:[%s0 + $0x8] sm:$0xf]
  %v18 = vld [vmem:[%s0 + $0xc] sm:$0xf]
  %v19 = vld [vmem:[%s0 + $0x10] sm:$0xf]
  %v20 = vld [vmem:[%s0 + $0x14] sm:$0xf]
  %v21 = vld [vmem:[%s0 + $0x18] sm:$0xf]
  %v22 = vld [vmem:[%s0 + $0x1c] sm:$0xf]
  %v23 = vld [vmem:[%s0 + $0x20] sm:$0xf]
  %v24 = vld [vmem:[%s0 + $0x24] sm:$0xf]
  %v25 = vld [vmem:[%s0 + $0x28] sm:$0xf]
  %v26 = vld [vmem:[%s0 + $0x2c] sm:$0xf]
  %v27 = vld [vmem:[%s0 + $0x30] sm:$0xf]
  %v28 = vld [vmem:[%s0 + $0x34] sm:$0xf]
  %v29 = vld [vmem:[%s0 + $0x38] sm:$0xf]
  %v30 = vld [vmem:[%s0 + $0x3c] sm:$0xf]
  %v31 = vld [vmem:[%s0 + $0x40] sm:$0xf]
  %v32 = vld [vmem:[%s0 + $0x44] sm:$0xf]
  %v33 = vld [vmem:[%s0 + $0x48] sm:$0xf]
  %v34 = vld [vmem:[%s0 + $0x4c] sm:$0xf]
  %v35 = vld [vmem:[%s0 + $0x50] sm:$0xf]
  %v36 = vld [vmem:[%s0 + $0x54] sm:$0xf]
  %v37 = vld [vmem:[%s0 + $0x58] sm:$0xf]
  %v38 = vld [vmem:[%s0 + $0x5c] sm:$0xf]
  %v39 = vld [vmem:[%s0 + $0x60] sm:$0xf]
  %v40 = vld [vmem:[%s0 + $0x64] sm:$0xf]
  %v41 = vld [vmem:[%s0 + $0x68] sm:$0xf]
  %v42 = vld [vmem:[%s0 + $0x6c] sm:$0xf]
  %v43 = vld [vmem:[%s0 + $0x70] sm:$0xf]
  %v44 = vld [vmem:[%s0 + $0x74] sm:$0xf]
  %v45 = vld [vmem:[%s0 + $0x78] sm:$0xf]
  %v46 = vld [vmem:[%s0 + $0x7c] sm:$0xf]
  %v47 = vld [vmem:[%s0 + $0x80] sm:$0xf]
  %v48 = vld [vmem:[%s0 + $0x84] sm:$0xf]
  %v49 = vld [vmem:[%s0 + $0x88] sm:$0xf]
  %v50 = vld [vmem:[%s0 + $0x8c] sm:$0xf]
  %v51 = vld [vmem:[%s0 + $0x90] sm:$0xf]
  %v52 = vld [vmem:[%s0 + $0x94] sm:$0xf]
  %v53 = vld [vmem:[%s0 + $0x98] sm:$0xf]
  %v54 = vld [vmem:[%s0 + $0x9c] sm:$0xf]
  %v55 = vld [vmem:[%s0 + $0xa0] sm:$0xf]
  %v56 = vld [vmem:[%s0 + $0xa4] sm:$0xf]
  %v57 = vld [vmem:[%s0 + $0xa8] sm:$0xf]
  %v58 = vld [vmem:[%s0 + $0xac] sm:$0xf]
  %v59 = vld [vmem:[%s0 + $0xb0] sm:$0xf]
  %v60 = vld [vmem:[%s0 + $0xb4] sm:$0xf]
  %v61 = vld [vmem:[%s0 + $0xb8] sm:$0xf]
  %v62 = vld [vmem:[%s0 + $0xbc] sm:$0xf]
  %v63 = vld [vmem:[%s0 + $0xc0] sm:$0xf]
  %v64 = vld [vmem:[%s0 + $0xc4] sm:$0xf]
  %v65 = vld [vmem:[%s0 + $0xc8] sm:$0xf]
  %v66 = vld [vmem:[%s0 + $0xcc] sm:$0xf]
  %v67 = vld [vmem:[%s0 + $0xd0] sm:$0xf]
  %v68 = vld [vmem:[%s0 + $0xd4] sm:$0xf]
  %v69 = vld [vmem:[%s0 + $0xd8] sm:$0xf]
  %v70 = vld [vmem:[%s0 + $0xdc] sm:$0xf]
  %v71 = vld [vmem:[%s0 + $0xe0] sm:$0xf]
  %v72 = vld [vmem:[%s0 + $0xe4] sm:$0xf]
  %v73 = vld [vmem:[%s0 + $0xe8] sm:$0xf]
  %v74 = vld [vmem:[%s0 + $0xec] sm:$0xf]
  %v75 = vld [vmem:[%s0 + $0xf0] sm:$0xf]
  %v76 = vld [vmem:[%s0 + $0xf4] sm:$0xf]
  %v77 = vld [vmem:[%s0 + $0xf8] sm:$0xf]
  %v78 = vld [vmem:[%s0 + $0xfc] sm:$0xf]
  %v79 = vld [vmem:[%s0 + $0x100] sm:$0xf]
  %v80 = vld [vmem:[%s0 + $0x104] sm:$0xf]
  %v81 = vld [vmem:[%s0 + $0x108] sm:$0xf]
  %v82 = vld [vmem:[%s0 + $0x10c] sm:$0xf]
  %v83 = vld [vmem:[%s0 + $0x110] sm:$0xf]
  %v84 = vld [vmem:[%s0 + $0x114] sm:$0xf]
  %v85 = vld [vmem:[%s0 + $0x118] sm:$0xf]
  %v86 = vld [vmem:[%s0 + $0x11c] sm:$0xf]
  %v87 = vld [vmem:[%s0 + $0x120] sm:$0xf]
  %v88 = vld [vmem:[%s0 + $0x124] sm:$0xf]
  %v89 = vld [vmem:[%s0 + $0x128] sm:$0xf]
  %v90 = vld [vmem:[%s0 + $0x12c] sm:$0xf]
  %v91 = vld [vmem:[%s0 + $0x130] sm:$0xf]
  %v92 = vld [vmem:[%s0 + $0x134] sm:$0xf]
  %v93 = vld [vmem:[%s0 + $0x138] sm:$0xf]
  %v94 = vld [vmem:[%s0 + $0x13c] sm:$0xf]
  %v95 = vld [vmem:[%s0 + $0x140] sm:$0xf]
  %v96 = vld [vmem:[%s0 + $0x144] sm:$0xf]
  %v97 = vld [vmem:[%s0 + $0x148] sm:$0xf]
  %v98 = vld [vmem:[%s0 + $0x14c] sm:$0xf]
  %v99 = vld [vmem:[%s0 + $0x150] sm:$0xf]
  %v100 = vld [vmem:[%s0 + $0x154] sm:$0xf]
  %v101 = vld [vmem:[%s0 + $0x158] sm:$0xf]
  %v102 = vld [vmem:[%s0 + $0x15c] sm:$0xf]
  %v103 = vld [vmem:[%s0 + $0x160] sm:$0xf]
  %v104 = vld [vmem:[%s0 + $0x164] sm:$0xf]
  %v105 = vld [vmem:[%s0 + $0x168] sm:$0xf]
  %v106 = vld [vmem:[%s0 + $0x16c] sm:$0xf]
  %v107 = vld [vmem:[%s0 + $0x170] sm:$0xf]
  %v108 = vld [vmem:[%s0 + $0x174] sm:$0xf]
  %v109 = vld [vmem:[%s0 + $0x178] sm:$0xf]
  %v110 = vld [vmem:[%s0 + $0x17c] sm:$0xf]
  %v111 = vld [vmem:[%s0 + $0x180] sm:$0xf]
  %v112 = vld [vmem:[%s0 + $0x184] sm:$0xf]
  %v113 = vld [vmem:[%s0 + $0x188] sm:$0xf]
  %v114 = vld [vmem:[%s0 + $0x18c] sm:$0xf]
  %v115 = vld [vmem:[%s0 + $0x190] sm:$0xf]
  %v116 = vld [vmem:[%s0 + $0x194] sm:$0xf]
  %v117 = vld [vmem:[%s0 + $0x198] sm:$0xf]
  %v118 = vld [vmem:[%s0 + $0x19c] sm:$0xf]
  %v119 = vld [vmem:[%s0 + $0x1a0] sm:$0xf]
  %v120 = vld [vmem:[%s0 + $0x1a4] sm:$0xf]
  %v121 = vld [vmem:[%s0 + $0x1a8] sm:$0xf]
  %v122 = vld [vmem:[%s0 + $0x1ac] sm:$0xf]
  %v123 = vld [vmem:[%s0 + $0x1b0] sm:$0xf]
  %v124 = vld [vmem:[%s0 + $0x1b4] sm:$0xf]
  %v125 = vld [vmem:[%s0 + $0x1b8] sm:$0xf]
  %v126 = vld [vmem:[%s0 + $0x1bc] sm:$0xf]
  %v127 = vld [vmem:[%s0 + $0x1c0] sm:$0xf]
  %v128 = vld [vmem:[%s0 + $0x1c4] sm:$0xf]
  %v129 = vld [vmem:[%s0 + $0x1c8] sm:$0xf]
  %v130 = vld [vmem:[%s0 + $0x1cc] sm:$0xf]
  %v131 = vld [vmem:[%s0 + $0x1d0] sm:$0xf]
  %v132 = vld [vmem:[%s0 + $0x1d4] sm:$0xf]
  %v133 = vld [vmem:[%s0 + $0x1d8] sm:$0xf]
  %v134 = vld [vmem:[%s0 + $0x1dc] sm:$0xf]
  %v135 = vld [vmem:[%s0 + $0x1e0] sm:$0xf]
  %v136 = vld [vmem:[%s0 + $0x1e4] sm:$0xf]
  %v137 = vld [vmem:[%s0 + $0x1e8] sm:$0xf]
  %v138 = vld [vmem:[%s0 + $0x1ec] sm:$0xf]
  %v139 = vld [vmem:[%s0 + $0x1f0] sm:$0xf]
  %v140 = vld [vmem:[%s0 + $0x1f4] sm:$0xf]
  %v141 = vld [vmem:[%s0 + $0x1f8] sm:$0xf]
  %v142 = vld [vmem:[%s0 + $0x1fc] sm:$0xf]
  %v143 = vld [vmem:[%s0 + $0x200] sm:$0xf]
  %v144 = vld [vmem:[%s0 + $0x204] sm:$0xf]
  %v145 = vld [vmem:[%s0 + $0x208] sm:$0xf]
  %v146 = vld [vmem:[%s0 + $0x20c] sm:$0xf]
  %v147 = vld [vmem:[%s0 + $0x210] sm:$0xf]
  %v148 = vld [vmem:[%s0 + $0x214] sm:$0xf]
  %v149 = vld [vmem:[%s0 + $0x218] sm:$0xf]
  %v150 = vld [vmem:[%s0 + $0x21c] sm:$0xf]
  %v151 = vld [vmem:[%s0 + $0x220] sm:$0xf]
  %v152 = vld [vmem:[%s0 + $0x224] sm:$0xf]
  %v153 = vld [vmem:[%s0 + $0x228] sm:$0xf]
  %v154 = vld [vmem:[%s0 + $0x22c] sm:$0xf]
  %v155 = vld [vmem:[%s0 + $0x230] sm:$0xf]
  %v156 = vld [vmem:[%s0 + $0x234] sm:$0xf]
  %v157 = vld [vmem:[%s0 + $0x238] sm:$0xf]
  %v158 = vld [vmem:[%s0 + $0x23c] sm:$0xf]
  %v159 = vld [vmem:[%s0 + $0x240] sm:$0xf]
  %v160 = vld [vmem:[%s0 + $0x244] sm:$0xf]
  %v161 = vld [vmem:[%s0 + $0x248] sm:$0xf]
  %v162 = vld [vmem:[%s0 + $0x24c] sm:$0xf]
  %v163 = vld [vmem:[%s0 + $0x250] sm:$0xf]
  %v164 = vld [vmem:[%s0 + $0x254] sm:$0xf]
  %v165 = vld [vmem:[%s0 + $0x258] sm:$0xf]
  %v166 = vld [vmem:[%s0 + $0x25c] sm:$0xf]
  %v167 = vld [vmem:[%s0 + $0x260] sm:$0xf]
  %v168 = vld [vmem:[%s0 + $0x264] sm:$0xf]
  %v169 = vld [vmem:[%s0 + $0x268] sm:$0xf]
  %v170 = vld [vmem:[%s0 + $0x26c] sm:$0xf]
  %v171 = vld [vmem:[%s0 + $0x270] sm:$0xf]
  %v172 = vld [vmem:[%s0 + $0x274] sm:$0xf]
  %v173 = vld [vmem:[%s0 + $0x278] sm:$0xf]
  %v174 = vld [vmem:[%s0 + $0x27c] sm:$0xf]
  %v175 = vld [vmem:[%s0 + $0x280] sm:$0xf]
  %v176 = vld [vmem:[%s0 + $0x284] sm:$0xf]
  %v177 = vld [vmem:[%s0 + $0x288] sm:$0xf]
  %v178 = vld [vmem:[%s0 + $0x28c] sm:$0xf]
  %v179 = vld [vmem:[%s0 + $0x290] sm:$0xf]
  %v180 = vld [vmem:[%s0 + $0x294] sm:$0xf]
  %v181 = vld [vmem:[%s0 + $0x298] sm:$0xf]
  %v182 = vld [vmem:[%s0 + $0x29c] sm:$0xf]
  %v183 = vld [vmem:[%s0 + $0x2a0] sm:$0xf]
  %v184 = vld [vmem:[%s0 + $0x2a4] sm:$0xf]
  %v185 = vld [vmem:[%s0 + $0x2a8] sm:$0xf]
  %v186 = vld [vmem:[%s0 + $0x2ac] sm:$0xf]
  %v187 = vld [vmem:[%s0 + $0x2b0] sm:$0xf]
  %v188 = vld [vmem:[%s0 + $0x2b4] sm:$0xf]
  %v189 = vld [vmem:[%s0 + $0x2b8] sm:$0xf]
  %v190 = vld [vmem:[%s0 + $0x2bc] sm:$0xf]
  %v191 = vld [vmem:[%s0 + $0x2c0] sm:$0xf]
  %v192 = vld [vmem:[%s0 + $0x2c4] sm:$0xf]
  %v193 = vld [vmem:[%s0 + $0x2c8] sm:$0xf]
  %v194 = vld [vmem:[%s0 + $0x2cc] sm:$0xf]
  %v195 = vld [vmem:[%s0 + $0x2d0] sm:$0xf]
  %v196 = vld [vmem:[%s0 + $0x2d4] sm:$0xf]
  %v197 = vld [vmem:[%s0 + $0x2d8] sm:$0xf]
  %v198 = vld [vmem:[%s0 + $0x2dc] sm:$0xf]
  %v199 = vld [vmem:[%s0 + $0x2e0] sm:$0xf]
  %v200 = vld [vmem:[%s0 + $0x2e4] sm:$0xf]
  %v201 = vld [vmem:[%s0 + $0x2e8] sm:$0xf]
  %v202 = vld [vmem:[%s0 + $0x2ec] sm:$0xf]
  %v203 = vld [vmem:[%s0 + $0x2f0] sm:$0xf]
  %v204 = vld [vmem:[%s0 + $0x2f4] sm:$0xf]
  %v205 = vld [vmem:[%s0 + $0x2f8] sm:$0xf]
  %v206 = vld [vmem:[%s0 + $0x2fc] sm:$0xf]
  %v207 = vld [vmem:[%s0 + $0x300] sm:$0xf]
  %v208 = vld [vmem:[%s0 + $0x304] sm:$0xf]
  %v209 = vld [vmem:[%s0 + $0x308] sm:$0xf]
  %v210 = vld [vmem:[%s0 + $0x30c] sm:$0xf]
  %v211 = vld [vmem:[%s1] sm:$0xf]
  %v212 = vld [vmem:[%s1 + $0x4] sm:$0xf]
  %v213 = vld [vmem:[%s1 + $0x8] sm:$0xf]
  %v214 = vld [vmem:[%s1 + $0xc] sm:$0x1]
  %v411 = vunpack.c.l.b16 %v15
  %v412 = vunpack.c.l.b16 %v16
  %v413 = vunpack.c.l.b16 %v17
  %v414 = vunpack.c.l.b16 %v18
  %v415 = vunpack.c.l.b16 %v19
  %v416 = vunpack.c.l.b16 %v20
  %v417 = vunpack.c.l.b16 %v21
  %v418 = vunpack.c.l.b16 %v22
  %v419 = vunpack.c.l.b16 %v23
  %v420 = vunpack.c.l.b16 %v24
  %v421 = vunpack.c.l.b16 %v25
  %v422 = vunpack.c.l.b16 %v26
  %v423 = vunpack.c.l.b16 %v27
  %v424 = vunpack.c.l.b16 %v28
  %v425 = vunpack.c.l.b16 %v29
  %v426 = vunpack.c.l.b16 %v30
  %v427 = vunpack.c.l.b16 %v31
  %v428 = vunpack.c.l.b16 %v32
  %v429 = vunpack.c.l.b16 %v33
  %v430 = vunpack.c.l.b16 %v34
  %v431 = vunpack.c.l.b16 %v35
  %v432 = vunpack.c.l.b16 %v36
  %v433 = vunpack.c.l.b16 %v37
  %v434 = vunpack.c.l.b16 %v38
  %v435 = vunpack.c.l.b16 %v39
  %v436 = vunpack.c.l.b16 %v40
  %v437 = vunpack.c.l.b16 %v41
  %v438 = vunpack.c.l.b16 %v42
  %v439 = vunpack.c.l.b16 %v43
  %v440 = vunpack.c.l.b16 %v44
  %v441 = vunpack.c.l.b16 %v45
  %v442 = vunpack.c.l.b16 %v46
  %v443 = vunpack.c.l.b16 %v47
  %v444 = vunpack.c.l.b16 %v48
  %v445 = vunpack.c.l.b16 %v49
  %v446 = vunpack.c.l.b16 %v50
  %v447 = vunpack.c.l.b16 %v51
  %v448 = vunpack.c.l.b16 %v52
  %v449 = vunpack.c.l.b16 %v53
  %v450 = vunpack.c.l.b16 %v54
  %v451 = vunpack.c.l.b16 %v55
  %v452 = vunpack.c.l.b16 %v56
  %v453 = vunpack.c.l.b16 %v57
  %v454 = vunpack.c.l.b16 %v58
  %v455 = vunpack.c.l.b16 %v59
  %v456 = vunpack.c.l.b16 %v60
  %v457 = vunpack.c.l.b16 %v61
  %v458 = vunpack.c.l.b16 %v62
  %v459 = vunpack.c.l.b16 %v63
  %v460 = vunpack.c.l.b16 %v64
  %v461 = vunpack.c.l.b16 %v65
  %v462 = vunpack.c.l.b16 %v66
  %v463 = vunpack.c.l.b16 %v67
  %v464 = vunpack.c.l.b16 %v68
  %v465 = vunpack.c.l.b16 %v69
  %v466 = vunpack.c.l.b16 %v70
  %v467 = vunpack.c.l.b16 %v71
  %v468 = vunpack.c.l.b16 %v72
  %v469 = vunpack.c.l.b16 %v73
  %v470 = vunpack.c.l.b16 %v74
  %v471 = vunpack.c.l.b16 %v75
  %v472 = vunpack.c.l.b16 %v76
  %v473 = vunpack.c.l.b16 %v77
  %v474 = vunpack.c.l.b16 %v78
  %v475 = vunpack.c.l.b16 %v79
  %v476 = vunpack.c.l.b16 %v80
  %v477 = vunpack.c.l.b16 %v81
  %v478 = vunpack.c.l.b16 %v82
  %v479 = vunpack.c.l.b16 %v83
  %v480 = vunpack.c.l.b16 %v84
  %v481 = vunpack.c.l.b16 %v85
  %v482 = vunpack.c.l.b16 %v86
  %v483 = vunpack.c.l.b16 %v87
  %v484 = vunpack.c.l.b16 %v88
  %v485 = vunpack.c.l.b16 %v89
  %v486 = vunpack.c.l.b16 %v90
  %v487 = vunpack.c.l.b16 %v91
  %v488 = vunpack.c.l.b16 %v92
  %v489 = vunpack.c.l.b16 %v93
  %v490 = vunpack.c.l.b16 %v94
  %v491 = vunpack.c.l.b16 %v95
  %v492 = vunpack.c.l.b16 %v96
  %v493 = vunpack.c.l.b16 %v97
  %v494 = vunpack.c.l.b16 %v98
  %v495 = vunpack.c.l.b16 %v99
  %v496 = vunpack.c.l.b16 %v100
  %v497 = vunpack.c.l.b16 %v101
  %v498 = vunpack.c.l.b16 %v102
  %v499 = vunpack.c.l.b16 %v103
  %v500 = vunpack.c.l.b16 %v104
  %v501 = vunpack.c.l.b16 %v105
  %v502 = vunpack.c.l.b16 %v106
  %v503 = vunpack.c.l.b16 %v107
  %v504 = vunpack.c.l.b16 %v108
  %v505 = vunpack.c.l.b16 %v109
  %v506 = vunpack.c.l.b16 %v110
  %v507 = vunpack.c.l.b16 %v111
  %v508 = vunpack.c.l.b16 %v112
  %v509 = vunpack.c.l.b16 %v113
  %v510 = vunpack.c.l.b16 %v114
  %v511 = vunpack.c.l.b16 %v115
  %v512 = vunpack.c.l.b16 %v116
  %v513 = vunpack.c.l.b16 %v117
  %v514 = vunpack.c.l.b16 %v118
  %v515 = vunpack.c.l.b16 %v119
  %v516 = vunpack.c.l.b16 %v120
  %v517 = vunpack.c.l.b16 %v121
  %v518 = vunpack.c.l.b16 %v122
  %v519 = vunpack.c.l.b16 %v123
  %v520 = vunpack.c.l.b16 %v124
  %v521 = vunpack.c.l.b16 %v125
  %v522 = vunpack.c.l.b16 %v126
  %v523 = vunpack.c.l.b16 %v127
  %v524 = vunpack.c.l.b16 %v128
  %v525 = vunpack.c.l.b16 %v129
  %v526 = vunpack.c.l.b16 %v130
  %v527 = vunpack.c.l.b16 %v131
  %v528 = vunpack.c.l.b16 %v132
  %v529 = vunpack.c.l.b16 %v133
  %v530 = vunpack.c.l.b16 %v134
  %v531 = vunpack.c.l.b16 %v135
  %v532 = vunpack.c.l.b16 %v136
  %v533 = vunpack.c.l.b16 %v137
  %v534 = vunpack.c.l.b16 %v138
  %v535 = vunpack.c.l.b16 %v139
  %v536 = vunpack.c.l.b16 %v140
  %v537 = vunpack.c.l.b16 %v141
  %v538 = vunpack.c.l.b16 %v142
  %v539 = vunpack.c.l.b16 %v143
  %v540 = vunpack.c.l.b16 %v144
  %v541 = vunpack.c.l.b16 %v145
  %v542 = vunpack.c.l.b16 %v146
  %v543 = vunpack.c.l.b16 %v147
  %v544 = vunpack.c.l.b16 %v148
  %v545 = vunpack.c.l.b16 %v149
  %v546 = vunpack.c.l.b16 %v150
  %v547 = vunpack.c.l.b16 %v151
  %v548 = vunpack.c.l.b16 %v152
  %v549 = vunpack.c.l.b16 %v153
  %v550 = vunpack.c.l.b16 %v154
  %v551 = vunpack.c.l.b16 %v155
  %v552 = vunpack.c.l.b16 %v156
  %v553 = vunpack.c.l.b16 %v157
  %v554 = vunpack.c.l.b16 %v158
  %v555 = vunpack.c.l.b16 %v159
  %v556 = vunpack.c.l.b16 %v160
  %v557 = vunpack.c.l.b16 %v161
  %v558 = vunpack.c.l.b16 %v162
  %v559 = vunpack.c.l.b16 %v163
  %v560 = vunpack.c.l.b16 %v164
  %v561 = vunpack.c.l.b16 %v165
  %v562 = vunpack.c.l.b16 %v166
  %v563 = vunpack.c.l.b16 %v167
  %v564 = vunpack.c.l.b16 %v168
  %v565 = vunpack.c.l.b16 %v169
  %v566 = vunpack.c.l.b16 %v170
  %v567 = vunpack.c.l.b16 %v171
  %v568 = vunpack.c.l.b16 %v172
  %v569 = vunpack.c.l.b16 %v173
  %v570 = vunpack.c.l.b16 %v174
  %v571 = vunpack.c.l.b16 %v175
  %v572 = vunpack.c.l.b16 %v176
  %v573 = vunpack.c.l.b16 %v177
  %v574 = vunpack.c.l.b16 %v178
  %v575 = vunpack.c.l.b16 %v179
  %v576 = vunpack.c.l.b16 %v180
  %v577 = vunpack.c.l.b16 %v181
  %v578 = vunpack.c.l.b16 %v182
  %v579 = vunpack.c.l.b16 %v183
  %v580 = vunpack.c.l.b16 %v184
  %v581 = vunpack.c.l.b16 %v185
  %v582 = vunpack.c.l.b16 %v186
  %v583 = vunpack.c.l.b16 %v187
  %v584 = vunpack.c.l.b16 %v188
  %v585 = vunpack.c.l.b16 %v189
  %v586 = vunpack.c.l.b16 %v190
  %v587 = vunpack.c.l.b16 %v191
  %v588 = vunpack.c.l.b16 %v192
  %v589 = vunpack.c.l.b16 %v193
  %v590 = vunpack.c.l.b16 %v194
  %v591 = vunpack.c.l.b16 %v195
  %v592 = vunpack.c.l.b16 %v196
  %v593 = vunpack.c.l.b16 %v197
  %v594 = vunpack.c.l.b16 %v198
  %v595 = vunpack.c.l.b16 %v199
  %v596 = vunpack.c.l.b16 %v200
  %v597 = vunpack.c.l.b16 %v201
  %v598 = vunpack.c.l.b16 %v202
  %v599 = vunpack.c.l.b16 %v203
  %v600 = vunpack.c.l.b16 %v204
  %v601 = vunpack.c.l.b16 %v205
  %v602 = vunpack.c.l.b16 %v206
  %v603 = vunpack.c.l.b16 %v207
  %v604 = vunpack.c.l.b16 %v208
  %v605 = vunpack.c.l.b16 %v209
  %v606 = vunpack.c.l.b16 %v210
  %v607 = vpack.c.b16 %v412, %v411
  %v608 = vpack.c.b16 %v414, %v413
  %v609 = vpack.c.b16 %v416, %v415
  %v610 = vpack.c.b16 %v418, %v417
  %v611 = vpack.c.b16 %v420, %v419
  %v612 = vpack.c.b16 %v422, %v421
  %v613 = vpack.c.b16 %v424, %v423
  %v614 = vpack.c.b16 %v426, %v425
  %v615 = vpack.c.b16 %v428, %v427
  %v616 = vpack.c.b16 %v430, %v429
  %v617 = vpack.c.b16 %v432, %v431
  %v618 = vpack.c.b16 %v434, %v433
  %v619 = vpack.c.b16 %v436, %v435
  %v620 = vpack.c.b16 %v438, %v437
  %v621 = vpack.c.b16 %v440, %v439
  %v622 = vpack.c.b16 %v442, %v441
  %v623 = vpack.c.b16 %v444, %v443
  %v624 = vpack.c.b16 %v446, %v445
  %v625 = vpack.c.b16 %v448, %v447
  %v626 = vpack.c.b16 %v450, %v449
  %v627 = vpack.c.b16 %v452, %v451
  %v628 = vpack.c.b16 %v454, %v453
  %v629 = vpack.c.b16 %v456, %v455
  %v630 = vpack.c.b16 %v458, %v457
  %v631 = vpack.c.b16 %v460, %v459
  %v632 = vpack.c.b16 %v462, %v461
  %v633 = vpack.c.b16 %v464, %v463
  %v634 = vpack.c.b16 %v466, %v465
  %v635 = vpack.c.b16 %v468, %v467
  %v636 = vpack.c.b16 %v470, %v469
  %v637 = vpack.c.b16 %v472, %v471
  %v638 = vpack.c.b16 %v474, %v473
  %v639 = vpack.c.b16 %v476, %v475
  %v640 = vpack.c.b16 %v478, %v477
  %v641 = vpack.c.b16 %v480, %v479
  %v642 = vpack.c.b16 %v482, %v481
  %v643 = vpack.c.b16 %v484, %v483
  %v644 = vpack.c.b16 %v486, %v485
  %v645 = vpack.c.b16 %v488, %v487
  %v646 = vpack.c.b16 %v490, %v489
  %v647 = vpack.c.b16 %v492, %v491
  %v648 = vpack.c.b16 %v494, %v493
  %v649 = vpack.c.b16 %v496, %v495
  %v650 = vpack.c.b16 %v498, %v497
  %v651 = vpack.c.b16 %v500, %v499
  %v652 = vpack.c.b16 %v502, %v501
  %v653 = vpack.c.b16 %v504, %v503
  %v654 = vpack.c.b16 %v506, %v505
  %v655 = vpack.c.b16 %v508, %v507
  %v656 = vpack.c.b16 %v510, %v509
  %v657 = vpack.c.b16 %v512, %v511
  %v658 = vpack.c.b16 %v514, %v513
  %v659 = vpack.c.b16 %v516, %v515
  %v660 = vpack.c.b16 %v518, %v517
  %v661 = vpack.c.b16 %v520, %v519
  %v662 = vpack.c.b16 %v522, %v521
  %v663 = vpack.c.b16 %v524, %v523
  %v664 = vpack.c.b16 %v526, %v525
  %v665 = vpack.c.b16 %v528, %v527
  %v666 = vpack.c.b16 %v530, %v529
  %v667 = vpack.c.b16 %v532, %v531
  %v668 = vpack.c.b16 %v534, %v533
  %v669 = vpack.c.b16 %v536, %v535
  %v670 = vpack.c.b16 %v538, %v537
  %v671 = vpack.c.b16 %v540, %v539
  %v672 = vpack.c.b16 %v542, %v541
  %v673 = vpack.c.b16 %v544, %v543
  %v674 = vpack.c.b16 %v546, %v545
  %v675 = vpack.c.b16 %v548, %v547
  %v676 = vpack.c.b16 %v550, %v549
  %v677 = vpack.c.b16 %v552, %v551
  %v678 = vpack.c.b16 %v554, %v553
  %v679 = vpack.c.b16 %v556, %v555
  %v680 = vpack.c.b16 %v558, %v557
  %v681 = vpack.c.b16 %v560, %v559
  %v682 = vpack.c.b16 %v562, %v561
  %v683 = vpack.c.b16 %v564, %v563
  %v684 = vpack.c.b16 %v566, %v565
  %v685 = vpack.c.b16 %v568, %v567
  %v686 = vpack.c.b16 %v570, %v569
  %v687 = vpack.c.b16 %v572, %v571
  %v688 = vpack.c.b16 %v574, %v573
  %v689 = vpack.c.b16 %v576, %v575
  %v690 = vpack.c.b16 %v578, %v577
  %v691 = vpack.c.b16 %v580, %v579
  %v692 = vpack.c.b16 %v582, %v581
  %v693 = vpack.c.b16 %v584, %v583
  %v694 = vpack.c.b16 %v586, %v585
  %v695 = vpack.c.b16 %v588, %v587
  %v696 = vpack.c.b16 %v590, %v589
  %v697 = vpack.c.b16 %v592, %v591
  %v698 = vpack.c.b16 %v594, %v593
  %v699 = vpack.c.b16 %v596, %v595
  %v700 = vpack.c.b16 %v598, %v597
  %v701 = vpack.c.b16 %v600, %v599
  %v702 = vpack.c.b16 %v602, %v601
  %v703 = vpack.c.b16 %v604, %v603
  %v704 = vpack.c.b16 %v606, %v605
  %v709 = vunpack.c.l.b16 %v211
  %v710 = vunpack.c.l.b16 %v212
  %v711 = vunpack.c.l.b16 %v213
  %v712 = vunpack.c.l.b16 %v214
  %v713 = vpack.c.b16 %v710, %v709
  %v714 = vpack.c.b16 %v712, %v711
  %vm716 = vcmask 203776
  %v718 = vsel %vm716, %v607, 0
  %v721 = vsel %vm716, %v608, 0
  %v724 = vsel %vm716, %v609, 0
  %v727 = vsel %vm716, %v610, 0
  %v730 = vsel %vm716, %v611, 0
  %v733 = vsel %vm716, %v612, 0
  %v736 = vsel %vm716, %v613, 0
  %v739 = vsel %vm716, %v614, 0
  %v742 = vsel %vm716, %v615, 0
  %v745 = vsel %vm716, %v616, 0
  %v748 = vsel %vm716, %v617, 0
  %v751 = vsel %vm716, %v618, 0
  %v754 = vsel %vm716, %v619, 0
  %v757 = vsel %vm716, %v620, 0
  %v760 = vsel %vm716, %v621, 0
  %v763 = vsel %vm716, %v622, 0
  %v766 = vsel %vm716, %v623, 0
  %v769 = vsel %vm716, %v624, 0
  %v772 = vsel %vm716, %v625, 0
  %v775 = vsel %vm716, %v626, 0
  %v778 = vsel %vm716, %v627, 0
  %v781 = vsel %vm716, %v628, 0
  %v784 = vsel %vm716, %v629, 0
  %v787 = vsel %vm716, %v630, 0
  %v790 = vsel %vm716, %v631, 0
  %v793 = vsel %vm716, %v632, 0
  %v796 = vsel %vm716, %v633, 0
  %v799 = vsel %vm716, %v634, 0
  %v802 = vsel %vm716, %v635, 0
  %v805 = vsel %vm716, %v636, 0
  %v808 = vsel %vm716, %v637, 0
  %v811 = vsel %vm716, %v638, 0
  %v814 = vsel %vm716, %v639, 0
  %v817 = vsel %vm716, %v640, 0
  %v820 = vsel %vm716, %v641, 0
  %v823 = vsel %vm716, %v642, 0
  %v826 = vsel %vm716, %v643, 0
  %v829 = vsel %vm716, %v644, 0
  %v832 = vsel %vm716, %v645, 0
  %v835 = vsel %vm716, %v646, 0
  %v838 = vsel %vm716, %v647, 0
  %v841 = vsel %vm716, %v648, 0
  %v844 = vsel %vm716, %v649, 0
  %v847 = vsel %vm716, %v650, 0
  %v850 = vsel %vm716, %v651, 0
  %v853 = vsel %vm716, %v652, 0
  %v856 = vsel %vm716, %v653, 0
  %v859 = vsel %vm716, %v654, 0
  %v862 = vsel %vm716, %v655, 0
  %v865 = vsel %vm716, %v656, 0
  %v868 = vsel %vm716, %v657, 0
  %v871 = vsel %vm716, %v658, 0
  %v874 = vsel %vm716, %v659, 0
  %v877 = vsel %vm716, %v660, 0
  %v880 = vsel %vm716, %v661, 0
  %v883 = vsel %vm716, %v662, 0
  %v886 = vsel %vm716, %v663, 0
  %v889 = vsel %vm716, %v664, 0
  %v892 = vsel %vm716, %v665, 0
  %v895 = vsel %vm716, %v666, 0
  %v898 = vsel %vm716, %v667, 0
  %v901 = vsel %vm716, %v668, 0
  %v904 = vsel %vm716, %v669, 0
  %v907 = vsel %vm716, %v670, 0
  %v910 = vsel %vm716, %v671, 0
  %v913 = vsel %vm716, %v672, 0
  %v916 = vsel %vm716, %v673, 0
  %v919 = vsel %vm716, %v674, 0
  %v922 = vsel %vm716, %v675, 0
  %v925 = vsel %vm716, %v676, 0
  %v928 = vsel %vm716, %v677, 0
  %v931 = vsel %vm716, %v678, 0
  %v934 = vsel %vm716, %v679, 0
  %v937 = vsel %vm716, %v680, 0
  %v940 = vsel %vm716, %v681, 0
  %v943 = vsel %vm716, %v682, 0
  %v946 = vsel %vm716, %v683, 0
  %v949 = vsel %vm716, %v684, 0
  %v952 = vsel %vm716, %v685, 0
  %v955 = vsel %vm716, %v686, 0
  %v958 = vsel %vm716, %v687, 0
  %v961 = vsel %vm716, %v688, 0
  %v964 = vsel %vm716, %v689, 0
  %v967 = vsel %vm716, %v690, 0
  %v970 = vsel %vm716, %v691, 0
  %v973 = vsel %vm716, %v692, 0
  %v976 = vsel %vm716, %v693, 0
  %v979 = vsel %vm716, %v694, 0
  %v982 = vsel %vm716, %v695, 0
  %v985 = vsel %vm716, %v696, 0
  %v988 = vsel %vm716, %v697, 0
  %v991 = vsel %vm716, %v698, 0
  %v994 = vsel %vm716, %v699, 0
  %v997 = vsel %vm716, %v700, 0
  %v1000 = vsel %vm716, %v701, 0
  %v1003 = vsel %vm716, %v702, 0
  %v1006 = vsel %vm716, %v703, 0
  %v1009 = vsel %vm716, %v704, 0
  %vm1011 = vcmask 1043456
  %vm1012 = vcmask 1044480
  %v1013 = vsel %vm1011, 4294967295, 65535
  %v1014 = vsel %vm1012, %v1013, 0
  %v1016 = vand.u32 %v714, %v1014
  %1018 = vmatprep.subr.bf16.mxu0 0
  %1019 = vmatpush1.bf16.msra.mxu0 %v713
  %1020 = vmatprep.subr.bf16.mxu0 0
  %1021 = vmatpush1.bf16.msra.mxu0 %v1016
  %1022 = vmatprep.subr.bf16.mxu0 0
  %1023 = vmatpush1.bf16.msra.mxu0 0
  %1024 = vmatprep.subr.bf16.mxu0 0
  %1025 = vmatpush1.bf16.msra.mxu0 0
  %1026 = vmatprep.subr.bf16.mxu0 0
  %1027 = vmatpush1.bf16.msra.mxu0 0
  %1028 = vmatprep.subr.bf16.mxu0 0
  %1029 = vmatpush1.bf16.msra.mxu0 0
  %1030 = vmatprep.subr.bf16.mxu0 0
  %1031 = vmatpush1.bf16.msra.mxu0 0
  %1032 = vmatprep.subr.bf16.mxu0 0
  %1033 = vmatpush1.bf16.msra.mxu0 0
  %1034 = vmatprep.subr.bf16.mxu0 0
  %1035 = vmatpush1.bf16.msra.mxu0 0
  %1036 = vmatprep.subr.bf16.mxu0 0
  %1037 = vmatpush1.bf16.msra.mxu0 0
  %1038 = vmatprep.subr.bf16.mxu0 0
  %1039 = vmatpush1.bf16.msra.mxu0 0
  %1040 = vmatprep.subr.bf16.mxu0 0
  %1041 = vmatpush1.bf16.msra.mxu0 0
  %1042 = vmatprep.subr.bf16.mxu0 0
  %1043 = vmatpush1.bf16.msra.mxu0 0
  %1044 = vmatprep.subr.bf16.mxu0 0
  %1045 = vmatpush1.bf16.msra.mxu0 0
  %1046 = vmatprep.subr.bf16.mxu0 0
  %1047 = vmatpush1.bf16.msra.mxu0 0
  %1048 = vmatprep.subr.bf16.mxu0 0
  %1049 = vmatpush1.bf16.msra.mxu0 0
  %1050 = vmatprep.mubr.bf16.mxu0 0
  %1051 = vmatmul.mubr.bf16.gmra.mrb[0].mxu0 %v718
  %v1052 = vpop.f32.mrb[0].mxu0
  %v1053 = vadd.f32 0.0, %v1052
  %v1054 = vpop.f32.mrb[0].mxu0
  %v1055 = vpop.f32.mrb[0].mxu0
  %v1056 = vadd.f32 0.0, %v1055
  %v1057 = vpop.f32.mrb[0].mxu0
  %1058 = vmatprep.mubr.bf16.mxu0 0
  %1059 = vmatmul.mubr.bf16.gmra.mrb[0].mxu0 %v721
  %v1060 = vpop.f32.mrb[0].mxu0
  %v1061 = vadd.f32 0.0, %v1060
  %v1062 = vpop.f32.mrb[0].mxu0
  %v1063 = vpop.f32.mrb[0].mxu0
  %v1064 = vadd.f32 0.0, %v1063
  %v1065 = vpop.f32.mrb[0].mxu0
  %1066 = vmatprep.mubr.bf16.mxu0 0
  %1067 = vmatmul.mubr.bf16.gmra.mrb[0].mxu0 %v724
  %v1068 = vpop.f32.mrb[0].mxu0
  %v1069 = vadd.f32 0.0, %v1068
  %v1070 = vpop.f32.mrb[0].mxu0
  %v1071 = vpop.f32.mrb[0].mxu0
  %v1072 = vadd.f32 0.0, %v1071
  %v1073 = vpop.f32.mrb[0].mxu0
  %1074 = vmatprep.mubr.bf16.mxu0 0
  %1075 = vmatmul.mubr.bf16.gmra.mrb[0].mxu0 %v727
  %v1076 = vpop.f32.mrb[0].mxu0
  %v1077 = vadd.f32 0.0, %v1076
  %v1078 = vpop.f32.mrb[0].mxu0
  %v1079 = vpop.f32.mrb[0].mxu0
  %v1080 = vadd.f32 0.0, %v1079
  %v1081 = vpop.f32.mrb[0].mxu0
  %1082 = vmatprep.mubr.bf16.mxu0 0
  %1083 = vmatmul.mubr.bf16.gmra.mrb[0].mxu0 %v730
  %v1084 = vpop.f32.mrb[0].mxu0
  %v1085 = vadd.f32 0.0, %v1084
  %v1086 = vpop.f32.mrb[0].mxu0
  %v1087 = vpop.f32.mrb[0].mxu0
  %v1088 = vadd.f32 0.0, %v1087
  %v1089 = vpop.f32.mrb[0].mxu0
  %1090 = vmatprep.mubr.bf16.mxu0 0
  %1091 = vmatmul.mubr.bf16.gmra.mrb[0].mxu0 %v733
  %v1092 = vpop.f32.mrb[0].mxu0
  %v1093 = vadd.f32 0.0, %v1092
  %v1094 = vpop.f32.mrb[0].mxu0
  %v1095 = vpop.f32.mrb[0].mxu0
  %v1096 = vadd.f32 0.0, %v1095
  %v1097 = vpop.f32.mrb[0].mxu0
  %1098 = vmatprep.mubr.bf16.mxu0 0
  %1099 = vmatmul.mubr.bf16.gmra.mrb[0].mxu0 %v736
  %v1100 = vpop.f32.mrb[0].mxu0
  %v1101 = vadd.f32 0.0, %v1100
  %v1102 = vpop.f32.mrb[0].mxu0
  %v1103 = vpop.f32.mrb[0].mxu0
  %v1104 = vadd.f32 0.0, %v1103
  %v1105 = vpop.f32.mrb[0].mxu0
  %1106 = vmatprep.mubr.bf16.mxu0 0
  %1107 = vmatmul.mubr.bf16.gmra.mrb[0].mxu0 %v739
  %v1108 = vpop.f32.mrb[0].mxu0
  %v1109 = vadd.f32 0.0, %v1108
  %v1110 = vpop.f32.mrb[0].mxu0
  %v1111 = vpop.f32.mrb[0].mxu0
  %v1112 = vadd.f32 0.0, %v1111
  %v1113 = vpop.f32.mrb[0].mxu0
  %1114 = vmatprep.mubr.bf16.mxu0 0
  %1115 = vmatmul.mubr.bf16.gmra.mrb[0].mxu0 %v742
  %v1116 = vpop.f32.mrb[0].mxu0
  %v1117 = vadd.f32 0.0, %v1116
  %v1118 = vpop.f32.mrb[0].mxu0
  %v1119 = vpop.f32.mrb[0].mxu0
  %v1120 = vadd.f32 0.0, %v1119
  %v1121 = vpop.f32.mrb[0].mxu0
  %1122 = vmatprep.mubr.bf16.mxu0 0
  %1123 = vmatmul.mubr.bf16.gmra.mrb[0].mxu0 %v745
  %v1124 = vpop.f32.mrb[0].mxu0
  %v1125 = vadd.f32 0.0, %v1124
  %v1126 = vpop.f32.mrb[0].mxu0
  %v1127 = vpop.f32.mrb[0].mxu0
  %v1128 = vadd.f32 0.0, %v1127
  %v1129 = vpop.f32.mrb[0].mxu0
  %1130 = vmatprep.mubr.bf16.mxu0 0
  %1131 = vmatmul.mubr.bf16.gmra.mrb[0].mxu0 %v748
  %v1132 = vpop.f32.mrb[0].mxu0
  %v1133 = vadd.f32 0.0, %v1132
  %v1134 = vpop.f32.mrb[0].mxu0
  %v1135 = vpop.f32.mrb[0].mxu0
  %v1136 = vadd.f32 0.0, %v1135
  %v1137 = vpop.f32.mrb[0].mxu0
  %1138 = vmatprep.mubr.bf16.mxu0 0
  %1139 = vmatmul.mubr.bf16.gmra.mrb[0].mxu0 %v751
  %v1140 = vpop.f32.mrb[0].mxu0
  %v1141 = vadd.f32 0.0, %v1140
  %v1142 = vpop.f32.mrb[0].mxu0
  %v1143 = vpop.f32.mrb[0].mxu0
  %v1144 = vadd.f32 0.0, %v1143
  %v1145 = vpop.f32.mrb[0].mxu0
  %1146 = vmatprep.mubr.bf16.mxu0 0
  %1147 = vmatmul.mubr.bf16.gmra.mrb[0].mxu0 %v754
  %v1148 = vpop.f32.mrb[0].mxu0
  %v1149 = vadd.f32 0.0, %v1148
  %v1150 = vpop.f32.mrb[0].mxu0
  %v1151 = vpop.f32.mrb[0].mxu0
  %v1152 = vadd.f32 0.0, %v1151
  %v1153 = vpop.f32.mrb[0].mxu0
  %1154 = vmatprep.mubr.bf16.mxu0 0
  %1155 = vmatmul.mubr.bf16.gmra.mrb[0].mxu0 %v757
  %v1156 = vpop.f32.mrb[0].mxu0
  %v1157 = vadd.f32 0.0, %v1156
  %v1158 = vpop.f32.mrb[0].mxu0
  %v1159 = vpop.f32.mrb[0].mxu0
  %v1160 = vadd.f32 0.0, %v1159
  %v1161 = vpop.f32.mrb[0].mxu0
  %1162 = vmatprep.mubr.bf16.mxu0 0
  %1163 = vmatmul.mubr.bf16.gmra.mrb[0].mxu0 %v760
  %v1164 = vpop.f32.mrb[0].mxu0
  %v1165 = vadd.f32 0.0, %v1164
  %v1166 = vpop.f32.mrb[0].mxu0
  %v1167 = vpop.f32.mrb[0].mxu0
  %v1168 = vadd.f32 0.0, %v1167
  %v1169 = vpop.f32.mrb[0].mxu0
  %1170 = vmatprep.mubr.bf16.mxu0 0
  %1171 = vmatmul.mubr.bf16.gmra.mrb[0].mxu0 %v763
  %v1172 = vpop.f32.mrb[0].mxu0
  %v1173 = vadd.f32 0.0, %v1172
  %v1174 = vpop.f32.mrb[0].mxu0
  %v1175 = vpop.f32.mrb[0].mxu0
  %v1176 = vadd.f32 0.0, %v1175
  %v1177 = vpop.f32.mrb[0].mxu0
  %1178 = vmatprep.mubr.bf16.mxu0 0
  %1179 = vmatmul.mubr.bf16.gmra.mrb[0].mxu0 %v766
  %v1180 = vpop.f32.mrb[0].mxu0
  %v1181 = vadd.f32 0.0, %v1180
  %v1182 = vpop.f32.mrb[0].mxu0
  %v1183 = vpop.f32.mrb[0].mxu0
  %v1184 = vadd.f32 0.0, %v1183
  %v1185 = vpop.f32.mrb[0].mxu0
  %1186 = vmatprep.mubr.bf16.mxu0 0
  %1187 = vmatmul.mubr.bf16.gmra.mrb[0].mxu0 %v769
  %v1188 = vpop.f32.mrb[0].mxu0
  %v1189 = vadd.f32 0.0, %v1188
  %v1190 = vpop.f32.mrb[0].mxu0
  %v1191 = vpop.f32.mrb[0].mxu0
  %v1192 = vadd.f32 0.0, %v1191
  %v1193 = vpop.f32.mrb[0].mxu0
  %1194 = vmatprep.mubr.bf16.mxu0 0
  %1195 = vmatmul.mubr.bf16.gmra.mrb[0].mxu0 %v772
  %v1196 = vpop.f32.mrb[0].mxu0
  %v1197 = vadd.f32 0.0, %v1196
  %v1198 = vpop.f32.mrb[0].mxu0
  %v1199 = vpop.f32.mrb[0].mxu0
  %v1200 = vadd.f32 0.0, %v1199
  %v1201 = vpop.f32.mrb[0].mxu0
  %1202 = vmatprep.mubr.bf16.mxu0 0
  %1203 = vmatmul.mubr.bf16.gmra.mrb[0].mxu0 %v775
  %v1204 = vpop.f32.mrb[0].mxu0
  %v1205 = vadd.f32 0.0, %v1204
  %v1206 = vpop.f32.mrb[0].mxu0
  %v1207 = vpop.f32.mrb[0].mxu0
  %v1208 = vadd.f32 0.0, %v1207
  %v1209 = vpop.f32.mrb[0].mxu0
  %1210 = vmatprep.mubr.bf16.mxu0 0
  %1211 = vmatmul.mubr.bf16.gmra.mrb[0].mxu0 %v778
  %v1212 = vpop.f32.mrb[0].mxu0
  %v1213 = vadd.f32 0.0, %v1212
  %v1214 = vpop.f32.mrb[0].mxu0
  %v1215 = vpop.f32.mrb[0].mxu0
  %v1216 = vadd.f32 0.0, %v1215
  %v1217 = vpop.f32.mrb[0].mxu0
  %1218 = vmatprep.mubr.bf16.mxu0 0
  %1219 = vmatmul.mubr.bf16.gmra.mrb[0].mxu0 %v781
  %v1220 = vpop.f32.mrb[0].mxu0
  %v1221 = vadd.f32 0.0, %v1220
  %v1222 = vpop.f32.mrb[0].mxu0
  %v1223 = vpop.f32.mrb[0].mxu0
  %v1224 = vadd.f32 0.0, %v1223
  %v1225 = vpop.f32.mrb[0].mxu0
  %1226 = vmatprep.mubr.bf16.mxu0 0
  %1227 = vmatmul.mubr.bf16.gmra.mrb[0].mxu0 %v784
  %v1228 = vpop.f32.mrb[0].mxu0
  %v1229 = vadd.f32 0.0, %v1228
  %v1230 = vpop.f32.mrb[0].mxu0
  %v1231 = vpop.f32.mrb[0].mxu0
  %v1232 = vadd.f32 0.0, %v1231
  %v1233 = vpop.f32.mrb[0].mxu0
  %1234 = vmatprep.mubr.bf16.mxu0 0
  %1235 = vmatmul.mubr.bf16.gmra.mrb[0].mxu0 %v787
  %v1236 = vpop.f32.mrb[0].mxu0
  %v1237 = vadd.f32 0.0, %v1236
  %v1238 = vpop.f32.mrb[0].mxu0
  %v1239 = vpop.f32.mrb[0].mxu0
  %v1240 = vadd.f32 0.0, %v1239
  %v1241 = vpop.f32.mrb[0].mxu0
  %1242 = vmatprep.mubr.bf16.mxu0 0
  %1243 = vmatmul.mubr.bf16.gmra.mrb[0].mxu0 %v790
  %v1244 = vpop.f32.mrb[0].mxu0
  %v1245 = vadd.f32 0.0, %v1244
  %v1246 = vpop.f32.mrb[0].mxu0
  %v1247 = vpop.f32.mrb[0].mxu0
  %v1248 = vadd.f32 0.0, %v1247
  %v1249 = vpop.f32.mrb[0].mxu0
  %1250 = vmatprep.mubr.bf16.mxu0 0
  %1251 = vmatmul.mubr.bf16.gmra.mrb[0].mxu0 %v793
  %v1252 = vpop.f32.mrb[0].mxu0
  %v1253 = vadd.f32 0.0, %v1252
  %v1254 = vpop.f32.mrb[0].mxu0
  %v1255 = vpop.f32.mrb[0].mxu0
  %v1256 = vadd.f32 0.0, %v1255
  %v1257 = vpop.f32.mrb[0].mxu0
  %1258 = vmatprep.mubr.bf16.mxu0 0
  %1259 = vmatmul.mubr.bf16.gmra.mrb[0].mxu0 %v796
  %v1260 = vpop.f32.mrb[0].mxu0
  %v1261 = vadd.f32 0.0, %v1260
  %v1262 = vpop.f32.mrb[0].mxu0
  %v1263 = vpop.f32.mrb[0].mxu0
  %v1264 = vadd.f32 0.0, %v1263
  %v1265 = vpop.f32.mrb[0].mxu0
  %1266 = vmatprep.mubr.bf16.mxu0 0
  %1267 = vmatmul.mubr.bf16.gmra.mrb[0].mxu0 %v799
  %v1268 = vpop.f32.mrb[0].mxu0
  %v1269 = vadd.f32 0.0, %v1268
  %v1270 = vpop.f32.mrb[0].mxu0
  %v1271 = vpop.f32.mrb[0].mxu0
  %v1272 = vadd.f32 0.0, %v1271
  %v1273 = vpop.f32.mrb[0].mxu0
  %1274 = vmatprep.mubr.bf16.mxu0 0
  %1275 = vmatmul.mubr.bf16.gmra.mrb[0].mxu0 %v802
  %v1276 = vpop.f32.mrb[0].mxu0
  %v1277 = vadd.f32 0.0, %v1276
  %v1278 = vpop.f32.mrb[0].mxu0
  %v1279 = vpop.f32.mrb[0].mxu0
  %v1280 = vadd.f32 0.0, %v1279
  %v1281 = vpop.f32.mrb[0].mxu0
  %1282 = vmatprep.mubr.bf16.mxu0 0
  %1283 = vmatmul.mubr.bf16.gmra.mrb[0].mxu0 %v805
  %v1284 = vpop.f32.mrb[0].mxu0
  %v1285 = vadd.f32 0.0, %v1284
  %v1286 = vpop.f32.mrb[0].mxu0
  %v1287 = vpop.f32.mrb[0].mxu0
  %v1288 = vadd.f32 0.0, %v1287
  %v1289 = vpop.f32.mrb[0].mxu0
  %1290 = vmatprep.mubr.bf16.mxu0 0
  %1291 = vmatmul.mubr.bf16.gmra.mrb[0].mxu0 %v808
  %v1292 = vpop.f32.mrb[0].mxu0
  %v1293 = vadd.f32 0.0, %v1292
  %v1294 = vpop.f32.mrb[0].mxu0
  %v1295 = vpop.f32.mrb[0].mxu0
  %v1296 = vadd.f32 0.0, %v1295
  %v1297 = vpop.f32.mrb[0].mxu0
  %1298 = vmatprep.mubr.bf16.mxu0 0
  %1299 = vmatmul.mubr.bf16.gmra.mrb[0].mxu0 %v811
  %v1300 = vpop.f32.mrb[0].mxu0
  %v1301 = vadd.f32 0.0, %v1300
  %v1302 = vpop.f32.mrb[0].mxu0
  %v1303 = vpop.f32.mrb[0].mxu0
  %v1304 = vadd.f32 0.0, %v1303
  %v1305 = vpop.f32.mrb[0].mxu0
  %1306 = vmatprep.mubr.bf16.mxu0 0
  %1307 = vmatmul.mubr.bf16.gmra.mrb[0].mxu0 %v814
  %v1308 = vpop.f32.mrb[0].mxu0
  %v1309 = vadd.f32 0.0, %v1308
  %v1310 = vpop.f32.mrb[0].mxu0
  %v1311 = vpop.f32.mrb[0].mxu0
  %v1312 = vadd.f32 0.0, %v1311
  %v1313 = vpop.f32.mrb[0].mxu0
  %1314 = vmatprep.mubr.bf16.mxu0 0
  %1315 = vmatmul.mubr.bf16.gmra.mrb[0].mxu0 %v817
  %v1316 = vpop.f32.mrb[0].mxu0
  %v1317 = vadd.f32 0.0, %v1316
  %v1318 = vpop.f32.mrb[0].mxu0
  %v1319 = vpop.f32.mrb[0].mxu0
  %v1320 = vadd.f32 0.0, %v1319
  %v1321 = vpop.f32.mrb[0].mxu0
  %1322 = vmatprep.mubr.bf16.mxu0 0
  %1323 = vmatmul.mubr.bf16.gmra.mrb[0].mxu0 %v820
  %v1324 = vpop.f32.mrb[0].mxu0
  %v1325 = vadd.f32 0.0, %v1324
  %v1326 = vpop.f32.mrb[0].mxu0
  %v1327 = vpop.f32.mrb[0].mxu0
  %v1328 = vadd.f32 0.0, %v1327
  %v1329 = vpop.f32.mrb[0].mxu0
  %1330 = vmatprep.mubr.bf16.mxu0 0
  %1331 = vmatmul.mubr.bf16.gmra.mrb[0].mxu0 %v823
  %v1332 = vpop.f32.mrb[0].mxu0
  %v1333 = vadd.f32 0.0, %v1332
  %v1334 = vpop.f32.mrb[0].mxu0
  %v1335 = vpop.f32.mrb[0].mxu0
  %v1336 = vadd.f32 0.0, %v1335
  %v1337 = vpop.f32.mrb[0].mxu0
  %1338 = vmatprep.mubr.bf16.mxu0 0
  %1339 = vmatmul.mubr.bf16.gmra.mrb[0].mxu0 %v826
  %v1340 = vpop.f32.mrb[0].mxu0
  %v1341 = vadd.f32 0.0, %v1340
  %v1342 = vpop.f32.mrb[0].mxu0
  %v1343 = vpop.f32.mrb[0].mxu0
  %v1344 = vadd.f32 0.0, %v1343
  %v1345 = vpop.f32.mrb[0].mxu0
  %1346 = vmatprep.mubr.bf16.mxu0 0
  %1347 = vmatmul.mubr.bf16.gmra.mrb[0].mxu0 %v829
  %v1348 = vpop.f32.mrb[0].mxu0
  %v1349 = vadd.f32 0.0, %v1348
  %v1350 = vpop.f32.mrb[0].mxu0
  %v1351 = vpop.f32.mrb[0].mxu0
  %v1352 = vadd.f32 0.0, %v1351
  %v1353 = vpop.f32.mrb[0].mxu0
  %1354 = vmatprep.mubr.bf16.mxu0 0
  %1355 = vmatmul.mubr.bf16.gmra.mrb[0].mxu0 %v832
  %v1356 = vpop.f32.mrb[0].mxu0
  %v1357 = vadd.f32 0.0, %v1356
  %v1358 = vpop.f32.mrb[0].mxu0
  %v1359 = vpop.f32.mrb[0].mxu0
  %v1360 = vadd.f32 0.0, %v1359
  %v1361 = vpop.f32.mrb[0].mxu0
  %1362 = vmatprep.mubr.bf16.mxu0 0
  %1363 = vmatmul.mubr.bf16.gmra.mrb[0].mxu0 %v835
  %v1364 = vpop.f32.mrb[0].mxu0
  %v1365 = vadd.f32 0.0, %v1364
  %v1366 = vpop.f32.mrb[0].mxu0
  %v1367 = vpop.f32.mrb[0].mxu0
  %v1368 = vadd.f32 0.0, %v1367
  %v1369 = vpop.f32.mrb[0].mxu0
  %1370 = vmatprep.mubr.bf16.mxu0 0
  %1371 = vmatmul.mubr.bf16.gmra.mrb[0].mxu0 %v838
  %v1372 = vpop.f32.mrb[0].mxu0
  %v1373 = vadd.f32 0.0, %v1372
  %v1374 = vpop.f32.mrb[0].mxu0
  %v1375 = vpop.f32.mrb[0].mxu0
  %v1376 = vadd.f32 0.0, %v1375
  %v1377 = vpop.f32.mrb[0].mxu0
  %1378 = vmatprep.mubr.bf16.mxu0 0
  %1379 = vmatmul.mubr.bf16.gmra.mrb[0].mxu0 %v841
  %v1380 = vpop.f32.mrb[0].mxu0
  %v1381 = vadd.f32 0.0, %v1380
  %v1382 = vpop.f32.mrb[0].mxu0
  %v1383 = vpop.f32.mrb[0].mxu0
  %v1384 = vadd.f32 0.0, %v1383
  %v1385 = vpop.f32.mrb[0].mxu0
  %1386 = vmatprep.mubr.bf16.mxu0 0
  %1387 = vmatmul.mubr.bf16.gmra.mrb[0].mxu0 %v844
  %v1388 = vpop.f32.mrb[0].mxu0
  %v1389 = vadd.f32 0.0, %v1388
  %v1390 = vpop.f32.mrb[0].mxu0
  %v1391 = vpop.f32.mrb[0].mxu0
  %v1392 = vadd.f32 0.0, %v1391
  %v1393 = vpop.f32.mrb[0].mxu0
  %1394 = vmatprep.mubr.bf16.mxu0 0
  %1395 = vmatmul.mubr.bf16.gmra.mrb[0].mxu0 %v847
  %v1396 = vpop.f32.mrb[0].mxu0
  %v1397 = vadd.f32 0.0, %v1396
  %v1398 = vpop.f32.mrb[0].mxu0
  %v1399 = vpop.f32.mrb[0].mxu0
  %v1400 = vadd.f32 0.0, %v1399
  %v1401 = vpop.f32.mrb[0].mxu0
  %1402 = vmatprep.mubr.bf16.mxu0 0
  %1403 = vmatmul.mubr.bf16.gmra.mrb[0].mxu0 %v850
  %v1404 = vpop.f32.mrb[0].mxu0
  %v1405 = vadd.f32 0.0, %v1404
  %v1406 = vpop.f32.mrb[0].mxu0
  %v1407 = vpop.f32.mrb[0].mxu0
  %v1408 = vadd.f32 0.0, %v1407
  %v1409 = vpop.f32.mrb[0].mxu0
  %1410 = vmatprep.mubr.bf16.mxu0 0
  %1411 = vmatmul.mubr.bf16.gmra.mrb[0].mxu0 %v853
  %v1412 = vpop.f32.mrb[0].mxu0
  %v1413 = vadd.f32 0.0, %v1412
  %v1414 = vpop.f32.mrb[0].mxu0
  %v1415 = vpop.f32.mrb[0].mxu0
  %v1416 = vadd.f32 0.0, %v1415
  %v1417 = vpop.f32.mrb[0].mxu0
  %1418 = vmatprep.mubr.bf16.mxu0 0
  %1419 = vmatmul.mubr.bf16.gmra.mrb[0].mxu0 %v856
  %v1420 = vpop.f32.mrb[0].mxu0
  %v1421 = vadd.f32 0.0, %v1420
  %v1422 = vpop.f32.mrb[0].mxu0
  %v1423 = vpop.f32.mrb[0].mxu0
  %v1424 = vadd.f32 0.0, %v1423
  %v1425 = vpop.f32.mrb[0].mxu0
  %1426 = vmatprep.mubr.bf16.mxu0 0
  %1427 = vmatmul.mubr.bf16.gmra.mrb[0].mxu0 %v859
  %v1428 = vpop.f32.mrb[0].mxu0
  %v1429 = vadd.f32 0.0, %v1428
  %v1430 = vpop.f32.mrb[0].mxu0
  %v1431 = vpop.f32.mrb[0].mxu0
  %v1432 = vadd.f32 0.0, %v1431
  %v1433 = vpop.f32.mrb[0].mxu0
  %1434 = vmatprep.mubr.bf16.mxu0 0
  %1435 = vmatmul.mubr.bf16.gmra.mrb[0].mxu0 %v862
  %v1436 = vpop.f32.mrb[0].mxu0
  %v1437 = vadd.f32 0.0, %v1436
  %v1438 = vpop.f32.mrb[0].mxu0
  %v1439 = vpop.f32.mrb[0].mxu0
  %v1440 = vadd.f32 0.0, %v1439
  %v1441 = vpop.f32.mrb[0].mxu0
  %1442 = vmatprep.mubr.bf16.mxu0 0
  %1443 = vmatmul.mubr.bf16.gmra.mrb[0].mxu0 %v865
  %v1444 = vpop.f32.mrb[0].mxu0
  %v1445 = vadd.f32 0.0, %v1444
  %v1446 = vpop.f32.mrb[0].mxu0
  %v1447 = vpop.f32.mrb[0].mxu0
  %v1448 = vadd.f32 0.0, %v1447
  %v1449 = vpop.f32.mrb[0].mxu0
  %1450 = vmatprep.mubr.bf16.mxu0 0
  %1451 = vmatmul.mubr.bf16.gmra.mrb[0].mxu0 %v868
  %v1452 = vpop.f32.mrb[0].mxu0
  %v1453 = vadd.f32 0.0, %v1452
  %v1454 = vpop.f32.mrb[0].mxu0
  %v1455 = vpop.f32.mrb[0].mxu0
  %v1456 = vadd.f32 0.0, %v1455
  %v1457 = vpop.f32.mrb[0].mxu0
  %1458 = vmatprep.mubr.bf16.mxu0 0
  %1459 = vmatmul.mubr.bf16.gmra.mrb[0].mxu0 %v871
  %v1460 = vpop.f32.mrb[0].mxu0
  %v1461 = vadd.f32 0.0, %v1460
  %v1462 = vpop.f32.mrb[0].mxu0
  %v1463 = vpop.f32.mrb[0].mxu0
  %v1464 = vadd.f32 0.0, %v1463
  %v1465 = vpop.f32.mrb[0].mxu0
  %1466 = vmatprep.mubr.bf16.mxu0 0
  %1467 = vmatmul.mubr.bf16.gmra.mrb[0].mxu0 %v874
  %v1468 = vpop.f32.mrb[0].mxu0
  %v1469 = vadd.f32 0.0, %v1468
  %v1470 = vpop.f32.mrb[0].mxu0
  %v1471 = vpop.f32.mrb[0].mxu0
  %v1472 = vadd.f32 0.0, %v1471
  %v1473 = vpop.f32.mrb[0].mxu0
  %1474 = vmatprep.mubr.bf16.mxu0 0
  %1475 = vmatmul.mubr.bf16.gmra.mrb[0].mxu0 %v877
  %v1476 = vpop.f32.mrb[0].mxu0
  %v1477 = vadd.f32 0.0, %v1476
  %v1478 = vpop.f32.mrb[0].mxu0
  %v1479 = vpop.f32.mrb[0].mxu0
  %v1480 = vadd.f32 0.0, %v1479
  %v1481 = vpop.f32.mrb[0].mxu0
  %1482 = vmatprep.mubr.bf16.mxu0 0
  %1483 = vmatmul.mubr.bf16.gmra.mrb[0].mxu0 %v880
  %v1484 = vpop.f32.mrb[0].mxu0
  %v1485 = vadd.f32 0.0, %v1484
  %v1486 = vpop.f32.mrb[0].mxu0
  %v1487 = vpop.f32.mrb[0].mxu0
  %v1488 = vadd.f32 0.0, %v1487
  %v1489 = vpop.f32.mrb[0].mxu0
  %1490 = vmatprep.mubr.bf16.mxu0 0
  %1491 = vmatmul.mubr.bf16.gmra.mrb[0].mxu0 %v883
  %v1492 = vpop.f32.mrb[0].mxu0
  %v1493 = vadd.f32 0.0, %v1492
  %v1494 = vpop.f32.mrb[0].mxu0
  %v1495 = vpop.f32.mrb[0].mxu0
  %v1496 = vadd.f32 0.0, %v1495
  %v1497 = vpop.f32.mrb[0].mxu0
  %1498 = vmatprep.mubr.bf16.mxu0 0
  %1499 = vmatmul.mubr.bf16.gmra.mrb[0].mxu0 %v886
  %v1500 = vpop.f32.mrb[0].mxu0
  %v1501 = vadd.f32 0.0, %v1500
  %v1502 = vpop.f32.mrb[0].mxu0
  %v1503 = vpop.f32.mrb[0].mxu0
  %v1504 = vadd.f32 0.0, %v1503
  %v1505 = vpop.f32.mrb[0].mxu0
  %1506 = vmatprep.mubr.bf16.mxu0 0
  %1507 = vmatmul.mubr.bf16.gmra.mrb[0].mxu0 %v889
  %v1508 = vpop.f32.mrb[0].mxu0
  %v1509 = vadd.f32 0.0, %v1508
  %v1510 = vpop.f32.mrb[0].mxu0
  %v1511 = vpop.f32.mrb[0].mxu0
  %v1512 = vadd.f32 0.0, %v1511
  %v1513 = vpop.f32.mrb[0].mxu0
  %1514 = vmatprep.mubr.bf16.mxu0 0
  %1515 = vmatmul.mubr.bf16.gmra.mrb[0].mxu0 %v892
  %v1516 = vpop.f32.mrb[0].mxu0
  %v1517 = vadd.f32 0.0, %v1516
  %v1518 = vpop.f32.mrb[0].mxu0
  %v1519 = vpop.f32.mrb[0].mxu0
  %v1520 = vadd.f32 0.0, %v1519
  %v1521 = vpop.f32.mrb[0].mxu0
  %1522 = vmatprep.mubr.bf16.mxu0 0
  %1523 = vmatmul.mubr.bf16.gmra.mrb[0].mxu0 %v895
  %v1524 = vpop.f32.mrb[0].mxu0
  %v1525 = vadd.f32 0.0, %v1524
  %v1526 = vpop.f32.mrb[0].mxu0
  %v1527 = vpop.f32.mrb[0].mxu0
  %v1528 = vadd.f32 0.0, %v1527
  %v1529 = vpop.f32.mrb[0].mxu0
  %1530 = vmatprep.mubr.bf16.mxu0 0
  %1531 = vmatmul.mubr.bf16.gmra.mrb[0].mxu0 %v898
  %v1532 = vpop.f32.mrb[0].mxu0
  %v1533 = vadd.f32 0.0, %v1532
  %v1534 = vpop.f32.mrb[0].mxu0
  %v1535 = vpop.f32.mrb[0].mxu0
  %v1536 = vadd.f32 0.0, %v1535
  %v1537 = vpop.f32.mrb[0].mxu0
  %1538 = vmatprep.mubr.bf16.mxu0 0
  %1539 = vmatmul.mubr.bf16.gmra.mrb[0].mxu0 %v901
  %v1540 = vpop.f32.mrb[0].mxu0
  %v1541 = vadd.f32 0.0, %v1540
  %v1542 = vpop.f32.mrb[0].mxu0
  %v1543 = vpop.f32.mrb[0].mxu0
  %v1544 = vadd.f32 0.0, %v1543
  %v1545 = vpop.f32.mrb[0].mxu0
  %1546 = vmatprep.mubr.bf16.mxu0 0
  %1547 = vmatmul.mubr.bf16.gmra.mrb[0].mxu0 %v904
  %v1548 = vpop.f32.mrb[0].mxu0
  %v1549 = vadd.f32 0.0, %v1548
  %v1550 = vpop.f32.mrb[0].mxu0
  %v1551 = vpop.f32.mrb[0].mxu0
  %v1552 = vadd.f32 0.0, %v1551
  %v1553 = vpop.f32.mrb[0].mxu0
  %1554 = vmatprep.mubr.bf16.mxu0 0
  %1555 = vmatmul.mubr.bf16.gmra.mrb[0].mxu0 %v907
  %v1556 = vpop.f32.mrb[0].mxu0
  %v1557 = vadd.f32 0.0, %v1556
  %v1558 = vpop.f32.mrb[0].mxu0
  %v1559 = vpop.f32.mrb[0].mxu0
  %v1560 = vadd.f32 0.0, %v1559
  %v1561 = vpop.f32.mrb[0].mxu0
  %1562 = vmatprep.mubr.bf16.mxu0 0
  %1563 = vmatmul.mubr.bf16.gmra.mrb[0].mxu0 %v910
  %v1564 = vpop.f32.mrb[0].mxu0
  %v1565 = vadd.f32 0.0, %v1564
  %v1566 = vpop.f32.mrb[0].mxu0
  %v1567 = vpop.f32.mrb[0].mxu0
  %v1568 = vadd.f32 0.0, %v1567
  %v1569 = vpop.f32.mrb[0].mxu0
  %1570 = vmatprep.mubr.bf16.mxu0 0
  %1571 = vmatmul.mubr.bf16.gmra.mrb[0].mxu0 %v913
  %v1572 = vpop.f32.mrb[0].mxu0
  %v1573 = vadd.f32 0.0, %v1572
  %v1574 = vpop.f32.mrb[0].mxu0
  %v1575 = vpop.f32.mrb[0].mxu0
  %v1576 = vadd.f32 0.0, %v1575
  %v1577 = vpop.f32.mrb[0].mxu0
  %1578 = vmatprep.mubr.bf16.mxu0 0
  %1579 = vmatmul.mubr.bf16.gmra.mrb[0].mxu0 %v916
  %v1580 = vpop.f32.mrb[0].mxu0
  %v1581 = vadd.f32 0.0, %v1580
  %v1582 = vpop.f32.mrb[0].mxu0
  %v1583 = vpop.f32.mrb[0].mxu0
  %v1584 = vadd.f32 0.0, %v1583
  %v1585 = vpop.f32.mrb[0].mxu0
  %1586 = vmatprep.mubr.bf16.mxu0 0
  %1587 = vmatmul.mubr.bf16.gmra.mrb[0].mxu0 %v919
  %v1588 = vpop.f32.mrb[0].mxu0
  %v1589 = vadd.f32 0.0, %v1588
  %v1590 = vpop.f32.mrb[0].mxu0
  %v1591 = vpop.f32.mrb[0].mxu0
  %v1592 = vadd.f32 0.0, %v1591
  %v1593 = vpop.f32.mrb[0].mxu0
  %1594 = vmatprep.mubr.bf16.mxu0 0
  %1595 = vmatmul.mubr.bf16.gmra.mrb[0].mxu0 %v922
  %v1596 = vpop.f32.mrb[0].mxu0
  %v1597 = vadd.f32 0.0, %v1596
  %v1598 = vpop.f32.mrb[0].mxu0
  %v1599 = vpop.f32.mrb[0].mxu0
  %v1600 = vadd.f32 0.0, %v1599
  %v1601 = vpop.f32.mrb[0].mxu0
  %1602 = vmatprep.mubr.bf16.mxu0 0
  %1603 = vmatmul.mubr.bf16.gmra.mrb[0].mxu0 %v925
  %v1604 = vpop.f32.mrb[0].mxu0
  %v1605 = vadd.f32 0.0, %v1604
  %v1606 = vpop.f32.mrb[0].mxu0
  %v1607 = vpop.f32.mrb[0].mxu0
  %v1608 = vadd.f32 0.0, %v1607
  %v1609 = vpop.f32.mrb[0].mxu0
  %1610 = vmatprep.mubr.bf16.mxu0 0
  %1611 = vmatmul.mubr.bf16.gmra.mrb[0].mxu0 %v928
  %v1612 = vpop.f32.mrb[0].mxu0
  %v1613 = vadd.f32 0.0, %v1612
  %v1614 = vpop.f32.mrb[0].mxu0
  %v1615 = vpop.f32.mrb[0].mxu0
  %v1616 = vadd.f32 0.0, %v1615
  %v1617 = vpop.f32.mrb[0].mxu0
  %1618 = vmatprep.mubr.bf16.mxu0 0
  %1619 = vmatmul.mubr.bf16.gmra.mrb[0].mxu0 %v931
  %v1620 = vpop.f32.mrb[0].mxu0
  %v1621 = vadd.f32 0.0, %v1620
  %v1622 = vpop.f32.mrb[0].mxu0
  %v1623 = vpop.f32.mrb[0].mxu0
  %v1624 = vadd.f32 0.0, %v1623
  %v1625 = vpop.f32.mrb[0].mxu0
  %1626 = vmatprep.mubr.bf16.mxu0 0
  %1627 = vmatmul.mubr.bf16.gmra.mrb[0].mxu0 %v934
  %v1628 = vpop.f32.mrb[0].mxu0
  %v1629 = vadd.f32 0.0, %v1628
  %v1630 = vpop.f32.mrb[0].mxu0
  %v1631 = vpop.f32.mrb[0].mxu0
  %v1632 = vadd.f32 0.0, %v1631
  %v1633 = vpop.f32.mrb[0].mxu0
  %1634 = vmatprep.mubr.bf16.mxu0 0
  %1635 = vmatmul.mubr.bf16.gmra.mrb[0].mxu0 %v937
  %v1636 = vpop.f32.mrb[0].mxu0
  %v1637 = vadd.f32 0.0, %v1636
  %v1638 = vpop.f32.mrb[0].mxu0
  %v1639 = vpop.f32.mrb[0].mxu0
  %v1640 = vadd.f32 0.0, %v1639
  %v1641 = vpop.f32.mrb[0].mxu0
  %1642 = vmatprep.mubr.bf16.mxu0 0
  %1643 = vmatmul.mubr.bf16.gmra.mrb[0].mxu0 %v940
  %v1644 = vpop.f32.mrb[0].mxu0
  %v1645 = vadd.f32 0.0, %v1644
  %v1646 = vpop.f32.mrb[0].mxu0
  %v1647 = vpop.f32.mrb[0].mxu0
  %v1648 = vadd.f32 0.0, %v1647
  %v1649 = vpop.f32.mrb[0].mxu0
  %1650 = vmatprep.mubr.bf16.mxu0 0
  %1651 = vmatmul.mubr.bf16.gmra.mrb[0].mxu0 %v943
  %v1652 = vpop.f32.mrb[0].mxu0
  %v1653 = vadd.f32 0.0, %v1652
  %v1654 = vpop.f32.mrb[0].mxu0
  %v1655 = vpop.f32.mrb[0].mxu0
  %v1656 = vadd.f32 0.0, %v1655
  %v1657 = vpop.f32.mrb[0].mxu0
  %1658 = vmatprep.mubr.bf16.mxu0 0
  %1659 = vmatmul.mubr.bf16.gmra.mrb[0].mxu0 %v946
  %v1660 = vpop.f32.mrb[0].mxu0
  %v1661 = vadd.f32 0.0, %v1660
  %v1662 = vpop.f32.mrb[0].mxu0
  %v1663 = vpop.f32.mrb[0].mxu0
  %v1664 = vadd.f32 0.0, %v1663
  %v1665 = vpop.f32.mrb[0].mxu0
  %1666 = vmatprep.mubr.bf16.mxu0 0
  %1667 = vmatmul.mubr.bf16.gmra.mrb[0].mxu0 %v949
  %v1668 = vpop.f32.mrb[0].mxu0
  %v1669 = vadd.f32 0.0, %v1668
  %v1670 = vpop.f32.mrb[0].mxu0
  %v1671 = vpop.f32.mrb[0].mxu0
  %v1672 = vadd.f32 0.0, %v1671
  %v1673 = vpop.f32.mrb[0].mxu0
  %1674 = vmatprep.mubr.bf16.mxu0 0
  %1675 = vmatmul.mubr.bf16.gmra.mrb[0].mxu0 %v952
  %v1676 = vpop.f32.mrb[0].mxu0
  %v1677 = vadd.f32 0.0, %v1676
  %v1678 = vpop.f32.mrb[0].mxu0
  %v1679 = vpop.f32.mrb[0].mxu0
  %v1680 = vadd.f32 0.0, %v1679
  %v1681 = vpop.f32.mrb[0].mxu0
  %1682 = vmatprep.mubr.bf16.mxu0 0
  %1683 = vmatmul.mubr.bf16.gmra.mrb[0].mxu0 %v955
  %v1684 = vpop.f32.mrb[0].mxu0
  %v1685 = vadd.f32 0.0, %v1684
  %v1686 = vpop.f32.mrb[0].mxu0
  %v1687 = vpop.f32.mrb[0].mxu0
  %v1688 = vadd.f32 0.0, %v1687
  %v1689 = vpop.f32.mrb[0].mxu0
  %1690 = vmatprep.mubr.bf16.mxu0 0
  %1691 = vmatmul.mubr.bf16.gmra.mrb[0].mxu0 %v958
  %v1692 = vpop.f32.mrb[0].mxu0
  %v1693 = vadd.f32 0.0, %v1692
  %v1694 = vpop.f32.mrb[0].mxu0
  %v1695 = vpop.f32.mrb[0].mxu0
  %v1696 = vadd.f32 0.0, %v1695
  %v1697 = vpop.f32.mrb[0].mxu0
  %1698 = vmatprep.mubr.bf16.mxu0 0
  %1699 = vmatmul.mubr.bf16.gmra.mrb[0].mxu0 %v961
  %v1700 = vpop.f32.mrb[0].mxu0
  %v1701 = vadd.f32 0.0, %v1700
  %v1702 = vpop.f32.mrb[0].mxu0
  %v1703 = vpop.f32.mrb[0].mxu0
  %v1704 = vadd.f32 0.0, %v1703
  %v1705 = vpop.f32.mrb[0].mxu0
  %1706 = vmatprep.mubr.bf16.mxu0 0
  %1707 = vmatmul.mubr.bf16.gmra.mrb[0].mxu0 %v964
  %v1708 = vpop.f32.mrb[0].mxu0
  %v1709 = vadd.f32 0.0, %v1708
  %v1710 = vpop.f32.mrb[0].mxu0
  %v1711 = vpop.f32.mrb[0].mxu0
  %v1712 = vadd.f32 0.0, %v1711
  %v1713 = vpop.f32.mrb[0].mxu0
  %1714 = vmatprep.mubr.bf16.mxu0 0
  %1715 = vmatmul.mubr.bf16.gmra.mrb[0].mxu0 %v967
  %v1716 = vpop.f32.mrb[0].mxu0
  %v1717 = vadd.f32 0.0, %v1716
  %v1718 = vpop.f32.mrb[0].mxu0
  %v1719 = vpop.f32.mrb[0].mxu0
  %v1720 = vadd.f32 0.0, %v1719
  %v1721 = vpop.f32.mrb[0].mxu0
  %1722 = vmatprep.mubr.bf16.mxu0 0
  %1723 = vmatmul.mubr.bf16.gmra.mrb[0].mxu0 %v970
  %v1724 = vpop.f32.mrb[0].mxu0
  %v1725 = vadd.f32 0.0, %v1724
  %v1726 = vpop.f32.mrb[0].mxu0
  %v1727 = vpop.f32.mrb[0].mxu0
  %v1728 = vadd.f32 0.0, %v1727
  %v1729 = vpop.f32.mrb[0].mxu0
  %1730 = vmatprep.mubr.bf16.mxu0 0
  %1731 = vmatmul.mubr.bf16.gmra.mrb[0].mxu0 %v973
  %v1732 = vpop.f32.mrb[0].mxu0
  %v1733 = vadd.f32 0.0, %v1732
  %v1734 = vpop.f32.mrb[0].mxu0
  %v1735 = vpop.f32.mrb[0].mxu0
  %v1736 = vadd.f32 0.0, %v1735
  %v1737 = vpop.f32.mrb[0].mxu0
  %1738 = vmatprep.mubr.bf16.mxu0 0
  %1739 = vmatmul.mubr.bf16.gmra.mrb[0].mxu0 %v976
  %v1740 = vpop.f32.mrb[0].mxu0
  %v1741 = vadd.f32 0.0, %v1740
  %v1742 = vpop.f32.mrb[0].mxu0
  %v1743 = vpop.f32.mrb[0].mxu0
  %v1744 = vadd.f32 0.0, %v1743
  %v1745 = vpop.f32.mrb[0].mxu0
  %1746 = vmatprep.mubr.bf16.mxu0 0
  %1747 = vmatmul.mubr.bf16.gmra.mrb[0].mxu0 %v979
  %v1748 = vpop.f32.mrb[0].mxu0
  %v1749 = vadd.f32 0.0, %v1748
  %v1750 = vpop.f32.mrb[0].mxu0
  %v1751 = vpop.f32.mrb[0].mxu0
  %v1752 = vadd.f32 0.0, %v1751
  %v1753 = vpop.f32.mrb[0].mxu0
  %1754 = vmatprep.mubr.bf16.mxu0 0
  %1755 = vmatmul.mubr.bf16.gmra.mrb[0].mxu0 %v982
  %v1756 = vpop.f32.mrb[0].mxu0
  %v1757 = vadd.f32 0.0, %v1756
  %v1758 = vpop.f32.mrb[0].mxu0
  %v1759 = vpop.f32.mrb[0].mxu0
  %v1760 = vadd.f32 0.0, %v1759
  %v1761 = vpop.f32.mrb[0].mxu0
  %1762 = vmatprep.mubr.bf16.mxu0 0
  %1763 = vmatmul.mubr.bf16.gmra.mrb[0].mxu0 %v985
  %v1764 = vpop.f32.mrb[0].mxu0
  %v1765 = vadd.f32 0.0, %v1764
  %v1766 = vpop.f32.mrb[0].mxu0
  %v1767 = vpop.f32.mrb[0].mxu0
  %v1768 = vadd.f32 0.0, %v1767
  %v1769 = vpop.f32.mrb[0].mxu0
  %1770 = vmatprep.mubr.bf16.mxu0 0
  %1771 = vmatmul.mubr.bf16.gmra.mrb[0].mxu0 %v988
  %v1772 = vpop.f32.mrb[0].mxu0
  %v1773 = vadd.f32 0.0, %v1772
  %v1774 = vpop.f32.mrb[0].mxu0
  %v1775 = vpop.f32.mrb[0].mxu0
  %v1776 = vadd.f32 0.0, %v1775
  %v1777 = vpop.f32.mrb[0].mxu0
  %1778 = vmatprep.mubr.bf16.mxu0 0
  %1779 = vmatmul.mubr.bf16.gmra.mrb[0].mxu0 %v991
  %v1780 = vpop.f32.mrb[0].mxu0
  %v1781 = vadd.f32 0.0, %v1780
  %v1782 = vpop.f32.mrb[0].mxu0
  %v1783 = vpop.f32.mrb[0].mxu0
  %v1784 = vadd.f32 0.0, %v1783
  %v1785 = vpop.f32.mrb[0].mxu0
  %1786 = vmatprep.mubr.bf16.mxu0 0
  %1787 = vmatmul.mubr.bf16.gmra.mrb[0].mxu0 %v994
  %v1788 = vpop.f32.mrb[0].mxu0
  %v1789 = vadd.f32 0.0, %v1788
  %v1790 = vpop.f32.mrb[0].mxu0
  %v1791 = vpop.f32.mrb[0].mxu0
  %v1792 = vadd.f32 0.0, %v1791
  %v1793 = vpop.f32.mrb[0].mxu0
  %1794 = vmatprep.mubr.bf16.mxu0 0
  %1795 = vmatmul.mubr.bf16.gmra.mrb[0].mxu0 %v997
  %v1796 = vpop.f32.mrb[0].mxu0
  %v1797 = vadd.f32 0.0, %v1796
  %v1798 = vpop.f32.mrb[0].mxu0
  %v1799 = vpop.f32.mrb[0].mxu0
  %v1800 = vadd.f32 0.0, %v1799
  %v1801 = vpop.f32.mrb[0].mxu0
  %1802 = vmatprep.mubr.bf16.mxu0 0
  %1803 = vmatmul.mubr.bf16.gmra.mrb[0].mxu0 %v1000
  %v1804 = vpop.f32.mrb[0].mxu0
  %v1805 = vadd.f32 0.0, %v1804
  %v1806 = vpop.f32.mrb[0].mxu0
  %v1807 = vpop.f32.mrb[0].mxu0
  %v1808 = vadd.f32 0.0, %v1807
  %v1809 = vpop.f32.mrb[0].mxu0
  %1810 = vmatprep.mubr.bf16.mxu0 0
  %1811 = vmatmul.mubr.bf16.gmra.mrb[0].mxu0 %v1003
  %v1812 = vpop.f32.mrb[0].mxu0
  %v1813 = vadd.f32 0.0, %v1812
  %v1814 = vpop.f32.mrb[0].mxu0
  %v1815 = vpop.f32.mrb[0].mxu0
  %v1816 = vadd.f32 0.0, %v1815
  %v1817 = vpop.f32.mrb[0].mxu0
  %1818 = vmatprep.mubr.bf16.mxu0 0
  %1819 = vmatmul.mubr.bf16.gmra.mrb[0].mxu0 %v1006
  %v1820 = vpop.f32.mrb[0].mxu0
  %v1821 = vadd.f32 0.0, %v1820
  %v1822 = vpop.f32.mrb[0].mxu0
  %v1823 = vpop.f32.mrb[0].mxu0
  %v1824 = vadd.f32 0.0, %v1823
  %v1825 = vpop.f32.mrb[0].mxu0
  %1826 = vmatprep.mubr.bf16.mxu0 0
  %1827 = vmatmul.mubr.bf16.gmra.mrb[0].mxu0 %v1009
  %v1828 = vpop.f32.mrb[0].mxu0
  %v1829 = vadd.f32 0.0, %v1828
  %v1830 = vpop.f32.mrb[0].mxu0
  %v1831 = vpop.f32.mrb[0].mxu0
  %v1832 = vadd.f32 0.0, %v1831
  %v1833 = vpop.f32.mrb[0].mxu0
  %1834 = vdwg.mxu0
  %v1835 = vmax.f32 %v1053, %v1248
  %v1836 = vmax.f32 %v1056, %v1253
  %v1837 = vmax.f32 %v1061, %v1256
  %v1838 = vmax.f32 %v1064, %v1261
  %v1839 = vmax.f32 %v1069, %v1264
  %v1840 = vmax.f32 %v1072, %v1269
  %v1841 = vmax.f32 %v1077, %v1272
  %v1842 = vmax.f32 %v1080, %v1277
  %v1843 = vmax.f32 %v1085, %v1280
  %v1844 = vmax.f32 %v1088, %v1285
  %v1845 = vmax.f32 %v1093, %v1288
  %v1846 = vmax.f32 %v1096, %v1293
  %v1847 = vmax.f32 %v1101, %v1296
  %v1848 = vmax.f32 %v1104, %v1301
  %v1849 = vmax.f32 %v1109, %v1304
  %v1850 = vmax.f32 %v1112, %v1309
  %v1851 = vmax.f32 %v1117, %v1312
  %v1852 = vmax.f32 %v1120, %v1317
  %v1853 = vmax.f32 %v1125, %v1320
  %v1854 = vmax.f32 %v1128, %v1325
  %v1855 = vmax.f32 %v1133, %v1328
  %v1856 = vmax.f32 %v1136, %v1333
  %v1857 = vmax.f32 %v1141, %v1336
  %v1858 = vmax.f32 %v1144, %v1341
  %v1859 = vmax.f32 %v1149, %v1344
  %v1860 = vmax.f32 %v1152, %v1349
  %v1861 = vmax.f32 %v1157, %v1352
  %v1862 = vmax.f32 %v1160, %v1357
  %v1863 = vmax.f32 %v1165, %v1360
  %v1864 = vmax.f32 %v1168, %v1365
  %v1865 = vmax.f32 %v1173, %v1368
  %v1866 = vmax.f32 %v1176, %v1373
  %v1867 = vmax.f32 %v1181, %v1376
  %v1868 = vmax.f32 %v1184, %v1381
  %v1869 = vmax.f32 %v1189, %v1384
  %v1870 = vmax.f32 %v1192, %v1389
  %v1871 = vmax.f32 %v1197, %v1392
  %v1872 = vmax.f32 %v1200, %v1397
  %v1873 = vmax.f32 %v1205, %v1400
  %v1874 = vmax.f32 %v1208, %v1405
  %v1875 = vmax.f32 %v1213, %v1408
  %v1876 = vmax.f32 %v1216, %v1413
  %v1877 = vmax.f32 %v1221, %v1416
  %v1878 = vmax.f32 %v1224, %v1421
  %v1879 = vmax.f32 %v1229, %v1424
  %v1880 = vmax.f32 %v1232, %v1429
  %v1881 = vmax.f32 %v1237, %v1432
  %v1882 = vmax.f32 %v1240, %v1437
  %v1883 = vmax.f32 %v1245, %v1440
  %v1884 = vmax.f32 %v1445, %v1640
  %v1885 = vmax.f32 %v1448, %v1645
  %v1886 = vmax.f32 %v1453, %v1648
  %v1887 = vmax.f32 %v1456, %v1653
  %v1888 = vmax.f32 %v1461, %v1656
  %v1889 = vmax.f32 %v1464, %v1661
  %v1890 = vmax.f32 %v1469, %v1664
  %v1891 = vmax.f32 %v1472, %v1669
  %v1892 = vmax.f32 %v1477, %v1672
  %v1893 = vmax.f32 %v1480, %v1677
  %v1894 = vmax.f32 %v1485, %v1680
  %v1895 = vmax.f32 %v1488, %v1685
  %v1896 = vmax.f32 %v1493, %v1688
  %v1897 = vmax.f32 %v1496, %v1693
  %v1898 = vmax.f32 %v1501, %v1696
  %v1899 = vmax.f32 %v1504, %v1701
  %v1900 = vmax.f32 %v1509, %v1704
  %v1901 = vmax.f32 %v1512, %v1709
  %v1902 = vmax.f32 %v1517, %v1712
  %v1903 = vmax.f32 %v1520, %v1717
  %v1904 = vmax.f32 %v1525, %v1720
  %v1905 = vmax.f32 %v1528, %v1725
  %v1906 = vmax.f32 %v1533, %v1728
  %v1907 = vmax.f32 %v1536, %v1733
  %v1908 = vmax.f32 %v1541, %v1736
  %v1909 = vmax.f32 %v1544, %v1741
  %v1910 = vmax.f32 %v1549, %v1744
  %v1911 = vmax.f32 %v1552, %v1749
  %v1912 = vmax.f32 %v1557, %v1752
  %v1913 = vmax.f32 %v1560, %v1757
  %v1914 = vmax.f32 %v1565, %v1760
  %v1915 = vmax.f32 %v1568, %v1765
  %v1916 = vmax.f32 %v1573, %v1768
  %v1917 = vmax.f32 %v1576, %v1773
  %v1918 = vmax.f32 %v1581, %v1776
  %v1919 = vmax.f32 %v1584, %v1781
  %v1920 = vmax.f32 %v1589, %v1784
  %v1921 = vmax.f32 %v1592, %v1789
  %v1922 = vmax.f32 %v1597, %v1792
  %v1923 = vmax.f32 %v1600, %v1797
  %v1924 = vmax.f32 %v1605, %v1800
  %v1925 = vmax.f32 %v1608, %v1805
  %v1926 = vmax.f32 %v1613, %v1808
  %v1927 = vmax.f32 %v1616, %v1813
  %v1928 = vmax.f32 %v1621, %v1816
  %v1929 = vmax.f32 %v1624, %v1821
  %v1930 = vmax.f32 %v1629, %v1824
  %v1931 = vmax.f32 %v1632, %v1829
  %v1932 = vmax.f32 %v1637, %v1832
  %v1933 = vmax.f32 %v1835, %v1884
  %v1934 = vmax.f32 %v1836, %v1885
  %v1935 = vmax.f32 %v1837, %v1886
  %v1936 = vmax.f32 %v1838, %v1887
  %v1937 = vmax.f32 %v1839, %v1888
  %v1938 = vmax.f32 %v1840, %v1889
  %v1939 = vmax.f32 %v1841, %v1890
  %v1940 = vmax.f32 %v1842, %v1891
  %v1941 = vmax.f32 %v1843, %v1892
  %v1942 = vmax.f32 %v1844, %v1893
  %v1943 = vmax.f32 %v1845, %v1894
  %v1944 = vmax.f32 %v1846, %v1895
  %v1945 = vmax.f32 %v1847, %v1896
  %v1946 = vmax.f32 %v1848, %v1897
  %v1947 = vmax.f32 %v1849, %v1898
  %v1948 = vmax.f32 %v1850, %v1899
  %v1949 = vmax.f32 %v1851, %v1900
  %v1950 = vmax.f32 %v1852, %v1901
  %v1951 = vmax.f32 %v1853, %v1902
  %v1952 = vmax.f32 %v1854, %v1903
  %v1953 = vmax.f32 %v1855, %v1904
  %v1954 = vmax.f32 %v1856, %v1905
  %v1955 = vmax.f32 %v1857, %v1906
  %v1956 = vmax.f32 %v1858, %v1907
  %v1957 = vmax.f32 %v1859, %v1908
  %v1958 = vmax.f32 %v1860, %v1909
  %v1959 = vmax.f32 %v1861, %v1910
  %v1960 = vmax.f32 %v1862, %v1911
  %v1961 = vmax.f32 %v1863, %v1912
  %v1962 = vmax.f32 %v1864, %v1913
  %v1963 = vmax.f32 %v1865, %v1914
  %v1964 = vmax.f32 %v1866, %v1915
  %v1965 = vmax.f32 %v1867, %v1916
  %v1966 = vmax.f32 %v1868, %v1917
  %v1967 = vmax.f32 %v1869, %v1918
  %v1968 = vmax.f32 %v1870, %v1919
  %v1969 = vmax.f32 %v1871, %v1920
  %v1970 = vmax.f32 %v1872, %v1921
  %v1971 = vmax.f32 %v1873, %v1922
  %v1972 = vmax.f32 %v1874, %v1923
  %v1973 = vmax.f32 %v1875, %v1924
  %v1974 = vmax.f32 %v1876, %v1925
  %v1975 = vmax.f32 %v1877, %v1926
  %v1976 = vmax.f32 %v1878, %v1927
  %v1977 = vmax.f32 %v1879, %v1928
  %v1978 = vmax.f32 %v1880, %v1929
  %v1979 = vmax.f32 %v1881, %v1930
  %v1980 = vmax.f32 %v1882, %v1931
  %v1981 = vmax.f32 %v1883, %v1932
  %v1982 = vld [vmem:[%s2] sm:$0x1]
  %v1984 = vlaneseq
  %v1985 = vshrl.u32 %v1984, 7
  %v1986 = vsub.s32 0, %v1985
  %v1987 = vrot.slane %v1982, %v1986
  %v1989 = vadd.f32 %v1933, %v1987
  %v1990 = vadd.f32 %v1934, %v1987
  %v1991 = vadd.f32 %v1935, %v1987
  %v1992 = vadd.f32 %v1936, %v1987
  %v1993 = vadd.f32 %v1937, %v1987
  %v1994 = vadd.f32 %v1938, %v1987
  %v1995 = vadd.f32 %v1939, %v1987
  %v1996 = vadd.f32 %v1940, %v1987
  %v1997 = vadd.f32 %v1941, %v1987
  %v1998 = vadd.f32 %v1942, %v1987
  %v1999 = vadd.f32 %v1943, %v1987
  %v2000 = vadd.f32 %v1944, %v1987
  %v2001 = vadd.f32 %v1945, %v1987
  %v2002 = vadd.f32 %v1946, %v1987
  %v2003 = vadd.f32 %v1947, %v1987
  %v2004 = vadd.f32 %v1948, %v1987
  %v2005 = vadd.f32 %v1949, %v1987
  %v2006 = vadd.f32 %v1950, %v1987
  %v2007 = vadd.f32 %v1951, %v1987
  %v2008 = vadd.f32 %v1952, %v1987
  %v2009 = vadd.f32 %v1953, %v1987
  %v2010 = vadd.f32 %v1954, %v1987
  %v2011 = vadd.f32 %v1955, %v1987
  %v2012 = vadd.f32 %v1956, %v1987
  %v2013 = vadd.f32 %v1957, %v1987
  %v2014 = vadd.f32 %v1958, %v1987
  %v2015 = vadd.f32 %v1959, %v1987
  %v2016 = vadd.f32 %v1960, %v1987
  %v2017 = vadd.f32 %v1961, %v1987
  %v2018 = vadd.f32 %v1962, %v1987
  %v2019 = vadd.f32 %v1963, %v1987
  %v2020 = vadd.f32 %v1964, %v1987
  %v2021 = vadd.f32 %v1965, %v1987
  %v2022 = vadd.f32 %v1966, %v1987
  %v2023 = vadd.f32 %v1967, %v1987
  %v2024 = vadd.f32 %v1968, %v1987
  %v2025 = vadd.f32 %v1969, %v1987
  %v2026 = vadd.f32 %v1970, %v1987
  %v2027 = vadd.f32 %v1971, %v1987
  %v2028 = vadd.f32 %v1972, %v1987
  %v2029 = vadd.f32 %v1973, %v1987
  %v2030 = vadd.f32 %v1974, %v1987
  %v2031 = vadd.f32 %v1975, %v1987
  %v2032 = vadd.f32 %v1976, %v1987
  %v2033 = vadd.f32 %v1977, %v1987
  %v2034 = vadd.f32 %v1978, %v1987
  %v2035 = vadd.f32 %v1979, %v1987
  %v2036 = vadd.f32 %v1980, %v1987
  %v2037 = vadd.f32 %v1981, %v1987
  %v2038 = vmax.f32 %v1989, 0.0
  %v2039 = vmax.f32 %v1990, 0.0
  %v2040 = vmax.f32 %v1991, 0.0
  %v2041 = vmax.f32 %v1992, 0.0
  %v2042 = vmax.f32 %v1993, 0.0
  %v2043 = vmax.f32 %v1994, 0.0
  %v2044 = vmax.f32 %v1995, 0.0
  %v2045 = vmax.f32 %v1996, 0.0
  %v2046 = vmax.f32 %v1997, 0.0
  %v2047 = vmax.f32 %v1998, 0.0
  %v2048 = vmax.f32 %v1999, 0.0
  %v2049 = vmax.f32 %v2000, 0.0
  %v2050 = vmax.f32 %v2001, 0.0
  %v2051 = vmax.f32 %v2002, 0.0
  %v2052 = vmax.f32 %v2003, 0.0
  %v2053 = vmax.f32 %v2004, 0.0
  %v2054 = vmax.f32 %v2005, 0.0
  %v2055 = vmax.f32 %v2006, 0.0
  %v2056 = vmax.f32 %v2007, 0.0
  %v2057 = vmax.f32 %v2008, 0.0
  %v2058 = vmax.f32 %v2009, 0.0
  %v2059 = vmax.f32 %v2010, 0.0
  %v2060 = vmax.f32 %v2011, 0.0
  %v2061 = vmax.f32 %v2012, 0.0
  %v2062 = vmax.f32 %v2013, 0.0
  %v2063 = vmax.f32 %v2014, 0.0
  %v2064 = vmax.f32 %v2015, 0.0
  %v2065 = vmax.f32 %v2016, 0.0
  %v2066 = vmax.f32 %v2017, 0.0
  %v2067 = vmax.f32 %v2018, 0.0
  %v2068 = vmax.f32 %v2019, 0.0
  %v2069 = vmax.f32 %v2020, 0.0
  %v2070 = vmax.f32 %v2021, 0.0
  %v2071 = vmax.f32 %v2022, 0.0
  %v2072 = vmax.f32 %v2023, 0.0
  %v2073 = vmax.f32 %v2024, 0.0
  %v2074 = vmax.f32 %v2025, 0.0
  %v2075 = vmax.f32 %v2026, 0.0
  %v2076 = vmax.f32 %v2027, 0.0
  %v2077 = vmax.f32 %v2028, 0.0
  %v2078 = vmax.f32 %v2029, 0.0
  %v2079 = vmax.f32 %v2030, 0.0
  %v2080 = vmax.f32 %v2031, 0.0
  %v2081 = vmax.f32 %v2032, 0.0
  %v2082 = vmax.f32 %v2033, 0.0
  %v2083 = vmax.f32 %v2034, 0.0
  %v2084 = vmax.f32 %v2035, 0.0
  %v2085 = vmax.f32 %v2036, 0.0
  %v2086 = vmax.f32 %v2037, 0.0
  %v2087 = vpack.c.bf16 %v2039, %v2038
  %v2088 = vpack.c.bf16 %v2041, %v2040
  %v2089 = vpack.c.bf16 %v2043, %v2042
  %v2090 = vpack.c.bf16 %v2045, %v2044
  %v2091 = vpack.c.bf16 %v2047, %v2046
  %v2092 = vpack.c.bf16 %v2049, %v2048
  %v2093 = vpack.c.bf16 %v2051, %v2050
  %v2094 = vpack.c.bf16 %v2053, %v2052
  %v2095 = vpack.c.bf16 %v2055, %v2054
  %v2096 = vpack.c.bf16 %v2057, %v2056
  %v2097 = vpack.c.bf16 %v2059, %v2058
  %v2098 = vpack.c.bf16 %v2061, %v2060
  %v2099 = vpack.c.bf16 %v2063, %v2062
  %v2100 = vpack.c.bf16 %v2065, %v2064
  %v2101 = vpack.c.bf16 %v2067, %v2066
  %v2102 = vpack.c.bf16 %v2069, %v2068
  %v2103 = vpack.c.bf16 %v2071, %v2070
  %v2104 = vpack.c.bf16 %v2073, %v2072
  %v2105 = vpack.c.bf16 %v2075, %v2074
  %v2106 = vpack.c.bf16 %v2077, %v2076
  %v2107 = vpack.c.bf16 %v2079, %v2078
  %v2108 = vpack.c.bf16 %v2081, %v2080
  %v2109 = vpack.c.bf16 %v2083, %v2082
  %v2110 = vpack.c.bf16 %v2085, %v2084
  %v2111 = vpack.c.bf16 %v2086, %v2086
  %v2137 = vunpack.c.l.b16 %v2087
  %v2138 = vunpack.c.h.b16 %v2087
  %v2139 = vunpack.c.l.b16 %v2088
  %v2140 = vunpack.c.h.b16 %v2088
  %v2141 = vunpack.c.l.b16 %v2089
  %v2142 = vunpack.c.h.b16 %v2089
  %v2143 = vunpack.c.l.b16 %v2090
  %v2144 = vunpack.c.h.b16 %v2090
  %v2145 = vunpack.c.l.b16 %v2091
  %v2146 = vunpack.c.h.b16 %v2091
  %v2147 = vunpack.c.l.b16 %v2092
  %v2148 = vunpack.c.h.b16 %v2092
  %v2149 = vunpack.c.l.b16 %v2093
  %v2150 = vunpack.c.h.b16 %v2093
  %v2151 = vunpack.c.l.b16 %v2094
  %v2152 = vunpack.c.h.b16 %v2094
  %v2153 = vunpack.c.l.b16 %v2095
  %v2154 = vunpack.c.h.b16 %v2095
  %v2155 = vunpack.c.l.b16 %v2096
  %v2156 = vunpack.c.h.b16 %v2096
  %v2157 = vunpack.c.l.b16 %v2097
  %v2158 = vunpack.c.h.b16 %v2097
  %v2159 = vunpack.c.l.b16 %v2098
  %v2160 = vunpack.c.h.b16 %v2098
  %v2161 = vunpack.c.l.b16 %v2099
  %v2162 = vunpack.c.h.b16 %v2099
  %v2163 = vunpack.c.l.b16 %v2100
  %v2164 = vunpack.c.h.b16 %v2100
  %v2165 = vunpack.c.l.b16 %v2101
  %v2166 = vunpack.c.h.b16 %v2101
  %v2167 = vunpack.c.l.b16 %v2102
  %v2168 = vunpack.c.h.b16 %v2102
  %v2169 = vunpack.c.l.b16 %v2103
  %v2170 = vunpack.c.h.b16 %v2103
  %v2171 = vunpack.c.l.b16 %v2104
  %v2172 = vunpack.c.h.b16 %v2104
  %v2173 = vunpack.c.l.b16 %v2105
  %v2174 = vunpack.c.h.b16 %v2105
  %v2175 = vunpack.c.l.b16 %v2106
  %v2176 = vunpack.c.h.b16 %v2106
  %v2177 = vunpack.c.l.b16 %v2107
  %v2178 = vunpack.c.h.b16 %v2107
  %v2179 = vunpack.c.l.b16 %v2108
  %v2180 = vunpack.c.h.b16 %v2108
  %v2181 = vunpack.c.l.b16 %v2109
  %v2182 = vunpack.c.h.b16 %v2109
  %v2183 = vunpack.c.l.b16 %v2110
  %v2184 = vunpack.c.h.b16 %v2110
  %v2185 = vunpack.c.l.b16 %v2111
  %v2186 = vpack.c.b16 %v2137, %v2137
  %v2187 = vpack.c.b16 %v2138, %v2138
  %v2188 = vpack.c.b16 %v2139, %v2139
  %v2189 = vpack.c.b16 %v2140, %v2140
  %v2190 = vpack.c.b16 %v2141, %v2141
  %v2191 = vpack.c.b16 %v2142, %v2142
  %v2192 = vpack.c.b16 %v2143, %v2143
  %v2193 = vpack.c.b16 %v2144, %v2144
  %v2194 = vpack.c.b16 %v2145, %v2145
  %v2195 = vpack.c.b16 %v2146, %v2146
  %v2196 = vpack.c.b16 %v2147, %v2147
  %v2197 = vpack.c.b16 %v2148, %v2148
  %v2198 = vpack.c.b16 %v2149, %v2149
  %v2199 = vpack.c.b16 %v2150, %v2150
  %v2200 = vpack.c.b16 %v2151, %v2151
  %v2201 = vpack.c.b16 %v2152, %v2152
  %v2202 = vpack.c.b16 %v2153, %v2153
  %v2203 = vpack.c.b16 %v2154, %v2154
  %v2204 = vpack.c.b16 %v2155, %v2155
  %v2205 = vpack.c.b16 %v2156, %v2156
  %v2206 = vpack.c.b16 %v2157, %v2157
  %v2207 = vpack.c.b16 %v2158, %v2158
  %v2208 = vpack.c.b16 %v2159, %v2159
  %v2209 = vpack.c.b16 %v2160, %v2160
  %v2210 = vpack.c.b16 %v2161, %v2161
  %v2211 = vpack.c.b16 %v2162, %v2162
  %v2212 = vpack.c.b16 %v2163, %v2163
  %v2213 = vpack.c.b16 %v2164, %v2164
  %v2214 = vpack.c.b16 %v2165, %v2165
  %v2215 = vpack.c.b16 %v2166, %v2166
  %v2216 = vpack.c.b16 %v2167, %v2167
  %v2217 = vpack.c.b16 %v2168, %v2168
  %v2218 = vpack.c.b16 %v2169, %v2169
  %v2219 = vpack.c.b16 %v2170, %v2170
  %v2220 = vpack.c.b16 %v2171, %v2171
  %v2221 = vpack.c.b16 %v2172, %v2172
  %v2222 = vpack.c.b16 %v2173, %v2173
  %v2223 = vpack.c.b16 %v2174, %v2174
  %v2224 = vpack.c.b16 %v2175, %v2175
  %v2225 = vpack.c.b16 %v2176, %v2176
  %v2226 = vpack.c.b16 %v2177, %v2177
  %v2227 = vpack.c.b16 %v2178, %v2178
  %v2228 = vpack.c.b16 %v2179, %v2179
  %v2229 = vpack.c.b16 %v2180, %v2180
  %v2230 = vpack.c.b16 %v2181, %v2181
  %v2231 = vpack.c.b16 %v2182, %v2182
  %v2232 = vpack.c.b16 %v2183, %v2183
  %v2233 = vpack.c.b16 %v2184, %v2184
  %v2234 = vpack.c.b16 %v2185, %v2185
  %vm2284 = vcmask 257024
  %2285 = vst.msk [vmem:[%s3] sm:$0xf] %vm2284, %v2186
  %2286 = vst.msk [vmem:[%s3 + $0x4] sm:$0xf] %vm2284, %v2187
  %2287 = vst.msk [vmem:[%s3 + $0x8] sm:$0xf] %vm2284, %v2188
  %2288 = vst.msk [vmem:[%s3 + $0xc] sm:$0xf] %vm2284, %v2189
  %2289 = vst.msk [vmem:[%s3 + $0x10] sm:$0xf] %vm2284, %v2190
  %2290 = vst.msk [vmem:[%s3 + $0x14] sm:$0xf] %vm2284, %v2191
  %2291 = vst.msk [vmem:[%s3 + $0x18] sm:$0xf] %vm2284, %v2192
  %2292 = vst.msk [vmem:[%s3 + $0x1c] sm:$0xf] %vm2284, %v2193
  %2293 = vst.msk [vmem:[%s3 + $0x20] sm:$0xf] %vm2284, %v2194
  %2294 = vst.msk [vmem:[%s3 + $0x24] sm:$0xf] %vm2284, %v2195
  %2295 = vst.msk [vmem:[%s3 + $0x28] sm:$0xf] %vm2284, %v2196
  %2296 = vst.msk [vmem:[%s3 + $0x2c] sm:$0xf] %vm2284, %v2197
  %2297 = vst.msk [vmem:[%s3 + $0x30] sm:$0xf] %vm2284, %v2198
  %2298 = vst.msk [vmem:[%s3 + $0x34] sm:$0xf] %vm2284, %v2199
  %2299 = vst.msk [vmem:[%s3 + $0x38] sm:$0xf] %vm2284, %v2200
  %2300 = vst.msk [vmem:[%s3 + $0x3c] sm:$0xf] %vm2284, %v2201
  %2301 = vst.msk [vmem:[%s3 + $0x40] sm:$0xf] %vm2284, %v2202
  %2302 = vst.msk [vmem:[%s3 + $0x44] sm:$0xf] %vm2284, %v2203
  %2303 = vst.msk [vmem:[%s3 + $0x48] sm:$0xf] %vm2284, %v2204
  %2304 = vst.msk [vmem:[%s3 + $0x4c] sm:$0xf] %vm2284, %v2205
  %2305 = vst.msk [vmem:[%s3 + $0x50] sm:$0xf] %vm2284, %v2206
  %2306 = vst.msk [vmem:[%s3 + $0x54] sm:$0xf] %vm2284, %v2207
  %2307 = vst.msk [vmem:[%s3 + $0x58] sm:$0xf] %vm2284, %v2208
  %2308 = vst.msk [vmem:[%s3 + $0x5c] sm:$0xf] %vm2284, %v2209
  %2309 = vst.msk [vmem:[%s3 + $0x60] sm:$0xf] %vm2284, %v2210
  %2310 = vst.msk [vmem:[%s3 + $0x64] sm:$0xf] %vm2284, %v2211
  %2311 = vst.msk [vmem:[%s3 + $0x68] sm:$0xf] %vm2284, %v2212
  %2312 = vst.msk [vmem:[%s3 + $0x6c] sm:$0xf] %vm2284, %v2213
  %2313 = vst.msk [vmem:[%s3 + $0x70] sm:$0xf] %vm2284, %v2214
  %2314 = vst.msk [vmem:[%s3 + $0x74] sm:$0xf] %vm2284, %v2215
  %2315 = vst.msk [vmem:[%s3 + $0x78] sm:$0xf] %vm2284, %v2216
  %2316 = vst.msk [vmem:[%s3 + $0x7c] sm:$0xf] %vm2284, %v2217
  %2317 = vst.msk [vmem:[%s3 + $0x80] sm:$0xf] %vm2284, %v2218
  %2318 = vst.msk [vmem:[%s3 + $0x84] sm:$0xf] %vm2284, %v2219
  %2319 = vst.msk [vmem:[%s3 + $0x88] sm:$0xf] %vm2284, %v2220
  %2320 = vst.msk [vmem:[%s3 + $0x8c] sm:$0xf] %vm2284, %v2221
  %2321 = vst.msk [vmem:[%s3 + $0x90] sm:$0xf] %vm2284, %v2222
  %2322 = vst.msk [vmem:[%s3 + $0x94] sm:$0xf] %vm2284, %v2223
  %2323 = vst.msk [vmem:[%s3 + $0x98] sm:$0xf] %vm2284, %v2224
  %2324 = vst.msk [vmem:[%s3 + $0x9c] sm:$0xf] %vm2284, %v2225
  %2325 = vst.msk [vmem:[%s3 + $0xa0] sm:$0xf] %vm2284, %v2226
  %2326 = vst.msk [vmem:[%s3 + $0xa4] sm:$0xf] %vm2284, %v2227
  %2327 = vst.msk [vmem:[%s3 + $0xa8] sm:$0xf] %vm2284, %v2228
  %2328 = vst.msk [vmem:[%s3 + $0xac] sm:$0xf] %vm2284, %v2229
  %2329 = vst.msk [vmem:[%s3 + $0xb0] sm:$0xf] %vm2284, %v2230
  %2330 = vst.msk [vmem:[%s3 + $0xb4] sm:$0xf] %vm2284, %v2231
  %2331 = vst.msk [vmem:[%s3 + $0xb8] sm:$0xf] %vm2284, %v2232
  %2332 = vst.msk [vmem:[%s3 + $0xbc] sm:$0xf] %vm2284, %v2233
  %2333 = vst.msk [vmem:[%s3 + $0xc0] sm:$0xf] %vm2284, %v2234
  // Predicated region
  $region14: #{model_vad_forward.3} parent=0 // pred_check
    _
  $region15: #{model_vad_forward.3} parent=0 // pred_check_branch
    %2335 = sbr.rel (0) target = $region17
  $region16: #{model_vad_forward.3} parent=0 // pred_region
    _
  $region17: #{model_vad_forward.3} parent=0 // pred_fallthru
    _
  // Predicated region
  $region18: #{model_vad_forward.3} parent=0 // pred_check
    _
  $region19: #{model_vad_forward.3} parent=0 // pred_check_branch
    %2337 = sbr.rel (0) target = $region21
  $region20: #{model_vad_forward.3} parent=0 // pred_region
    _
  $region21: #{model_vad_forward.3} parent=0 // pred_fallthru
    _

// kernel: model_vad_forward.4
$region0: #{model_vad_forward.4}
  #allocation0 [shape = 'u32[]', space=smem, size = 0x4, offset = 0x4, fixed_abs, tag = 'smem constant byte address 0x4 - core index']
  #allocation1 [shape = 'u32[144,128]{1,0:T(1,128)}', space=vmem, size = 0x12000, scoped, tag = 'internal scratch']
  %s0 = inlined_call_operand.vmem [shape: bf16[288,288], index: 0, kind: input, shape index: {}]
  %s1 = inlined_call_operand.vmem [shape: bf16[288,128], index: 1, kind: input, shape index: {}]
  %s2 = inlined_call_operand.vmem [shape: f32[1,128], index: 2, kind: input, shape index: {}]
  %s3 = inlined_call_operand.vmem [shape: bf16[72,128], index: 3, kind: output, shape index: {}]
  %s4 = sld [smem:[#allocation0]]
  $region22: #{model_vad_forward.4} parent=0
    _
  %s6 = ssub.s32 1, %s4
  %s7 = scalar_select 0, %s6, %s4
  // Predicated region
  $region2: #{model_vad_forward.4} parent=0 // pred_check
    _
  $region3: #{model_vad_forward.4} parent=0 // pred_check_branch
    %9 = sbr.rel (0) target = $region5
  $region4: #{model_vad_forward.4} parent=0 // pred_region
    _
  $region5: #{model_vad_forward.4} parent=0 // pred_fallthru
    _
  // Predicated region
  $region6: #{model_vad_forward.4} parent=0 // pred_check
    _
  $region7: #{model_vad_forward.4} parent=0 // pred_check_branch
    %11 = sbr.rel (0) target = $region9
  $region8: #{model_vad_forward.4} parent=0 // pred_region
    _
  $region9: #{model_vad_forward.4} parent=0 // pred_fallthru
    _
  // Predicated region
  $region10: #{model_vad_forward.4} parent=0 // pred_check
    _
  $region11: #{model_vad_forward.4} parent=0 // pred_check_branch
    %13 = sbr.rel (0) target = $region13
  $region12: #{model_vad_forward.4} parent=0 // pred_region
    _
  $region13: #{model_vad_forward.4} parent=0 // pred_fallthru
    _
  %v15 = vld [vmem:[%s0] sm:$0xff]
  %v16 = vld [vmem:[%s0 + $0x8] sm:$0xf]
  %v17 = vld [vmem:[%s0 + $0xc] sm:$0xff]
  %v18 = vld [vmem:[%s0 + $0x14] sm:$0xf]
  %v19 = vld [vmem:[%s0 + $0x18] sm:$0xff]
  %v20 = vld [vmem:[%s0 + $0x20] sm:$0xf]
  %v21 = vld [vmem:[%s0 + $0x24] sm:$0xff]
  %v22 = vld [vmem:[%s0 + $0x2c] sm:$0xf]
  %v23 = vld [vmem:[%s0 + $0x30] sm:$0xff]
  %v24 = vld [vmem:[%s0 + $0x38] sm:$0xf]
  %v25 = vld [vmem:[%s0 + $0x3c] sm:$0xff]
  %v26 = vld [vmem:[%s0 + $0x44] sm:$0xf]
  %v27 = vld [vmem:[%s0 + $0x48] sm:$0xff]
  %v28 = vld [vmem:[%s0 + $0x50] sm:$0xf]
  %v29 = vld [vmem:[%s0 + $0x54] sm:$0xff]
  %v30 = vld [vmem:[%s0 + $0x5c] sm:$0xf]
  %v31 = vld [vmem:[%s0 + $0x60] sm:$0xff]
  %v32 = vld [vmem:[%s0 + $0x68] sm:$0xf]
  %v33 = vld [vmem:[%s0 + $0x6c] sm:$0xff]
  %v34 = vld [vmem:[%s0 + $0x74] sm:$0xf]
  %v35 = vld [vmem:[%s0 + $0x78] sm:$0xff]
  %v36 = vld [vmem:[%s0 + $0x80] sm:$0xf]
  %v37 = vld [vmem:[%s0 + $0x84] sm:$0xff]
  %v38 = vld [vmem:[%s0 + $0x8c] sm:$0xf]
  %v39 = vld [vmem:[%s0 + $0x90] sm:$0xff]
  %v40 = vld [vmem:[%s0 + $0x98] sm:$0xf]
  %v41 = vld [vmem:[%s0 + $0x9c] sm:$0xff]
  %v42 = vld [vmem:[%s0 + $0xa4] sm:$0xf]
  %v43 = vld [vmem:[%s0 + $0xa8] sm:$0xff]
  %v44 = vld [vmem:[%s0 + $0xb0] sm:$0xf]
  %v45 = vld [vmem:[%s0 + $0xb4] sm:$0xff]
  %v46 = vld [vmem:[%s0 + $0xbc] sm:$0xf]
  %v47 = vld [vmem:[%s0 + $0xc0] sm:$0xff]
  %v48 = vld [vmem:[%s0 + $0xc8] sm:$0xf]
  %v49 = vld [vmem:[%s0 + $0xcc] sm:$0xff]
  %v50 = vld [vmem:[%s0 + $0xd4] sm:$0xf]
  %v51 = vld [vmem:[%s0 + $0xd8] sm:$0xff]
  %v52 = vld [vmem:[%s0 + $0xe0] sm:$0xf]
  %v53 = vld [vmem:[%s0 + $0xe4] sm:$0xff]
  %v54 = vld [vmem:[%s0 + $0xec] sm:$0xf]
  %v55 = vld [vmem:[%s0 + $0xf0] sm:$0xff]
  %v56 = vld [vmem:[%s0 + $0xf8] sm:$0xf]
  %v57 = vld [vmem:[%s0 + $0xfc] sm:$0xff]
  %v58 = vld [vmem:[%s0 + $0x104] sm:$0xf]
  %v59 = vld [vmem:[%s0 + $0x108] sm:$0xff]
  %v60 = vld [vmem:[%s0 + $0x110] sm:$0xf]
  %v61 = vld [vmem:[%s0 + $0x114] sm:$0xff]
  %v62 = vld [vmem:[%s0 + $0x11c] sm:$0xf]
  %v63 = vld [vmem:[%s0 + $0x120] sm:$0xff]
  %v64 = vld [vmem:[%s0 + $0x128] sm:$0xf]
  %v65 = vld [vmem:[%s0 + $0x12c] sm:$0xff]
  %v66 = vld [vmem:[%s0 + $0x134] sm:$0xf]
  %v67 = vld [vmem:[%s0 + $0x138] sm:$0xff]
  %v68 = vld [vmem:[%s0 + $0x140] sm:$0xf]
  %v69 = vld [vmem:[%s0 + $0x144] sm:$0xff]
  %v70 = vld [vmem:[%s0 + $0x14c] sm:$0xf]
  %v71 = vld [vmem:[%s0 + $0x150] sm:$0xff]
  %v72 = vld [vmem:[%s0 + $0x158] sm:$0xf]
  %v73 = vld [vmem:[%s0 + $0x15c] sm:$0xff]
  %v74 = vld [vmem:[%s0 + $0x164] sm:$0xf]
  %v75 = vld [vmem:[%s0 + $0x168] sm:$0xff]
  %v76 = vld [vmem:[%s0 + $0x170] sm:$0xf]
  %v77 = vld [vmem:[%s0 + $0x174] sm:$0xff]
  %v78 = vld [vmem:[%s0 + $0x17c] sm:$0xf]
  %v79 = vld [vmem:[%s0 + $0x180] sm:$0xff]
  %v80 = vld [vmem:[%s0 + $0x188] sm:$0xf]
  %v81 = vld [vmem:[%s0 + $0x18c] sm:$0xff]
  %v82 = vld [vmem:[%s0 + $0x194] sm:$0xf]
  %v83 = vld [vmem:[%s0 + $0x198] sm:$0xff]
  %v84 = vld [vmem:[%s0 + $0x1a0] sm:$0xf]
  %v85 = vld [vmem:[%s0 + $0x1a4] sm:$0xff]
  %v86 = vld [vmem:[%s0 + $0x1ac] sm:$0xf]
  %v87 = vld [vmem:[%s1] sm:$0xf]
  %v88 = vld [vmem:[%s1 + $0x4] sm:$0xf]
  %v89 = vld [vmem:[%s1 + $0x8] sm:$0xf]
  %v90 = vld [vmem:[%s1 + $0xc] sm:$0xf]
  %v91 = vld [vmem:[%s1 + $0x10] sm:$0xf]
  %v92 = vld [vmem:[%s1 + $0x14] sm:$0xf]
  %v93 = vld [vmem:[%s1 + $0x18] sm:$0xf]
  %v94 = vld [vmem:[%s1 + $0x1c] sm:$0xf]
  %v95 = vld [vmem:[%s1 + $0x20] sm:$0xf]
  %v96 = vld [vmem:[%s1 + $0x24] sm:$0xf]
  %v97 = vld [vmem:[%s1 + $0x28] sm:$0xf]
  %v98 = vld [vmem:[%s1 + $0x2c] sm:$0xf]
  %v99 = vld [vmem:[%s1 + $0x30] sm:$0xf]
  %v100 = vld [vmem:[%s1 + $0x34] sm:$0xf]
  %v101 = vld [vmem:[%s1 + $0x38] sm:$0xf]
  %v102 = vld [vmem:[%s1 + $0x3c] sm:$0xf]
  %v103 = vld [vmem:[%s1 + $0x40] sm:$0xf]
  %v104 = vld [vmem:[%s1 + $0x44] sm:$0xf]
  %v105 = vld [vmem:[%s1 + $0x48] sm:$0xf]
  %v106 = vld [vmem:[%s1 + $0x4c] sm:$0xf]
  %v107 = vld [vmem:[%s1 + $0x50] sm:$0xf]
  %v108 = vld [vmem:[%s1 + $0x54] sm:$0xf]
  %v109 = vld [vmem:[%s1 + $0x58] sm:$0xf]
  %v110 = vld [vmem:[%s1 + $0x5c] sm:$0xf]
  %v111 = vld [vmem:[%s1 + $0x60] sm:$0xf]
  %v112 = vld [vmem:[%s1 + $0x64] sm:$0xf]
  %v113 = vld [vmem:[%s1 + $0x68] sm:$0xf]
  %v114 = vld [vmem:[%s1 + $0x6c] sm:$0xf]
  %v115 = vld [vmem:[%s1 + $0x70] sm:$0xf]
  %v116 = vld [vmem:[%s1 + $0x74] sm:$0xf]
  %v117 = vld [vmem:[%s1 + $0x78] sm:$0xf]
  %v118 = vld [vmem:[%s1 + $0x7c] sm:$0xf]
  %v119 = vld [vmem:[%s1 + $0x80] sm:$0xf]
  %v120 = vld [vmem:[%s1 + $0x84] sm:$0xf]
  %v121 = vld [vmem:[%s1 + $0x88] sm:$0xf]
  %v122 = vld [vmem:[%s1 + $0x8c] sm:$0xf]
  %v195 = vunpack.c.l.b16 %v15
  %v196 = vunpack.c.h.b16 %v15
  %v197 = vunpack.c.l.b16 %v16
  %v198 = vunpack.c.l.b16 %v17
  %v199 = vunpack.c.h.b16 %v17
  %v200 = vunpack.c.l.b16 %v18
  %v201 = vunpack.c.l.b16 %v19
  %v202 = vunpack.c.h.b16 %v19
  %v203 = vunpack.c.l.b16 %v20
  %v204 = vunpack.c.l.b16 %v21
  %v205 = vunpack.c.h.b16 %v21
  %v206 = vunpack.c.l.b16 %v22
  %v207 = vunpack.c.l.b16 %v23
  %v208 = vunpack.c.h.b16 %v23
  %v209 = vunpack.c.l.b16 %v24
  %v210 = vunpack.c.l.b16 %v25
  %v211 = vunpack.c.h.b16 %v25
  %v212 = vunpack.c.l.b16 %v26
  %v213 = vunpack.c.l.b16 %v27
  %v214 = vunpack.c.h.b16 %v27
  %v215 = vunpack.c.l.b16 %v28
  %v216 = vunpack.c.l.b16 %v29
  %v217 = vunpack.c.h.b16 %v29
  %v218 = vunpack.c.l.b16 %v30
  %v219 = vunpack.c.l.b16 %v31
  %v220 = vunpack.c.h.b16 %v31
  %v221 = vunpack.c.l.b16 %v32
  %v222 = vunpack.c.l.b16 %v33
  %v223 = vunpack.c.h.b16 %v33
  %v224 = vunpack.c.l.b16 %v34
  %v225 = vunpack.c.l.b16 %v35
  %v226 = vunpack.c.h.b16 %v35
  %v227 = vunpack.c.l.b16 %v36
  %v228 = vunpack.c.l.b16 %v37
  %v229 = vunpack.c.h.b16 %v37
  %v230 = vunpack.c.l.b16 %v38
  %v231 = vunpack.c.l.b16 %v39
  %v232 = vunpack.c.h.b16 %v39
  %v233 = vunpack.c.l.b16 %v40
  %v234 = vunpack.c.l.b16 %v41
  %v235 = vunpack.c.h.b16 %v41
  %v236 = vunpack.c.l.b16 %v42
  %v237 = vunpack.c.l.b16 %v43
  %v238 = vunpack.c.h.b16 %v43
  %v239 = vunpack.c.l.b16 %v44
  %v240 = vunpack.c.l.b16 %v45
  %v241 = vunpack.c.h.b16 %v45
  %v242 = vunpack.c.l.b16 %v46
  %v243 = vunpack.c.l.b16 %v47
  %v244 = vunpack.c.h.b16 %v47
  %v245 = vunpack.c.l.b16 %v48
  %v246 = vunpack.c.l.b16 %v49
  %v247 = vunpack.c.h.b16 %v49
  %v248 = vunpack.c.l.b16 %v50
  %v249 = vunpack.c.l.b16 %v51
  %v250 = vunpack.c.h.b16 %v51
  %v251 = vunpack.c.l.b16 %v52
  %v252 = vunpack.c.l.b16 %v53
  %v253 = vunpack.c.h.b16 %v53
  %v254 = vunpack.c.l.b16 %v54
  %v255 = vunpack.c.l.b16 %v55
  %v256 = vunpack.c.h.b16 %v55
  %v257 = vunpack.c.l.b16 %v56
  %v258 = vunpack.c.l.b16 %v57
  %v259 = vunpack.c.h.b16 %v57
  %v260 = vunpack.c.l.b16 %v58
  %v261 = vunpack.c.l.b16 %v59
  %v262 = vunpack.c.h.b16 %v59
  %v263 = vunpack.c.l.b16 %v60
  %v264 = vunpack.c.l.b16 %v61
  %v265 = vunpack.c.h.b16 %v61
  %v266 = vunpack.c.l.b16 %v62
  %v267 = vunpack.c.l.b16 %v63
  %v268 = vunpack.c.h.b16 %v63
  %v269 = vunpack.c.l.b16 %v64
  %v270 = vunpack.c.l.b16 %v65
  %v271 = vunpack.c.h.b16 %v65
  %v272 = vunpack.c.l.b16 %v66
  %v273 = vunpack.c.l.b16 %v67
  %v274 = vunpack.c.h.b16 %v67
  %v275 = vunpack.c.l.b16 %v68
  %v276 = vunpack.c.l.b16 %v69
  %v277 = vunpack.c.h.b16 %v69
  %v278 = vunpack.c.l.b16 %v70
  %v279 = vunpack.c.l.b16 %v71
  %v280 = vunpack.c.h.b16 %v71
  %v281 = vunpack.c.l.b16 %v72
  %v282 = vunpack.c.l.b16 %v73
  %v283 = vunpack.c.h.b16 %v73
  %v284 = vunpack.c.l.b16 %v74
  %v285 = vunpack.c.l.b16 %v75
  %v286 = vunpack.c.h.b16 %v75
  %v287 = vunpack.c.l.b16 %v76
  %v288 = vunpack.c.l.b16 %v77
  %v289 = vunpack.c.h.b16 %v77
  %v290 = vunpack.c.l.b16 %v78
  %v291 = vunpack.c.l.b16 %v79
  %v292 = vunpack.c.h.b16 %v79
  %v293 = vunpack.c.l.b16 %v80
  %v294 = vunpack.c.l.b16 %v81
  %v295 = vunpack.c.h.b16 %v81
  %v296 = vunpack.c.l.b16 %v82
  %v297 = vunpack.c.l.b16 %v83
  %v298 = vunpack.c.h.b16 %v83
  %v299 = vunpack.c.l.b16 %v84
  %v300 = vunpack.c.l.b16 %v85
  %v301 = vunpack.c.h.b16 %v85
  %v302 = vunpack.c.l.b16 %v86
  %v303 = vpack.c.b16 %v198, %v195
  %v304 = vpack.c.b16 %v199, %v196
  %v305 = vpack.c.b16 %v200, %v197
  %v306 = vpack.c.b16 %v204, %v201
  %v307 = vpack.c.b16 %v205, %v202
  %v308 = vpack.c.b16 %v206, %v203
  %v309 = vpack.c.b16 %v210, %v207
  %v310 = vpack.c.b16 %v211, %v208
  %v311 = vpack.c.b16 %v212, %v209
  %v312 = vpack.c.b16 %v216, %v213
  %v313 = vpack.c.b16 %v217, %v214
  %v314 = vpack.c.b16 %v218, %v215
  %v315 = vpack.c.b16 %v222, %v219
  %v316 = vpack.c.b16 %v223, %v220
  %v317 = vpack.c.b16 %v224, %v221
  %v318 = vpack.c.b16 %v228, %v225
  %v319 = vpack.c.b16 %v229, %v226
  %v320 = vpack.c.b16 %v230, %v227
  %v321 = vpack.c.b16 %v234, %v231
  %v322 = vpack.c.b16 %v235, %v232
  %v323 = vpack.c.b16 %v236, %v233
  %v324 = vpack.c.b16 %v240, %v237
  %v325 = vpack.c.b16 %v241, %v238
  %v326 = vpack.c.b16 %v242, %v239
  %v327 = vpack.c.b16 %v246, %v243
  %v328 = vpack.c.b16 %v247, %v244
  %v329 = vpack.c.b16 %v248, %v245
  %v330 = vpack.c.b16 %v252, %v249
  %v331 = vpack.c.b16 %v253, %v250
  %v332 = vpack.c.b16 %v254, %v251
  %v333 = vpack.c.b16 %v258, %v255
  %v334 = vpack.c.b16 %v259, %v256
  %v335 = vpack.c.b16 %v260, %v257
  %v336 = vpack.c.b16 %v264, %v261
  %v337 = vpack.c.b16 %v265, %v262
  %v338 = vpack.c.b16 %v266, %v263
  %v339 = vpack.c.b16 %v270, %v267
  %v340 = vpack.c.b16 %v271, %v268
  %v341 = vpack.c.b16 %v272, %v269
  %v342 = vpack.c.b16 %v276, %v273
  %v343 = vpack.c.b16 %v277, %v274
  %v344 = vpack.c.b16 %v278, %v275
  %v345 = vpack.c.b16 %v282, %v279
  %v346 = vpack.c.b16 %v283, %v280
  %v347 = vpack.c.b16 %v284, %v281
  %v348 = vpack.c.b16 %v288, %v285
  %v349 = vpack.c.b16 %v289, %v286
  %v350 = vpack.c.b16 %v290, %v287
  %v351 = vpack.c.b16 %v294, %v291
  %v352 = vpack.c.b16 %v295, %v292
  %v353 = vpack.c.b16 %v296, %v293
  %v354 = vpack.c.b16 %v300, %v297
  %v355 = vpack.c.b16 %v301, %v298
  %v356 = vpack.c.b16 %v302, %v299
  %v429 = vunpack.c.l.b16 %v87
  %v430 = vunpack.c.l.b16 %v88
  %v431 = vunpack.c.l.b16 %v89
  %v432 = vunpack.c.l.b16 %v90
  %v433 = vunpack.c.l.b16 %v91
  %v434 = vunpack.c.l.b16 %v92
  %v435 = vunpack.c.l.b16 %v93
  %v436 = vunpack.c.l.b16 %v94
  %v437 = vunpack.c.l.b16 %v95
  %v438 = vunpack.c.l.b16 %v96
  %v439 = vunpack.c.l.b16 %v97
  %v440 = vunpack.c.l.b16 %v98
  %v441 = vunpack.c.l.b16 %v99
  %v442 = vunpack.c.l.b16 %v100
  %v443 = vunpack.c.l.b16 %v101
  %v444 = vunpack.c.l.b16 %v102
  %v445 = vunpack.c.l.b16 %v103
  %v446 = vunpack.c.l.b16 %v104
  %v447 = vunpack.c.l.b16 %v105
  %v448 = vunpack.c.l.b16 %v106
  %v449 = vunpack.c.l.b16 %v107
  %v450 = vunpack.c.l.b16 %v108
  %v451 = vunpack.c.l.b16 %v109
  %v452 = vunpack.c.l.b16 %v110
  %v453 = vunpack.c.l.b16 %v111
  %v454 = vunpack.c.l.b16 %v112
  %v455 = vunpack.c.l.b16 %v113
  %v456 = vunpack.c.l.b16 %v114
  %v457 = vunpack.c.l.b16 %v115
  %v458 = vunpack.c.l.b16 %v116
  %v459 = vunpack.c.l.b16 %v117
  %v460 = vunpack.c.l.b16 %v118
  %v461 = vunpack.c.l.b16 %v119
  %v462 = vunpack.c.l.b16 %v120
  %v463 = vunpack.c.l.b16 %v121
  %v464 = vunpack.c.l.b16 %v122
  %v465 = vpack.c.b16 %v430, %v429
  %v466 = vpack.c.b16 %v432, %v431
  %v467 = vpack.c.b16 %v434, %v433
  %v468 = vpack.c.b16 %v436, %v435
  %v469 = vpack.c.b16 %v438, %v437
  %v470 = vpack.c.b16 %v440, %v439
  %v471 = vpack.c.b16 %v442, %v441
  %v472 = vpack.c.b16 %v444, %v443
  %v473 = vpack.c.b16 %v446, %v445
  %v474 = vpack.c.b16 %v448, %v447
  %v475 = vpack.c.b16 %v450, %v449
  %v476 = vpack.c.b16 %v452, %v451
  %v477 = vpack.c.b16 %v454, %v453
  %v478 = vpack.c.b16 %v456, %v455
  %v479 = vpack.c.b16 %v458, %v457
  %v480 = vpack.c.b16 %v460, %v459
  %v481 = vpack.c.b16 %v462, %v461
  %v482 = vpack.c.b16 %v464, %v463
  %vm501 = vcmask 261120
  %v503 = vsel %vm501, %v305, 0
  %v506 = vsel %vm501, %v308, 0
  %v509 = vsel %vm501, %v311, 0
  %v512 = vsel %vm501, %v314, 0
  %v515 = vsel %vm501, %v317, 0
  %v518 = vsel %vm501, %v320, 0
  %v521 = vsel %vm501, %v323, 0
  %v524 = vsel %vm501, %v326, 0
  %v527 = vsel %vm501, %v329, 0
  %v530 = vsel %vm501, %v332, 0
  %v533 = vsel %vm501, %v335, 0
  %v536 = vsel %vm501, %v338, 0
  %v539 = vsel %vm501, %v341, 0
  %v542 = vsel %vm501, %v344, 0
  %v545 = vsel %vm501, %v347, 0
  %v548 = vsel %vm501, %v350, 0
  %v551 = vsel %vm501, %v353, 0
  %v554 = vsel %vm501, %v356, 0
  %556 = vmatprep.subr.bf16.mxu0 0
  %557 = vmatpush1.bf16.msra.mxu0 %v465
  %558 = vmatprep.subr.bf16.mxu0 0
  %559 = vmatpush1.bf16.msra.mxu0 %v466
  %560 = vmatprep.subr.bf16.mxu0 0
  %561 = vmatpush1.bf16.msra.mxu0 %v467
  %562 = vmatprep.subr.bf16.mxu0 0
  %563 = vmatpush1.bf16.msra.mxu0 %v468
  %564 = vmatprep.subr.bf16.mxu0 0
  %565 = vmatpush1.bf16.msra.mxu0 %v469
  %566 = vmatprep.subr.bf16.mxu0 0
  %567 = vmatpush1.bf16.msra.mxu0 %v470
  %568 = vmatprep.subr.bf16.mxu0 0
  %569 = vmatpush1.bf16.msra.mxu0 %v471
  %570 = vmatprep.subr.bf16.mxu0 0
  %571 = vmatpush1.bf16.msra.mxu0 %v472
  %572 = vmatprep.subr.bf16.mxu0 0
  %573 = vmatpush1.bf16.msra.mxu0 %v473
  %574 = vmatprep.subr.bf16.mxu0 0
  %575 = vmatpush1.bf16.msra.mxu0 %v474
  %576 = vmatprep.subr.bf16.mxu0 0
  %577 = vmatpush1.bf16.msra.mxu0 %v475
  %578 = vmatprep.subr.bf16.mxu0 0
  %579 = vmatpush1.bf16.msra.mxu0 %v476
  %580 = vmatprep.subr.bf16.mxu0 0
  %581 = vmatpush1.bf16.msra.mxu0 %v477
  %582 = vmatprep.subr.bf16.mxu0 0
  %583 = vmatpush1.bf16.msra.mxu0 %v478
  %584 = vmatprep.subr.bf16.mxu0 0
  %585 = vmatpush1.bf16.msra.mxu0 %v479
  %586 = vmatprep.subr.bf16.mxu0 0
  %587 = vmatpush1.bf16.msra.mxu0 %v480
  %588 = vmatprep.mubr.bf16.mxu0 %v304
  %589 = vmatmul.mubr.bf16.gmra.mrb[0].mxu0 %v303
  %v590 = vpop.f32.mrb[0].mxu0
  %v591 = vadd.f32 0.0, %v590
  %v592 = vpop.f32.mrb[0].mxu0
  %v593 = vpop.f32.mrb[0].mxu0
  %v594 = vadd.f32 0.0, %v593
  %v595 = vpop.f32.mrb[0].mxu0
  %596 = vmatprep.mubr.bf16.mxu0 %v307
  %597 = vmatmul.mubr.bf16.gmra.mrb[0].mxu0 %v306
  %v598 = vpop.f32.mrb[0].mxu0
  %v599 = vadd.f32 0.0, %v598
  %v600 = vpop.f32.mrb[0].mxu0
  %v601 = vpop.f32.mrb[0].mxu0
  %v602 = vadd.f32 0.0, %v601
  %v603 = vpop.f32.mrb[0].mxu0
  %604 = vmatprep.mubr.bf16.mxu0 %v310
  %605 = vmatmul.mubr.bf16.gmra.mrb[0].mxu0 %v309
  %v606 = vpop.f32.mrb[0].mxu0
  %v607 = vadd.f32 0.0, %v606
  %v608 = vpop.f32.mrb[0].mxu0
  %v609 = vpop.f32.mrb[0].mxu0
  %v610 = vadd.f32 0.0, %v609
  %v611 = vpop.f32.mrb[0].mxu0
  %612 = vmatprep.mubr.bf16.mxu0 %v313
  %613 = vmatmul.mubr.bf16.gmra.mrb[0].mxu0 %v312
  %v614 = vpop.f32.mrb[0].mxu0
  %v615 = vadd.f32 0.0, %v614
  %v616 = vpop.f32.mrb[0].mxu0
  %v617 = vpop.f32.mrb[0].mxu0
  %v618 = vadd.f32 0.0, %v617
  %v619 = vpop.f32.mrb[0].mxu0
  %620 = vmatprep.mubr.bf16.mxu0 %v316
  %621 = vmatmul.mubr.bf16.gmra.mrb[0].mxu0 %v315
  %v622 = vpop.f32.mrb[0].mxu0
  %v623 = vadd.f32 0.0, %v622
  %v624 = vpop.f32.mrb[0].mxu0
  %v625 = vpop.f32.mrb[0].mxu0
  %v626 = vadd.f32 0.0, %v625
  %v627 = vpop.f32.mrb[0].mxu0
  %628 = vmatprep.mubr.bf16.mxu0 %v319
  %629 = vmatmul.mubr.bf16.gmra.mrb[0].mxu0 %v318
  %v630 = vpop.f32.mrb[0].mxu0
  %v631 = vadd.f32 0.0, %v630
  %v632 = vpop.f32.mrb[0].mxu0
  %v633 = vpop.f32.mrb[0].mxu0
  %v634 = vadd.f32 0.0, %v633
  %v635 = vpop.f32.mrb[0].mxu0
  %636 = vmatprep.mubr.bf16.mxu0 %v322
  %637 = vmatmul.mubr.bf16.gmra.mrb[0].mxu0 %v321
  %v638 = vpop.f32.mrb[0].mxu0
  %v639 = vadd.f32 0.0, %v638
  %v640 = vpop.f32.mrb[0].mxu0
  %v641 = vpop.f32.mrb[0].mxu0
  %v642 = vadd.f32 0.0, %v641
  %v643 = vpop.f32.mrb[0].mxu0
  %644 = vmatprep.mubr.bf16.mxu0 %v325
  %645 = vmatmul.mubr.bf16.gmra.mrb[0].mxu0 %v324
  %v646 = vpop.f32.mrb[0].mxu0
  %v647 = vadd.f32 0.0, %v646
  %v648 = vpop.f32.mrb[0].mxu0
  %v649 = vpop.f32.mrb[0].mxu0
  %v650 = vadd.f32 0.0, %v649
  %v651 = vpop.f32.mrb[0].mxu0
  %652 = vmatprep.mubr.bf16.mxu0 %v328
  %653 = vmatmul.mubr.bf16.gmra.mrb[0].mxu0 %v327
  %v654 = vpop.f32.mrb[0].mxu0
  %v655 = vadd.f32 0.0, %v654
  %v656 = vpop.f32.mrb[0].mxu0
  %v657 = vpop.f32.mrb[0].mxu0
  %v658 = vadd.f32 0.0, %v657
  %v659 = vpop.f32.mrb[0].mxu0
  %660 = vmatprep.mubr.bf16.mxu0 %v331
  %661 = vmatmul.mubr.bf16.gmra.mrb[0].mxu0 %v330
  %v662 = vpop.f32.mrb[0].mxu0
  %v663 = vadd.f32 0.0, %v662
  %v664 = vpop.f32.mrb[0].mxu0
  %v665 = vpop.f32.mrb[0].mxu0
  %v666 = vadd.f32 0.0, %v665
  %v667 = vpop.f32.mrb[0].mxu0
  %668 = vmatprep.mubr.bf16.mxu0 %v334
  %669 = vmatmul.mubr.bf16.gmra.mrb[0].mxu0 %v333
  %v670 = vpop.f32.mrb[0].mxu0
  %v671 = vadd.f32 0.0, %v670
  %v672 = vpop.f32.mrb[0].mxu0
  %v673 = vpop.f32.mrb[0].mxu0
  %v674 = vadd.f32 0.0, %v673
  %v675 = vpop.f32.mrb[0].mxu0
  %676 = vmatprep.mubr.bf16.mxu0 %v337
  %677 = vmatmul.mubr.bf16.gmra.mrb[0].mxu0 %v336
  %v678 = vpop.f32.mrb[0].mxu0
  %v679 = vadd.f32 0.0, %v678
  %v680 = vpop.f32.mrb[0].mxu0
  %v681 = vpop.f32.mrb[0].mxu0
  %v682 = vadd.f32 0.0, %v681
  %v683 = vpop.f32.mrb[0].mxu0
  %684 = vmatprep.mubr.bf16.mxu0 %v340
  %685 = vmatmul.mubr.bf16.gmra.mrb[0].mxu0 %v339
  %v686 = vpop.f32.mrb[0].mxu0
  %v687 = vadd.f32 0.0, %v686
  %v688 = vpop.f32.mrb[0].mxu0
  %v689 = vpop.f32.mrb[0].mxu0
  %v690 = vadd.f32 0.0, %v689
  %v691 = vpop.f32.mrb[0].mxu0
  %692 = vmatprep.mubr.bf16.mxu0 %v343
  %693 = vmatmul.mubr.bf16.gmra.mrb[0].mxu0 %v342
  %v694 = vpop.f32.mrb[0].mxu0
  %v695 = vadd.f32 0.0, %v694
  %v696 = vpop.f32.mrb[0].mxu0
  %v697 = vpop.f32.mrb[0].mxu0
  %v698 = vadd.f32 0.0, %v697
  %v699 = vpop.f32.mrb[0].mxu0
  %700 = vmatprep.mubr.bf16.mxu0 %v346
  %701 = vmatmul.mubr.bf16.gmra.mrb[0].mxu0 %v345
  %v702 = vpop.f32.mrb[0].mxu0
  %v703 = vadd.f32 0.0, %v702
  %v704 = vpop.f32.mrb[0].mxu0
  %v705 = vpop.f32.mrb[0].mxu0
  %v706 = vadd.f32 0.0, %v705
  %v707 = vpop.f32.mrb[0].mxu0
  %708 = vmatprep.mubr.bf16.mxu0 %v349
  %709 = vmatmul.mubr.bf16.gmra.mrb[0].mxu0 %v348
  %v710 = vpop.f32.mrb[0].mxu0
  %v711 = vadd.f32 0.0, %v710
  %v712 = vpop.f32.mrb[0].mxu0
  %v713 = vpop.f32.mrb[0].mxu0
  %v714 = vadd.f32 0.0, %v713
  %v715 = vpop.f32.mrb[0].mxu0
  %716 = vmatprep.mubr.bf16.mxu0 %v352
  %717 = vmatmul.mubr.bf16.gmra.mrb[0].mxu0 %v351
  %v718 = vpop.f32.mrb[0].mxu0
  %v719 = vadd.f32 0.0, %v718
  %v720 = vpop.f32.mrb[0].mxu0
  %v721 = vpop.f32.mrb[0].mxu0
  %v722 = vadd.f32 0.0, %v721
  %v723 = vpop.f32.mrb[0].mxu0
  %724 = vmatprep.mubr.bf16.mxu0 %v355
  %725 = vmatmul.mubr.bf16.gmra.mrb[0].mxu0 %v354
  %v726 = vpop.f32.mrb[0].mxu0
  %v727 = vadd.f32 0.0, %v726
  %v728 = vpop.f32.mrb[0].mxu0
  %v729 = vpop.f32.mrb[0].mxu0
  %v730 = vadd.f32 0.0, %v729
  %v731 = vpop.f32.mrb[0].mxu0
  %732 = vdwg.mxu0
  %733 = vmatprep.subr.bf16.mxu0 0
  %734 = vmatpush1.bf16.msra.mxu0 %v481
  %735 = vmatprep.subr.bf16.mxu0 0
  %736 = vmatpush1.bf16.msra.mxu0 %v482
  %737 = vmatprep.subr.bf16.mxu0 0
  %738 = vmatpush1.bf16.msra.mxu0 0
  %739 = vmatprep.subr.bf16.mxu0 0
  %740 = vmatpush1.bf16.msra.mxu0 0
  %741 = vmatprep.subr.bf16.mxu0 0
  %742 = vmatpush1.bf16.msra.mxu0 0
  %743 = vmatprep.subr.bf16.mxu0 0
  %744 = vmatpush1.bf16.msra.mxu0 0
  %745 = vmatprep.subr.bf16.mxu0 0
  %746 = vmatpush1.bf16.msra.mxu0 0
  %747 = vmatprep.subr.bf16.mxu0 0
  %748 = vmatpush1.bf16.msra.mxu0 0
  %749 = vmatprep.subr.bf16.mxu0 0
  %750 = vmatpush1.bf16.msra.mxu0 0
  %751 = vmatprep.subr.bf16.mxu0 0
  %752 = vmatpush1.bf16.msra.mxu0 0
  %753 = vmatprep.subr.bf16.mxu0 0
  %754 = vmatpush1.bf16.msra.mxu0 0
  %755 = vmatprep.subr.bf16.mxu0 0
  %756 = vmatpush1.bf16.msra.mxu0 0
  %757 = vmatprep.subr.bf16.mxu0 0
  %758 = vmatpush1.bf16.msra.mxu0 0
  %759 = vmatprep.subr.bf16.mxu0 0
  %760 = vmatpush1.bf16.msra.mxu0 0
  %761 = vmatprep.subr.bf16.mxu0 0
  %762 = vmatpush1.bf16.msra.mxu0 0
  %763 = vmatprep.subr.bf16.mxu0 0
  %764 = vmatpush1.bf16.msra.mxu0 0
  %765 = vmatprep.mubr.bf16.mxu0 0
  %766 = vmatmul.mubr.bf16.gmra.mrb[0].mxu0 %v503
  %v767 = vpop.f32.mrb[0].mxu0
  %v768 = vadd.f32 %v591, %v767
  %v769 = vpop.f32.mrb[0].mxu0
  %v770 = vpop.f32.mrb[0].mxu0
  %v771 = vadd.f32 %v594, %v770
  %v772 = vpop.f32.mrb[0].mxu0
  %773 = vmatprep.mubr.bf16.mxu0 0
  %774 = vmatmul.mubr.bf16.gmra.mrb[0].mxu0 %v506
  %v775 = vpop.f32.mrb[0].mxu0
  %v776 = vadd.f32 %v599, %v775
  %v777 = vpop.f32.mrb[0].mxu0
  %v778 = vpop.f32.mrb[0].mxu0
  %v779 = vadd.f32 %v602, %v778
  %v780 = vpop.f32.mrb[0].mxu0
  %781 = vmatprep.mubr.bf16.mxu0 0
  %782 = vmatmul.mubr.bf16.gmra.mrb[0].mxu0 %v509
  %v783 = vpop.f32.mrb[0].mxu0
  %v784 = vadd.f32 %v607, %v783
  %v785 = vpop.f32.mrb[0].mxu0
  %v786 = vpop.f32.mrb[0].mxu0
  %v787 = vadd.f32 %v610, %v786
  %v788 = vpop.f32.mrb[0].mxu0
  %789 = vmatprep.mubr.bf16.mxu0 0
  %790 = vmatmul.mubr.bf16.gmra.mrb[0].mxu0 %v512
  %v791 = vpop.f32.mrb[0].mxu0
  %v792 = vadd.f32 %v615, %v791
  %v793 = vpop.f32.mrb[0].mxu0
  %v794 = vpop.f32.mrb[0].mxu0
  %v795 = vadd.f32 %v618, %v794
  %v796 = vpop.f32.mrb[0].mxu0
  %797 = vmatprep.mubr.bf16.mxu0 0
  %798 = vmatmul.mubr.bf16.gmra.mrb[0].mxu0 %v515
  %v799 = vpop.f32.mrb[0].mxu0
  %v800 = vadd.f32 %v623, %v799
  %v801 = vpop.f32.mrb[0].mxu0
  %v802 = vpop.f32.mrb[0].mxu0
  %v803 = vadd.f32 %v626, %v802
  %v804 = vpop.f32.mrb[0].mxu0
  %805 = vmatprep.mubr.bf16.mxu0 0
  %806 = vmatmul.mubr.bf16.gmra.mrb[0].mxu0 %v518
  %v807 = vpop.f32.mrb[0].mxu0
  %v808 = vadd.f32 %v631, %v807
  %v809 = vpop.f32.mrb[0].mxu0
  %v810 = vpop.f32.mrb[0].mxu0
  %v811 = vadd.f32 %v634, %v810
  %v812 = vpop.f32.mrb[0].mxu0
  %813 = vmatprep.mubr.bf16.mxu0 0
  %814 = vmatmul.mubr.bf16.gmra.mrb[0].mxu0 %v521
  %v815 = vpop.f32.mrb[0].mxu0
  %v816 = vadd.f32 %v639, %v815
  %v817 = vpop.f32.mrb[0].mxu0
  %v818 = vpop.f32.mrb[0].mxu0
  %v819 = vadd.f32 %v642, %v818
  %v820 = vpop.f32.mrb[0].mxu0
  %821 = vmatprep.mubr.bf16.mxu0 0
  %822 = vmatmul.mubr.bf16.gmra.mrb[0].mxu0 %v524
  %v823 = vpop.f32.mrb[0].mxu0
  %v824 = vadd.f32 %v647, %v823
  %v825 = vpop.f32.mrb[0].mxu0
  %v826 = vpop.f32.mrb[0].mxu0
  %v827 = vadd.f32 %v650, %v826
  %v828 = vpop.f32.mrb[0].mxu0
  %829 = vmatprep.mubr.bf16.mxu0 0
  %830 = vmatmul.mubr.bf16.gmra.mrb[0].mxu0 %v527
  %v831 = vpop.f32.mrb[0].mxu0
  %v832 = vadd.f32 %v655, %v831
  %v833 = vpop.f32.mrb[0].mxu0
  %v834 = vpop.f32.mrb[0].mxu0
  %v835 = vadd.f32 %v658, %v834
  %v836 = vpop.f32.mrb[0].mxu0
  %837 = vmatprep.mubr.bf16.mxu0 0
  %838 = vmatmul.mubr.bf16.gmra.mrb[0].mxu0 %v530
  %v839 = vpop.f32.mrb[0].mxu0
  %v840 = vadd.f32 %v663, %v839
  %v841 = vpop.f32.mrb[0].mxu0
  %v842 = vpop.f32.mrb[0].mxu0
  %v843 = vadd.f32 %v666, %v842
  %v844 = vpop.f32.mrb[0].mxu0
  %845 = vmatprep.mubr.bf16.mxu0 0
  %846 = vmatmul.mubr.bf16.gmra.mrb[0].mxu0 %v533
  %v847 = vpop.f32.mrb[0].mxu0
  %v848 = vadd.f32 %v671, %v847
  %v849 = vpop.f32.mrb[0].mxu0
  %v850 = vpop.f32.mrb[0].mxu0
  %v851 = vadd.f32 %v674, %v850
  %v852 = vpop.f32.mrb[0].mxu0
  %853 = vmatprep.mubr.bf16.mxu0 0
  %854 = vmatmul.mubr.bf16.gmra.mrb[0].mxu0 %v536
  %v855 = vpop.f32.mrb[0].mxu0
  %v856 = vadd.f32 %v679, %v855
  %v857 = vpop.f32.mrb[0].mxu0
  %v858 = vpop.f32.mrb[0].mxu0
  %v859 = vadd.f32 %v682, %v858
  %v860 = vpop.f32.mrb[0].mxu0
  %861 = vmatprep.mubr.bf16.mxu0 0
  %862 = vmatmul.mubr.bf16.gmra.mrb[0].mxu0 %v539
  %v863 = vpop.f32.mrb[0].mxu0
  %v864 = vadd.f32 %v687, %v863
  %v865 = vpop.f32.mrb[0].mxu0
  %v866 = vpop.f32.mrb[0].mxu0
  %v867 = vadd.f32 %v690, %v866
  %v868 = vpop.f32.mrb[0].mxu0
  %869 = vmatprep.mubr.bf16.mxu0 0
  %870 = vmatmul.mubr.bf16.gmra.mrb[0].mxu0 %v542
  %v871 = vpop.f32.mrb[0].mxu0
  %v872 = vadd.f32 %v695, %v871
  %v873 = vpop.f32.mrb[0].mxu0
  %v874 = vpop.f32.mrb[0].mxu0
  %v875 = vadd.f32 %v698, %v874
  %v876 = vpop.f32.mrb[0].mxu0
  %877 = vmatprep.mubr.bf16.mxu0 0
  %878 = vmatmul.mubr.bf16.gmra.mrb[0].mxu0 %v545
  %v879 = vpop.f32.mrb[0].mxu0
  %v880 = vadd.f32 %v703, %v879
  %v881 = vpop.f32.mrb[0].mxu0
  %v882 = vpop.f32.mrb[0].mxu0
  %v883 = vadd.f32 %v706, %v882
  %v884 = vpop.f32.mrb[0].mxu0
  %885 = vmatprep.mubr.bf16.mxu0 0
  %886 = vmatmul.mubr.bf16.gmra.mrb[0].mxu0 %v548
  %v887 = vpop.f32.mrb[0].mxu0
  %v888 = vadd.f32 %v711, %v887
  %v889 = vpop.f32.mrb[0].mxu0
  %v890 = vpop.f32.mrb[0].mxu0
  %v891 = vadd.f32 %v714, %v890
  %v892 = vpop.f32.mrb[0].mxu0
  %893 = vmatprep.mubr.bf16.mxu0 0
  %894 = vmatmul.mubr.bf16.gmra.mrb[0].mxu0 %v551
  %v895 = vpop.f32.mrb[0].mxu0
  %v896 = vadd.f32 %v719, %v895
  %v897 = vpop.f32.mrb[0].mxu0
  %v898 = vpop.f32.mrb[0].mxu0
  %v899 = vadd.f32 %v722, %v898
  %v900 = vpop.f32.mrb[0].mxu0
  %901 = vmatprep.mubr.bf16.mxu0 0
  %902 = vmatmul.mubr.bf16.gmra.mrb[0].mxu0 %v554
  %v903 = vpop.f32.mrb[0].mxu0
  %v904 = vadd.f32 %v727, %v903
  %v905 = vpop.f32.mrb[0].mxu0
  %v906 = vpop.f32.mrb[0].mxu0
  %v907 = vadd.f32 %v730, %v906
  %v908 = vpop.f32.mrb[0].mxu0
  %909 = vdwg.mxu0
  %v910 = vmax.f32 %v768, %v803
  %v911 = vmax.f32 %v771, %v808
  %v912 = vmax.f32 %v776, %v811
  %v913 = vmax.f32 %v779, %v816
  %v914 = vmax.f32 %v784, %v819
  %v915 = vmax.f32 %v787, %v824
  %v916 = vmax.f32 %v792, %v827
  %v917 = vmax.f32 %v795, %v832
  %v918 = vmax.f32 %v800, %v835
  %v919 = vmax.f32 %v840, %v875
  %v920 = vmax.f32 %v843, %v880
  %v921 = vmax.f32 %v848, %v883
  %v922 = vmax.f32 %v851, %v888
  %v923 = vmax.f32 %v856, %v891
  %v924 = vmax.f32 %v859, %v896
  %v925 = vmax.f32 %v864, %v899
  %v926 = vmax.f32 %v867, %v904
  %v927 = vmax.f32 %v872, %v907
  %v928 = vmax.f32 %v910, %v919
  %v929 = vmax.f32 %v911, %v920
  %v930 = vmax.f32 %v912, %v921
  %v931 = vmax.f32 %v913, %v922
  %v932 = vmax.f32 %v914, %v923
  %v933 = vmax.f32 %v915, %v924
  %v934 = vmax.f32 %v916, %v925
  %v935 = vmax.f32 %v917, %v926
  %v936 = vmax.f32 %v918, %v927
  %v937 = vld [vmem:[%s2] sm:$0x1]
  %v939 = vlaneseq
  %v940 = vshrl.u32 %v939, 7
  %v941 = vsub.s32 0, %v940
  %v942 = vrot.slane %v937, %v941
  %v944 = vadd.f32 %v928, %v942
  %v945 = vadd.f32 %v929, %v942
  %v946 = vadd.f32 %v930, %v942
  %v947 = vadd.f32 %v931, %v942
  %v948 = vadd.f32 %v932, %v942
  %v949 = vadd.f32 %v933, %v942
  %v950 = vadd.f32 %v934, %v942
  %v951 = vadd.f32 %v935, %v942
  %v952 = vadd.f32 %v936, %v942
  %v953 = vmax.f32 %v944, 0.0
  %v954 = vmax.f32 %v945, 0.0
  %v955 = vmax.f32 %v946, 0.0
  %v956 = vmax.f32 %v947, 0.0
  %v957 = vmax.f32 %v948, 0.0
  %v958 = vmax.f32 %v949, 0.0
  %v959 = vmax.f32 %v950, 0.0
  %v960 = vmax.f32 %v951, 0.0
  %v961 = vmax.f32 %v952, 0.0
  %v962 = vpack.c.bf16 %v954, %v953
  %v963 = vpack.c.bf16 %v956, %v955
  %v964 = vpack.c.bf16 %v958, %v957
  %v965 = vpack.c.bf16 %v960, %v959
  %v966 = vpack.c.bf16 %v961, %v961
  %v972 = vunpack.c.l.b16 %v962
  %v973 = vunpack.c.h.b16 %v962
  %v974 = vunpack.c.l.b16 %v963
  %v975 = vunpack.c.h.b16 %v963
  %v976 = vunpack.c.l.b16 %v964
  %v977 = vunpack.c.h.b16 %v964
  %v978 = vunpack.c.l.b16 %v965
  %v979 = vunpack.c.h.b16 %v965
  %v980 = vunpack.c.l.b16 %v966
  %v981 = vpack.c.b16 %v972, %v972
  %v982 = vpack.c.b16 %v973, %v973
  %v983 = vpack.c.b16 %v974, %v974
  %v984 = vpack.c.b16 %v975, %v975
  %v985 = vpack.c.b16 %v976, %v976
  %v986 = vpack.c.b16 %v977, %v977
  %v987 = vpack.c.b16 %v978, %v978
  %v988 = vpack.c.b16 %v979, %v979
  %v989 = vpack.c.b16 %v980, %v980
  %999 = vst [vmem:[%s3] sm:$0xf] %v981
  %1000 = vst [vmem:[%s3 + $0x4] sm:$0xf] %v982
  %1001 = vst [vmem:[%s3 + $0x8] sm:$0xf] %v983
  %1002 = vst [vmem:[%s3 + $0xc] sm:$0xf] %v984
  %1003 = vst [vmem:[%s3 + $0x10] sm:$0xf] %v985
  %1004 = vst [vmem:[%s3 + $0x14] sm:$0xf] %v986
  %1005 = vst [vmem:[%s3 + $0x18] sm:$0xf] %v987
  %1006 = vst [vmem:[%s3 + $0x1c] sm:$0xf] %v988
  %1007 = vst [vmem:[%s3 + $0x20] sm:$0xf] %v989
  // Predicated region
  $region14: #{model_vad_forward.4} parent=0 // pred_check
    _
  $region15: #{model_vad_forward.4} parent=0 // pred_check_branch
    %1009 = sbr.rel (0) target = $region17
  $region16: #{model_vad_forward.4} parent=0 // pred_region
    _
  $region17: #{model_vad_forward.4} parent=0 // pred_fallthru
    _
  // Predicated region
  $region18: #{model_vad_forward.4} parent=0 // pred_check
    _
  $region19: #{model_vad_forward.4} parent=0 // pred_check_branch
    %1011 = sbr.rel (0) target = $region21
  $region20: #{model_vad_forward.4} parent=0 // pred_region
    _
  $region21: #{model_vad_forward.4} parent=0 // pred_fallthru
    _

// kernel: model_vad_forward.5
$region0: #{model_vad_forward.5}
  #allocation0 [shape = 'u32[]', space=smem, size = 0x4, offset = 0x4, fixed_abs, tag = 'smem constant byte address 0x4 - core index']
  #allocation1 [shape = 'u32[144,128]{1,0:T(1,128)}', space=vmem, size = 0x12000, scoped, tag = 'internal scratch']
  #allocation2 [shape = 'f32[64,2,512]{2,1,0:T(2,128)}', space=vmem, size = 0x40000, scoped, tag = 'scratch operand']
  #allocation3 [shape = 'f32[64,2,512]{2,1,0:T(2,128)}', space=vmem, size = 0x40000, scoped, tag = 'scratch operand']
  %s0 = inlined_call_operand.vmem [shape: bf16[4608,2], index: 0, kind: input, shape index: {}]
  %s1 = inlined_call_operand.vmem [shape: bf16[64,4608], index: 1, kind: input, shape index: {}]
  %s2 = inlined_call_operand.vmem [shape: f32[64,1], index: 2, kind: input, shape index: {}]
  %s3 = inlined_call_operand.vmem [shape: f32[2,1,512], index: 3, kind: input, shape index: {}]
  %s4 = inlined_call_operand.vmem [shape: f32[2,1,512], index: 4, kind: input, shape index: {}]
  %s5 = inlined_call_operand.vmem [shape: bf16[128,512], index: 5, kind: input, shape index: {}]
  %s6 = inlined_call_operand.vmem [shape: bf16[128,512], index: 6, kind: input, shape index: {}]
  %s7 = inlined_call_operand.vmem [shape: f32[256,2], index: 7, kind: input, shape index: {}]
  %s8 = inlined_call_operand.vmem [shape: f32[1,2], index: 8, kind: input, shape index: {}]
  %s9 = inlined_call_operand.hbm [shape: f32[2,2], index: 9, kind: output, shape index: {}]
  %s10 = sld [smem:[#allocation0]]
  $region53: #{model_vad_forward.5} parent=0
    _
  %s12 = ssub.s32 1, %s10
  %s13 = scalar_select 0, %s12, %s10
  $region1: #{model_vad_forward.5} parent=0
    #allocation4 [shape = 'u8[1024]{0}', space=vmem, size = 0x400, scoped, tag = 'output window, operand 0, single buffered']
    #allocation5 [shape = 's32[1]{0}', space=sflag, size = 0x4, scoped, tag = 'scoped memory for model_vad_forward.5']
    %14 = vsyncpa [#allocation5], 0
    // Predicated region
    $region2: #{model_vad_forward.5} parent=1 // pred_check
      _
    $region3: #{model_vad_forward.5} parent=1 // pred_check_branch
      %16 = sbr.rel (0) target = $region5
    $region4: #{model_vad_forward.5} parent=1 // pred_region
      _
    $region5: #{model_vad_forward.5} parent=1 // pred_fallthru
      _
    // Predicated region
    $region6: #{model_vad_forward.5} parent=1 // pred_check
      _
    $region7: #{model_vad_forward.5} parent=1 // pred_check_branch
      %18 = sbr.rel (0) target = $region9
    $region8: #{model_vad_forward.5} parent=1 // pred_region
      _
    $region9: #{model_vad_forward.5} parent=1 // pred_fallthru
      _
    // Predicated region
    $region10: #{model_vad_forward.5} parent=1 // pred_check
      _
    $region11: #{model_vad_forward.5} parent=1 // pred_check_branch
      %20 = sbr.rel (0) target = $region13
    $region12: #{model_vad_forward.5} parent=1 // pred_region
      _
    $region13: #{model_vad_forward.5} parent=1 // pred_fallthru
      _
    // Predicated region
    $region14: #{model_vad_forward.5} parent=1 // pred_check
      _
    $region15: #{model_vad_forward.5} parent=1 // pred_check_branch
      %22 = sbr.rel (0) target = $region17
    $region16: #{model_vad_forward.5} parent=1 // pred_region
      _
    $region17: #{model_vad_forward.5} parent=1 // pred_fallthru
      _
    // Predicated region
    $region18: #{model_vad_forward.5} parent=1 // pred_check
      _
    $region19: #{model_vad_forward.5} parent=1 // pred_check_branch
      %24 = sbr.rel (0) target = $region21
    $region20: #{model_vad_forward.5} parent=1 // pred_region
      _
    $region21: #{model_vad_forward.5} parent=1 // pred_fallthru
      _
    // Predicated region
    $region22: #{model_vad_forward.5} parent=1 // pred_check
      _
    $region23: #{model_vad_forward.5} parent=1 // pred_check_branch
      %26 = sbr.rel (0) target = $region25
    $region24: #{model_vad_forward.5} parent=1 // pred_region
      _
    $region25: #{model_vad_forward.5} parent=1 // pred_fallthru
      _
    // Predicated region
    $region26: #{model_vad_forward.5} parent=1 // pred_check
      _
    $region27: #{model_vad_forward.5} parent=1 // pred_check_branch
      %28 = sbr.rel (0) target = $region29
    $region28: #{model_vad_forward.5} parent=1 // pred_region
      _
    $region29: #{model_vad_forward.5} parent=1 // pred_fallthru
      _
    // Predicated region
    $region30: #{model_vad_forward.5} parent=1 // pred_check
      _
    $region31: #{model_vad_forward.5} parent=1 // pred_check_branch
      %30 = sbr.rel (0) target = $region33
    $region32: #{model_vad_forward.5} parent=1 // pred_region
      _
    $region33: #{model_vad_forward.5} parent=1 // pred_fallthru
      _
    // Predicated region
    $region34: #{model_vad_forward.5} parent=1 // pred_check
      _
    $region35: #{model_vad_forward.5} parent=1 // pred_check_branch
      %32 = sbr.rel (0) target = $region37
    $region36: #{model_vad_forward.5} parent=1 // pred_region
      _
    $region37: #{model_vad_forward.5} parent=1 // pred_fallthru
      _
    %v34 = vld [vmem:[%s1] sm:$0xff]
    %v35 = vld [vmem:[%s1 + $0x8] sm:$0xff]
    %v36 = vld [vmem:[%s1 + $0x10] sm:$0xff]
    %v37 = vld [vmem:[%s1 + $0x18] sm:$0xff]
    %v38 = vld [vmem:[%s1 + $0x20] sm:$0xff]
    %v39 = vld [vmem:[%s1 + $0x28] sm:$0xff]
    %v40 = vld [vmem:[%s1 + $0x30] sm:$0xff]
    %v41 = vld [vmem:[%s1 + $0x38] sm:$0xff]
    %v42 = vld [vmem:[%s1 + $0x40] sm:$0xff]
    %v43 = vld [vmem:[%s1 + $0x48] sm:$0xff]
    %v44 = vld [vmem:[%s1 + $0x50] sm:$0xff]
    %v45 = vld [vmem:[%s1 + $0x58] sm:$0xff]
    %v46 = vld [vmem:[%s1 + $0x60] sm:$0xff]
    %v47 = vld [vmem:[%s1 + $0x68] sm:$0xff]
    %v48 = vld [vmem:[%s1 + $0x70] sm:$0xff]
    %v49 = vld [vmem:[%s1 + $0x78] sm:$0xff]
    %v50 = vld [vmem:[%s1 + $0x80] sm:$0xff]
    %v51 = vld [vmem:[%s1 + $0x88] sm:$0xff]
    %v52 = vld [vmem:[%s1 + $0x90] sm:$0xff]
    %v53 = vld [vmem:[%s1 + $0x98] sm:$0xff]
    %v54 = vld [vmem:[%s1 + $0xa0] sm:$0xff]
    %v55 = vld [vmem:[%s1 + $0xa8] sm:$0xff]
    %v56 = vld [vmem:[%s1 + $0xb0] sm:$0xff]
    %v57 = vld [vmem:[%s1 + $0xb8] sm:$0xff]
    %v58 = vld [vmem:[%s1 + $0xc0] sm:$0xff]
    %v59 = vld [vmem:[%s1 + $0xc8] sm:$0xff]
    %v60 = vld [vmem:[%s1 + $0xd0] sm:$0xff]
    %v61 = vld [vmem:[%s1 + $0xd8] sm:$0xff]
    %v62 = vld [vmem:[%s1 + $0xe0] sm:$0xff]
    %v63 = vld [vmem:[%s1 + $0xe8] sm:$0xff]
    %v64 = vld [vmem:[%s1 + $0xf0] sm:$0xff]
    %v65 = vld [vmem:[%s1 + $0xf8] sm:$0xff]
    %v66 = vld [vmem:[%s1 + $0x100] sm:$0xff]
    %v67 = vld [vmem:[%s1 + $0x108] sm:$0xff]
    %v68 = vld [vmem:[%s1 + $0x110] sm:$0xff]
    %v69 = vld [vmem:[%s1 + $0x118] sm:$0xff]
    %v70 = vld [vmem:[%s1 + $0x120] sm:$0xff]
    %v71 = vld [vmem:[%s1 + $0x128] sm:$0xff]
    %v72 = vld [vmem:[%s1 + $0x130] sm:$0xff]
    %v73 = vld [vmem:[%s1 + $0x138] sm:$0xff]
    %v74 = vld [vmem:[%s1 + $0x140] sm:$0xff]
    %v75 = vld [vmem:[%s1 + $0x148] sm:$0xff]
    %v76 = vld [vmem:[%s1 + $0x150] sm:$0xff]
    %v77 = vld [vmem:[%s1 + $0x158] sm:$0xff]
    %v78 = vld [vmem:[%s1 + $0x160] sm:$0xff]
    %v79 = vld [vmem:[%s1 + $0x168] sm:$0xff]
    %v80 = vld [vmem:[%s1 + $0x170] sm:$0xff]
    %v81 = vld [vmem:[%s1 + $0x178] sm:$0xff]
    %v82 = vld [vmem:[%s1 + $0x180] sm:$0xff]
    %v83 = vld [vmem:[%s1 + $0x188] sm:$0xff]
    %v84 = vld [vmem:[%s1 + $0x190] sm:$0xff]
    %v85 = vld [vmem:[%s1 + $0x198] sm:$0xff]
    %v86 = vld [vmem:[%s1 + $0x1a0] sm:$0xff]
    %v87 = vld [vmem:[%s1 + $0x1a8] sm:$0xff]
    %v88 = vld [vmem:[%s1 + $0x1b0] sm:$0xff]
    %v89 = vld [vmem:[%s1 + $0x1b8] sm:$0xff]
    %v90 = vld [vmem:[%s1 + $0x1c0] sm:$0xff]
    %v91 = vld [vmem:[%s1 + $0x1c8] sm:$0xff]
    %v92 = vld [vmem:[%s1 + $0x1d0] sm:$0xff]
    %v93 = vld [vmem:[%s1 + $0x1d8] sm:$0xff]
    %v94 = vld [vmem:[%s1 + $0x1e0] sm:$0xff]
    %v95 = vld [vmem:[%s1 + $0x1e8] sm:$0xff]
    %v96 = vld [vmem:[%s1 + $0x1f0] sm:$0xff]
    %v97 = vld [vmem:[%s1 + $0x1f8] sm:$0xff]
    %v98 = vld [vmem:[%s1 + $0x200] sm:$0xff]
    %v99 = vld [vmem:[%s1 + $0x208] sm:$0xff]
    %v100 = vld [vmem:[%s1 + $0x210] sm:$0xff]
    %v101 = vld [vmem:[%s1 + $0x218] sm:$0xff]
    %v102 = vld [vmem:[%s1 + $0x220] sm:$0xff]
    %v103 = vld [vmem:[%s1 + $0x228] sm:$0xff]
    %v104 = vld [vmem:[%s1 + $0x230] sm:$0xff]
    %v105 = vld [vmem:[%s1 + $0x238] sm:$0xff]
    %v106 = vld [vmem:[%s1 + $0x240] sm:$0xff]
    %v107 = vld [vmem:[%s1 + $0x248] sm:$0xff]
    %v108 = vld [vmem:[%s1 + $0x250] sm:$0xff]
    %v109 = vld [vmem:[%s1 + $0x258] sm:$0xff]
    %v110 = vld [vmem:[%s1 + $0x260] sm:$0xff]
    %v111 = vld [vmem:[%s1 + $0x268] sm:$0xff]
    %v112 = vld [vmem:[%s1 + $0x270] sm:$0xff]
    %v113 = vld [vmem:[%s1 + $0x278] sm:$0xff]
    %v114 = vld [vmem:[%s1 + $0x280] sm:$0xff]
    %v115 = vld [vmem:[%s1 + $0x288] sm:$0xff]
    %v116 = vld [vmem:[%s1 + $0x290] sm:$0xff]
    %v117 = vld [vmem:[%s1 + $0x298] sm:$0xff]
    %v118 = vld [vmem:[%s1 + $0x2a0] sm:$0xff]
    %v119 = vld [vmem:[%s1 + $0x2a8] sm:$0xff]
    %v120 = vld [vmem:[%s1 + $0x2b0] sm:$0xff]
    %v121 = vld [vmem:[%s1 + $0x2b8] sm:$0xff]
    %v122 = vld [vmem:[%s1 + $0x2c0] sm:$0xff]
    %v123 = vld [vmem:[%s1 + $0x2c8] sm:$0xff]
    %v124 = vld [vmem:[%s1 + $0x2d0] sm:$0xff]
    %v125 = vld [vmem:[%s1 + $0x2d8] sm:$0xff]
    %v126 = vld [vmem:[%s1 + $0x2e0] sm:$0xff]
    %v127 = vld [vmem:[%s1 + $0x2e8] sm:$0xff]
    %v128 = vld [vmem:[%s1 + $0x2f0] sm:$0xff]
    %v129 = vld [vmem:[%s1 + $0x2f8] sm:$0xff]
    %v130 = vld [vmem:[%s1 + $0x300] sm:$0xff]
    %v131 = vld [vmem:[%s1 + $0x308] sm:$0xff]
    %v132 = vld [vmem:[%s1 + $0x310] sm:$0xff]
    %v133 = vld [vmem:[%s1 + $0x318] sm:$0xff]
    %v134 = vld [vmem:[%s1 + $0x320] sm:$0xff]
    %v135 = vld [vmem:[%s1 + $0x328] sm:$0xff]
    %v136 = vld [vmem:[%s1 + $0x330] sm:$0xff]
    %v137 = vld [vmem:[%s1 + $0x338] sm:$0xff]
    %v138 = vld [vmem:[%s1 + $0x340] sm:$0xff]
    %v139 = vld [vmem:[%s1 + $0x348] sm:$0xff]
    %v140 = vld [vmem:[%s1 + $0x350] sm:$0xff]
    %v141 = vld [vmem:[%s1 + $0x358] sm:$0xff]
    %v142 = vld [vmem:[%s1 + $0x360] sm:$0xff]
    %v143 = vld [vmem:[%s1 + $0x368] sm:$0xff]
    %v144 = vld [vmem:[%s1 + $0x370] sm:$0xff]
    %v145 = vld [vmem:[%s1 + $0x378] sm:$0xff]
    %v146 = vld [vmem:[%s1 + $0x380] sm:$0xff]
    %v147 = vld [vmem:[%s1 + $0x388] sm:$0xff]
    %v148 = vld [vmem:[%s1 + $0x390] sm:$0xff]
    %v149 = vld [vmem:[%s1 + $0x398] sm:$0xff]
    %v150 = vld [vmem:[%s1 + $0x3a0] sm:$0xff]
    %v151 = vld [vmem:[%s1 + $0x3a8] sm:$0xff]
    %v152 = vld [vmem:[%s1 + $0x3b0] sm:$0xff]
    %v153 = vld [vmem:[%s1 + $0x3b8] sm:$0xff]
    %v154 = vld [vmem:[%s1 + $0x3c0] sm:$0xff]
    %v155 = vld [vmem:[%s1 + $0x3c8] sm:$0xff]
    %v156 = vld [vmem:[%s1 + $0x3d0] sm:$0xff]
    %v157 = vld [vmem:[%s1 + $0x3d8] sm:$0xff]
    %v158 = vld [vmem:[%s1 + $0x3e0] sm:$0xff]
    %v159 = vld [vmem:[%s1 + $0x3e8] sm:$0xff]
    %v160 = vld [vmem:[%s1 + $0x3f0] sm:$0xff]
    %v161 = vld [vmem:[%s1 + $0x3f8] sm:$0xff]
    %v162 = vld [vmem:[%s1 + $0x400] sm:$0xff]
    %v163 = vld [vmem:[%s1 + $0x408] sm:$0xff]
    %v164 = vld [vmem:[%s1 + $0x410] sm:$0xff]
    %v165 = vld [vmem:[%s1 + $0x418] sm:$0xff]
    %v166 = vld [vmem:[%s1 + $0x420] sm:$0xff]
    %v167 = vld [vmem:[%s1 + $0x428] sm:$0xff]
    %v168 = vld [vmem:[%s1 + $0x430] sm:$0xff]
    %v169 = vld [vmem:[%s1 + $0x438] sm:$0xff]
    %v170 = vld [vmem:[%s1 + $0x440] sm:$0xff]
    %v171 = vld [vmem:[%s1 + $0x448] sm:$0xff]
    %v172 = vld [vmem:[%s1 + $0x450] sm:$0xff]
    %v173 = vld [vmem:[%s1 + $0x458] sm:$0xff]
    %v174 = vld [vmem:[%s1 + $0x460] sm:$0xff]
    %v175 = vld [vmem:[%s1 + $0x468] sm:$0xff]
    %v176 = vld [vmem:[%s1 + $0x470] sm:$0xff]
    %v177 = vld [vmem:[%s1 + $0x478] sm:$0xff]
    %v178 = vld [vmem:[%s0] sm:$0xf]
    %v179 = vld [vmem:[%s0 + $0x4] sm:$0xf]
    %v180 = vld [vmem:[%s0 + $0x8] sm:$0xf]
    %v181 = vld [vmem:[%s0 + $0xc] sm:$0xf]
    %v182 = vld [vmem:[%s0 + $0x10] sm:$0xf]
    %v183 = vld [vmem:[%s0 + $0x14] sm:$0xf]
    %v184 = vld [vmem:[%s0 + $0x18] sm:$0xf]
    %v185 = vld [vmem:[%s0 + $0x1c] sm:$0xf]
    %v186 = vld [vmem:[%s0 + $0x20] sm:$0xf]
    %v187 = vld [vmem:[%s0 + $0x24] sm:$0xf]
    %v188 = vld [vmem:[%s0 + $0x28] sm:$0xf]
    %v189 = vld [vmem:[%s0 + $0x2c] sm:$0xf]
    %v190 = vld [vmem:[%s0 + $0x30] sm:$0xf]
    %v191 = vld [vmem:[%s0 + $0x34] sm:$0xf]
    %v192 = vld [vmem:[%s0 + $0x38] sm:$0xf]
    %v193 = vld [vmem:[%s0 + $0x3c] sm:$0xf]
    %v194 = vld [vmem:[%s0 + $0x40] sm:$0xf]
    %v195 = vld [vmem:[%s0 + $0x44] sm:$0xf]
    %v196 = vld [vmem:[%s0 + $0x48] sm:$0xf]
    %v197 = vld [vmem:[%s0 + $0x4c] sm:$0xf]
    %v198 = vld [vmem:[%s0 + $0x50] sm:$0xf]
    %v199 = vld [vmem:[%s0 + $0x54] sm:$0xf]
    %v200 = vld [vmem:[%s0 + $0x58] sm:$0xf]
    %v201 = vld [vmem:[%s0 + $0x5c] sm:$0xf]
    %v202 = vld [vmem:[%s0 + $0x60] sm:$0xf]
    %v203 = vld [vmem:[%s0 + $0x64] sm:$0xf]
    %v204 = vld [vmem:[%s0 + $0x68] sm:$0xf]
    %v205 = vld [vmem:[%s0 + $0x6c] sm:$0xf]
    %v206 = vld [vmem:[%s0 + $0x70] sm:$0xf]
    %v207 = vld [vmem:[%s0 + $0x74] sm:$0xf]
    %v208 = vld [vmem:[%s0 + $0x78] sm:$0xf]
    %v209 = vld [vmem:[%s0 + $0x7c] sm:$0xf]
    %v210 = vld [vmem:[%s0 + $0x80] sm:$0xf]
    %v211 = vld [vmem:[%s0 + $0x84] sm:$0xf]
    %v212 = vld [vmem:[%s0 + $0x88] sm:$0xf]
    %v213 = vld [vmem:[%s0 + $0x8c] sm:$0xf]
    %v214 = vld [vmem:[%s0 + $0x90] sm:$0xf]
    %v215 = vld [vmem:[%s0 + $0x94] sm:$0xf]
    %v216 = vld [vmem:[%s0 + $0x98] sm:$0xf]
    %v217 = vld [vmem:[%s0 + $0x9c] sm:$0xf]
    %v218 = vld [vmem:[%s0 + $0xa0] sm:$0xf]
    %v219 = vld [vmem:[%s0 + $0xa4] sm:$0xf]
    %v220 = vld [vmem:[%s0 + $0xa8] sm:$0xf]
    %v221 = vld [vmem:[%s0 + $0xac] sm:$0xf]
    %v222 = vld [vmem:[%s0 + $0xb0] sm:$0xf]
    %v223 = vld [vmem:[%s0 + $0xb4] sm:$0xf]
    %v224 = vld [vmem:[%s0 + $0xb8] sm:$0xf]
    %v225 = vld [vmem:[%s0 + $0xbc] sm:$0xf]
    %v226 = vld [vmem:[%s0 + $0xc0] sm:$0xf]
    %v227 = vld [vmem:[%s0 + $0xc4] sm:$0xf]
    %v228 = vld [vmem:[%s0 + $0xc8] sm:$0xf]
    %v229 = vld [vmem:[%s0 + $0xcc] sm:$0xf]
    %v230 = vld [vmem:[%s0 + $0xd0] sm:$0xf]
    %v231 = vld [vmem:[%s0 + $0xd4] sm:$0xf]
    %v232 = vld [vmem:[%s0 + $0xd8] sm:$0xf]
    %v233 = vld [vmem:[%s0 + $0xdc] sm:$0xf]
    %v234 = vld [vmem:[%s0 + $0xe0] sm:$0xf]
    %v235 = vld [vmem:[%s0 + $0xe4] sm:$0xf]
    %v236 = vld [vmem:[%s0 + $0xe8] sm:$0xf]
    %v237 = vld [vmem:[%s0 + $0xec] sm:$0xf]
    %v238 = vld [vmem:[%s0 + $0xf0] sm:$0xf]
    %v239 = vld [vmem:[%s0 + $0xf4] sm:$0xf]
    %v240 = vld [vmem:[%s0 + $0xf8] sm:$0xf]
    %v241 = vld [vmem:[%s0 + $0xfc] sm:$0xf]
    %v242 = vld [vmem:[%s0 + $0x100] sm:$0xf]
    %v243 = vld [vmem:[%s0 + $0x104] sm:$0xf]
    %v244 = vld [vmem:[%s0 + $0x108] sm:$0xf]
    %v245 = vld [vmem:[%s0 + $0x10c] sm:$0xf]
    %v246 = vld [vmem:[%s0 + $0x110] sm:$0xf]
    %v247 = vld [vmem:[%s0 + $0x114] sm:$0xf]
    %v248 = vld [vmem:[%s0 + $0x118] sm:$0xf]
    %v249 = vld [vmem:[%s0 + $0x11c] sm:$0xf]
    %v250 = vld [vmem:[%s0 + $0x120] sm:$0xf]
    %v251 = vld [vmem:[%s0 + $0x124] sm:$0xf]
    %v252 = vld [vmem:[%s0 + $0x128] sm:$0xf]
    %v253 = vld [vmem:[%s0 + $0x12c] sm:$0xf]
    %v254 = vld [vmem:[%s0 + $0x130] sm:$0xf]
    %v255 = vld [vmem:[%s0 + $0x134] sm:$0xf]
    %v256 = vld [vmem:[%s0 + $0x138] sm:$0xf]
    %v257 = vld [vmem:[%s0 + $0x13c] sm:$0xf]
    %v258 = vld [vmem:[%s0 + $0x140] sm:$0xf]
    %v259 = vld [vmem:[%s0 + $0x144] sm:$0xf]
    %v260 = vld [vmem:[%s0 + $0x148] sm:$0xf]
    %v261 = vld [vmem:[%s0 + $0x14c] sm:$0xf]
    %v262 = vld [vmem:[%s0 + $0x150] sm:$0xf]
    %v263 = vld [vmem:[%s0 + $0x154] sm:$0xf]
    %v264 = vld [vmem:[%s0 + $0x158] sm:$0xf]
    %v265 = vld [vmem:[%s0 + $0x15c] sm:$0xf]
    %v266 = vld [vmem:[%s0 + $0x160] sm:$0xf]
    %v267 = vld [vmem:[%s0 + $0x164] sm:$0xf]
    %v268 = vld [vmem:[%s0 + $0x168] sm:$0xf]
    %v269 = vld [vmem:[%s0 + $0x16c] sm:$0xf]
    %v270 = vld [vmem:[%s0 + $0x170] sm:$0xf]
    %v271 = vld [vmem:[%s0 + $0x174] sm:$0xf]
    %v272 = vld [vmem:[%s0 + $0x178] sm:$0xf]
    %v273 = vld [vmem:[%s0 + $0x17c] sm:$0xf]
    %v274 = vld [vmem:[%s0 + $0x180] sm:$0xf]
    %v275 = vld [vmem:[%s0 + $0x184] sm:$0xf]
    %v276 = vld [vmem:[%s0 + $0x188] sm:$0xf]
    %v277 = vld [vmem:[%s0 + $0x18c] sm:$0xf]
    %v278 = vld [vmem:[%s0 + $0x190] sm:$0xf]
    %v279 = vld [vmem:[%s0 + $0x194] sm:$0xf]
    %v280 = vld [vmem:[%s0 + $0x198] sm:$0xf]
    %v281 = vld [vmem:[%s0 + $0x19c] sm:$0xf]
    %v282 = vld [vmem:[%s0 + $0x1a0] sm:$0xf]
    %v283 = vld [vmem:[%s0 + $0x1a4] sm:$0xf]
    %v284 = vld [vmem:[%s0 + $0x1a8] sm:$0xf]
    %v285 = vld [vmem:[%s0 + $0x1ac] sm:$0xf]
    %v286 = vld [vmem:[%s0 + $0x1b0] sm:$0xf]
    %v287 = vld [vmem:[%s0 + $0x1b4] sm:$0xf]
    %v288 = vld [vmem:[%s0 + $0x1b8] sm:$0xf]
    %v289 = vld [vmem:[%s0 + $0x1bc] sm:$0xf]
    %v290 = vld [vmem:[%s0 + $0x1c0] sm:$0xf]
    %v291 = vld [vmem:[%s0 + $0x1c4] sm:$0xf]
    %v292 = vld [vmem:[%s0 + $0x1c8] sm:$0xf]
    %v293 = vld [vmem:[%s0 + $0x1cc] sm:$0xf]
    %v294 = vld [vmem:[%s0 + $0x1d0] sm:$0xf]
    %v295 = vld [vmem:[%s0 + $0x1d4] sm:$0xf]
    %v296 = vld [vmem:[%s0 + $0x1d8] sm:$0xf]
    %v297 = vld [vmem:[%s0 + $0x1dc] sm:$0xf]
    %v298 = vld [vmem:[%s0 + $0x1e0] sm:$0xf]
    %v299 = vld [vmem:[%s0 + $0x1e4] sm:$0xf]
    %v300 = vld [vmem:[%s0 + $0x1e8] sm:$0xf]
    %v301 = vld [vmem:[%s0 + $0x1ec] sm:$0xf]
    %v302 = vld [vmem:[%s0 + $0x1f0] sm:$0xf]
    %v303 = vld [vmem:[%s0 + $0x1f4] sm:$0xf]
    %v304 = vld [vmem:[%s0 + $0x1f8] sm:$0xf]
    %v305 = vld [vmem:[%s0 + $0x1fc] sm:$0xf]
    %v306 = vld [vmem:[%s0 + $0x200] sm:$0xf]
    %v307 = vld [vmem:[%s0 + $0x204] sm:$0xf]
    %v308 = vld [vmem:[%s0 + $0x208] sm:$0xf]
    %v309 = vld [vmem:[%s0 + $0x20c] sm:$0xf]
    %v310 = vld [vmem:[%s0 + $0x210] sm:$0xf]
    %v311 = vld [vmem:[%s0 + $0x214] sm:$0xf]
    %v312 = vld [vmem:[%s0 + $0x218] sm:$0xf]
    %v313 = vld [vmem:[%s0 + $0x21c] sm:$0xf]
    %v314 = vld [vmem:[%s0 + $0x220] sm:$0xf]
    %v315 = vld [vmem:[%s0 + $0x224] sm:$0xf]
    %v316 = vld [vmem:[%s0 + $0x228] sm:$0xf]
    %v317 = vld [vmem:[%s0 + $0x22c] sm:$0xf]
    %v318 = vld [vmem:[%s0 + $0x230] sm:$0xf]
    %v319 = vld [vmem:[%s0 + $0x234] sm:$0xf]
    %v320 = vld [vmem:[%s0 + $0x238] sm:$0xf]
    %v321 = vld [vmem:[%s0 + $0x23c] sm:$0xf]
    %v322 = vld [vmem:[%s0 + $0x240] sm:$0xf]
    %v323 = vld [vmem:[%s0 + $0x244] sm:$0xf]
    %v324 = vld [vmem:[%s0 + $0x248] sm:$0xf]
    %v325 = vld [vmem:[%s0 + $0x24c] sm:$0xf]
    %v326 = vld [vmem:[%s0 + $0x250] sm:$0xf]
    %v327 = vld [vmem:[%s0 + $0x254] sm:$0xf]
    %v328 = vld [vmem:[%s0 + $0x258] sm:$0xf]
    %v329 = vld [vmem:[%s0 + $0x25c] sm:$0xf]
    %v330 = vld [vmem:[%s0 + $0x260] sm:$0xf]
    %v331 = vld [vmem:[%s0 + $0x264] sm:$0xf]
    %v332 = vld [vmem:[%s0 + $0x268] sm:$0xf]
    %v333 = vld [vmem:[%s0 + $0x26c] sm:$0xf]
    %v334 = vld [vmem:[%s0 + $0x270] sm:$0xf]
    %v335 = vld [vmem:[%s0 + $0x274] sm:$0xf]
    %v336 = vld [vmem:[%s0 + $0x278] sm:$0xf]
    %v337 = vld [vmem:[%s0 + $0x27c] sm:$0xf]
    %v338 = vld [vmem:[%s0 + $0x280] sm:$0xf]
    %v339 = vld [vmem:[%s0 + $0x284] sm:$0xf]
    %v340 = vld [vmem:[%s0 + $0x288] sm:$0xf]
    %v341 = vld [vmem:[%s0 + $0x28c] sm:$0xf]
    %v342 = vld [vmem:[%s0 + $0x290] sm:$0xf]
    %v343 = vld [vmem:[%s0 + $0x294] sm:$0xf]
    %v344 = vld [vmem:[%s0 + $0x298] sm:$0xf]
    %v345 = vld [vmem:[%s0 + $0x29c] sm:$0xf]
    %v346 = vld [vmem:[%s0 + $0x2a0] sm:$0xf]
    %v347 = vld [vmem:[%s0 + $0x2a4] sm:$0xf]
    %v348 = vld [vmem:[%s0 + $0x2a8] sm:$0xf]
    %v349 = vld [vmem:[%s0 + $0x2ac] sm:$0xf]
    %v350 = vld [vmem:[%s0 + $0x2b0] sm:$0xf]
    %v351 = vld [vmem:[%s0 + $0x2b4] sm:$0xf]
    %v352 = vld [vmem:[%s0 + $0x2b8] sm:$0xf]
    %v353 = vld [vmem:[%s0 + $0x2bc] sm:$0xf]
    %v354 = vld [vmem:[%s0 + $0x2c0] sm:$0xf]
    %v355 = vld [vmem:[%s0 + $0x2c4] sm:$0xf]
    %v356 = vld [vmem:[%s0 + $0x2c8] sm:$0xf]
    %v357 = vld [vmem:[%s0 + $0x2cc] sm:$0xf]
    %v358 = vld [vmem:[%s0 + $0x2d0] sm:$0xf]
    %v359 = vld [vmem:[%s0 + $0x2d4] sm:$0xf]
    %v360 = vld [vmem:[%s0 + $0x2d8] sm:$0xf]
    %v361 = vld [vmem:[%s0 + $0x2dc] sm:$0xf]
    %v362 = vld [vmem:[%s0 + $0x2e0] sm:$0xf]
    %v363 = vld [vmem:[%s0 + $0x2e4] sm:$0xf]
    %v364 = vld [vmem:[%s0 + $0x2e8] sm:$0xf]
    %v365 = vld [vmem:[%s0 + $0x2ec] sm:$0xf]
    %v366 = vld [vmem:[%s0 + $0x2f0] sm:$0xf]
    %v367 = vld [vmem:[%s0 + $0x2f4] sm:$0xf]
    %v368 = vld [vmem:[%s0 + $0x2f8] sm:$0xf]
    %v369 = vld [vmem:[%s0 + $0x2fc] sm:$0xf]
    %v370 = vld [vmem:[%s0 + $0x300] sm:$0xf]
    %v371 = vld [vmem:[%s0 + $0x304] sm:$0xf]
    %v372 = vld [vmem:[%s0 + $0x308] sm:$0xf]
    %v373 = vld [vmem:[%s0 + $0x30c] sm:$0xf]
    %v374 = vld [vmem:[%s0 + $0x310] sm:$0xf]
    %v375 = vld [vmem:[%s0 + $0x314] sm:$0xf]
    %v376 = vld [vmem:[%s0 + $0x318] sm:$0xf]
    %v377 = vld [vmem:[%s0 + $0x31c] sm:$0xf]
    %v378 = vld [vmem:[%s0 + $0x320] sm:$0xf]
    %v379 = vld [vmem:[%s0 + $0x324] sm:$0xf]
    %v380 = vld [vmem:[%s0 + $0x328] sm:$0xf]
    %v381 = vld [vmem:[%s0 + $0x32c] sm:$0xf]
    %v382 = vld [vmem:[%s0 + $0x330] sm:$0xf]
    %v383 = vld [vmem:[%s0 + $0x334] sm:$0xf]
    %v384 = vld [vmem:[%s0 + $0x338] sm:$0xf]
    %v385 = vld [vmem:[%s0 + $0x33c] sm:$0xf]
    %v386 = vld [vmem:[%s0 + $0x340] sm:$0xf]
    %v387 = vld [vmem:[%s0 + $0x344] sm:$0xf]
    %v388 = vld [vmem:[%s0 + $0x348] sm:$0xf]
    %v389 = vld [vmem:[%s0 + $0x34c] sm:$0xf]
    %v390 = vld [vmem:[%s0 + $0x350] sm:$0xf]
    %v391 = vld [vmem:[%s0 + $0x354] sm:$0xf]
    %v392 = vld [vmem:[%s0 + $0x358] sm:$0xf]
    %v393 = vld [vmem:[%s0 + $0x35c] sm:$0xf]
    %v394 = vld [vmem:[%s0 + $0x360] sm:$0xf]
    %v395 = vld [vmem:[%s0 + $0x364] sm:$0xf]
    %v396 = vld [vmem:[%s0 + $0x368] sm:$0xf]
    %v397 = vld [vmem:[%s0 + $0x36c] sm:$0xf]
    %v398 = vld [vmem:[%s0 + $0x370] sm:$0xf]
    %v399 = vld [vmem:[%s0 + $0x374] sm:$0xf]
    %v400 = vld [vmem:[%s0 + $0x378] sm:$0xf]
    %v401 = vld [vmem:[%s0 + $0x37c] sm:$0xf]
    %v402 = vld [vmem:[%s0 + $0x380] sm:$0xf]
    %v403 = vld [vmem:[%s0 + $0x384] sm:$0xf]
    %v404 = vld [vmem:[%s0 + $0x388] sm:$0xf]
    %v405 = vld [vmem:[%s0 + $0x38c] sm:$0xf]
    %v406 = vld [vmem:[%s0 + $0x390] sm:$0xf]
    %v407 = vld [vmem:[%s0 + $0x394] sm:$0xf]
    %v408 = vld [vmem:[%s0 + $0x398] sm:$0xf]
    %v409 = vld [vmem:[%s0 + $0x39c] sm:$0xf]
    %v410 = vld [vmem:[%s0 + $0x3a0] sm:$0xf]
    %v411 = vld [vmem:[%s0 + $0x3a4] sm:$0xf]
    %v412 = vld [vmem:[%s0 + $0x3a8] sm:$0xf]
    %v413 = vld [vmem:[%s0 + $0x3ac] sm:$0xf]
    %v414 = vld [vmem:[%s0 + $0x3b0] sm:$0xf]
    %v415 = vld [vmem:[%s0 + $0x3b4] sm:$0xf]
    %v416 = vld [vmem:[%s0 + $0x3b8] sm:$0xf]
    %v417 = vld [vmem:[%s0 + $0x3bc] sm:$0xf]
    %v418 = vld [vmem:[%s0 + $0x3c0] sm:$0xf]
    %v419 = vld [vmem:[%s0 + $0x3c4] sm:$0xf]
    %v420 = vld [vmem:[%s0 + $0x3c8] sm:$0xf]
    %v421 = vld [vmem:[%s0 + $0x3cc] sm:$0xf]
    %v422 = vld [vmem:[%s0 + $0x3d0] sm:$0xf]
    %v423 = vld [vmem:[%s0 + $0x3d4] sm:$0xf]
    %v424 = vld [vmem:[%s0 + $0x3d8] sm:$0xf]
    %v425 = vld [vmem:[%s0 + $0x3dc] sm:$0xf]
    %v426 = vld [vmem:[%s0 + $0x3e0] sm:$0xf]
    %v427 = vld [vmem:[%s0 + $0x3e4] sm:$0xf]
    %v428 = vld [vmem:[%s0 + $0x3e8] sm:$0xf]
    %v429 = vld [vmem:[%s0 + $0x3ec] sm:$0xf]
    %v430 = vld [vmem:[%s0 + $0x3f0] sm:$0xf]
    %v431 = vld [vmem:[%s0 + $0x3f4] sm:$0xf]
    %v432 = vld [vmem:[%s0 + $0x3f8] sm:$0xf]
    %v433 = vld [vmem:[%s0 + $0x3fc] sm:$0xf]
    %v434 = vld [vmem:[%s0 + $0x400] sm:$0xf]
    %v435 = vld [vmem:[%s0 + $0x404] sm:$0xf]
    %v436 = vld [vmem:[%s0 + $0x408] sm:$0xf]
    %v437 = vld [vmem:[%s0 + $0x40c] sm:$0xf]
    %v438 = vld [vmem:[%s0 + $0x410] sm:$0xf]
    %v439 = vld [vmem:[%s0 + $0x414] sm:$0xf]
    %v440 = vld [vmem:[%s0 + $0x418] sm:$0xf]
    %v441 = vld [vmem:[%s0 + $0x41c] sm:$0xf]
    %v442 = vld [vmem:[%s0 + $0x420] sm:$0xf]
    %v443 = vld [vmem:[%s0 + $0x424] sm:$0xf]
    %v444 = vld [vmem:[%s0 + $0x428] sm:$0xf]
    %v445 = vld [vmem:[%s0 + $0x42c] sm:$0xf]
    %v446 = vld [vmem:[%s0 + $0x430] sm:$0xf]
    %v447 = vld [vmem:[%s0 + $0x434] sm:$0xf]
    %v448 = vld [vmem:[%s0 + $0x438] sm:$0xf]
    %v449 = vld [vmem:[%s0 + $0x43c] sm:$0xf]
    %v450 = vld [vmem:[%s0 + $0x440] sm:$0xf]
    %v451 = vld [vmem:[%s0 + $0x444] sm:$0xf]
    %v452 = vld [vmem:[%s0 + $0x448] sm:$0xf]
    %v453 = vld [vmem:[%s0 + $0x44c] sm:$0xf]
    %v454 = vld [vmem:[%s0 + $0x450] sm:$0xf]
    %v455 = vld [vmem:[%s0 + $0x454] sm:$0xf]
    %v456 = vld [vmem:[%s0 + $0x458] sm:$0xf]
    %v457 = vld [vmem:[%s0 + $0x45c] sm:$0xf]
    %v458 = vld [vmem:[%s0 + $0x460] sm:$0xf]
    %v459 = vld [vmem:[%s0 + $0x464] sm:$0xf]
    %v460 = vld [vmem:[%s0 + $0x468] sm:$0xf]
    %v461 = vld [vmem:[%s0 + $0x46c] sm:$0xf]
    %v462 = vld [vmem:[%s0 + $0x470] sm:$0xf]
    %v463 = vld [vmem:[%s0 + $0x474] sm:$0xf]
    %v464 = vld [vmem:[%s0 + $0x478] sm:$0xf]
    %v465 = vld [vmem:[%s0 + $0x47c] sm:$0xf]
    %v466 = vld [vmem:[%s0 + $0x480] sm:$0xf]
    %v467 = vld [vmem:[%s0 + $0x484] sm:$0xf]
    %v468 = vld [vmem:[%s0 + $0x488] sm:$0xf]
    %v469 = vld [vmem:[%s0 + $0x48c] sm:$0xf]
    %v470 = vld [vmem:[%s0 + $0x490] sm:$0xf]
    %v471 = vld [vmem:[%s0 + $0x494] sm:$0xf]
    %v472 = vld [vmem:[%s0 + $0x498] sm:$0xf]
    %v473 = vld [vmem:[%s0 + $0x49c] sm:$0xf]
    %v474 = vld [vmem:[%s0 + $0x4a0] sm:$0xf]
    %v475 = vld [vmem:[%s0 + $0x4a4] sm:$0xf]
    %v476 = vld [vmem:[%s0 + $0x4a8] sm:$0xf]
    %v477 = vld [vmem:[%s0 + $0x4ac] sm:$0xf]
    %v478 = vld [vmem:[%s0 + $0x4b0] sm:$0xf]
    %v479 = vld [vmem:[%s0 + $0x4b4] sm:$0xf]
    %v480 = vld [vmem:[%s0 + $0x4b8] sm:$0xf]
    %v481 = vld [vmem:[%s0 + $0x4bc] sm:$0xf]
    %v482 = vld [vmem:[%s0 + $0x4c0] sm:$0xf]
    %v483 = vld [vmem:[%s0 + $0x4c4] sm:$0xf]
    %v484 = vld [vmem:[%s0 + $0x4c8] sm:$0xf]
    %v485 = vld [vmem:[%s0 + $0x4cc] sm:$0xf]
    %v486 = vld [vmem:[%s0 + $0x4d0] sm:$0xf]
    %v487 = vld [vmem:[%s0 + $0x4d4] sm:$0xf]
    %v488 = vld [vmem:[%s0 + $0x4d8] sm:$0xf]
    %v489 = vld [vmem:[%s0 + $0x4dc] sm:$0xf]
    %v490 = vld [vmem:[%s0 + $0x4e0] sm:$0xf]
    %v491 = vld [vmem:[%s0 + $0x4e4] sm:$0xf]
    %v492 = vld [vmem:[%s0 + $0x4e8] sm:$0xf]
    %v493 = vld [vmem:[%s0 + $0x4ec] sm:$0xf]
    %v494 = vld [vmem:[%s0 + $0x4f0] sm:$0xf]
    %v495 = vld [vmem:[%s0 + $0x4f4] sm:$0xf]
    %v496 = vld [vmem:[%s0 + $0x4f8] sm:$0xf]
    %v497 = vld [vmem:[%s0 + $0x4fc] sm:$0xf]
    %v498 = vld [vmem:[%s0 + $0x500] sm:$0xf]
    %v499 = vld [vmem:[%s0 + $0x504] sm:$0xf]
    %v500 = vld [vmem:[%s0 + $0x508] sm:$0xf]
    %v501 = vld [vmem:[%s0 + $0x50c] sm:$0xf]
    %v502 = vld [vmem:[%s0 + $0x510] sm:$0xf]
    %v503 = vld [vmem:[%s0 + $0x514] sm:$0xf]
    %v504 = vld [vmem:[%s0 + $0x518] sm:$0xf]
    %v505 = vld [vmem:[%s0 + $0x51c] sm:$0xf]
    %v506 = vld [vmem:[%s0 + $0x520] sm:$0xf]
    %v507 = vld [vmem:[%s0 + $0x524] sm:$0xf]
    %v508 = vld [vmem:[%s0 + $0x528] sm:$0xf]
    %v509 = vld [vmem:[%s0 + $0x52c] sm:$0xf]
    %v510 = vld [vmem:[%s0 + $0x530] sm:$0xf]
    %v511 = vld [vmem:[%s0 + $0x534] sm:$0xf]
    %v512 = vld [vmem:[%s0 + $0x538] sm:$0xf]
    %v513 = vld [vmem:[%s0 + $0x53c] sm:$0xf]
    %v514 = vld [vmem:[%s0 + $0x540] sm:$0xf]
    %v515 = vld [vmem:[%s0 + $0x544] sm:$0xf]
    %v516 = vld [vmem:[%s0 + $0x548] sm:$0xf]
    %v517 = vld [vmem:[%s0 + $0x54c] sm:$0xf]
    %v518 = vld [vmem:[%s0 + $0x550] sm:$0xf]
    %v519 = vld [vmem:[%s0 + $0x554] sm:$0xf]
    %v520 = vld [vmem:[%s0 + $0x558] sm:$0xf]
    %v521 = vld [vmem:[%s0 + $0x55c] sm:$0xf]
    %v522 = vld [vmem:[%s0 + $0x560] sm:$0xf]
    %v523 = vld [vmem:[%s0 + $0x564] sm:$0xf]
    %v524 = vld [vmem:[%s0 + $0x568] sm:$0xf]
    %v525 = vld [vmem:[%s0 + $0x56c] sm:$0xf]
    %v526 = vld [vmem:[%s0 + $0x570] sm:$0xf]
    %v527 = vld [vmem:[%s0 + $0x574] sm:$0xf]
    %v528 = vld [vmem:[%s0 + $0x578] sm:$0xf]
    %v529 = vld [vmem:[%s0 + $0x57c] sm:$0xf]
    %v530 = vld [vmem:[%s0 + $0x580] sm:$0xf]
    %v531 = vld [vmem:[%s0 + $0x584] sm:$0xf]
    %v532 = vld [vmem:[%s0 + $0x588] sm:$0xf]
    %v533 = vld [vmem:[%s0 + $0x58c] sm:$0xf]
    %v534 = vld [vmem:[%s0 + $0x590] sm:$0xf]
    %v535 = vld [vmem:[%s0 + $0x594] sm:$0xf]
    %v536 = vld [vmem:[%s0 + $0x598] sm:$0xf]
    %v537 = vld [vmem:[%s0 + $0x59c] sm:$0xf]
    %v538 = vld [vmem:[%s0 + $0x5a0] sm:$0xf]
    %v539 = vld [vmem:[%s0 + $0x5a4] sm:$0xf]
    %v540 = vld [vmem:[%s0 + $0x5a8] sm:$0xf]
    %v541 = vld [vmem:[%s0 + $0x5ac] sm:$0xf]
    %v542 = vld [vmem:[%s0 + $0x5b0] sm:$0xf]
    %v543 = vld [vmem:[%s0 + $0x5b4] sm:$0xf]
    %v544 = vld [vmem:[%s0 + $0x5b8] sm:$0xf]
    %v545 = vld [vmem:[%s0 + $0x5bc] sm:$0xf]
    %v546 = vld [vmem:[%s0 + $0x5c0] sm:$0xf]
    %v547 = vld [vmem:[%s0 + $0x5c4] sm:$0xf]
    %v548 = vld [vmem:[%s0 + $0x5c8] sm:$0xf]
    %v549 = vld [vmem:[%s0 + $0x5cc] sm:$0xf]
    %v550 = vld [vmem:[%s0 + $0x5d0] sm:$0xf]
    %v551 = vld [vmem:[%s0 + $0x5d4] sm:$0xf]
    %v552 = vld [vmem:[%s0 + $0x5d8] sm:$0xf]
    %v553 = vld [vmem:[%s0 + $0x5dc] sm:$0xf]
    %v554 = vld [vmem:[%s0 + $0x5e0] sm:$0xf]
    %v555 = vld [vmem:[%s0 + $0x5e4] sm:$0xf]
    %v556 = vld [vmem:[%s0 + $0x5e8] sm:$0xf]
    %v557 = vld [vmem:[%s0 + $0x5ec] sm:$0xf]
    %v558 = vld [vmem:[%s0 + $0x5f0] sm:$0xf]
    %v559 = vld [vmem:[%s0 + $0x5f4] sm:$0xf]
    %v560 = vld [vmem:[%s0 + $0x5f8] sm:$0xf]
    %v561 = vld [vmem:[%s0 + $0x5fc] sm:$0xf]
    %v562 = vld [vmem:[%s0 + $0x600] sm:$0xf]
    %v563 = vld [vmem:[%s0 + $0x604] sm:$0xf]
    %v564 = vld [vmem:[%s0 + $0x608] sm:$0xf]
    %v565 = vld [vmem:[%s0 + $0x60c] sm:$0xf]
    %v566 = vld [vmem:[%s0 + $0x610] sm:$0xf]
    %v567 = vld [vmem:[%s0 + $0x614] sm:$0xf]
    %v568 = vld [vmem:[%s0 + $0x618] sm:$0xf]
    %v569 = vld [vmem:[%s0 + $0x61c] sm:$0xf]
    %v570 = vld [vmem:[%s0 + $0x620] sm:$0xf]
    %v571 = vld [vmem:[%s0 + $0x624] sm:$0xf]
    %v572 = vld [vmem:[%s0 + $0x628] sm:$0xf]
    %v573 = vld [vmem:[%s0 + $0x62c] sm:$0xf]
    %v574 = vld [vmem:[%s0 + $0x630] sm:$0xf]
    %v575 = vld [vmem:[%s0 + $0x634] sm:$0xf]
    %v576 = vld [vmem:[%s0 + $0x638] sm:$0xf]
    %v577 = vld [vmem:[%s0 + $0x63c] sm:$0xf]
    %v578 = vld [vmem:[%s0 + $0x640] sm:$0xf]
    %v579 = vld [vmem:[%s0 + $0x644] sm:$0xf]
    %v580 = vld [vmem:[%s0 + $0x648] sm:$0xf]
    %v581 = vld [vmem:[%s0 + $0x64c] sm:$0xf]
    %v582 = vld [vmem:[%s0 + $0x650] sm:$0xf]
    %v583 = vld [vmem:[%s0 + $0x654] sm:$0xf]
    %v584 = vld [vmem:[%s0 + $0x658] sm:$0xf]
    %v585 = vld [vmem:[%s0 + $0x65c] sm:$0xf]
    %v586 = vld [vmem:[%s0 + $0x660] sm:$0xf]
    %v587 = vld [vmem:[%s0 + $0x664] sm:$0xf]
    %v588 = vld [vmem:[%s0 + $0x668] sm:$0xf]
    %v589 = vld [vmem:[%s0 + $0x66c] sm:$0xf]
    %v590 = vld [vmem:[%s0 + $0x670] sm:$0xf]
    %v591 = vld [vmem:[%s0 + $0x674] sm:$0xf]
    %v592 = vld [vmem:[%s0 + $0x678] sm:$0xf]
    %v593 = vld [vmem:[%s0 + $0x67c] sm:$0xf]
    %v594 = vld [vmem:[%s0 + $0x680] sm:$0xf]
    %v595 = vld [vmem:[%s0 + $0x684] sm:$0xf]
    %v596 = vld [vmem:[%s0 + $0x688] sm:$0xf]
    %v597 = vld [vmem:[%s0 + $0x68c] sm:$0xf]
    %v598 = vld [vmem:[%s0 + $0x690] sm:$0xf]
    %v599 = vld [vmem:[%s0 + $0x694] sm:$0xf]
    %v600 = vld [vmem:[%s0 + $0x698] sm:$0xf]
    %v601 = vld [vmem:[%s0 + $0x69c] sm:$0xf]
    %v602 = vld [vmem:[%s0 + $0x6a0] sm:$0xf]
    %v603 = vld [vmem:[%s0 + $0x6a4] sm:$0xf]
    %v604 = vld [vmem:[%s0 + $0x6a8] sm:$0xf]
    %v605 = vld [vmem:[%s0 + $0x6ac] sm:$0xf]
    %v606 = vld [vmem:[%s0 + $0x6b0] sm:$0xf]
    %v607 = vld [vmem:[%s0 + $0x6b4] sm:$0xf]
    %v608 = vld [vmem:[%s0 + $0x6b8] sm:$0xf]
    %v609 = vld [vmem:[%s0 + $0x6bc] sm:$0xf]
    %v610 = vld [vmem:[%s0 + $0x6c0] sm:$0xf]
    %v611 = vld [vmem:[%s0 + $0x6c4] sm:$0xf]
    %v612 = vld [vmem:[%s0 + $0x6c8] sm:$0xf]
    %v613 = vld [vmem:[%s0 + $0x6cc] sm:$0xf]
    %v614 = vld [vmem:[%s0 + $0x6d0] sm:$0xf]
    %v615 = vld [vmem:[%s0 + $0x6d4] sm:$0xf]
    %v616 = vld [vmem:[%s0 + $0x6d8] sm:$0xf]
    %v617 = vld [vmem:[%s0 + $0x6dc] sm:$0xf]
    %v618 = vld [vmem:[%s0 + $0x6e0] sm:$0xf]
    %v619 = vld [vmem:[%s0 + $0x6e4] sm:$0xf]
    %v620 = vld [vmem:[%s0 + $0x6e8] sm:$0xf]
    %v621 = vld [vmem:[%s0 + $0x6ec] sm:$0xf]
    %v622 = vld [vmem:[%s0 + $0x6f0] sm:$0xf]
    %v623 = vld [vmem:[%s0 + $0x6f4] sm:$0xf]
    %v624 = vld [vmem:[%s0 + $0x6f8] sm:$0xf]
    %v625 = vld [vmem:[%s0 + $0x6fc] sm:$0xf]
    %v626 = vld [vmem:[%s0 + $0x700] sm:$0xf]
    %v627 = vld [vmem:[%s0 + $0x704] sm:$0xf]
    %v628 = vld [vmem:[%s0 + $0x708] sm:$0xf]
    %v629 = vld [vmem:[%s0 + $0x70c] sm:$0xf]
    %v630 = vld [vmem:[%s0 + $0x710] sm:$0xf]
    %v631 = vld [vmem:[%s0 + $0x714] sm:$0xf]
    %v632 = vld [vmem:[%s0 + $0x718] sm:$0xf]
    %v633 = vld [vmem:[%s0 + $0x71c] sm:$0xf]
    %v634 = vld [vmem:[%s0 + $0x720] sm:$0xf]
    %v635 = vld [vmem:[%s0 + $0x724] sm:$0xf]
    %v636 = vld [vmem:[%s0 + $0x728] sm:$0xf]
    %v637 = vld [vmem:[%s0 + $0x72c] sm:$0xf]
    %v638 = vld [vmem:[%s0 + $0x730] sm:$0xf]
    %v639 = vld [vmem:[%s0 + $0x734] sm:$0xf]
    %v640 = vld [vmem:[%s0 + $0x738] sm:$0xf]
    %v641 = vld [vmem:[%s0 + $0x73c] sm:$0xf]
    %v642 = vld [vmem:[%s0 + $0x740] sm:$0xf]
    %v643 = vld [vmem:[%s0 + $0x744] sm:$0xf]
    %v644 = vld [vmem:[%s0 + $0x748] sm:$0xf]
    %v645 = vld [vmem:[%s0 + $0x74c] sm:$0xf]
    %v646 = vld [vmem:[%s0 + $0x750] sm:$0xf]
    %v647 = vld [vmem:[%s0 + $0x754] sm:$0xf]
    %v648 = vld [vmem:[%s0 + $0x758] sm:$0xf]
    %v649 = vld [vmem:[%s0 + $0x75c] sm:$0xf]
    %v650 = vld [vmem:[%s0 + $0x760] sm:$0xf]
    %v651 = vld [vmem:[%s0 + $0x764] sm:$0xf]
    %v652 = vld [vmem:[%s0 + $0x768] sm:$0xf]
    %v653 = vld [vmem:[%s0 + $0x76c] sm:$0xf]
    %v654 = vld [vmem:[%s0 + $0x770] sm:$0xf]
    %v655 = vld [vmem:[%s0 + $0x774] sm:$0xf]
    %v656 = vld [vmem:[%s0 + $0x778] sm:$0xf]
    %v657 = vld [vmem:[%s0 + $0x77c] sm:$0xf]
    %v658 = vld [vmem:[%s0 + $0x780] sm:$0xf]
    %v659 = vld [vmem:[%s0 + $0x784] sm:$0xf]
    %v660 = vld [vmem:[%s0 + $0x788] sm:$0xf]
    %v661 = vld [vmem:[%s0 + $0x78c] sm:$0xf]
    %v662 = vld [vmem:[%s0 + $0x790] sm:$0xf]
    %v663 = vld [vmem:[%s0 + $0x794] sm:$0xf]
    %v664 = vld [vmem:[%s0 + $0x798] sm:$0xf]
    %v665 = vld [vmem:[%s0 + $0x79c] sm:$0xf]
    %v666 = vld [vmem:[%s0 + $0x7a0] sm:$0xf]
    %v667 = vld [vmem:[%s0 + $0x7a4] sm:$0xf]
    %v668 = vld [vmem:[%s0 + $0x7a8] sm:$0xf]
    %v669 = vld [vmem:[%s0 + $0x7ac] sm:$0xf]
    %v670 = vld [vmem:[%s0 + $0x7b0] sm:$0xf]
    %v671 = vld [vmem:[%s0 + $0x7b4] sm:$0xf]
    %v672 = vld [vmem:[%s0 + $0x7b8] sm:$0xf]
    %v673 = vld [vmem:[%s0 + $0x7bc] sm:$0xf]
    %v674 = vld [vmem:[%s0 + $0x7c0] sm:$0xf]
    %v675 = vld [vmem:[%s0 + $0x7c4] sm:$0xf]
    %v676 = vld [vmem:[%s0 + $0x7c8] sm:$0xf]
    %v677 = vld [vmem:[%s0 + $0x7cc] sm:$0xf]
    %v678 = vld [vmem:[%s0 + $0x7d0] sm:$0xf]
    %v679 = vld [vmem:[%s0 + $0x7d4] sm:$0xf]
    %v680 = vld [vmem:[%s0 + $0x7d8] sm:$0xf]
    %v681 = vld [vmem:[%s0 + $0x7dc] sm:$0xf]
    %v682 = vld [vmem:[%s0 + $0x7e0] sm:$0xf]
    %v683 = vld [vmem:[%s0 + $0x7e4] sm:$0xf]
    %v684 = vld [vmem:[%s0 + $0x7e8] sm:$0xf]
    %v685 = vld [vmem:[%s0 + $0x7ec] sm:$0xf]
    %v686 = vld [vmem:[%s0 + $0x7f0] sm:$0xf]
    %v687 = vld [vmem:[%s0 + $0x7f4] sm:$0xf]
    %v688 = vld [vmem:[%s0 + $0x7f8] sm:$0xf]
    %v689 = vld [vmem:[%s0 + $0x7fc] sm:$0xf]
    %v690 = vld [vmem:[%s0 + $0x800] sm:$0xf]
    %v691 = vld [vmem:[%s0 + $0x804] sm:$0xf]
    %v692 = vld [vmem:[%s0 + $0x808] sm:$0xf]
    %v693 = vld [vmem:[%s0 + $0x80c] sm:$0xf]
    %v694 = vld [vmem:[%s0 + $0x810] sm:$0xf]
    %v695 = vld [vmem:[%s0 + $0x814] sm:$0xf]
    %v696 = vld [vmem:[%s0 + $0x818] sm:$0xf]
    %v697 = vld [vmem:[%s0 + $0x81c] sm:$0xf]
    %v698 = vld [vmem:[%s0 + $0x820] sm:$0xf]
    %v699 = vld [vmem:[%s0 + $0x824] sm:$0xf]
    %v700 = vld [vmem:[%s0 + $0x828] sm:$0xf]
    %v701 = vld [vmem:[%s0 + $0x82c] sm:$0xf]
    %v702 = vld [vmem:[%s0 + $0x830] sm:$0xf]
    %v703 = vld [vmem:[%s0 + $0x834] sm:$0xf]
    %v704 = vld [vmem:[%s0 + $0x838] sm:$0xf]
    %v705 = vld [vmem:[%s0 + $0x83c] sm:$0xf]
    %v706 = vld [vmem:[%s0 + $0x840] sm:$0xf]
    %v707 = vld [vmem:[%s0 + $0x844] sm:$0xf]
    %v708 = vld [vmem:[%s0 + $0x848] sm:$0xf]
    %v709 = vld [vmem:[%s0 + $0x84c] sm:$0xf]
    %v710 = vld [vmem:[%s0 + $0x850] sm:$0xf]
    %v711 = vld [vmem:[%s0 + $0x854] sm:$0xf]
    %v712 = vld [vmem:[%s0 + $0x858] sm:$0xf]
    %v713 = vld [vmem:[%s0 + $0x85c] sm:$0xf]
    %v714 = vld [vmem:[%s0 + $0x860] sm:$0xf]
    %v715 = vld [vmem:[%s0 + $0x864] sm:$0xf]
    %v716 = vld [vmem:[%s0 + $0x868] sm:$0xf]
    %v717 = vld [vmem:[%s0 + $0x86c] sm:$0xf]
    %v718 = vld [vmem:[%s0 + $0x870] sm:$0xf]
    %v719 = vld [vmem:[%s0 + $0x874] sm:$0xf]
    %v720 = vld [vmem:[%s0 + $0x878] sm:$0xf]
    %v721 = vld [vmem:[%s0 + $0x87c] sm:$0xf]
    %v722 = vld [vmem:[%s0 + $0x880] sm:$0xf]
    %v723 = vld [vmem:[%s0 + $0x884] sm:$0xf]
    %v724 = vld [vmem:[%s0 + $0x888] sm:$0xf]
    %v725 = vld [vmem:[%s0 + $0x88c] sm:$0xf]
    %v726 = vld [vmem:[%s0 + $0x890] sm:$0xf]
    %v727 = vld [vmem:[%s0 + $0x894] sm:$0xf]
    %v728 = vld [vmem:[%s0 + $0x898] sm:$0xf]
    %v729 = vld [vmem:[%s0 + $0x89c] sm:$0xf]
    %v730 = vld [vmem:[%s0 + $0x8a0] sm:$0xf]
    %v731 = vld [vmem:[%s0 + $0x8a4] sm:$0xf]
    %v732 = vld [vmem:[%s0 + $0x8a8] sm:$0xf]
    %v733 = vld [vmem:[%s0 + $0x8ac] sm:$0xf]
    %v734 = vld [vmem:[%s0 + $0x8b0] sm:$0xf]
    %v735 = vld [vmem:[%s0 + $0x8b4] sm:$0xf]
    %v736 = vld [vmem:[%s0 + $0x8b8] sm:$0xf]
    %v737 = vld [vmem:[%s0 + $0x8bc] sm:$0xf]
    %v738 = vld [vmem:[%s0 + $0x8c0] sm:$0xf]
    %v739 = vld [vmem:[%s0 + $0x8c4] sm:$0xf]
    %v740 = vld [vmem:[%s0 + $0x8c8] sm:$0xf]
    %v741 = vld [vmem:[%s0 + $0x8cc] sm:$0xf]
    %v742 = vld [vmem:[%s0 + $0x8d0] sm:$0xf]
    %v743 = vld [vmem:[%s0 + $0x8d4] sm:$0xf]
    %v744 = vld [vmem:[%s0 + $0x8d8] sm:$0xf]
    %v745 = vld [vmem:[%s0 + $0x8dc] sm:$0xf]
    %v746 = vld [vmem:[%s0 + $0x8e0] sm:$0xf]
    %v747 = vld [vmem:[%s0 + $0x8e4] sm:$0xf]
    %v748 = vld [vmem:[%s0 + $0x8e8] sm:$0xf]
    %v749 = vld [vmem:[%s0 + $0x8ec] sm:$0xf]
    %v750 = vld [vmem:[%s0 + $0x8f0] sm:$0xf]
    %v751 = vld [vmem:[%s0 + $0x8f4] sm:$0xf]
    %v752 = vld [vmem:[%s0 + $0x8f8] sm:$0xf]
    %v753 = vld [vmem:[%s0 + $0x8fc] sm:$0xf]
    %v754 = vld [vmem:[%s2] sm:$0xff]
    %v755 = vld [vmem:[%s2 + $0x8] sm:$0xff]
    %v756 = vld [vmem:[%s2 + $0x10] sm:$0xff]
    %v757 = vld [vmem:[%s2 + $0x18] sm:$0xff]
    %v758 = vld [vmem:[%s2 + $0x20] sm:$0xff]
    %v759 = vld [vmem:[%s2 + $0x28] sm:$0xff]
    %v760 = vld [vmem:[%s2 + $0x30] sm:$0xff]
    %v761 = vld [vmem:[%s2 + $0x38] sm:$0xff]
    %763 = vset.pattern.permute.xlu0 0
    %764 = vperm.xlu0 %763, %v754
    %v765 = vpop.permute.xlu0 %764
    %768 = vset.pattern.permute.xlu0 0
    %769 = vperm.xlu0 %768, %v755
    %v770 = vpop.permute.xlu0 %769
    %773 = vset.pattern.permute.xlu0 0
    %774 = vperm.xlu0 %773, %v756
    %v775 = vpop.permute.xlu0 %774
    %778 = vset.pattern.permute.xlu0 0
    %779 = vperm.xlu0 %778, %v757
    %v780 = vpop.permute.xlu0 %779
    %783 = vset.pattern.permute.xlu0 0
    %784 = vperm.xlu0 %783, %v758
    %v785 = vpop.permute.xlu0 %784
    %788 = vset.pattern.permute.xlu0 0
    %789 = vperm.xlu0 %788, %v759
    %v790 = vpop.permute.xlu0 %789
    %793 = vset.pattern.permute.xlu0 0
    %794 = vperm.xlu0 %793, %v760
    %v795 = vpop.permute.xlu0 %794
    %798 = vset.pattern.permute.xlu0 0
    %799 = vperm.xlu0 %798, %v761
    %v800 = vpop.permute.xlu0 %799
    %v946 = vunpack.c.l.b16 %v34
    %v947 = vunpack.c.h.b16 %v34
    %v948 = vunpack.c.l.b16 %v35
    %v949 = vunpack.c.h.b16 %v35
    %v950 = vunpack.c.l.b16 %v36
    %v951 = vunpack.c.h.b16 %v36
    %v952 = vunpack.c.l.b16 %v37
    %v953 = vunpack.c.h.b16 %v37
    %v954 = vunpack.c.l.b16 %v38
    %v955 = vunpack.c.h.b16 %v38
    %v956 = vunpack.c.l.b16 %v39
    %v957 = vunpack.c.h.b16 %v39
    %v958 = vunpack.c.l.b16 %v40
    %v959 = vunpack.c.h.b16 %v40
    %v960 = vunpack.c.l.b16 %v41
    %v961 = vunpack.c.h.b16 %v41
    %v962 = vunpack.c.l.b16 %v42
    %v963 = vunpack.c.h.b16 %v42
    %v964 = vunpack.c.l.b16 %v43
    %v965 = vunpack.c.h.b16 %v43
    %v966 = vunpack.c.l.b16 %v44
    %v967 = vunpack.c.h.b16 %v44
    %v968 = vunpack.c.l.b16 %v45
    %v969 = vunpack.c.h.b16 %v45
    %v970 = vunpack.c.l.b16 %v46
    %v971 = vunpack.c.h.b16 %v46
    %v972 = vunpack.c.l.b16 %v47
    %v973 = vunpack.c.h.b16 %v47
    %v974 = vunpack.c.l.b16 %v48
    %v975 = vunpack.c.h.b16 %v48
    %v976 = vunpack.c.l.b16 %v49
    %v977 = vunpack.c.h.b16 %v49
    %v978 = vunpack.c.l.b16 %v50
    %v979 = vunpack.c.h.b16 %v50
    %v980 = vunpack.c.l.b16 %v51
    %v981 = vunpack.c.h.b16 %v51
    %v982 = vunpack.c.l.b16 %v52
    %v983 = vunpack.c.h.b16 %v52
    %v984 = vunpack.c.l.b16 %v53
    %v985 = vunpack.c.h.b16 %v53
    %v986 = vunpack.c.l.b16 %v54
    %v987 = vunpack.c.h.b16 %v54
    %v988 = vunpack.c.l.b16 %v55
    %v989 = vunpack.c.h.b16 %v55
    %v990 = vunpack.c.l.b16 %v56
    %v991 = vunpack.c.h.b16 %v56
    %v992 = vunpack.c.l.b16 %v57
    %v993 = vunpack.c.h.b16 %v57
    %v994 = vunpack.c.l.b16 %v58
    %v995 = vunpack.c.h.b16 %v58
    %v996 = vunpack.c.l.b16 %v59
    %v997 = vunpack.c.h.b16 %v59
    %v998 = vunpack.c.l.b16 %v60
    %v999 = vunpack.c.h.b16 %v60
    %v1000 = vunpack.c.l.b16 %v61
    %v1001 = vunpack.c.h.b16 %v61
    %v1002 = vunpack.c.l.b16 %v62
    %v1003 = vunpack.c.h.b16 %v62
    %v1004 = vunpack.c.l.b16 %v63
    %v1005 = vunpack.c.h.b16 %v63
    %v1006 = vunpack.c.l.b16 %v64
    %v1007 = vunpack.c.h.b16 %v64
    %v1008 = vunpack.c.l.b16 %v65
    %v1009 = vunpack.c.h.b16 %v65
    %v1010 = vunpack.c.l.b16 %v66
    %v1011 = vunpack.c.h.b16 %v66
    %v1012 = vunpack.c.l.b16 %v67
    %v1013 = vunpack.c.h.b16 %v67
    %v1014 = vunpack.c.l.b16 %v68
    %v1015 = vunpack.c.h.b16 %v68
    %v1016 = vunpack.c.l.b16 %v69
    %v1017 = vunpack.c.h.b16 %v69
    %v1018 = vunpack.c.l.b16 %v70
    %v1019 = vunpack.c.h.b16 %v70
    %v1020 = vunpack.c.l.b16 %v71
    %v1021 = vunpack.c.h.b16 %v71
    %v1022 = vunpack.c.l.b16 %v72
    %v1023 = vunpack.c.h.b16 %v72
    %v1024 = vunpack.c.l.b16 %v73
    %v1025 = vunpack.c.h.b16 %v73
    %v1026 = vunpack.c.l.b16 %v74
    %v1027 = vunpack.c.h.b16 %v74
    %v1028 = vunpack.c.l.b16 %v75
    %v1029 = vunpack.c.h.b16 %v75
    %v1030 = vunpack.c.l.b16 %v76
    %v1031 = vunpack.c.h.b16 %v76
    %v1032 = vunpack.c.l.b16 %v77
    %v1033 = vunpack.c.h.b16 %v77
    %v1034 = vunpack.c.l.b16 %v78
    %v1035 = vunpack.c.h.b16 %v78
    %v1036 = vunpack.c.l.b16 %v79
    %v1037 = vunpack.c.h.b16 %v79
    %v1038 = vunpack.c.l.b16 %v80
    %v1039 = vunpack.c.h.b16 %v80
    %v1040 = vunpack.c.l.b16 %v81
    %v1041 = vunpack.c.h.b16 %v81
    %v1042 = vunpack.c.l.b16 %v82
    %v1043 = vunpack.c.h.b16 %v82
    %v1044 = vunpack.c.l.b16 %v83
    %v1045 = vunpack.c.h.b16 %v83
    %v1046 = vunpack.c.l.b16 %v84
    %v1047 = vunpack.c.h.b16 %v84
    %v1048 = vunpack.c.l.b16 %v85
    %v1049 = vunpack.c.h.b16 %v85
    %v1050 = vunpack.c.l.b16 %v86
    %v1051 = vunpack.c.h.b16 %v86
    %v1052 = vunpack.c.l.b16 %v87
    %v1053 = vunpack.c.h.b16 %v87
    %v1054 = vunpack.c.l.b16 %v88
    %v1055 = vunpack.c.h.b16 %v88
    %v1056 = vunpack.c.l.b16 %v89
    %v1057 = vunpack.c.h.b16 %v89
    %v1058 = vunpack.c.l.b16 %v90
    %v1059 = vunpack.c.h.b16 %v90
    %v1060 = vunpack.c.l.b16 %v91
    %v1061 = vunpack.c.h.b16 %v91
    %v1062 = vunpack.c.l.b16 %v92
    %v1063 = vunpack.c.h.b16 %v92
    %v1064 = vunpack.c.l.b16 %v93
    %v1065 = vunpack.c.h.b16 %v93
    %v1066 = vunpack.c.l.b16 %v94
    %v1067 = vunpack.c.h.b16 %v94
    %v1068 = vunpack.c.l.b16 %v95
    %v1069 = vunpack.c.h.b16 %v95
    %v1070 = vunpack.c.l.b16 %v96
    %v1071 = vunpack.c.h.b16 %v96
    %v1072 = vunpack.c.l.b16 %v97
    %v1073 = vunpack.c.h.b16 %v97
    %v1074 = vunpack.c.l.b16 %v98
    %v1075 = vunpack.c.h.b16 %v98
    %v1076 = vunpack.c.l.b16 %v99
    %v1077 = vunpack.c.h.b16 %v99
    %v1078 = vunpack.c.l.b16 %v100
    %v1079 = vunpack.c.h.b16 %v100
    %v1080 = vunpack.c.l.b16 %v101
    %v1081 = vunpack.c.h.b16 %v101
    %v1082 = vunpack.c.l.b16 %v102
    %v1083 = vunpack.c.h.b16 %v102
    %v1084 = vunpack.c.l.b16 %v103
    %v1085 = vunpack.c.h.b16 %v103
    %v1086 = vunpack.c.l.b16 %v104
    %v1087 = vunpack.c.h.b16 %v104
    %v1088 = vunpack.c.l.b16 %v105
    %v1089 = vunpack.c.h.b16 %v105
    %v1090 = vunpack.c.l.b16 %v106
    %v1091 = vunpack.c.h.b16 %v106
    %v1092 = vunpack.c.l.b16 %v107
    %v1093 = vunpack.c.h.b16 %v107
    %v1094 = vunpack.c.l.b16 %v108
    %v1095 = vunpack.c.h.b16 %v108
    %v1096 = vunpack.c.l.b16 %v109
    %v1097 = vunpack.c.h.b16 %v109
    %v1098 = vunpack.c.l.b16 %v110
    %v1099 = vunpack.c.h.b16 %v110
    %v1100 = vunpack.c.l.b16 %v111
    %v1101 = vunpack.c.h.b16 %v111
    %v1102 = vunpack.c.l.b16 %v112
    %v1103 = vunpack.c.h.b16 %v112
    %v1104 = vunpack.c.l.b16 %v113
    %v1105 = vunpack.c.h.b16 %v113
    %v1106 = vunpack.c.l.b16 %v114
    %v1107 = vunpack.c.h.b16 %v114
    %v1108 = vunpack.c.l.b16 %v115
    %v1109 = vunpack.c.h.b16 %v115
    %v1110 = vunpack.c.l.b16 %v116
    %v1111 = vunpack.c.h.b16 %v116
    %v1112 = vunpack.c.l.b16 %v117
    %v1113 = vunpack.c.h.b16 %v117
    %v1114 = vunpack.c.l.b16 %v118
    %v1115 = vunpack.c.h.b16 %v118
    %v1116 = vunpack.c.l.b16 %v119
    %v1117 = vunpack.c.h.b16 %v119
    %v1118 = vunpack.c.l.b16 %v120
    %v1119 = vunpack.c.h.b16 %v120
    %v1120 = vunpack.c.l.b16 %v121
    %v1121 = vunpack.c.h.b16 %v121
    %v1122 = vunpack.c.l.b16 %v122
    %v1123 = vunpack.c.h.b16 %v122
    %v1124 = vunpack.c.l.b16 %v123
    %v1125 = vunpack.c.h.b16 %v123
    %v1126 = vunpack.c.l.b16 %v124
    %v1127 = vunpack.c.h.b16 %v124
    %v1128 = vunpack.c.l.b16 %v125
    %v1129 = vunpack.c.h.b16 %v125
    %v1130 = vunpack.c.l.b16 %v126
    %v1131 = vunpack.c.h.b16 %v126
    %v1132 = vunpack.c.l.b16 %v127
    %v1133 = vunpack.c.h.b16 %v127
    %v1134 = vunpack.c.l.b16 %v128
    %v1135 = vunpack.c.h.b16 %v128
    %v1136 = vunpack.c.l.b16 %v129
    %v1137 = vunpack.c.h.b16 %v129
    %v1138 = vunpack.c.l.b16 %v130
    %v1139 = vunpack.c.h.b16 %v130
    %v1140 = vunpack.c.l.b16 %v131
    %v1141 = vunpack.c.h.b16 %v131
    %v1142 = vunpack.c.l.b16 %v132
    %v1143 = vunpack.c.h.b16 %v132
    %v1144 = vunpack.c.l.b16 %v133
    %v1145 = vunpack.c.h.b16 %v133
    %v1146 = vunpack.c.l.b16 %v134
    %v1147 = vunpack.c.h.b16 %v134
    %v1148 = vunpack.c.l.b16 %v135
    %v1149 = vunpack.c.h.b16 %v135
    %v1150 = vunpack.c.l.b16 %v136
    %v1151 = vunpack.c.h.b16 %v136
    %v1152 = vunpack.c.l.b16 %v137
    %v1153 = vunpack.c.h.b16 %v137
    %v1154 = vunpack.c.l.b16 %v138
    %v1155 = vunpack.c.h.b16 %v138
    %v1156 = vunpack.c.l.b16 %v139
    %v1157 = vunpack.c.h.b16 %v139
    %v1158 = vunpack.c.l.b16 %v140
    %v1159 = vunpack.c.h.b16 %v140
    %v1160 = vunpack.c.l.b16 %v141
    %v1161 = vunpack.c.h.b16 %v141
    %v1162 = vunpack.c.l.b16 %v142
    %v1163 = vunpack.c.h.b16 %v142
    %v1164 = vunpack.c.l.b16 %v143
    %v1165 = vunpack.c.h.b16 %v143
    %v1166 = vunpack.c.l.b16 %v144
    %v1167 = vunpack.c.h.b16 %v144
    %v1168 = vunpack.c.l.b16 %v145
    %v1169 = vunpack.c.h.b16 %v145
    %v1170 = vunpack.c.l.b16 %v146
    %v1171 = vunpack.c.h.b16 %v146
    %v1172 = vunpack.c.l.b16 %v147
    %v1173 = vunpack.c.h.b16 %v147
    %v1174 = vunpack.c.l.b16 %v148
    %v1175 = vunpack.c.h.b16 %v148
    %v1176 = vunpack.c.l.b16 %v149
    %v1177 = vunpack.c.h.b16 %v149
    %v1178 = vunpack.c.l.b16 %v150
    %v1179 = vunpack.c.h.b16 %v150
    %v1180 = vunpack.c.l.b16 %v151
    %v1181 = vunpack.c.h.b16 %v151
    %v1182 = vunpack.c.l.b16 %v152
    %v1183 = vunpack.c.h.b16 %v152
    %v1184 = vunpack.c.l.b16 %v153
    %v1185 = vunpack.c.h.b16 %v153
    %v1186 = vunpack.c.l.b16 %v154
    %v1187 = vunpack.c.h.b16 %v154
    %v1188 = vunpack.c.l.b16 %v155
    %v1189 = vunpack.c.h.b16 %v155
    %v1190 = vunpack.c.l.b16 %v156
    %v1191 = vunpack.c.h.b16 %v156
    %v1192 = vunpack.c.l.b16 %v157
    %v1193 = vunpack.c.h.b16 %v157
    %v1194 = vunpack.c.l.b16 %v158
    %v1195 = vunpack.c.h.b16 %v158
    %v1196 = vunpack.c.l.b16 %v159
    %v1197 = vunpack.c.h.b16 %v159
    %v1198 = vunpack.c.l.b16 %v160
    %v1199 = vunpack.c.h.b16 %v160
    %v1200 = vunpack.c.l.b16 %v161
    %v1201 = vunpack.c.h.b16 %v161
    %v1202 = vunpack.c.l.b16 %v162
    %v1203 = vunpack.c.h.b16 %v162
    %v1204 = vunpack.c.l.b16 %v163
    %v1205 = vunpack.c.h.b16 %v163
    %v1206 = vunpack.c.l.b16 %v164
    %v1207 = vunpack.c.h.b16 %v164
    %v1208 = vunpack.c.l.b16 %v165
    %v1209 = vunpack.c.h.b16 %v165
    %v1210 = vunpack.c.l.b16 %v166
    %v1211 = vunpack.c.h.b16 %v166
    %v1212 = vunpack.c.l.b16 %v167
    %v1213 = vunpack.c.h.b16 %v167
    %v1214 = vunpack.c.l.b16 %v168
    %v1215 = vunpack.c.h.b16 %v168
    %v1216 = vunpack.c.l.b16 %v169
    %v1217 = vunpack.c.h.b16 %v169
    %v1218 = vunpack.c.l.b16 %v170
    %v1219 = vunpack.c.h.b16 %v170
    %v1220 = vunpack.c.l.b16 %v171
    %v1221 = vunpack.c.h.b16 %v171
    %v1222 = vunpack.c.l.b16 %v172
    %v1223 = vunpack.c.h.b16 %v172
    %v1224 = vunpack.c.l.b16 %v173
    %v1225 = vunpack.c.h.b16 %v173
    %v1226 = vunpack.c.l.b16 %v174
    %v1227 = vunpack.c.h.b16 %v174
    %v1228 = vunpack.c.l.b16 %v175
    %v1229 = vunpack.c.h.b16 %v175
    %v1230 = vunpack.c.l.b16 %v176
    %v1231 = vunpack.c.h.b16 %v176
    %v1232 = vunpack.c.l.b16 %v177
    %v1233 = vunpack.c.h.b16 %v177
    %v1234 = vpack.c.b16 %v982, %v946
    %v1235 = vpack.c.b16 %v983, %v947
    %v1236 = vpack.c.b16 %v984, %v948
    %v1237 = vpack.c.b16 %v985, %v949
    %v1238 = vpack.c.b16 %v986, %v950
    %v1239 = vpack.c.b16 %v987, %v951
    %v1240 = vpack.c.b16 %v988, %v952
    %v1241 = vpack.c.b16 %v989, %v953
    %v1242 = vpack.c.b16 %v990, %v954
    %v1243 = vpack.c.b16 %v991, %v955
    %v1244 = vpack.c.b16 %v992, %v956
    %v1245 = vpack.c.b16 %v993, %v957
    %v1246 = vpack.c.b16 %v994, %v958
    %v1247 = vpack.c.b16 %v995, %v959
    %v1248 = vpack.c.b16 %v996, %v960
    %v1249 = vpack.c.b16 %v997, %v961
    %v1250 = vpack.c.b16 %v998, %v962
    %v1251 = vpack.c.b16 %v999, %v963
    %v1252 = vpack.c.b16 %v1000, %v964
    %v1253 = vpack.c.b16 %v1001, %v965
    %v1254 = vpack.c.b16 %v1002, %v966
    %v1255 = vpack.c.b16 %v1003, %v967
    %v1256 = vpack.c.b16 %v1004, %v968
    %v1257 = vpack.c.b16 %v1005, %v969
    %v1258 = vpack.c.b16 %v1006, %v970
    %v1259 = vpack.c.b16 %v1007, %v971
    %v1260 = vpack.c.b16 %v1008, %v972
    %v1261 = vpack.c.b16 %v1009, %v973
    %v1262 = vpack.c.b16 %v1010, %v974
    %v1263 = vpack.c.b16 %v1011, %v975
    %v1264 = vpack.c.b16 %v1012, %v976
    %v1265 = vpack.c.b16 %v1013, %v977
    %v1266 = vpack.c.b16 %v1014, %v978
    %v1267 = vpack.c.b16 %v1015, %v979
    %v1268 = vpack.c.b16 %v1016, %v980
    %v1269 = vpack.c.b16 %v1017, %v981
    %v1270 = vpack.c.b16 %v1054, %v1018
    %v1271 = vpack.c.b16 %v1055, %v1019
    %v1272 = vpack.c.b16 %v1056, %v1020
    %v1273 = vpack.c.b16 %v1057, %v1021
    %v1274 = vpack.c.b16 %v1058, %v1022
    %v1275 = vpack.c.b16 %v1059, %v1023
    %v1276 = vpack.c.b16 %v1060, %v1024
    %v1277 = vpack.c.b16 %v1061, %v1025
    %v1278 = vpack.c.b16 %v1062, %v1026
    %v1279 = vpack.c.b16 %v1063, %v1027
    %v1280 = vpack.c.b16 %v1064, %v1028
    %v1281 = vpack.c.b16 %v1065, %v1029
    %v1282 = vpack.c.b16 %v1066, %v1030
    %v1283 = vpack.c.b16 %v1067, %v1031
    %v1284 = vpack.c.b16 %v1068, %v1032
    %v1285 = vpack.c.b16 %v1069, %v1033
    %v1286 = vpack.c.b16 %v1070, %v1034
    %v1287 = vpack.c.b16 %v1071, %v1035
    %v1288 = vpack.c.b16 %v1072, %v1036
    %v1289 = vpack.c.b16 %v1073, %v1037
    %v1290 = vpack.c.b16 %v1074, %v1038
    %v1291 = vpack.c.b16 %v1075, %v1039
    %v1292 = vpack.c.b16 %v1076, %v1040
    %v1293 = vpack.c.b16 %v1077, %v1041
    %v1294 = vpack.c.b16 %v1078, %v1042
    %v1295 = vpack.c.b16 %v1079, %v1043
    %v1296 = vpack.c.b16 %v1080, %v1044
    %v1297 = vpack.c.b16 %v1081, %v1045
    %v1298 = vpack.c.b16 %v1082, %v1046
    %v1299 = vpack.c.b16 %v1083, %v1047
    %v1300 = vpack.c.b16 %v1084, %v1048
    %v1301 = vpack.c.b16 %v1085, %v1049
    %v1302 = vpack.c.b16 %v1086, %v1050
    %v1303 = vpack.c.b16 %v1087, %v1051
    %v1304 = vpack.c.b16 %v1088, %v1052
    %v1305 = vpack.c.b16 %v1089, %v1053
    %v1306 = vpack.c.b16 %v1126, %v1090
    %v1307 = vpack.c.b16 %v1127, %v1091
    %v1308 = vpack.c.b16 %v1128, %v1092
    %v1309 = vpack.c.b16 %v1129, %v1093
    %v1310 = vpack.c.b16 %v1130, %v1094
    %v1311 = vpack.c.b16 %v1131, %v1095
    %v1312 = vpack.c.b16 %v1132, %v1096
    %v1313 = vpack.c.b16 %v1133, %v1097
    %v1314 = vpack.c.b16 %v1134, %v1098
    %v1315 = vpack.c.b16 %v1135, %v1099
    %v1316 = vpack.c.b16 %v1136, %v1100
    %v1317 = vpack.c.b16 %v1137, %v1101
    %v1318 = vpack.c.b16 %v1138, %v1102
    %v1319 = vpack.c.b16 %v1139, %v1103
    %v1320 = vpack.c.b16 %v1140, %v1104
    %v1321 = vpack.c.b16 %v1141, %v1105
    %v1322 = vpack.c.b16 %v1142, %v1106
    %v1323 = vpack.c.b16 %v1143, %v1107
    %v1324 = vpack.c.b16 %v1144, %v1108
    %v1325 = vpack.c.b16 %v1145, %v1109
    %v1326 = vpack.c.b16 %v1146, %v1110
    %v1327 = vpack.c.b16 %v1147, %v1111
    %v1328 = vpack.c.b16 %v1148, %v1112
    %v1329 = vpack.c.b16 %v1149, %v1113
    %v1330 = vpack.c.b16 %v1150, %v1114
    %v1331 = vpack.c.b16 %v1151, %v1115
    %v1332 = vpack.c.b16 %v1152, %v1116
    %v1333 = vpack.c.b16 %v1153, %v1117
    %v1334 = vpack.c.b16 %v1154, %v1118
    %v1335 = vpack.c.b16 %v1155, %v1119
    %v1336 = vpack.c.b16 %v1156, %v1120
    %v1337 = vpack.c.b16 %v1157, %v1121
    %v1338 = vpack.c.b16 %v1158, %v1122
    %v1339 = vpack.c.b16 %v1159, %v1123
    %v1340 = vpack.c.b16 %v1160, %v1124
    %v1341 = vpack.c.b16 %v1161, %v1125
    %v1342 = vpack.c.b16 %v1198, %v1162
    %v1343 = vpack.c.b16 %v1199, %v1163
    %v1344 = vpack.c.b16 %v1200, %v1164
    %v1345 = vpack.c.b16 %v1201, %v1165
    %v1346 = vpack.c.b16 %v1202, %v1166
    %v1347 = vpack.c.b16 %v1203, %v1167
    %v1348 = vpack.c.b16 %v1204, %v1168
    %v1349 = vpack.c.b16 %v1205, %v1169
    %v1350 = vpack.c.b16 %v1206, %v1170
    %v1351 = vpack.c.b16 %v1207, %v1171
    %v1352 = vpack.c.b16 %v1208, %v1172
    %v1353 = vpack.c.b16 %v1209, %v1173
    %v1354 = vpack.c.b16 %v1210, %v1174
    %v1355 = vpack.c.b16 %v1211, %v1175
    %v1356 = vpack.c.b16 %v1212, %v1176
    %v1357 = vpack.c.b16 %v1213, %v1177
    %v1358 = vpack.c.b16 %v1214, %v1178
    %v1359 = vpack.c.b16 %v1215, %v1179
    %v1360 = vpack.c.b16 %v1216, %v1180
    %v1361 = vpack.c.b16 %v1217, %v1181
    %v1362 = vpack.c.b16 %v1218, %v1182
    %v1363 = vpack.c.b16 %v1219, %v1183
    %v1364 = vpack.c.b16 %v1220, %v1184
    %v1365 = vpack.c.b16 %v1221, %v1185
    %v1366 = vpack.c.b16 %v1222, %v1186
    %v1367 = vpack.c.b16 %v1223, %v1187
    %v1368 = vpack.c.b16 %v1224, %v1188
    %v1369 = vpack.c.b16 %v1225, %v1189
    %v1370 = vpack.c.b16 %v1226, %v1190
    %v1371 = vpack.c.b16 %v1227, %v1191
    %v1372 = vpack.c.b16 %v1228, %v1192
    %v1373 = vpack.c.b16 %v1229, %v1193
    %v1374 = vpack.c.b16 %v1230, %v1194
    %v1375 = vpack.c.b16 %v1231, %v1195
    %v1376 = vpack.c.b16 %v1232, %v1196
    %v1377 = vpack.c.b16 %v1233, %v1197
    %v2098 = vunpack.c.l.b16 %v178
    %v2099 = vunpack.c.l.b16 %v179
    %v2100 = vunpack.c.l.b16 %v180
    %v2101 = vunpack.c.l.b16 %v181
    %v2102 = vunpack.c.l.b16 %v182
    %v2103 = vunpack.c.l.b16 %v183
    %v2104 = vunpack.c.l.b16 %v184
    %v2105 = vunpack.c.l.b16 %v185
    %v2106 = vunpack.c.l.b16 %v186
    %v2107 = vunpack.c.l.b16 %v187
    %v2108 = vunpack.c.l.b16 %v188
    %v2109 = vunpack.c.l.b16 %v189
    %v2110 = vunpack.c.l.b16 %v190
    %v2111 = vunpack.c.l.b16 %v191
    %v2112 = vunpack.c.l.b16 %v192
    %v2113 = vunpack.c.l.b16 %v193
    %v2114 = vunpack.c.l.b16 %v194
    %v2115 = vunpack.c.l.b16 %v195
    %v2116 = vunpack.c.l.b16 %v196
    %v2117 = vunpack.c.l.b16 %v197
    %v2118 = vunpack.c.l.b16 %v198
    %v2119 = vunpack.c.l.b16 %v199
    %v2120 = vunpack.c.l.b16 %v200
    %v2121 = vunpack.c.l.b16 %v201
    %v2122 = vunpack.c.l.b16 %v202
    %v2123 = vunpack.c.l.b16 %v203
    %v2124 = vunpack.c.l.b16 %v204
    %v2125 = vunpack.c.l.b16 %v205
    %v2126 = vunpack.c.l.b16 %v206
    %v2127 = vunpack.c.l.b16 %v207
    %v2128 = vunpack.c.l.b16 %v208
    %v2129 = vunpack.c.l.b16 %v209
    %v2130 = vunpack.c.l.b16 %v210
    %v2131 = vunpack.c.l.b16 %v211
    %v2132 = vunpack.c.l.b16 %v212
    %v2133 = vunpack.c.l.b16 %v213
    %v2134 = vunpack.c.l.b16 %v214
    %v2135 = vunpack.c.l.b16 %v215
    %v2136 = vunpack.c.l.b16 %v216
    %v2137 = vunpack.c.l.b16 %v217
    %v2138 = vunpack.c.l.b16 %v218
    %v2139 = vunpack.c.l.b16 %v219
    %v2140 = vunpack.c.l.b16 %v220
    %v2141 = vunpack.c.l.b16 %v221
    %v2142 = vunpack.c.l.b16 %v222
    %v2143 = vunpack.c.l.b16 %v223
    %v2144 = vunpack.c.l.b16 %v224
    %v2145 = vunpack.c.l.b16 %v225
    %v2146 = vunpack.c.l.b16 %v226
    %v2147 = vunpack.c.l.b16 %v227
    %v2148 = vunpack.c.l.b16 %v228
    %v2149 = vunpack.c.l.b16 %v229
    %v2150 = vunpack.c.l.b16 %v230
    %v2151 = vunpack.c.l.b16 %v231
    %v2152 = vunpack.c.l.b16 %v232
    %v2153 = vunpack.c.l.b16 %v233
    %v2154 = vunpack.c.l.b16 %v234
    %v2155 = vunpack.c.l.b16 %v235
    %v2156 = vunpack.c.l.b16 %v236
    %v2157 = vunpack.c.l.b16 %v237
    %v2158 = vunpack.c.l.b16 %v238
    %v2159 = vunpack.c.l.b16 %v239
    %v2160 = vunpack.c.l.b16 %v240
    %v2161 = vunpack.c.l.b16 %v241
    %v2162 = vunpack.c.l.b16 %v242
    %v2163 = vunpack.c.l.b16 %v243
    %v2164 = vunpack.c.l.b16 %v244
    %v2165 = vunpack.c.l.b16 %v245
    %v2166 = vunpack.c.l.b16 %v246
    %v2167 = vunpack.c.l.b16 %v247
    %v2168 = vunpack.c.l.b16 %v248
    %v2169 = vunpack.c.l.b16 %v249
    %v2170 = vunpack.c.l.b16 %v250
    %v2171 = vunpack.c.l.b16 %v251
    %v2172 = vunpack.c.l.b16 %v252
    %v2173 = vunpack.c.l.b16 %v253
    %v2174 = vunpack.c.l.b16 %v254
    %v2175 = vunpack.c.l.b16 %v255
    %v2176 = vunpack.c.l.b16 %v256
    %v2177 = vunpack.c.l.b16 %v257
    %v2178 = vunpack.c.l.b16 %v258
    %v2179 = vunpack.c.l.b16 %v259
    %v2180 = vunpack.c.l.b16 %v260
    %v2181 = vunpack.c.l.b16 %v261
    %v2182 = vunpack.c.l.b16 %v262
    %v2183 = vunpack.c.l.b16 %v263
    %v2184 = vunpack.c.l.b16 %v264
    %v2185 = vunpack.c.l.b16 %v265
    %v2186 = vunpack.c.l.b16 %v266
    %v2187 = vunpack.c.l.b16 %v267
    %v2188 = vunpack.c.l.b16 %v268
    %v2189 = vunpack.c.l.b16 %v269
    %v2190 = vunpack.c.l.b16 %v270
    %v2191 = vunpack.c.l.b16 %v271
    %v2192 = vunpack.c.l.b16 %v272
    %v2193 = vunpack.c.l.b16 %v273
    %v2194 = vunpack.c.l.b16 %v274
    %v2195 = vunpack.c.l.b16 %v275
    %v2196 = vunpack.c.l.b16 %v276
    %v2197 = vunpack.c.l.b16 %v277
    %v2198 = vunpack.c.l.b16 %v278
    %v2199 = vunpack.c.l.b16 %v279
    %v2200 = vunpack.c.l.b16 %v280
    %v2201 = vunpack.c.l.b16 %v281
    %v2202 = vunpack.c.l.b16 %v282
    %v2203 = vunpack.c.l.b16 %v283
    %v2204 = vunpack.c.l.b16 %v284
    %v2205 = vunpack.c.l.b16 %v285
    %v2206 = vunpack.c.l.b16 %v286
    %v2207 = vunpack.c.l.b16 %v287
    %v2208 = vunpack.c.l.b16 %v288
    %v2209 = vunpack.c.l.b16 %v289
    %v2210 = vunpack.c.l.b16 %v290
    %v2211 = vunpack.c.l.b16 %v291
    %v2212 = vunpack.c.l.b16 %v292
    %v2213 = vunpack.c.l.b16 %v293
    %v2214 = vunpack.c.l.b16 %v294
    %v2215 = vunpack.c.l.b16 %v295
    %v2216 = vunpack.c.l.b16 %v296
    %v2217 = vunpack.c.l.b16 %v297
    %v2218 = vunpack.c.l.b16 %v298
    %v2219 = vunpack.c.l.b16 %v299
    %v2220 = vunpack.c.l.b16 %v300
    %v2221 = vunpack.c.l.b16 %v301
    %v2222 = vunpack.c.l.b16 %v302
    %v2223 = vunpack.c.l.b16 %v303
    %v2224 = vunpack.c.l.b16 %v304
    %v2225 = vunpack.c.l.b16 %v305
    %v2226 = vunpack.c.l.b16 %v306
    %v2227 = vunpack.c.l.b16 %v307
    %v2228 = vunpack.c.l.b16 %v308
    %v2229 = vunpack.c.l.b16 %v309
    %v2230 = vunpack.c.l.b16 %v310
    %v2231 = vunpack.c.l.b16 %v311
    %v2232 = vunpack.c.l.b16 %v312
    %v2233 = vunpack.c.l.b16 %v313
    %v2234 = vunpack.c.l.b16 %v314
    %v2235 = vunpack.c.l.b16 %v315
    %v2236 = vunpack.c.l.b16 %v316
    %v2237 = vunpack.c.l.b16 %v317
    %v2238 = vunpack.c.l.b16 %v318
    %v2239 = vunpack.c.l.b16 %v319
    %v2240 = vunpack.c.l.b16 %v320
    %v2241 = vunpack.c.l.b16 %v321
    %v2242 = vunpack.c.l.b16 %v322
    %v2243 = vunpack.c.l.b16 %v323
    %v2244 = vunpack.c.l.b16 %v324
    %v2245 = vunpack.c.l.b16 %v325
    %v2246 = vunpack.c.l.b16 %v326
    %v2247 = vunpack.c.l.b16 %v327
    %v2248 = vunpack.c.l.b16 %v328
    %v2249 = vunpack.c.l.b16 %v329
    %v2250 = vunpack.c.l.b16 %v330
    %v2251 = vunpack.c.l.b16 %v331
    %v2252 = vunpack.c.l.b16 %v332
    %v2253 = vunpack.c.l.b16 %v333
    %v2254 = vunpack.c.l.b16 %v334
    %v2255 = vunpack.c.l.b16 %v335
    %v2256 = vunpack.c.l.b16 %v336
    %v2257 = vunpack.c.l.b16 %v337
    %v2258 = vunpack.c.l.b16 %v338
    %v2259 = vunpack.c.l.b16 %v339
    %v2260 = vunpack.c.l.b16 %v340
    %v2261 = vunpack.c.l.b16 %v341
    %v2262 = vunpack.c.l.b16 %v342
    %v2263 = vunpack.c.l.b16 %v343
    %v2264 = vunpack.c.l.b16 %v344
    %v2265 = vunpack.c.l.b16 %v345
    %v2266 = vunpack.c.l.b16 %v346
    %v2267 = vunpack.c.l.b16 %v347
    %v2268 = vunpack.c.l.b16 %v348
    %v2269 = vunpack.c.l.b16 %v349
    %v2270 = vunpack.c.l.b16 %v350
    %v2271 = vunpack.c.l.b16 %v351
    %v2272 = vunpack.c.l.b16 %v352
    %v2273 = vunpack.c.l.b16 %v353
    %v2274 = vunpack.c.l.b16 %v354
    %v2275 = vunpack.c.l.b16 %v355
    %v2276 = vunpack.c.l.b16 %v356
    %v2277 = vunpack.c.l.b16 %v357
    %v2278 = vunpack.c.l.b16 %v358
    %v2279 = vunpack.c.l.b16 %v359
    %v2280 = vunpack.c.l.b16 %v360
    %v2281 = vunpack.c.l.b16 %v361
    %v2282 = vunpack.c.l.b16 %v362
    %v2283 = vunpack.c.l.b16 %v363
    %v2284 = vunpack.c.l.b16 %v364
    %v2285 = vunpack.c.l.b16 %v365
    %v2286 = vunpack.c.l.b16 %v366
    %v2287 = vunpack.c.l.b16 %v367
    %v2288 = vunpack.c.l.b16 %v368
    %v2289 = vunpack.c.l.b16 %v369
    %v2290 = vunpack.c.l.b16 %v370
    %v2291 = vunpack.c.l.b16 %v371
    %v2292 = vunpack.c.l.b16 %v372
    %v2293 = vunpack.c.l.b16 %v373
    %v2294 = vunpack.c.l.b16 %v374
    %v2295 = vunpack.c.l.b16 %v375
    %v2296 = vunpack.c.l.b16 %v376
    %v2297 = vunpack.c.l.b16 %v377
    %v2298 = vunpack.c.l.b16 %v378
    %v2299 = vunpack.c.l.b16 %v379
    %v2300 = vunpack.c.l.b16 %v380
    %v2301 = vunpack.c.l.b16 %v381
    %v2302 = vunpack.c.l.b16 %v382
    %v2303 = vunpack.c.l.b16 %v383
    %v2304 = vunpack.c.l.b16 %v384
    %v2305 = vunpack.c.l.b16 %v385
    %v2306 = vunpack.c.l.b16 %v386
    %v2307 = vunpack.c.l.b16 %v387
    %v2308 = vunpack.c.l.b16 %v388
    %v2309 = vunpack.c.l.b16 %v389
    %v2310 = vunpack.c.l.b16 %v390
    %v2311 = vunpack.c.l.b16 %v391
    %v2312 = vunpack.c.l.b16 %v392
    %v2313 = vunpack.c.l.b16 %v393
    %v2314 = vunpack.c.l.b16 %v394
    %v2315 = vunpack.c.l.b16 %v395
    %v2316 = vunpack.c.l.b16 %v396
    %v2317 = vunpack.c.l.b16 %v397
    %v2318 = vunpack.c.l.b16 %v398
    %v2319 = vunpack.c.l.b16 %v399
    %v2320 = vunpack.c.l.b16 %v400
    %v2321 = vunpack.c.l.b16 %v401
    %v2322 = vunpack.c.l.b16 %v402
    %v2323 = vunpack.c.l.b16 %v403
    %v2324 = vunpack.c.l.b16 %v404
    %v2325 = vunpack.c.l.b16 %v405
    %v2326 = vunpack.c.l.b16 %v406
    %v2327 = vunpack.c.l.b16 %v407
    %v2328 = vunpack.c.l.b16 %v408
    %v2329 = vunpack.c.l.b16 %v409
    %v2330 = vunpack.c.l.b16 %v410
    %v2331 = vunpack.c.l.b16 %v411
    %v2332 = vunpack.c.l.b16 %v412
    %v2333 = vunpack.c.l.b16 %v413
    %v2334 = vunpack.c.l.b16 %v414
    %v2335 = vunpack.c.l.b16 %v415
    %v2336 = vunpack.c.l.b16 %v416
    %v2337 = vunpack.c.l.b16 %v417
    %v2338 = vunpack.c.l.b16 %v418
    %v2339 = vunpack.c.l.b16 %v419
    %v2340 = vunpack.c.l.b16 %v420
    %v2341 = vunpack.c.l.b16 %v421
    %v2342 = vunpack.c.l.b16 %v422
    %v2343 = vunpack.c.l.b16 %v423
    %v2344 = vunpack.c.l.b16 %v424
    %v2345 = vunpack.c.l.b16 %v425
    %v2346 = vunpack.c.l.b16 %v426
    %v2347 = vunpack.c.l.b16 %v427
    %v2348 = vunpack.c.l.b16 %v428
    %v2349 = vunpack.c.l.b16 %v429
    %v2350 = vunpack.c.l.b16 %v430
    %v2351 = vunpack.c.l.b16 %v431
    %v2352 = vunpack.c.l.b16 %v432
    %v2353 = vunpack.c.l.b16 %v433
    %v2354 = vunpack.c.l.b16 %v434
    %v2355 = vunpack.c.l.b16 %v435
    %v2356 = vunpack.c.l.b16 %v436
    %v2357 = vunpack.c.l.b16 %v437
    %v2358 = vunpack.c.l.b16 %v438
    %v2359 = vunpack.c.l.b16 %v439
    %v2360 = vunpack.c.l.b16 %v440
    %v2361 = vunpack.c.l.b16 %v441
    %v2362 = vunpack.c.l.b16 %v442
    %v2363 = vunpack.c.l.b16 %v443
    %v2364 = vunpack.c.l.b16 %v444
    %v2365 = vunpack.c.l.b16 %v445
    %v2366 = vunpack.c.l.b16 %v446
    %v2367 = vunpack.c.l.b16 %v447
    %v2368 = vunpack.c.l.b16 %v448
    %v2369 = vunpack.c.l.b16 %v449
    %v2370 = vunpack.c.l.b16 %v450
    %v2371 = vunpack.c.l.b16 %v451
    %v2372 = vunpack.c.l.b16 %v452
    %v2373 = vunpack.c.l.b16 %v453
    %v2374 = vunpack.c.l.b16 %v454
    %v2375 = vunpack.c.l.b16 %v455
    %v2376 = vunpack.c.l.b16 %v456
    %v2377 = vunpack.c.l.b16 %v457
    %v2378 = vunpack.c.l.b16 %v458
    %v2379 = vunpack.c.l.b16 %v459
    %v2380 = vunpack.c.l.b16 %v460
    %v2381 = vunpack.c.l.b16 %v461
    %v2382 = vunpack.c.l.b16 %v462
    %v2383 = vunpack.c.l.b16 %v463
    %v2384 = vunpack.c.l.b16 %v464
    %v2385 = vunpack.c.l.b16 %v465
    %v2386 = vunpack.c.l.b16 %v466
    %v2387 = vunpack.c.l.b16 %v467
    %v2388 = vunpack.c.l.b16 %v468
    %v2389 = vunpack.c.l.b16 %v469
    %v2390 = vunpack.c.l.b16 %v470
    %v2391 = vunpack.c.l.b16 %v471
    %v2392 = vunpack.c.l.b16 %v472
    %v2393 = vunpack.c.l.b16 %v473
    %v2394 = vunpack.c.l.b16 %v474
    %v2395 = vunpack.c.l.b16 %v475
    %v2396 = vunpack.c.l.b16 %v476
    %v2397 = vunpack.c.l.b16 %v477
    %v2398 = vunpack.c.l.b16 %v478
    %v2399 = vunpack.c.l.b16 %v479
    %v2400 = vunpack.c.l.b16 %v480
    %v2401 = vunpack.c.l.b16 %v481
    %v2402 = vunpack.c.l.b16 %v482
    %v2403 = vunpack.c.l.b16 %v483
    %v2404 = vunpack.c.l.b16 %v484
    %v2405 = vunpack.c.l.b16 %v485
    %v2406 = vunpack.c.l.b16 %v486
    %v2407 = vunpack.c.l.b16 %v487
    %v2408 = vunpack.c.l.b16 %v488
    %v2409 = vunpack.c.l.b16 %v489
    %v2410 = vunpack.c.l.b16 %v490
    %v2411 = vunpack.c.l.b16 %v491
    %v2412 = vunpack.c.l.b16 %v492
    %v2413 = vunpack.c.l.b16 %v493
    %v2414 = vunpack.c.l.b16 %v494
    %v2415 = vunpack.c.l.b16 %v495
    %v2416 = vunpack.c.l.b16 %v496
    %v2417 = vunpack.c.l.b16 %v497
    %v2418 = vunpack.c.l.b16 %v498
    %v2419 = vunpack.c.l.b16 %v499
    %v2420 = vunpack.c.l.b16 %v500
    %v2421 = vunpack.c.l.b16 %v501
    %v2422 = vunpack.c.l.b16 %v502
    %v2423 = vunpack.c.l.b16 %v503
    %v2424 = vunpack.c.l.b16 %v504
    %v2425 = vunpack.c.l.b16 %v505
    %v2426 = vunpack.c.l.b16 %v506
    %v2427 = vunpack.c.l.b16 %v507
    %v2428 = vunpack.c.l.b16 %v508
    %v2429 = vunpack.c.l.b16 %v509
    %v2430 = vunpack.c.l.b16 %v510
    %v2431 = vunpack.c.l.b16 %v511
    %v2432 = vunpack.c.l.b16 %v512
    %v2433 = vunpack.c.l.b16 %v513
    %v2434 = vunpack.c.l.b16 %v514
    %v2435 = vunpack.c.l.b16 %v515
    %v2436 = vunpack.c.l.b16 %v516
    %v2437 = vunpack.c.l.b16 %v517
    %v2438 = vunpack.c.l.b16 %v518
    %v2439 = vunpack.c.l.b16 %v519
    %v2440 = vunpack.c.l.b16 %v520
    %v2441 = vunpack.c.l.b16 %v521
    %v2442 = vunpack.c.l.b16 %v522
    %v2443 = vunpack.c.l.b16 %v523
    %v2444 = vunpack.c.l.b16 %v524
    %v2445 = vunpack.c.l.b16 %v525
    %v2446 = vunpack.c.l.b16 %v526
    %v2447 = vunpack.c.l.b16 %v527
    %v2448 = vunpack.c.l.b16 %v528
    %v2449 = vunpack.c.l.b16 %v529
    %v2450 = vunpack.c.l.b16 %v530
    %v2451 = vunpack.c.l.b16 %v531
    %v2452 = vunpack.c.l.b16 %v532
    %v2453 = vunpack.c.l.b16 %v533
    %v2454 = vunpack.c.l.b16 %v534
    %v2455 = vunpack.c.l.b16 %v535
    %v2456 = vunpack.c.l.b16 %v536
    %v2457 = vunpack.c.l.b16 %v537
    %v2458 = vunpack.c.l.b16 %v538
    %v2459 = vunpack.c.l.b16 %v539
    %v2460 = vunpack.c.l.b16 %v540
    %v2461 = vunpack.c.l.b16 %v541
    %v2462 = vunpack.c.l.b16 %v542
    %v2463 = vunpack.c.l.b16 %v543
    %v2464 = vunpack.c.l.b16 %v544
    %v2465 = vunpack.c.l.b16 %v545
    %v2466 = vunpack.c.l.b16 %v546
    %v2467 = vunpack.c.l.b16 %v547
    %v2468 = vunpack.c.l.b16 %v548
    %v2469 = vunpack.c.l.b16 %v549
    %v2470 = vunpack.c.l.b16 %v550
    %v2471 = vunpack.c.l.b16 %v551
    %v2472 = vunpack.c.l.b16 %v552
    %v2473 = vunpack.c.l.b16 %v553
    %v2474 = vunpack.c.l.b16 %v554
    %v2475 = vunpack.c.l.b16 %v555
    %v2476 = vunpack.c.l.b16 %v556
    %v2477 = vunpack.c.l.b16 %v557
    %v2478 = vunpack.c.l.b16 %v558
    %v2479 = vunpack.c.l.b16 %v559
    %v2480 = vunpack.c.l.b16 %v560
    %v2481 = vunpack.c.l.b16 %v561
    %v2482 = vunpack.c.l.b16 %v562
    %v2483 = vunpack.c.l.b16 %v563
    %v2484 = vunpack.c.l.b16 %v564
    %v2485 = vunpack.c.l.b16 %v565
    %v2486 = vunpack.c.l.b16 %v566
    %v2487 = vunpack.c.l.b16 %v567
    %v2488 = vunpack.c.l.b16 %v568
    %v2489 = vunpack.c.l.b16 %v569
    %v2490 = vunpack.c.l.b16 %v570
    %v2491 = vunpack.c.l.b16 %v571
    %v2492 = vunpack.c.l.b16 %v572
    %v2493 = vunpack.c.l.b16 %v573
    %v2494 = vunpack.c.l.b16 %v574
    %v2495 = vunpack.c.l.b16 %v575
    %v2496 = vunpack.c.l.b16 %v576
    %v2497 = vunpack.c.l.b16 %v577
    %v2498 = vunpack.c.l.b16 %v578
    %v2499 = vunpack.c.l.b16 %v579
    %v2500 = vunpack.c.l.b16 %v580
    %v2501 = vunpack.c.l.b16 %v581
    %v2502 = vunpack.c.l.b16 %v582
    %v2503 = vunpack.c.l.b16 %v583
    %v2504 = vunpack.c.l.b16 %v584
    %v2505 = vunpack.c.l.b16 %v585
    %v2506 = vunpack.c.l.b16 %v586
    %v2507 = vunpack.c.l.b16 %v587
    %v2508 = vunpack.c.l.b16 %v588
    %v2509 = vunpack.c.l.b16 %v589
    %v2510 = vunpack.c.l.b16 %v590
    %v2511 = vunpack.c.l.b16 %v591
    %v2512 = vunpack.c.l.b16 %v592
    %v2513 = vunpack.c.l.b16 %v593
    %v2514 = vunpack.c.l.b16 %v594
    %v2515 = vunpack.c.l.b16 %v595
    %v2516 = vunpack.c.l.b16 %v596
    %v2517 = vunpack.c.l.b16 %v597
    %v2518 = vunpack.c.l.b16 %v598
    %v2519 = vunpack.c.l.b16 %v599
    %v2520 = vunpack.c.l.b16 %v600
    %v2521 = vunpack.c.l.b16 %v601
    %v2522 = vunpack.c.l.b16 %v602
    %v2523 = vunpack.c.l.b16 %v603
    %v2524 = vunpack.c.l.b16 %v604
    %v2525 = vunpack.c.l.b16 %v605
    %v2526 = vunpack.c.l.b16 %v606
    %v2527 = vunpack.c.l.b16 %v607
    %v2528 = vunpack.c.l.b16 %v608
    %v2529 = vunpack.c.l.b16 %v609
    %v2530 = vunpack.c.l.b16 %v610
    %v2531 = vunpack.c.l.b16 %v611
    %v2532 = vunpack.c.l.b16 %v612
    %v2533 = vunpack.c.l.b16 %v613
    %v2534 = vunpack.c.l.b16 %v614
    %v2535 = vunpack.c.l.b16 %v615
    %v2536 = vunpack.c.l.b16 %v616
    %v2537 = vunpack.c.l.b16 %v617
    %v2538 = vunpack.c.l.b16 %v618
    %v2539 = vunpack.c.l.b16 %v619
    %v2540 = vunpack.c.l.b16 %v620
    %v2541 = vunpack.c.l.b16 %v621
    %v2542 = vunpack.c.l.b16 %v622
    %v2543 = vunpack.c.l.b16 %v623
    %v2544 = vunpack.c.l.b16 %v624
    %v2545 = vunpack.c.l.b16 %v625
    %v2546 = vunpack.c.l.b16 %v626
    %v2547 = vunpack.c.l.b16 %v627
    %v2548 = vunpack.c.l.b16 %v628
    %v2549 = vunpack.c.l.b16 %v629
    %v2550 = vunpack.c.l.b16 %v630
    %v2551 = vunpack.c.l.b16 %v631
    %v2552 = vunpack.c.l.b16 %v632
    %v2553 = vunpack.c.l.b16 %v633
    %v2554 = vunpack.c.l.b16 %v634
    %v2555 = vunpack.c.l.b16 %v635
    %v2556 = vunpack.c.l.b16 %v636
    %v2557 = vunpack.c.l.b16 %v637
    %v2558 = vunpack.c.l.b16 %v638
    %v2559 = vunpack.c.l.b16 %v639
    %v2560 = vunpack.c.l.b16 %v640
    %v2561 = vunpack.c.l.b16 %v641
    %v2562 = vunpack.c.l.b16 %v642
    %v2563 = vunpack.c.l.b16 %v643
    %v2564 = vunpack.c.l.b16 %v644
    %v2565 = vunpack.c.l.b16 %v645
    %v2566 = vunpack.c.l.b16 %v646
    %v2567 = vunpack.c.l.b16 %v647
    %v2568 = vunpack.c.l.b16 %v648
    %v2569 = vunpack.c.l.b16 %v649
    %v2570 = vunpack.c.l.b16 %v650
    %v2571 = vunpack.c.l.b16 %v651
    %v2572 = vunpack.c.l.b16 %v652
    %v2573 = vunpack.c.l.b16 %v653
    %v2574 = vunpack.c.l.b16 %v654
    %v2575 = vunpack.c.l.b16 %v655
    %v2576 = vunpack.c.l.b16 %v656
    %v2577 = vunpack.c.l.b16 %v657
    %v2578 = vunpack.c.l.b16 %v658
    %v2579 = vunpack.c.l.b16 %v659
    %v2580 = vunpack.c.l.b16 %v660
    %v2581 = vunpack.c.l.b16 %v661
    %v2582 = vunpack.c.l.b16 %v662
    %v2583 = vunpack.c.l.b16 %v663
    %v2584 = vunpack.c.l.b16 %v664
    %v2585 = vunpack.c.l.b16 %v665
    %v2586 = vunpack.c.l.b16 %v666
    %v2587 = vunpack.c.l.b16 %v667
    %v2588 = vunpack.c.l.b16 %v668
    %v2589 = vunpack.c.l.b16 %v669
    %v2590 = vunpack.c.l.b16 %v670
    %v2591 = vunpack.c.l.b16 %v671
    %v2592 = vunpack.c.l.b16 %v672
    %v2593 = vunpack.c.l.b16 %v673
    %v2594 = vunpack.c.l.b16 %v674
    %v2595 = vunpack.c.l.b16 %v675
    %v2596 = vunpack.c.l.b16 %v676
    %v2597 = vunpack.c.l.b16 %v677
    %v2598 = vunpack.c.l.b16 %v678
    %v2599 = vunpack.c.l.b16 %v679
    %v2600 = vunpack.c.l.b16 %v680
    %v2601 = vunpack.c.l.b16 %v681
    %v2602 = vunpack.c.l.b16 %v682
    %v2603 = vunpack.c.l.b16 %v683
    %v2604 = vunpack.c.l.b16 %v684
    %v2605 = vunpack.c.l.b16 %v685
    %v2606 = vunpack.c.l.b16 %v686
    %v2607 = vunpack.c.l.b16 %v687
    %v2608 = vunpack.c.l.b16 %v688
    %v2609 = vunpack.c.l.b16 %v689
    %v2610 = vunpack.c.l.b16 %v690
    %v2611 = vunpack.c.l.b16 %v691
    %v2612 = vunpack.c.l.b16 %v692
    %v2613 = vunpack.c.l.b16 %v693
    %v2614 = vunpack.c.l.b16 %v694
    %v2615 = vunpack.c.l.b16 %v695
    %v2616 = vunpack.c.l.b16 %v696
    %v2617 = vunpack.c.l.b16 %v697
    %v2618 = vunpack.c.l.b16 %v698
    %v2619 = vunpack.c.l.b16 %v699
    %v2620 = vunpack.c.l.b16 %v700
    %v2621 = vunpack.c.l.b16 %v701
    %v2622 = vunpack.c.l.b16 %v702
    %v2623 = vunpack.c.l.b16 %v703
    %v2624 = vunpack.c.l.b16 %v704
    %v2625 = vunpack.c.l.b16 %v705
    %v2626 = vunpack.c.l.b16 %v706
    %v2627 = vunpack.c.l.b16 %v707
    %v2628 = vunpack.c.l.b16 %v708
    %v2629 = vunpack.c.l.b16 %v709
    %v2630 = vunpack.c.l.b16 %v710
    %v2631 = vunpack.c.l.b16 %v711
    %v2632 = vunpack.c.l.b16 %v712
    %v2633 = vunpack.c.l.b16 %v713
    %v2634 = vunpack.c.l.b16 %v714
    %v2635 = vunpack.c.l.b16 %v715
    %v2636 = vunpack.c.l.b16 %v716
    %v2637 = vunpack.c.l.b16 %v717
    %v2638 = vunpack.c.l.b16 %v718
    %v2639 = vunpack.c.l.b16 %v719
    %v2640 = vunpack.c.l.b16 %v720
    %v2641 = vunpack.c.l.b16 %v721
    %v2642 = vunpack.c.l.b16 %v722
    %v2643 = vunpack.c.l.b16 %v723
    %v2644 = vunpack.c.l.b16 %v724
    %v2645 = vunpack.c.l.b16 %v725
    %v2646 = vunpack.c.l.b16 %v726
    %v2647 = vunpack.c.l.b16 %v727
    %v2648 = vunpack.c.l.b16 %v728
    %v2649 = vunpack.c.l.b16 %v729
    %v2650 = vunpack.c.l.b16 %v730
    %v2651 = vunpack.c.l.b16 %v731
    %v2652 = vunpack.c.l.b16 %v732
    %v2653 = vunpack.c.l.b16 %v733
    %v2654 = vunpack.c.l.b16 %v734
    %v2655 = vunpack.c.l.b16 %v735
    %v2656 = vunpack.c.l.b16 %v736
    %v2657 = vunpack.c.l.b16 %v737
    %v2658 = vunpack.c.l.b16 %v738
    %v2659 = vunpack.c.l.b16 %v739
    %v2660 = vunpack.c.l.b16 %v740
    %v2661 = vunpack.c.l.b16 %v741
    %v2662 = vunpack.c.l.b16 %v742
    %v2663 = vunpack.c.l.b16 %v743
    %v2664 = vunpack.c.l.b16 %v744
    %v2665 = vunpack.c.l.b16 %v745
    %v2666 = vunpack.c.l.b16 %v746
    %v2667 = vunpack.c.l.b16 %v747
    %v2668 = vunpack.c.l.b16 %v748
    %v2669 = vunpack.c.l.b16 %v749
    %v2670 = vunpack.c.l.b16 %v750
    %v2671 = vunpack.c.l.b16 %v751
    %v2672 = vunpack.c.l.b16 %v752
    %v2673 = vunpack.c.l.b16 %v753
    %v2674 = vpack.c.b16 %v2099, %v2098
    %v2675 = vpack.c.b16 %v2101, %v2100
    %v2676 = vpack.c.b16 %v2103, %v2102
    %v2677 = vpack.c.b16 %v2105, %v2104
    %v2678 = vpack.c.b16 %v2107, %v2106
    %v2679 = vpack.c.b16 %v2109, %v2108
    %v2680 = vpack.c.b16 %v2111, %v2110
    %v2681 = vpack.c.b16 %v2113, %v2112
    %v2682 = vpack.c.b16 %v2115, %v2114
    %v2683 = vpack.c.b16 %v2117, %v2116
    %v2684 = vpack.c.b16 %v2119, %v2118
    %v2685 = vpack.c.b16 %v2121, %v2120
    %v2686 = vpack.c.b16 %v2123, %v2122
    %v2687 = vpack.c.b16 %v2125, %v2124
    %v2688 = vpack.c.b16 %v2127, %v2126
    %v2689 = vpack.c.b16 %v2129, %v2128
    %v2690 = vpack.c.b16 %v2131, %v2130
    %v2691 = vpack.c.b16 %v2133, %v2132
    %v2692 = vpack.c.b16 %v2135, %v2134
    %v2693 = vpack.c.b16 %v2137, %v2136
    %v2694 = vpack.c.b16 %v2139, %v2138
    %v2695 = vpack.c.b16 %v2141, %v2140
    %v2696 = vpack.c.b16 %v2143, %v2142
    %v2697 = vpack.c.b16 %v2145, %v2144
    %v2698 = vpack.c.b16 %v2147, %v2146
    %v2699 = vpack.c.b16 %v2149, %v2148
    %v2700 = vpack.c.b16 %v2151, %v2150
    %v2701 = vpack.c.b16 %v2153, %v2152
    %v2702 = vpack.c.b16 %v2155, %v2154
    %v2703 = vpack.c.b16 %v2157, %v2156
    %v2704 = vpack.c.b16 %v2159, %v2158
    %v2705 = vpack.c.b16 %v2161, %v2160
    %v2706 = vpack.c.b16 %v2163, %v2162
    %v2707 = vpack.c.b16 %v2165, %v2164
    %v2708 = vpack.c.b16 %v2167, %v2166
    %v2709 = vpack.c.b16 %v2169, %v2168
    %v2710 = vpack.c.b16 %v2171, %v2170
    %v2711 = vpack.c.b16 %v2173, %v2172
    %v2712 = vpack.c.b16 %v2175, %v2174
    %v2713 = vpack.c.b16 %v2177, %v2176
    %v2714 = vpack.c.b16 %v2179, %v2178
    %v2715 = vpack.c.b16 %v2181, %v2180
    %v2716 = vpack.c.b16 %v2183, %v2182
    %v2717 = vpack.c.b16 %v2185, %v2184
    %v2718 = vpack.c.b16 %v2187, %v2186
    %v2719 = vpack.c.b16 %v2189, %v2188
    %v2720 = vpack.c.b16 %v2191, %v2190
    %v2721 = vpack.c.b16 %v2193, %v2192
    %v2722 = vpack.c.b16 %v2195, %v2194
    %v2723 = vpack.c.b16 %v2197, %v2196
    %v2724 = vpack.c.b16 %v2199, %v2198
    %v2725 = vpack.c.b16 %v2201, %v2200
    %v2726 = vpack.c.b16 %v2203, %v2202
    %v2727 = vpack.c.b16 %v2205, %v2204
    %v2728 = vpack.c.b16 %v2207, %v2206
    %v2729 = vpack.c.b16 %v2209, %v2208
    %v2730 = vpack.c.b16 %v2211, %v2210
    %v2731 = vpack.c.b16 %v2213, %v2212
    %v2732 = vpack.c.b16 %v2215, %v2214
    %v2733 = vpack.c.b16 %v2217, %v2216
    %v2734 = vpack.c.b16 %v2219, %v2218
    %v2735 = vpack.c.b16 %v2221, %v2220
    %v2736 = vpack.c.b16 %v2223, %v2222
    %v2737 = vpack.c.b16 %v2225, %v2224
    %v2738 = vpack.c.b16 %v2227, %v2226
    %v2739 = vpack.c.b16 %v2229, %v2228
    %v2740 = vpack.c.b16 %v2231, %v2230
    %v2741 = vpack.c.b16 %v2233, %v2232
    %v2742 = vpack.c.b16 %v2235, %v2234
    %v2743 = vpack.c.b16 %v2237, %v2236
    %v2744 = vpack.c.b16 %v2239, %v2238
    %v2745 = vpack.c.b16 %v2241, %v2240
    %v2746 = vpack.c.b16 %v2243, %v2242
    %v2747 = vpack.c.b16 %v2245, %v2244
    %v2748 = vpack.c.b16 %v2247, %v2246
    %v2749 = vpack.c.b16 %v2249, %v2248
    %v2750 = vpack.c.b16 %v2251, %v2250
    %v2751 = vpack.c.b16 %v2253, %v2252
    %v2752 = vpack.c.b16 %v2255, %v2254
    %v2753 = vpack.c.b16 %v2257, %v2256
    %v2754 = vpack.c.b16 %v2259, %v2258
    %v2755 = vpack.c.b16 %v2261, %v2260
    %v2756 = vpack.c.b16 %v2263, %v2262
    %v2757 = vpack.c.b16 %v2265, %v2264
    %v2758 = vpack.c.b16 %v2267, %v2266
    %v2759 = vpack.c.b16 %v2269, %v2268
    %v2760 = vpack.c.b16 %v2271, %v2270
    %v2761 = vpack.c.b16 %v2273, %v2272
    %v2762 = vpack.c.b16 %v2275, %v2274
    %v2763 = vpack.c.b16 %v2277, %v2276
    %v2764 = vpack.c.b16 %v2279, %v2278
    %v2765 = vpack.c.b16 %v2281, %v2280
    %v2766 = vpack.c.b16 %v2283, %v2282
    %v2767 = vpack.c.b16 %v2285, %v2284
    %v2768 = vpack.c.b16 %v2287, %v2286
    %v2769 = vpack.c.b16 %v2289, %v2288
    %v2770 = vpack.c.b16 %v2291, %v2290
    %v2771 = vpack.c.b16 %v2293, %v2292
    %v2772 = vpack.c.b16 %v2295, %v2294
    %v2773 = vpack.c.b16 %v2297, %v2296
    %v2774 = vpack.c.b16 %v2299, %v2298
    %v2775 = vpack.c.b16 %v2301, %v2300
    %v2776 = vpack.c.b16 %v2303, %v2302
    %v2777 = vpack.c.b16 %v2305, %v2304
    %v2778 = vpack.c.b16 %v2307, %v2306
    %v2779 = vpack.c.b16 %v2309, %v2308
    %v2780 = vpack.c.b16 %v2311, %v2310
    %v2781 = vpack.c.b16 %v2313, %v2312
    %v2782 = vpack.c.b16 %v2315, %v2314
    %v2783 = vpack.c.b16 %v2317, %v2316
    %v2784 = vpack.c.b16 %v2319, %v2318
    %v2785 = vpack.c.b16 %v2321, %v2320
    %v2786 = vpack.c.b16 %v2323, %v2322
    %v2787 = vpack.c.b16 %v2325, %v2324
    %v2788 = vpack.c.b16 %v2327, %v2326
    %v2789 = vpack.c.b16 %v2329, %v2328
    %v2790 = vpack.c.b16 %v2331, %v2330
    %v2791 = vpack.c.b16 %v2333, %v2332
    %v2792 = vpack.c.b16 %v2335, %v2334
    %v2793 = vpack.c.b16 %v2337, %v2336
    %v2794 = vpack.c.b16 %v2339, %v2338
    %v2795 = vpack.c.b16 %v2341, %v2340
    %v2796 = vpack.c.b16 %v2343, %v2342
    %v2797 = vpack.c.b16 %v2345, %v2344
    %v2798 = vpack.c.b16 %v2347, %v2346
    %v2799 = vpack.c.b16 %v2349, %v2348
    %v2800 = vpack.c.b16 %v2351, %v2350
    %v2801 = vpack.c.b16 %v2353, %v2352
    %v2802 = vpack.c.b16 %v2355, %v2354
    %v2803 = vpack.c.b16 %v2357, %v2356
    %v2804 = vpack.c.b16 %v2359, %v2358
    %v2805 = vpack.c.b16 %v2361, %v2360
    %v2806 = vpack.c.b16 %v2363, %v2362
    %v2807 = vpack.c.b16 %v2365, %v2364
    %v2808 = vpack.c.b16 %v2367, %v2366
    %v2809 = vpack.c.b16 %v2369, %v2368
    %v2810 = vpack.c.b16 %v2371, %v2370
    %v2811 = vpack.c.b16 %v2373, %v2372
    %v2812 = vpack.c.b16 %v2375, %v2374
    %v2813 = vpack.c.b16 %v2377, %v2376
    %v2814 = vpack.c.b16 %v2379, %v2378
    %v2815 = vpack.c.b16 %v2381, %v2380
    %v2816 = vpack.c.b16 %v2383, %v2382
    %v2817 = vpack.c.b16 %v2385, %v2384
    %v2818 = vpack.c.b16 %v2387, %v2386
    %v2819 = vpack.c.b16 %v2389, %v2388
    %v2820 = vpack.c.b16 %v2391, %v2390
    %v2821 = vpack.c.b16 %v2393, %v2392
    %v2822 = vpack.c.b16 %v2395, %v2394
    %v2823 = vpack.c.b16 %v2397, %v2396
    %v2824 = vpack.c.b16 %v2399, %v2398
    %v2825 = vpack.c.b16 %v2401, %v2400
    %v2826 = vpack.c.b16 %v2403, %v2402
    %v2827 = vpack.c.b16 %v2405, %v2404
    %v2828 = vpack.c.b16 %v2407, %v2406
    %v2829 = vpack.c.b16 %v2409, %v2408
    %v2830 = vpack.c.b16 %v2411, %v2410
    %v2831 = vpack.c.b16 %v2413, %v2412
    %v2832 = vpack.c.b16 %v2415, %v2414
    %v2833 = vpack.c.b16 %v2417, %v2416
    %v2834 = vpack.c.b16 %v2419, %v2418
    %v2835 = vpack.c.b16 %v2421, %v2420
    %v2836 = vpack.c.b16 %v2423, %v2422
    %v2837 = vpack.c.b16 %v2425, %v2424
    %v2838 = vpack.c.b16 %v2427, %v2426
    %v2839 = vpack.c.b16 %v2429, %v2428
    %v2840 = vpack.c.b16 %v2431, %v2430
    %v2841 = vpack.c.b16 %v2433, %v2432
    %v2842 = vpack.c.b16 %v2435, %v2434
    %v2843 = vpack.c.b16 %v2437, %v2436
    %v2844 = vpack.c.b16 %v2439, %v2438
    %v2845 = vpack.c.b16 %v2441, %v2440
    %v2846 = vpack.c.b16 %v2443, %v2442
    %v2847 = vpack.c.b16 %v2445, %v2444
    %v2848 = vpack.c.b16 %v2447, %v2446
    %v2849 = vpack.c.b16 %v2449, %v2448
    %v2850 = vpack.c.b16 %v2451, %v2450
    %v2851 = vpack.c.b16 %v2453, %v2452
    %v2852 = vpack.c.b16 %v2455, %v2454
    %v2853 = vpack.c.b16 %v2457, %v2456
    %v2854 = vpack.c.b16 %v2459, %v2458
    %v2855 = vpack.c.b16 %v2461, %v2460
    %v2856 = vpack.c.b16 %v2463, %v2462
    %v2857 = vpack.c.b16 %v2465, %v2464
    %v2858 = vpack.c.b16 %v2467, %v2466
    %v2859 = vpack.c.b16 %v2469, %v2468
    %v2860 = vpack.c.b16 %v2471, %v2470
    %v2861 = vpack.c.b16 %v2473, %v2472
    %v2862 = vpack.c.b16 %v2475, %v2474
    %v2863 = vpack.c.b16 %v2477, %v2476
    %v2864 = vpack.c.b16 %v2479, %v2478
    %v2865 = vpack.c.b16 %v2481, %v2480
    %v2866 = vpack.c.b16 %v2483, %v2482
    %v2867 = vpack.c.b16 %v2485, %v2484
    %v2868 = vpack.c.b16 %v2487, %v2486
    %v2869 = vpack.c.b16 %v2489, %v2488
    %v2870 = vpack.c.b16 %v2491, %v2490
    %v2871 = vpack.c.b16 %v2493, %v2492
    %v2872 = vpack.c.b16 %v2495, %v2494
    %v2873 = vpack.c.b16 %v2497, %v2496
    %v2874 = vpack.c.b16 %v2499, %v2498
    %v2875 = vpack.c.b16 %v2501, %v2500
    %v2876 = vpack.c.b16 %v2503, %v2502
    %v2877 = vpack.c.b16 %v2505, %v2504
    %v2878 = vpack.c.b16 %v2507, %v2506
    %v2879 = vpack.c.b16 %v2509, %v2508
    %v2880 = vpack.c.b16 %v2511, %v2510
    %v2881 = vpack.c.b16 %v2513, %v2512
    %v2882 = vpack.c.b16 %v2515, %v2514
    %v2883 = vpack.c.b16 %v2517, %v2516
    %v2884 = vpack.c.b16 %v2519, %v2518
    %v2885 = vpack.c.b16 %v2521, %v2520
    %v2886 = vpack.c.b16 %v2523, %v2522
    %v2887 = vpack.c.b16 %v2525, %v2524
    %v2888 = vpack.c.b16 %v2527, %v2526
    %v2889 = vpack.c.b16 %v2529, %v2528
    %v2890 = vpack.c.b16 %v2531, %v2530
    %v2891 = vpack.c.b16 %v2533, %v2532
    %v2892 = vpack.c.b16 %v2535, %v2534
    %v2893 = vpack.c.b16 %v2537, %v2536
    %v2894 = vpack.c.b16 %v2539, %v2538
    %v2895 = vpack.c.b16 %v2541, %v2540
    %v2896 = vpack.c.b16 %v2543, %v2542
    %v2897 = vpack.c.b16 %v2545, %v2544
    %v2898 = vpack.c.b16 %v2547, %v2546
    %v2899 = vpack.c.b16 %v2549, %v2548
    %v2900 = vpack.c.b16 %v2551, %v2550
    %v2901 = vpack.c.b16 %v2553, %v2552
    %v2902 = vpack.c.b16 %v2555, %v2554
    %v2903 = vpack.c.b16 %v2557, %v2556
    %v2904 = vpack.c.b16 %v2559, %v2558
    %v2905 = vpack.c.b16 %v2561, %v2560
    %v2906 = vpack.c.b16 %v2563, %v2562
    %v2907 = vpack.c.b16 %v2565, %v2564
    %v2908 = vpack.c.b16 %v2567, %v2566
    %v2909 = vpack.c.b16 %v2569, %v2568
    %v2910 = vpack.c.b16 %v2571, %v2570
    %v2911 = vpack.c.b16 %v2573, %v2572
    %v2912 = vpack.c.b16 %v2575, %v2574
    %v2913 = vpack.c.b16 %v2577, %v2576
    %v2914 = vpack.c.b16 %v2579, %v2578
    %v2915 = vpack.c.b16 %v2581, %v2580
    %v2916 = vpack.c.b16 %v2583, %v2582
    %v2917 = vpack.c.b16 %v2585, %v2584
    %v2918 = vpack.c.b16 %v2587, %v2586
    %v2919 = vpack.c.b16 %v2589, %v2588
    %v2920 = vpack.c.b16 %v2591, %v2590
    %v2921 = vpack.c.b16 %v2593, %v2592
    %v2922 = vpack.c.b16 %v2595, %v2594
    %v2923 = vpack.c.b16 %v2597, %v2596
    %v2924 = vpack.c.b16 %v2599, %v2598
    %v2925 = vpack.c.b16 %v2601, %v2600
    %v2926 = vpack.c.b16 %v2603, %v2602
    %v2927 = vpack.c.b16 %v2605, %v2604
    %v2928 = vpack.c.b16 %v2607, %v2606
    %v2929 = vpack.c.b16 %v2609, %v2608
    %v2930 = vpack.c.b16 %v2611, %v2610
    %v2931 = vpack.c.b16 %v2613, %v2612
    %v2932 = vpack.c.b16 %v2615, %v2614
    %v2933 = vpack.c.b16 %v2617, %v2616
    %v2934 = vpack.c.b16 %v2619, %v2618
    %v2935 = vpack.c.b16 %v2621, %v2620
    %v2936 = vpack.c.b16 %v2623, %v2622
    %v2937 = vpack.c.b16 %v2625, %v2624
    %v2938 = vpack.c.b16 %v2627, %v2626
    %v2939 = vpack.c.b16 %v2629, %v2628
    %v2940 = vpack.c.b16 %v2631, %v2630
    %v2941 = vpack.c.b16 %v2633, %v2632
    %v2942 = vpack.c.b16 %v2635, %v2634
    %v2943 = vpack.c.b16 %v2637, %v2636
    %v2944 = vpack.c.b16 %v2639, %v2638
    %v2945 = vpack.c.b16 %v2641, %v2640
    %v2946 = vpack.c.b16 %v2643, %v2642
    %v2947 = vpack.c.b16 %v2645, %v2644
    %v2948 = vpack.c.b16 %v2647, %v2646
    %v2949 = vpack.c.b16 %v2649, %v2648
    %v2950 = vpack.c.b16 %v2651, %v2650
    %v2951 = vpack.c.b16 %v2653, %v2652
    %v2952 = vpack.c.b16 %v2655, %v2654
    %v2953 = vpack.c.b16 %v2657, %v2656
    %v2954 = vpack.c.b16 %v2659, %v2658
    %v2955 = vpack.c.b16 %v2661, %v2660
    %v2956 = vpack.c.b16 %v2663, %v2662
    %v2957 = vpack.c.b16 %v2665, %v2664
    %v2958 = vpack.c.b16 %v2667, %v2666
    %v2959 = vpack.c.b16 %v2669, %v2668
    %v2960 = vpack.c.b16 %v2671, %v2670
    %v2961 = vpack.c.b16 %v2673, %v2672
    %3250 = vmatprep.subr.bf16.mxu0 0
    %3251 = vmatpush1.bf16.msra.mxu0 %v2674
    %3252 = vmatprep.subr.bf16.mxu0 0
    %3253 = vmatpush1.bf16.msra.mxu0 %v2675
    %3254 = vmatprep.subr.bf16.mxu0 0
    %3255 = vmatpush1.bf16.msra.mxu0 %v2676
    %3256 = vmatprep.subr.bf16.mxu0 0
    %3257 = vmatpush1.bf16.msra.mxu0 %v2677
    %3258 = vmatprep.subr.bf16.mxu0 0
    %3259 = vmatpush1.bf16.msra.mxu0 %v2678
    %3260 = vmatprep.subr.bf16.mxu0 0
    %3261 = vmatpush1.bf16.msra.mxu0 %v2679
    %3262 = vmatprep.subr.bf16.mxu0 0
    %3263 = vmatpush1.bf16.msra.mxu0 %v2680
    %3264 = vmatprep.subr.bf16.mxu0 0
    %3265 = vmatpush1.bf16.msra.mxu0 %v2681
    %3266 = vmatprep.subr.bf16.mxu0 0
    %3267 = vmatpush1.bf16.msra.mxu0 %v2682
    %3268 = vmatprep.subr.bf16.mxu0 0
    %3269 = vmatpush1.bf16.msra.mxu0 %v2683
    %3270 = vmatprep.subr.bf16.mxu0 0
    %3271 = vmatpush1.bf16.msra.mxu0 %v2684
    %3272 = vmatprep.subr.bf16.mxu0 0
    %3273 = vmatpush1.bf16.msra.mxu0 %v2685
    %3274 = vmatprep.subr.bf16.mxu0 0
    %3275 = vmatpush1.bf16.msra.mxu0 %v2686
    %3276 = vmatprep.subr.bf16.mxu0 0
    %3277 = vmatpush1.bf16.msra.mxu0 %v2687
    %3278 = vmatprep.subr.bf16.mxu0 0
    %3279 = vmatpush1.bf16.msra.mxu0 %v2688
    %3280 = vmatprep.subr.bf16.mxu0 0
    %3281 = vmatpush1.bf16.msra.mxu0 %v2689
    %3282 = vmatprep.mubr.bf16.mxu0 %v1235
    %3283 = vmatmul.mubr.bf16.gmra.mrb[0].mxu0 %v1234
    %v3284 = vpop.f32.mrb[0].mxu0
    %v3285 = vadd.f32 %v765, %v3284
    %v3286 = vpop.f32.mrb[0].mxu0
    %v3287 = vpop.f32.mrb[0].mxu0
    %v3288 = vadd.f32 %v770, %v3287
    %v3289 = vpop.f32.mrb[0].mxu0
    %3290 = vmatprep.mubr.bf16.mxu0 %v1271
    %3291 = vmatmul.mubr.bf16.gmra.mrb[0].mxu0 %v1270
    %v3292 = vpop.f32.mrb[0].mxu0
    %v3293 = vadd.f32 %v775, %v3292
    %v3294 = vpop.f32.mrb[0].mxu0
    %v3295 = vpop.f32.mrb[0].mxu0
    %v3296 = vadd.f32 %v780, %v3295
    %v3297 = vpop.f32.mrb[0].mxu0
    %3298 = vmatprep.mubr.bf16.mxu0 %v1307
    %3299 = vmatmul.mubr.bf16.gmra.mrb[0].mxu0 %v1306
    %v3300 = vpop.f32.mrb[0].mxu0
    %v3301 = vadd.f32 %v785, %v3300
    %v3302 = vpop.f32.mrb[0].mxu0
    %v3303 = vpop.f32.mrb[0].mxu0
    %v3304 = vadd.f32 %v790, %v3303
    %v3305 = vpop.f32.mrb[0].mxu0
    %3306 = vmatprep.mubr.bf16.mxu0 %v1343
    %3307 = vmatmul.mubr.bf16.gmra.mrb[0].mxu0 %v1342
    %v3308 = vpop.f32.mrb[0].mxu0
    %v3309 = vadd.f32 %v795, %v3308
    %v3310 = vpop.f32.mrb[0].mxu0
    %v3311 = vpop.f32.mrb[0].mxu0
    %v3312 = vadd.f32 %v800, %v3311
    %v3313 = vpop.f32.mrb[0].mxu0
    %3314 = vdwg.mxu0
    %3315 = vmatprep.subr.bf16.mxu0 0
    %3316 = vmatpush1.bf16.msra.mxu0 %v2690
    %3317 = vmatprep.subr.bf16.mxu0 0
    %3318 = vmatpush1.bf16.msra.mxu0 %v2691
    %3319 = vmatprep.subr.bf16.mxu0 0
    %3320 = vmatpush1.bf16.msra.mxu0 %v2692
    %3321 = vmatprep.subr.bf16.mxu0 0
    %3322 = vmatpush1.bf16.msra.mxu0 %v2693
    %3323 = vmatprep.subr.bf16.mxu0 0
    %3324 = vmatpush1.bf16.msra.mxu0 %v2694
    %3325 = vmatprep.subr.bf16.mxu0 0
    %3326 = vmatpush1.bf16.msra.mxu0 %v2695
    %3327 = vmatprep.subr.bf16.mxu0 0
    %3328 = vmatpush1.bf16.msra.mxu0 %v2696
    %3329 = vmatprep.subr.bf16.mxu0 0
    %3330 = vmatpush1.bf16.msra.mxu0 %v2697
    %3331 = vmatprep.subr.bf16.mxu0 0
    %3332 = vmatpush1.bf16.msra.mxu0 %v2698
    %3333 = vmatprep.subr.bf16.mxu0 0
    %3334 = vmatpush1.bf16.msra.mxu0 %v2699
    %3335 = vmatprep.subr.bf16.mxu0 0
    %3336 = vmatpush1.bf16.msra.mxu0 %v2700
    %3337 = vmatprep.subr.bf16.mxu0 0
    %3338 = vmatpush1.bf16.msra.mxu0 %v2701
    %3339 = vmatprep.subr.bf16.mxu0 0
    %3340 = vmatpush1.bf16.msra.mxu0 %v2702
    %3341 = vmatprep.subr.bf16.mxu0 0
    %3342 = vmatpush1.bf16.msra.mxu0 %v2703
    %3343 = vmatprep.subr.bf16.mxu0 0
    %3344 = vmatpush1.bf16.msra.mxu0 %v2704
    %3345 = vmatprep.subr.bf16.mxu0 0
    %3346 = vmatpush1.bf16.msra.mxu0 %v2705
    %3347 = vmatprep.mubr.bf16.mxu0 %v1237
    %3348 = vmatmul.mubr.bf16.gmra.mrb[0].mxu0 %v1236
    %v3349 = vpop.f32.mrb[0].mxu0
    %v3350 = vadd.f32 %v3285, %v3349
    %v3351 = vpop.f32.mrb[0].mxu0
    %v3352 = vpop.f32.mrb[0].mxu0
    %v3353 = vadd.f32 %v3288, %v3352
    %v3354 = vpop.f32.mrb[0].mxu0
    %3355 = vmatprep.mubr.bf16.mxu0 %v1273
    %3356 = vmatmul.mubr.bf16.gmra.mrb[0].mxu0 %v1272
    %v3357 = vpop.f32.mrb[0].mxu0
    %v3358 = vadd.f32 %v3293, %v3357
    %v3359 = vpop.f32.mrb[0].mxu0
    %v3360 = vpop.f32.mrb[0].mxu0
    %v3361 = vadd.f32 %v3296, %v3360
    %v3362 = vpop.f32.mrb[0].mxu0
    %3363 = vmatprep.mubr.bf16.mxu0 %v1309
    %3364 = vmatmul.mubr.bf16.gmra.mrb[0].mxu0 %v1308
    %v3365 = vpop.f32.mrb[0].mxu0
    %v3366 = vadd.f32 %v3301, %v3365
    %v3367 = vpop.f32.mrb[0].mxu0
    %v3368 = vpop.f32.mrb[0].mxu0
    %v3369 = vadd.f32 %v3304, %v3368
    %v3370 = vpop.f32.mrb[0].mxu0
    %3371 = vmatprep.mubr.bf16.mxu0 %v1345
    %3372 = vmatmul.mubr.bf16.gmra.mrb[0].mxu0 %v1344
    %v3373 = vpop.f32.mrb[0].mxu0
    %v3374 = vadd.f32 %v3309, %v3373
    %v3375 = vpop.f32.mrb[0].mxu0
    %v3376 = vpop.f32.mrb[0].mxu0
    %v3377 = vadd.f32 %v3312, %v3376
    %v3378 = vpop.f32.mrb[0].mxu0
    %3379 = vdwg.mxu0
    %3380 = vmatprep.subr.bf16.mxu0 0
    %3381 = vmatpush1.bf16.msra.mxu0 %v2706
    %3382 = vmatprep.subr.bf16.mxu0 0
    %3383 = vmatpush1.bf16.msra.mxu0 %v2707
    %3384 = vmatprep.subr.bf16.mxu0 0
    %3385 = vmatpush1.bf16.msra.mxu0 %v2708
    %3386 = vmatprep.subr.bf16.mxu0 0
    %3387 = vmatpush1.bf16.msra.mxu0 %v2709
    %3388 = vmatprep.subr.bf16.mxu0 0
    %3389 = vmatpush1.bf16.msra.mxu0 %v2710
    %3390 = vmatprep.subr.bf16.mxu0 0
    %3391 = vmatpush1.bf16.msra.mxu0 %v2711
    %3392 = vmatprep.subr.bf16.mxu0 0
    %3393 = vmatpush1.bf16.msra.mxu0 %v2712
    %3394 = vmatprep.subr.bf16.mxu0 0
    %3395 = vmatpush1.bf16.msra.mxu0 %v2713
    %3396 = vmatprep.subr.bf16.mxu0 0
    %3397 = vmatpush1.bf16.msra.mxu0 %v2714
    %3398 = vmatprep.subr.bf16.mxu0 0
    %3399 = vmatpush1.bf16.msra.mxu0 %v2715
    %3400 = vmatprep.subr.bf16.mxu0 0
    %3401 = vmatpush1.bf16.msra.mxu0 %v2716
    %3402 = vmatprep.subr.bf16.mxu0 0
    %3403 = vmatpush1.bf16.msra.mxu0 %v2717
    %3404 = vmatprep.subr.bf16.mxu0 0
    %3405 = vmatpush1.bf16.msra.mxu0 %v2718
    %3406 = vmatprep.subr.bf16.mxu0 0
    %3407 = vmatpush1.bf16.msra.mxu0 %v2719
    %3408 = vmatprep.subr.bf16.mxu0 0
    %3409 = vmatpush1.bf16.msra.mxu0 %v2720
    %3410 = vmatprep.subr.bf16.mxu0 0
    %3411 = vmatpush1.bf16.msra.mxu0 %v2721
    %3412 = vmatprep.mubr.bf16.mxu0 %v1239
    %3413 = vmatmul.mubr.bf16.gmra.mrb[0].mxu0 %v1238
    %v3414 = vpop.f32.mrb[0].mxu0
    %v3415 = vadd.f32 %v3350, %v3414
    %v3416 = vpop.f32.mrb[0].mxu0
    %v3417 = vpop.f32.mrb[0].mxu0
    %v3418 = vadd.f32 %v3353, %v3417
    %v3419 = vpop.f32.mrb[0].mxu0
    %3420 = vmatprep.mubr.bf16.mxu0 %v1275
    %3421 = vmatmul.mubr.bf16.gmra.mrb[0].mxu0 %v1274
    %v3422 = vpop.f32.mrb[0].mxu0
    %v3423 = vadd.f32 %v3358, %v3422
    %v3424 = vpop.f32.mrb[0].mxu0
    %v3425 = vpop.f32.mrb[0].mxu0
    %v3426 = vadd.f32 %v3361, %v3425
    %v3427 = vpop.f32.mrb[0].mxu0
    %3428 = vmatprep.mubr.bf16.mxu0 %v1311
    %3429 = vmatmul.mubr.bf16.gmra.mrb[0].mxu0 %v1310
    %v3430 = vpop.f32.mrb[0].mxu0
    %v3431 = vadd.f32 %v3366, %v3430
    %v3432 = vpop.f32.mrb[0].mxu0
    %v3433 = vpop.f32.mrb[0].mxu0
    %v3434 = vadd.f32 %v3369, %v3433
    %v3435 = vpop.f32.mrb[0].mxu0
    %3436 = vmatprep.mubr.bf16.mxu0 %v1347
    %3437 = vmatmul.mubr.bf16.gmra.mrb[0].mxu0 %v1346
    %v3438 = vpop.f32.mrb[0].mxu0
    %v3439 = vadd.f32 %v3374, %v3438
    %v3440 = vpop.f32.mrb[0].mxu0
    %v3441 = vpop.f32.mrb[0].mxu0
    %v3442 = vadd.f32 %v3377, %v3441
    %v3443 = vpop.f32.mrb[0].mxu0
    %3444 = vdwg.mxu0
    %3445 = vmatprep.subr.bf16.mxu0 0
    %3446 = vmatpush1.bf16.msra.mxu0 %v2722
    %3447 = vmatprep.subr.bf16.mxu0 0
    %3448 = vmatpush1.bf16.msra.mxu0 %v2723
    %3449 = vmatprep.subr.bf16.mxu0 0
    %3450 = vmatpush1.bf16.msra.mxu0 %v2724
    %3451 = vmatprep.subr.bf16.mxu0 0
    %3452 = vmatpush1.bf16.msra.mxu0 %v2725
    %3453 = vmatprep.subr.bf16.mxu0 0
    %3454 = vmatpush1.bf16.msra.mxu0 %v2726
    %3455 = vmatprep.subr.bf16.mxu0 0
    %3456 = vmatpush1.bf16.msra.mxu0 %v2727
    %3457 = vmatprep.subr.bf16.mxu0 0
    %3458 = vmatpush1.bf16.msra.mxu0 %v2728
    %3459 = vmatprep.subr.bf16.mxu0 0
    %3460 = vmatpush1.bf16.msra.mxu0 %v2729
    %3461 = vmatprep.subr.bf16.mxu0 0
    %3462 = vmatpush1.bf16.msra.mxu0 %v2730
    %3463 = vmatprep.subr.bf16.mxu0 0
    %3464 = vmatpush1.bf16.msra.mxu0 %v2731
    %3465 = vmatprep.subr.bf16.mxu0 0
    %3466 = vmatpush1.bf16.msra.mxu0 %v2732
    %3467 = vmatprep.subr.bf16.mxu0 0
    %3468 = vmatpush1.bf16.msra.mxu0 %v2733
    %3469 = vmatprep.subr.bf16.mxu0 0
    %3470 = vmatpush1.bf16.msra.mxu0 %v2734
    %3471 = vmatprep.subr.bf16.mxu0 0
    %3472 = vmatpush1.bf16.msra.mxu0 %v2735
    %3473 = vmatprep.subr.bf16.mxu0 0
    %3474 = vmatpush1.bf16.msra.mxu0 %v2736
    %3475 = vmatprep.subr.bf16.mxu0 0
    %3476 = vmatpush1.bf16.msra.mxu0 %v2737
    %3477 = vmatprep.mubr.bf16.mxu0 %v1241
    %3478 = vmatmul.mubr.bf16.gmra.mrb[0].mxu0 %v1240
    %v3479 = vpop.f32.mrb[0].mxu0
    %v3480 = vadd.f32 %v3415, %v3479
    %v3481 = vpop.f32.mrb[0].mxu0
    %v3482 = vpop.f32.mrb[0].mxu0
    %v3483 = vadd.f32 %v3418, %v3482
    %v3484 = vpop.f32.mrb[0].mxu0
    %3485 = vmatprep.mubr.bf16.mxu0 %v1277
    %3486 = vmatmul.mubr.bf16.gmra.mrb[0].mxu0 %v1276
    %v3487 = vpop.f32.mrb[0].mxu0
    %v3488 = vadd.f32 %v3423, %v3487
    %v3489 = vpop.f32.mrb[0].mxu0
    %v3490 = vpop.f32.mrb[0].mxu0
    %v3491 = vadd.f32 %v3426, %v3490
    %v3492 = vpop.f32.mrb[0].mxu0
    %3493 = vmatprep.mubr.bf16.mxu0 %v1313
    %3494 = vmatmul.mubr.bf16.gmra.mrb[0].mxu0 %v1312
    %v3495 = vpop.f32.mrb[0].mxu0
    %v3496 = vadd.f32 %v3431, %v3495
    %v3497 = vpop.f32.mrb[0].mxu0
    %v3498 = vpop.f32.mrb[0].mxu0
    %v3499 = vadd.f32 %v3434, %v3498
    %v3500 = vpop.f32.mrb[0].mxu0
    %3501 = vmatprep.mubr.bf16.mxu0 %v1349
    %3502 = vmatmul.mubr.bf16.gmra.mrb[0].mxu0 %v1348
    %v3503 = vpop.f32.mrb[0].mxu0
    %v3504 = vadd.f32 %v3439, %v3503
    %v3505 = vpop.f32.mrb[0].mxu0
    %v3506 = vpop.f32.mrb[0].mxu0
    %v3507 = vadd.f32 %v3442, %v3506
    %v3508 = vpop.f32.mrb[0].mxu0
    %3509 = vdwg.mxu0
    %3510 = vmatprep.subr.bf16.mxu0 0
    %3511 = vmatpush1.bf16.msra.mxu0 %v2738
    %3512 = vmatprep.subr.bf16.mxu0 0
    %3513 = vmatpush1.bf16.msra.mxu0 %v2739
    %3514 = vmatprep.subr.bf16.mxu0 0
    %3515 = vmatpush1.bf16.msra.mxu0 %v2740
    %3516 = vmatprep.subr.bf16.mxu0 0
    %3517 = vmatpush1.bf16.msra.mxu0 %v2741
    %3518 = vmatprep.subr.bf16.mxu0 0
    %3519 = vmatpush1.bf16.msra.mxu0 %v2742
    %3520 = vmatprep.subr.bf16.mxu0 0
    %3521 = vmatpush1.bf16.msra.mxu0 %v2743
    %3522 = vmatprep.subr.bf16.mxu0 0
    %3523 = vmatpush1.bf16.msra.mxu0 %v2744
    %3524 = vmatprep.subr.bf16.mxu0 0
    %3525 = vmatpush1.bf16.msra.mxu0 %v2745
    %3526 = vmatprep.subr.bf16.mxu0 0
    %3527 = vmatpush1.bf16.msra.mxu0 %v2746
    %3528 = vmatprep.subr.bf16.mxu0 0
    %3529 = vmatpush1.bf16.msra.mxu0 %v2747
    %3530 = vmatprep.subr.bf16.mxu0 0
    %3531 = vmatpush1.bf16.msra.mxu0 %v2748
    %3532 = vmatprep.subr.bf16.mxu0 0
    %3533 = vmatpush1.bf16.msra.mxu0 %v2749
    %3534 = vmatprep.subr.bf16.mxu0 0
    %3535 = vmatpush1.bf16.msra.mxu0 %v2750
    %3536 = vmatprep.subr.bf16.mxu0 0
    %3537 = vmatpush1.bf16.msra.mxu0 %v2751
    %3538 = vmatprep.subr.bf16.mxu0 0
    %3539 = vmatpush1.bf16.msra.mxu0 %v2752
    %3540 = vmatprep.subr.bf16.mxu0 0
    %3541 = vmatpush1.bf16.msra.mxu0 %v2753
    %3542 = vmatprep.mubr.bf16.mxu0 %v1243
    %3543 = vmatmul.mubr.bf16.gmra.mrb[0].mxu0 %v1242
    %v3544 = vpop.f32.mrb[0].mxu0
    %v3545 = vadd.f32 %v3480, %v3544
    %v3546 = vpop.f32.mrb[0].mxu0
    %v3547 = vpop.f32.mrb[0].mxu0
    %v3548 = vadd.f32 %v3483, %v3547
    %v3549 = vpop.f32.mrb[0].mxu0
    %3550 = vmatprep.mubr.bf16.mxu0 %v1279
    %3551 = vmatmul.mubr.bf16.gmra.mrb[0].mxu0 %v1278
    %v3552 = vpop.f32.mrb[0].mxu0
    %v3553 = vadd.f32 %v3488, %v3552
    %v3554 = vpop.f32.mrb[0].mxu0
    %v3555 = vpop.f32.mrb[0].mxu0
    %v3556 = vadd.f32 %v3491, %v3555
    %v3557 = vpop.f32.mrb[0].mxu0
    %3558 = vmatprep.mubr.bf16.mxu0 %v1315
    %3559 = vmatmul.mubr.bf16.gmra.mrb[0].mxu0 %v1314
    %v3560 = vpop.f32.mrb[0].mxu0
    %v3561 = vadd.f32 %v3496, %v3560
    %v3562 = vpop.f32.mrb[0].mxu0
    %v3563 = vpop.f32.mrb[0].mxu0
    %v3564 = vadd.f32 %v3499, %v3563
    %v3565 = vpop.f32.mrb[0].mxu0
    %3566 = vmatprep.mubr.bf16.mxu0 %v1351
    %3567 = vmatmul.mubr.bf16.gmra.mrb[0].mxu0 %v1350
    %v3568 = vpop.f32.mrb[0].mxu0
    %v3569 = vadd.f32 %v3504, %v3568
    %v3570 = vpop.f32.mrb[0].mxu0
    %v3571 = vpop.f32.mrb[0].mxu0
    %v3572 = vadd.f32 %v3507, %v3571
    %v3573 = vpop.f32.mrb[0].mxu0
    %3574 = vdwg.mxu0
    %3575 = vmatprep.subr.bf16.mxu0 0
    %3576 = vmatpush1.bf16.msra.mxu0 %v2754
    %3577 = vmatprep.subr.bf16.mxu0 0
    %3578 = vmatpush1.bf16.msra.mxu0 %v2755
    %3579 = vmatprep.subr.bf16.mxu0 0
    %3580 = vmatpush1.bf16.msra.mxu0 %v2756
    %3581 = vmatprep.subr.bf16.mxu0 0
    %3582 = vmatpush1.bf16.msra.mxu0 %v2757
    %3583 = vmatprep.subr.bf16.mxu0 0
    %3584 = vmatpush1.bf16.msra.mxu0 %v2758
    %3585 = vmatprep.subr.bf16.mxu0 0
    %3586 = vmatpush1.bf16.msra.mxu0 %v2759
    %3587 = vmatprep.subr.bf16.mxu0 0
    %3588 = vmatpush1.bf16.msra.mxu0 %v2760
    %3589 = vmatprep.subr.bf16.mxu0 0
    %3590 = vmatpush1.bf16.msra.mxu0 %v2761
    %3591 = vmatprep.subr.bf16.mxu0 0
    %3592 = vmatpush1.bf16.msra.mxu0 %v2762
    %3593 = vmatprep.subr.bf16.mxu0 0
    %3594 = vmatpush1.bf16.msra.mxu0 %v2763
    %3595 = vmatprep.subr.bf16.mxu0 0
    %3596 = vmatpush1.bf16.msra.mxu0 %v2764
    %3597 = vmatprep.subr.bf16.mxu0 0
    %3598 = vmatpush1.bf16.msra.mxu0 %v2765
    %3599 = vmatprep.subr.bf16.mxu0 0
    %3600 = vmatpush1.bf16.msra.mxu0 %v2766
    %3601 = vmatprep.subr.bf16.mxu0 0
    %3602 = vmatpush1.bf16.msra.mxu0 %v2767
    %3603 = vmatprep.subr.bf16.mxu0 0
    %3604 = vmatpush1.bf16.msra.mxu0 %v2768
    %3605 = vmatprep.subr.bf16.mxu0 0
    %3606 = vmatpush1.bf16.msra.mxu0 %v2769
    %3607 = vmatprep.mubr.bf16.mxu0 %v1245
    %3608 = vmatmul.mubr.bf16.gmra.mrb[0].mxu0 %v1244
    %v3609 = vpop.f32.mrb[0].mxu0
    %v3610 = vadd.f32 %v3545, %v3609
    %v3611 = vpop.f32.mrb[0].mxu0
    %v3612 = vpop.f32.mrb[0].mxu0
    %v3613 = vadd.f32 %v3548, %v3612
    %v3614 = vpop.f32.mrb[0].mxu0
    %3615 = vmatprep.mubr.bf16.mxu0 %v1281
    %3616 = vmatmul.mubr.bf16.gmra.mrb[0].mxu0 %v1280
    %v3617 = vpop.f32.mrb[0].mxu0
    %v3618 = vadd.f32 %v3553, %v3617
    %v3619 = vpop.f32.mrb[0].mxu0
    %v3620 = vpop.f32.mrb[0].mxu0
    %v3621 = vadd.f32 %v3556, %v3620
    %v3622 = vpop.f32.mrb[0].mxu0
    %3623 = vmatprep.mubr.bf16.mxu0 %v1317
    %3624 = vmatmul.mubr.bf16.gmra.mrb[0].mxu0 %v1316
    %v3625 = vpop.f32.mrb[0].mxu0
    %v3626 = vadd.f32 %v3561, %v3625
    %v3627 = vpop.f32.mrb[0].mxu0
    %v3628 = vpop.f32.mrb[0].mxu0
    %v3629 = vadd.f32 %v3564, %v3628
    %v3630 = vpop.f32.mrb[0].mxu0
    %3631 = vmatprep.mubr.bf16.mxu0 %v1353
    %3632 = vmatmul.mubr.bf16.gmra.mrb[0].mxu0 %v1352
    %v3633 = vpop.f32.mrb[0].mxu0
    %v3634 = vadd.f32 %v3569, %v3633
    %v3635 = vpop.f32.mrb[0].mxu0
    %v3636 = vpop.f32.mrb[0].mxu0
    %v3637 = vadd.f32 %v3572, %v3636
    %v3638 = vpop.f32.mrb[0].mxu0
    %3639 = vdwg.mxu0
    %3640 = vmatprep.subr.bf16.mxu0 0
    %3641 = vmatpush1.bf16.msra.mxu0 %v2770
    %3642 = vmatprep.subr.bf16.mxu0 0
    %3643 = vmatpush1.bf16.msra.mxu0 %v2771
    %3644 = vmatprep.subr.bf16.mxu0 0
    %3645 = vmatpush1.bf16.msra.mxu0 %v2772
    %3646 = vmatprep.subr.bf16.mxu0 0
    %3647 = vmatpush1.bf16.msra.mxu0 %v2773
    %3648 = vmatprep.subr.bf16.mxu0 0
    %3649 = vmatpush1.bf16.msra.mxu0 %v2774
    %3650 = vmatprep.subr.bf16.mxu0 0
    %3651 = vmatpush1.bf16.msra.mxu0 %v2775
    %3652 = vmatprep.subr.bf16.mxu0 0
    %3653 = vmatpush1.bf16.msra.mxu0 %v2776
    %3654 = vmatprep.subr.bf16.mxu0 0
    %3655 = vmatpush1.bf16.msra.mxu0 %v2777
    %3656 = vmatprep.subr.bf16.mxu0 0
    %3657 = vmatpush1.bf16.msra.mxu0 %v2778
    %3658 = vmatprep.subr.bf16.mxu0 0
    %3659 = vmatpush1.bf16.msra.mxu0 %v2779
    %3660 = vmatprep.subr.bf16.mxu0 0
    %3661 = vmatpush1.bf16.msra.mxu0 %v2780
    %3662 = vmatprep.subr.bf16.mxu0 0
    %3663 = vmatpush1.bf16.msra.mxu0 %v2781
    %3664 = vmatprep.subr.bf16.mxu0 0
    %3665 = vmatpush1.bf16.msra.mxu0 %v2782
    %3666 = vmatprep.subr.bf16.mxu0 0
    %3667 = vmatpush1.bf16.msra.mxu0 %v2783
    %3668 = vmatprep.subr.bf16.mxu0 0
    %3669 = vmatpush1.bf16.msra.mxu0 %v2784
    %3670 = vmatprep.subr.bf16.mxu0 0
    %3671 = vmatpush1.bf16.msra.mxu0 %v2785
    %3672 = vmatprep.mubr.bf16.mxu0 %v1247
    %3673 = vmatmul.mubr.bf16.gmra.mrb[0].mxu0 %v1246
    %v3674 = vpop.f32.mrb[0].mxu0
    %v3675 = vadd.f32 %v3610, %v3674
    %v3676 = vpop.f32.mrb[0].mxu0
    %v3677 = vpop.f32.mrb[0].mxu0
    %v3678 = vadd.f32 %v3613, %v3677
    %v3679 = vpop.f32.mrb[0].mxu0
    %3680 = vmatprep.mubr.bf16.mxu0 %v1283
    %3681 = vmatmul.mubr.bf16.gmra.mrb[0].mxu0 %v1282
    %v3682 = vpop.f32.mrb[0].mxu0
    %v3683 = vadd.f32 %v3618, %v3682
    %v3684 = vpop.f32.mrb[0].mxu0
    %v3685 = vpop.f32.mrb[0].mxu0
    %v3686 = vadd.f32 %v3621, %v3685
    %v3687 = vpop.f32.mrb[0].mxu0
    %3688 = vmatprep.mubr.bf16.mxu0 %v1319
    %3689 = vmatmul.mubr.bf16.gmra.mrb[0].mxu0 %v1318
    %v3690 = vpop.f32.mrb[0].mxu0
    %v3691 = vadd.f32 %v3626, %v3690
    %v3692 = vpop.f32.mrb[0].mxu0
    %v3693 = vpop.f32.mrb[0].mxu0
    %v3694 = vadd.f32 %v3629, %v3693
    %v3695 = vpop.f32.mrb[0].mxu0
    %3696 = vmatprep.mubr.bf16.mxu0 %v1355
    %3697 = vmatmul.mubr.bf16.gmra.mrb[0].mxu0 %v1354
    %v3698 = vpop.f32.mrb[0].mxu0
    %v3699 = vadd.f32 %v3634, %v3698
    %v3700 = vpop.f32.mrb[0].mxu0
    %v3701 = vpop.f32.mrb[0].mxu0
    %v3702 = vadd.f32 %v3637, %v3701
    %v3703 = vpop.f32.mrb[0].mxu0
    %3704 = vdwg.mxu0
    %3705 = vmatprep.subr.bf16.mxu0 0
    %3706 = vmatpush1.bf16.msra.mxu0 %v2786
    %3707 = vmatprep.subr.bf16.mxu0 0
    %3708 = vmatpush1.bf16.msra.mxu0 %v2787
    %3709 = vmatprep.subr.bf16.mxu0 0
    %3710 = vmatpush1.bf16.msra.mxu0 %v2788
    %3711 = vmatprep.subr.bf16.mxu0 0
    %3712 = vmatpush1.bf16.msra.mxu0 %v2789
    %3713 = vmatprep.subr.bf16.mxu0 0
    %3714 = vmatpush1.bf16.msra.mxu0 %v2790
    %3715 = vmatprep.subr.bf16.mxu0 0
    %3716 = vmatpush1.bf16.msra.mxu0 %v2791
    %3717 = vmatprep.subr.bf16.mxu0 0
    %3718 = vmatpush1.bf16.msra.mxu0 %v2792
    %3719 = vmatprep.subr.bf16.mxu0 0
    %3720 = vmatpush1.bf16.msra.mxu0 %v2793
    %3721 = vmatprep.subr.bf16.mxu0 0
    %3722 = vmatpush1.bf16.msra.mxu0 %v2794
    %3723 = vmatprep.subr.bf16.mxu0 0
    %3724 = vmatpush1.bf16.msra.mxu0 %v2795
    %3725 = vmatprep.subr.bf16.mxu0 0
    %3726 = vmatpush1.bf16.msra.mxu0 %v2796
    %3727 = vmatprep.subr.bf16.mxu0 0
    %3728 = vmatpush1.bf16.msra.mxu0 %v2797
    %3729 = vmatprep.subr.bf16.mxu0 0
    %3730 = vmatpush1.bf16.msra.mxu0 %v2798
    %3731 = vmatprep.subr.bf16.mxu0 0
    %3732 = vmatpush1.bf16.msra.mxu0 %v2799
    %3733 = vmatprep.subr.bf16.mxu0 0
    %3734 = vmatpush1.bf16.msra.mxu0 %v2800
    %3735 = vmatprep.subr.bf16.mxu0 0
    %3736 = vmatpush1.bf16.msra.mxu0 %v2801
    %3737 = vmatprep.mubr.bf16.mxu0 %v1249
    %3738 = vmatmul.mubr.bf16.gmra.mrb[0].mxu0 %v1248
    %v3739 = vpop.f32.mrb[0].mxu0
    %v3740 = vadd.f32 %v3675, %v3739
    %v3741 = vpop.f32.mrb[0].mxu0
    %v3742 = vpop.f32.mrb[0].mxu0
    %v3743 = vadd.f32 %v3678, %v3742
    %v3744 = vpop.f32.mrb[0].mxu0
    %3745 = vmatprep.mubr.bf16.mxu0 %v1285
    %3746 = vmatmul.mubr.bf16.gmra.mrb[0].mxu0 %v1284
    %v3747 = vpop.f32.mrb[0].mxu0
    %v3748 = vadd.f32 %v3683, %v3747
    %v3749 = vpop.f32.mrb[0].mxu0
    %v3750 = vpop.f32.mrb[0].mxu0
    %v3751 = vadd.f32 %v3686, %v3750
    %v3752 = vpop.f32.mrb[0].mxu0
    %3753 = vmatprep.mubr.bf16.mxu0 %v1321
    %3754 = vmatmul.mubr.bf16.gmra.mrb[0].mxu0 %v1320
    %v3755 = vpop.f32.mrb[0].mxu0
    %v3756 = vadd.f32 %v3691, %v3755
    %v3757 = vpop.f32.mrb[0].mxu0
    %v3758 = vpop.f32.mrb[0].mxu0
    %v3759 = vadd.f32 %v3694, %v3758
    %v3760 = vpop.f32.mrb[0].mxu0
    %3761 = vmatprep.mubr.bf16.mxu0 %v1357
    %3762 = vmatmul.mubr.bf16.gmra.mrb[0].mxu0 %v1356
    %v3763 = vpop.f32.mrb[0].mxu0
    %v3764 = vadd.f32 %v3699, %v3763
    %v3765 = vpop.f32.mrb[0].mxu0
    %v3766 = vpop.f32.mrb[0].mxu0
    %v3767 = vadd.f32 %v3702, %v3766
    %v3768 = vpop.f32.mrb[0].mxu0
    %3769 = vdwg.mxu0
    %3770 = vmatprep.subr.bf16.mxu0 0
    %3771 = vmatpush1.bf16.msra.mxu0 %v2802
    %3772 = vmatprep.subr.bf16.mxu0 0
    %3773 = vmatpush1.bf16.msra.mxu0 %v2803
    %3774 = vmatprep.subr.bf16.mxu0 0
    %3775 = vmatpush1.bf16.msra.mxu0 %v2804
    %3776 = vmatprep.subr.bf16.mxu0 0
    %3777 = vmatpush1.bf16.msra.mxu0 %v2805
    %3778 = vmatprep.subr.bf16.mxu0 0
    %3779 = vmatpush1.bf16.msra.mxu0 %v2806
    %3780 = vmatprep.subr.bf16.mxu0 0
    %3781 = vmatpush1.bf16.msra.mxu0 %v2807
    %3782 = vmatprep.subr.bf16.mxu0 0
    %3783 = vmatpush1.bf16.msra.mxu0 %v2808
    %3784 = vmatprep.subr.bf16.mxu0 0
    %3785 = vmatpush1.bf16.msra.mxu0 %v2809
    %3786 = vmatprep.subr.bf16.mxu0 0
    %3787 = vmatpush1.bf16.msra.mxu0 %v2810
    %3788 = vmatprep.subr.bf16.mxu0 0
    %3789 = vmatpush1.bf16.msra.mxu0 %v2811
    %3790 = vmatprep.subr.bf16.mxu0 0
    %3791 = vmatpush1.bf16.msra.mxu0 %v2812
    %3792 = vmatprep.subr.bf16.mxu0 0
    %3793 = vmatpush1.bf16.msra.mxu0 %v2813
    %3794 = vmatprep.subr.bf16.mxu0 0
    %3795 = vmatpush1.bf16.msra.mxu0 %v2814
    %3796 = vmatprep.subr.bf16.mxu0 0
    %3797 = vmatpush1.bf16.msra.mxu0 %v2815
    %3798 = vmatprep.subr.bf16.mxu0 0
    %3799 = vmatpush1.bf16.msra.mxu0 %v2816
    %3800 = vmatprep.subr.bf16.mxu0 0
    %3801 = vmatpush1.bf16.msra.mxu0 %v2817
    %3802 = vmatprep.mubr.bf16.mxu0 %v1251
    %3803 = vmatmul.mubr.bf16.gmra.mrb[0].mxu0 %v1250
    %v3804 = vpop.f32.mrb[0].mxu0
    %v3805 = vadd.f32 %v3740, %v3804
    %v3806 = vpop.f32.mrb[0].mxu0
    %v3807 = vpop.f32.mrb[0].mxu0
    %v3808 = vadd.f32 %v3743, %v3807
    %v3809 = vpop.f32.mrb[0].mxu0
    %3810 = vmatprep.mubr.bf16.mxu0 %v1287
    %3811 = vmatmul.mubr.bf16.gmra.mrb[0].mxu0 %v1286
    %v3812 = vpop.f32.mrb[0].mxu0
    %v3813 = vadd.f32 %v3748, %v3812
    %v3814 = vpop.f32.mrb[0].mxu0
    %v3815 = vpop.f32.mrb[0].mxu0
    %v3816 = vadd.f32 %v3751, %v3815
    %v3817 = vpop.f32.mrb[0].mxu0
    %3818 = vmatprep.mubr.bf16.mxu0 %v1323
    %3819 = vmatmul.mubr.bf16.gmra.mrb[0].mxu0 %v1322
    %v3820 = vpop.f32.mrb[0].mxu0
    %v3821 = vadd.f32 %v3756, %v3820
    %v3822 = vpop.f32.mrb[0].mxu0
    %v3823 = vpop.f32.mrb[0].mxu0
    %v3824 = vadd.f32 %v3759, %v3823
    %v3825 = vpop.f32.mrb[0].mxu0
    %3826 = vmatprep.mubr.bf16.mxu0 %v1359
    %3827 = vmatmul.mubr.bf16.gmra.mrb[0].mxu0 %v1358
    %v3828 = vpop.f32.mrb[0].mxu0
    %v3829 = vadd.f32 %v3764, %v3828
    %v3830 = vpop.f32.mrb[0].mxu0
    %v3831 = vpop.f32.mrb[0].mxu0
    %v3832 = vadd.f32 %v3767, %v3831
    %v3833 = vpop.f32.mrb[0].mxu0
    %3834 = vdwg.mxu0
    %3835 = vmatprep.subr.bf16.mxu0 0
    %3836 = vmatpush1.bf16.msra.mxu0 %v2818
    %3837 = vmatprep.subr.bf16.mxu0 0
    %3838 = vmatpush1.bf16.msra.mxu0 %v2819
    %3839 = vmatprep.subr.bf16.mxu0 0
    %3840 = vmatpush1.bf16.msra.mxu0 %v2820
    %3841 = vmatprep.subr.bf16.mxu0 0
    %3842 = vmatpush1.bf16.msra.mxu0 %v2821
    %3843 = vmatprep.subr.bf16.mxu0 0
    %3844 = vmatpush1.bf16.msra.mxu0 %v2822
    %3845 = vmatprep.subr.bf16.mxu0 0
    %3846 = vmatpush1.bf16.msra.mxu0 %v2823
    %3847 = vmatprep.subr.bf16.mxu0 0
    %3848 = vmatpush1.bf16.msra.mxu0 %v2824
    %3849 = vmatprep.subr.bf16.mxu0 0
    %3850 = vmatpush1.bf16.msra.mxu0 %v2825
    %3851 = vmatprep.subr.bf16.mxu0 0
    %3852 = vmatpush1.bf16.msra.mxu0 %v2826
    %3853 = vmatprep.subr.bf16.mxu0 0
    %3854 = vmatpush1.bf16.msra.mxu0 %v2827
    %3855 = vmatprep.subr.bf16.mxu0 0
    %3856 = vmatpush1.bf16.msra.mxu0 %v2828
    %3857 = vmatprep.subr.bf16.mxu0 0
    %3858 = vmatpush1.bf16.msra.mxu0 %v2829
    %3859 = vmatprep.subr.bf16.mxu0 0
    %3860 = vmatpush1.bf16.msra.mxu0 %v2830
    %3861 = vmatprep.subr.bf16.mxu0 0
    %3862 = vmatpush1.bf16.msra.mxu0 %v2831
    %3863 = vmatprep.subr.bf16.mxu0 0
    %3864 = vmatpush1.bf16.msra.mxu0 %v2832
    %3865 = vmatprep.subr.bf16.mxu0 0
    %3866 = vmatpush1.bf16.msra.mxu0 %v2833
    %3867 = vmatprep.mubr.bf16.mxu0 %v1253
    %3868 = vmatmul.mubr.bf16.gmra.mrb[0].mxu0 %v1252
    %v3869 = vpop.f32.mrb[0].mxu0
    %v3870 = vadd.f32 %v3805, %v3869
    %v3871 = vpop.f32.mrb[0].mxu0
    %v3872 = vpop.f32.mrb[0].mxu0
    %v3873 = vadd.f32 %v3808, %v3872
    %v3874 = vpop.f32.mrb[0].mxu0
    %3875 = vmatprep.mubr.bf16.mxu0 %v1289
    %3876 = vmatmul.mubr.bf16.gmra.mrb[0].mxu0 %v1288
    %v3877 = vpop.f32.mrb[0].mxu0
    %v3878 = vadd.f32 %v3813, %v3877
    %v3879 = vpop.f32.mrb[0].mxu0
    %v3880 = vpop.f32.mrb[0].mxu0
    %v3881 = vadd.f32 %v3816, %v3880
    %v3882 = vpop.f32.mrb[0].mxu0
    %3883 = vmatprep.mubr.bf16.mxu0 %v1325
    %3884 = vmatmul.mubr.bf16.gmra.mrb[0].mxu0 %v1324
    %v3885 = vpop.f32.mrb[0].mxu0
    %v3886 = vadd.f32 %v3821, %v3885
    %v3887 = vpop.f32.mrb[0].mxu0
    %v3888 = vpop.f32.mrb[0].mxu0
    %v3889 = vadd.f32 %v3824, %v3888
    %v3890 = vpop.f32.mrb[0].mxu0
    %3891 = vmatprep.mubr.bf16.mxu0 %v1361
    %3892 = vmatmul.mubr.bf16.gmra.mrb[0].mxu0 %v1360
    %v3893 = vpop.f32.mrb[0].mxu0
    %v3894 = vadd.f32 %v3829, %v3893
    %v3895 = vpop.f32.mrb[0].mxu0
    %v3896 = vpop.f32.mrb[0].mxu0
    %v3897 = vadd.f32 %v3832, %v3896
    %v3898 = vpop.f32.mrb[0].mxu0
    %3899 = vdwg.mxu0
    %3900 = vmatprep.subr.bf16.mxu0 0
    %3901 = vmatpush1.bf16.msra.mxu0 %v2834
    %3902 = vmatprep.subr.bf16.mxu0 0
    %3903 = vmatpush1.bf16.msra.mxu0 %v2835
    %3904 = vmatprep.subr.bf16.mxu0 0
    %3905 = vmatpush1.bf16.msra.mxu0 %v2836
    %3906 = vmatprep.subr.bf16.mxu0 0
    %3907 = vmatpush1.bf16.msra.mxu0 %v2837
    %3908 = vmatprep.subr.bf16.mxu0 0
    %3909 = vmatpush1.bf16.msra.mxu0 %v2838
    %3910 = vmatprep.subr.bf16.mxu0 0
    %3911 = vmatpush1.bf16.msra.mxu0 %v2839
    %3912 = vmatprep.subr.bf16.mxu0 0
    %3913 = vmatpush1.bf16.msra.mxu0 %v2840
    %3914 = vmatprep.subr.bf16.mxu0 0
    %3915 = vmatpush1.bf16.msra.mxu0 %v2841
    %3916 = vmatprep.subr.bf16.mxu0 0
    %3917 = vmatpush1.bf16.msra.mxu0 %v2842
    %3918 = vmatprep.subr.bf16.mxu0 0
    %3919 = vmatpush1.bf16.msra.mxu0 %v2843
    %3920 = vmatprep.subr.bf16.mxu0 0
    %3921 = vmatpush1.bf16.msra.mxu0 %v2844
    %3922 = vmatprep.subr.bf16.mxu0 0
    %3923 = vmatpush1.bf16.msra.mxu0 %v2845
    %3924 = vmatprep.subr.bf16.mxu0 0
    %3925 = vmatpush1.bf16.msra.mxu0 %v2846
    %3926 = vmatprep.subr.bf16.mxu0 0
    %3927 = vmatpush1.bf16.msra.mxu0 %v2847
    %3928 = vmatprep.subr.bf16.mxu0 0
    %3929 = vmatpush1.bf16.msra.mxu0 %v2848
    %3930 = vmatprep.subr.bf16.mxu0 0
    %3931 = vmatpush1.bf16.msra.mxu0 %v2849
    %3932 = vmatprep.mubr.bf16.mxu0 %v1255
    %3933 = vmatmul.mubr.bf16.gmra.mrb[0].mxu0 %v1254
    %v3934 = vpop.f32.mrb[0].mxu0
    %v3935 = vadd.f32 %v3870, %v3934
    %v3936 = vpop.f32.mrb[0].mxu0
    %v3937 = vpop.f32.mrb[0].mxu0
    %v3938 = vadd.f32 %v3873, %v3937
    %v3939 = vpop.f32.mrb[0].mxu0
    %3940 = vmatprep.mubr.bf16.mxu0 %v1291
    %3941 = vmatmul.mubr.bf16.gmra.mrb[0].mxu0 %v1290
    %v3942 = vpop.f32.mrb[0].mxu0
    %v3943 = vadd.f32 %v3878, %v3942
    %v3944 = vpop.f32.mrb[0].mxu0
    %v3945 = vpop.f32.mrb[0].mxu0
    %v3946 = vadd.f32 %v3881, %v3945
    %v3947 = vpop.f32.mrb[0].mxu0
    %3948 = vmatprep.mubr.bf16.mxu0 %v1327
    %3949 = vmatmul.mubr.bf16.gmra.mrb[0].mxu0 %v1326
    %v3950 = vpop.f32.mrb[0].mxu0
    %v3951 = vadd.f32 %v3886, %v3950
    %v3952 = vpop.f32.mrb[0].mxu0
    %v3953 = vpop.f32.mrb[0].mxu0
    %v3954 = vadd.f32 %v3889, %v3953
    %v3955 = vpop.f32.mrb[0].mxu0
    %3956 = vmatprep.mubr.bf16.mxu0 %v1363
    %3957 = vmatmul.mubr.bf16.gmra.mrb[0].mxu0 %v1362
    %v3958 = vpop.f32.mrb[0].mxu0
    %v3959 = vadd.f32 %v3894, %v3958
    %v3960 = vpop.f32.mrb[0].mxu0
    %v3961 = vpop.f32.mrb[0].mxu0
    %v3962 = vadd.f32 %v3897, %v3961
    %v3963 = vpop.f32.mrb[0].mxu0
    %3964 = vdwg.mxu0
    %3965 = vmatprep.subr.bf16.mxu0 0
    %3966 = vmatpush1.bf16.msra.mxu0 %v2850
    %3967 = vmatprep.subr.bf16.mxu0 0
    %3968 = vmatpush1.bf16.msra.mxu0 %v2851
    %3969 = vmatprep.subr.bf16.mxu0 0
    %3970 = vmatpush1.bf16.msra.mxu0 %v2852
    %3971 = vmatprep.subr.bf16.mxu0 0
    %3972 = vmatpush1.bf16.msra.mxu0 %v2853
    %3973 = vmatprep.subr.bf16.mxu0 0
    %3974 = vmatpush1.bf16.msra.mxu0 %v2854
    %3975 = vmatprep.subr.bf16.mxu0 0
    %3976 = vmatpush1.bf16.msra.mxu0 %v2855
    %3977 = vmatprep.subr.bf16.mxu0 0
    %3978 = vmatpush1.bf16.msra.mxu0 %v2856
    %3979 = vmatprep.subr.bf16.mxu0 0
    %3980 = vmatpush1.bf16.msra.mxu0 %v2857
    %3981 = vmatprep.subr.bf16.mxu0 0
    %3982 = vmatpush1.bf16.msra.mxu0 %v2858
    %3983 = vmatprep.subr.bf16.mxu0 0
    %3984 = vmatpush1.bf16.msra.mxu0 %v2859
    %3985 = vmatprep.subr.bf16.mxu0 0
    %3986 = vmatpush1.bf16.msra.mxu0 %v2860
    %3987 = vmatprep.subr.bf16.mxu0 0
    %3988 = vmatpush1.bf16.msra.mxu0 %v2861
    %3989 = vmatprep.subr.bf16.mxu0 0
    %3990 = vmatpush1.bf16.msra.mxu0 %v2862
    %3991 = vmatprep.subr.bf16.mxu0 0
    %3992 = vmatpush1.bf16.msra.mxu0 %v2863
    %3993 = vmatprep.subr.bf16.mxu0 0
    %3994 = vmatpush1.bf16.msra.mxu0 %v2864
    %3995 = vmatprep.subr.bf16.mxu0 0
    %3996 = vmatpush1.bf16.msra.mxu0 %v2865
    %3997 = vmatprep.mubr.bf16.mxu0 %v1257
    %3998 = vmatmul.mubr.bf16.gmra.mrb[0].mxu0 %v1256
    %v3999 = vpop.f32.mrb[0].mxu0
    %v4000 = vadd.f32 %v3935, %v3999
    %v4001 = vpop.f32.mrb[0].mxu0
    %v4002 = vpop.f32.mrb[0].mxu0
    %v4003 = vadd.f32 %v3938, %v4002
    %v4004 = vpop.f32.mrb[0].mxu0
    %4005 = vmatprep.mubr.bf16.mxu0 %v1293
    %4006 = vmatmul.mubr.bf16.gmra.mrb[0].mxu0 %v1292
    %v4007 = vpop.f32.mrb[0].mxu0
    %v4008 = vadd.f32 %v3943, %v4007
    %v4009 = vpop.f32.mrb[0].mxu0
    %v4010 = vpop.f32.mrb[0].mxu0
    %v4011 = vadd.f32 %v3946, %v4010
    %v4012 = vpop.f32.mrb[0].mxu0
    %4013 = vmatprep.mubr.bf16.mxu0 %v1329
    %4014 = vmatmul.mubr.bf16.gmra.mrb[0].mxu0 %v1328
    %v4015 = vpop.f32.mrb[0].mxu0
    %v4016 = vadd.f32 %v3951, %v4015
    %v4017 = vpop.f32.mrb[0].mxu0
    %v4018 = vpop.f32.mrb[0].mxu0
    %v4019 = vadd.f32 %v3954, %v4018
    %v4020 = vpop.f32.mrb[0].mxu0
    %4021 = vmatprep.mubr.bf16.mxu0 %v1365
    %4022 = vmatmul.mubr.bf16.gmra.mrb[0].mxu0 %v1364
    %v4023 = vpop.f32.mrb[0].mxu0
    %v4024 = vadd.f32 %v3959, %v4023
    %v4025 = vpop.f32.mrb[0].mxu0
    %v4026 = vpop.f32.mrb[0].mxu0
    %v4027 = vadd.f32 %v3962, %v4026
    %v4028 = vpop.f32.mrb[0].mxu0
    %4029 = vdwg.mxu0
    %4030 = vmatprep.subr.bf16.mxu0 0
    %4031 = vmatpush1.bf16.msra.mxu0 %v2866
    %4032 = vmatprep.subr.bf16.mxu0 0
    %4033 = vmatpush1.bf16.msra.mxu0 %v2867
    %4034 = vmatprep.subr.bf16.mxu0 0
    %4035 = vmatpush1.bf16.msra.mxu0 %v2868
    %4036 = vmatprep.subr.bf16.mxu0 0
    %4037 = vmatpush1.bf16.msra.mxu0 %v2869
    %4038 = vmatprep.subr.bf16.mxu0 0
    %4039 = vmatpush1.bf16.msra.mxu0 %v2870
    %4040 = vmatprep.subr.bf16.mxu0 0
    %4041 = vmatpush1.bf16.msra.mxu0 %v2871
    %4042 = vmatprep.subr.bf16.mxu0 0
    %4043 = vmatpush1.bf16.msra.mxu0 %v2872
    %4044 = vmatprep.subr.bf16.mxu0 0
    %4045 = vmatpush1.bf16.msra.mxu0 %v2873
    %4046 = vmatprep.subr.bf16.mxu0 0
    %4047 = vmatpush1.bf16.msra.mxu0 %v2874
    %4048 = vmatprep.subr.bf16.mxu0 0
    %4049 = vmatpush1.bf16.msra.mxu0 %v2875
    %4050 = vmatprep.subr.bf16.mxu0 0
    %4051 = vmatpush1.bf16.msra.mxu0 %v2876
    %4052 = vmatprep.subr.bf16.mxu0 0
    %4053 = vmatpush1.bf16.msra.mxu0 %v2877
    %4054 = vmatprep.subr.bf16.mxu0 0
    %4055 = vmatpush1.bf16.msra.mxu0 %v2878
    %4056 = vmatprep.subr.bf16.mxu0 0
    %4057 = vmatpush1.bf16.msra.mxu0 %v2879
    %4058 = vmatprep.subr.bf16.mxu0 0
    %4059 = vmatpush1.bf16.msra.mxu0 %v2880
    %4060 = vmatprep.subr.bf16.mxu0 0
    %4061 = vmatpush1.bf16.msra.mxu0 %v2881
    %4062 = vmatprep.mubr.bf16.mxu0 %v1259
    %4063 = vmatmul.mubr.bf16.gmra.mrb[0].mxu0 %v1258
    %v4064 = vpop.f32.mrb[0].mxu0
    %v4065 = vadd.f32 %v4000, %v4064
    %v4066 = vpop.f32.mrb[0].mxu0
    %v4067 = vpop.f32.mrb[0].mxu0
    %v4068 = vadd.f32 %v4003, %v4067
    %v4069 = vpop.f32.mrb[0].mxu0
    %4070 = vmatprep.mubr.bf16.mxu0 %v1295
    %4071 = vmatmul.mubr.bf16.gmra.mrb[0].mxu0 %v1294
    %v4072 = vpop.f32.mrb[0].mxu0
    %v4073 = vadd.f32 %v4008, %v4072
    %v4074 = vpop.f32.mrb[0].mxu0
    %v4075 = vpop.f32.mrb[0].mxu0
    %v4076 = vadd.f32 %v4011, %v4075
    %v4077 = vpop.f32.mrb[0].mxu0
    %4078 = vmatprep.mubr.bf16.mxu0 %v1331
    %4079 = vmatmul.mubr.bf16.gmra.mrb[0].mxu0 %v1330
    %v4080 = vpop.f32.mrb[0].mxu0
    %v4081 = vadd.f32 %v4016, %v4080
    %v4082 = vpop.f32.mrb[0].mxu0
    %v4083 = vpop.f32.mrb[0].mxu0
    %v4084 = vadd.f32 %v4019, %v4083
    %v4085 = vpop.f32.mrb[0].mxu0
    %4086 = vmatprep.mubr.bf16.mxu0 %v1367
    %4087 = vmatmul.mubr.bf16.gmra.mrb[0].mxu0 %v1366
    %v4088 = vpop.f32.mrb[0].mxu0
    %v4089 = vadd.f32 %v4024, %v4088
    %v4090 = vpop.f32.mrb[0].mxu0
    %v4091 = vpop.f32.mrb[0].mxu0
    %v4092 = vadd.f32 %v4027, %v4091
    %v4093 = vpop.f32.mrb[0].mxu0
    %4094 = vdwg.mxu0
    %4095 = vmatprep.subr.bf16.mxu0 0
    %4096 = vmatpush1.bf16.msra.mxu0 %v2882
    %4097 = vmatprep.subr.bf16.mxu0 0
    %4098 = vmatpush1.bf16.msra.mxu0 %v2883
    %4099 = vmatprep.subr.bf16.mxu0 0
    %4100 = vmatpush1.bf16.msra.mxu0 %v2884
    %4101 = vmatprep.subr.bf16.mxu0 0
    %4102 = vmatpush1.bf16.msra.mxu0 %v2885
    %4103 = vmatprep.subr.bf16.mxu0 0
    %4104 = vmatpush1.bf16.msra.mxu0 %v2886
    %4105 = vmatprep.subr.bf16.mxu0 0
    %4106 = vmatpush1.bf16.msra.mxu0 %v2887
    %4107 = vmatprep.subr.bf16.mxu0 0
    %4108 = vmatpush1.bf16.msra.mxu0 %v2888
    %4109 = vmatprep.subr.bf16.mxu0 0
    %4110 = vmatpush1.bf16.msra.mxu0 %v2889
    %4111 = vmatprep.subr.bf16.mxu0 0
    %4112 = vmatpush1.bf16.msra.mxu0 %v2890
    %4113 = vmatprep.subr.bf16.mxu0 0
    %4114 = vmatpush1.bf16.msra.mxu0 %v2891
    %4115 = vmatprep.subr.bf16.mxu0 0
    %4116 = vmatpush1.bf16.msra.mxu0 %v2892
    %4117 = vmatprep.subr.bf16.mxu0 0
    %4118 = vmatpush1.bf16.msra.mxu0 %v2893
    %4119 = vmatprep.subr.bf16.mxu0 0
    %4120 = vmatpush1.bf16.msra.mxu0 %v2894
    %4121 = vmatprep.subr.bf16.mxu0 0
    %4122 = vmatpush1.bf16.msra.mxu0 %v2895
    %4123 = vmatprep.subr.bf16.mxu0 0
    %4124 = vmatpush1.bf16.msra.mxu0 %v2896
    %4125 = vmatprep.subr.bf16.mxu0 0
    %4126 = vmatpush1.bf16.msra.mxu0 %v2897
    %4127 = vmatprep.mubr.bf16.mxu0 %v1261
    %4128 = vmatmul.mubr.bf16.gmra.mrb[0].mxu0 %v1260
    %v4129 = vpop.f32.mrb[0].mxu0
    %v4130 = vadd.f32 %v4065, %v4129
    %v4131 = vpop.f32.mrb[0].mxu0
    %v4132 = vpop.f32.mrb[0].mxu0
    %v4133 = vadd.f32 %v4068, %v4132
    %v4134 = vpop.f32.mrb[0].mxu0
    %4135 = vmatprep.mubr.bf16.mxu0 %v1297
    %4136 = vmatmul.mubr.bf16.gmra.mrb[0].mxu0 %v1296
    %v4137 = vpop.f32.mrb[0].mxu0
    %v4138 = vadd.f32 %v4073, %v4137
    %v4139 = vpop.f32.mrb[0].mxu0
    %v4140 = vpop.f32.mrb[0].mxu0
    %v4141 = vadd.f32 %v4076, %v4140
    %v4142 = vpop.f32.mrb[0].mxu0
    %4143 = vmatprep.mubr.bf16.mxu0 %v1333
    %4144 = vmatmul.mubr.bf16.gmra.mrb[0].mxu0 %v1332
    %v4145 = vpop.f32.mrb[0].mxu0
    %v4146 = vadd.f32 %v4081, %v4145
    %v4147 = vpop.f32.mrb[0].mxu0
    %v4148 = vpop.f32.mrb[0].mxu0
    %v4149 = vadd.f32 %v4084, %v4148
    %v4150 = vpop.f32.mrb[0].mxu0
    %4151 = vmatprep.mubr.bf16.mxu0 %v1369
    %4152 = vmatmul.mubr.bf16.gmra.mrb[0].mxu0 %v1368
    %v4153 = vpop.f32.mrb[0].mxu0
    %v4154 = vadd.f32 %v4089, %v4153
    %v4155 = vpop.f32.mrb[0].mxu0
    %v4156 = vpop.f32.mrb[0].mxu0
    %v4157 = vadd.f32 %v4092, %v4156
    %v4158 = vpop.f32.mrb[0].mxu0
    %4159 = vdwg.mxu0
    %4160 = vmatprep.subr.bf16.mxu0 0
    %4161 = vmatpush1.bf16.msra.mxu0 %v2898
    %4162 = vmatprep.subr.bf16.mxu0 0
    %4163 = vmatpush1.bf16.msra.mxu0 %v2899
    %4164 = vmatprep.subr.bf16.mxu0 0
    %4165 = vmatpush1.bf16.msra.mxu0 %v2900
    %4166 = vmatprep.subr.bf16.mxu0 0
    %4167 = vmatpush1.bf16.msra.mxu0 %v2901
    %4168 = vmatprep.subr.bf16.mxu0 0
    %4169 = vmatpush1.bf16.msra.mxu0 %v2902
    %4170 = vmatprep.subr.bf16.mxu0 0
    %4171 = vmatpush1.bf16.msra.mxu0 %v2903
    %4172 = vmatprep.subr.bf16.mxu0 0
    %4173 = vmatpush1.bf16.msra.mxu0 %v2904
    %4174 = vmatprep.subr.bf16.mxu0 0
    %4175 = vmatpush1.bf16.msra.mxu0 %v2905
    %4176 = vmatprep.subr.bf16.mxu0 0
    %4177 = vmatpush1.bf16.msra.mxu0 %v2906
    %4178 = vmatprep.subr.bf16.mxu0 0
    %4179 = vmatpush1.bf16.msra.mxu0 %v2907
    %4180 = vmatprep.subr.bf16.mxu0 0
    %4181 = vmatpush1.bf16.msra.mxu0 %v2908
    %4182 = vmatprep.subr.bf16.mxu0 0
    %4183 = vmatpush1.bf16.msra.mxu0 %v2909
    %4184 = vmatprep.subr.bf16.mxu0 0
    %4185 = vmatpush1.bf16.msra.mxu0 %v2910
    %4186 = vmatprep.subr.bf16.mxu0 0
    %4187 = vmatpush1.bf16.msra.mxu0 %v2911
    %4188 = vmatprep.subr.bf16.mxu0 0
    %4189 = vmatpush1.bf16.msra.mxu0 %v2912
    %4190 = vmatprep.subr.bf16.mxu0 0
    %4191 = vmatpush1.bf16.msra.mxu0 %v2913
    %4192 = vmatprep.mubr.bf16.mxu0 %v1263
    %4193 = vmatmul.mubr.bf16.gmra.mrb[0].mxu0 %v1262
    %v4194 = vpop.f32.mrb[0].mxu0
    %v4195 = vadd.f32 %v4130, %v4194
    %v4196 = vpop.f32.mrb[0].mxu0
    %v4197 = vpop.f32.mrb[0].mxu0
    %v4198 = vadd.f32 %v4133, %v4197
    %v4199 = vpop.f32.mrb[0].mxu0
    %4200 = vmatprep.mubr.bf16.mxu0 %v1299
    %4201 = vmatmul.mubr.bf16.gmra.mrb[0].mxu0 %v1298
    %v4202 = vpop.f32.mrb[0].mxu0
    %v4203 = vadd.f32 %v4138, %v4202
    %v4204 = vpop.f32.mrb[0].mxu0
    %v4205 = vpop.f32.mrb[0].mxu0
    %v4206 = vadd.f32 %v4141, %v4205
    %v4207 = vpop.f32.mrb[0].mxu0
    %4208 = vmatprep.mubr.bf16.mxu0 %v1335
    %4209 = vmatmul.mubr.bf16.gmra.mrb[0].mxu0 %v1334
    %v4210 = vpop.f32.mrb[0].mxu0
    %v4211 = vadd.f32 %v4146, %v4210
    %v4212 = vpop.f32.mrb[0].mxu0
    %v4213 = vpop.f32.mrb[0].mxu0
    %v4214 = vadd.f32 %v4149, %v4213
    %v4215 = vpop.f32.mrb[0].mxu0
    %4216 = vmatprep.mubr.bf16.mxu0 %v1371
    %4217 = vmatmul.mubr.bf16.gmra.mrb[0].mxu0 %v1370
    %v4218 = vpop.f32.mrb[0].mxu0
    %v4219 = vadd.f32 %v4154, %v4218
    %v4220 = vpop.f32.mrb[0].mxu0
    %v4221 = vpop.f32.mrb[0].mxu0
    %v4222 = vadd.f32 %v4157, %v4221
    %v4223 = vpop.f32.mrb[0].mxu0
    %4224 = vdwg.mxu0
    %4225 = vmatprep.subr.bf16.mxu0 0
    %4226 = vmatpush1.bf16.msra.mxu0 %v2914
    %4227 = vmatprep.subr.bf16.mxu0 0
    %4228 = vmatpush1.bf16.msra.mxu0 %v2915
    %4229 = vmatprep.subr.bf16.mxu0 0
    %4230 = vmatpush1.bf16.msra.mxu0 %v2916
    %4231 = vmatprep.subr.bf16.mxu0 0
    %4232 = vmatpush1.bf16.msra.mxu0 %v2917
    %4233 = vmatprep.subr.bf16.mxu0 0
    %4234 = vmatpush1.bf16.msra.mxu0 %v2918
    %4235 = vmatprep.subr.bf16.mxu0 0
    %4236 = vmatpush1.bf16.msra.mxu0 %v2919
    %4237 = vmatprep.subr.bf16.mxu0 0
    %4238 = vmatpush1.bf16.msra.mxu0 %v2920
    %4239 = vmatprep.subr.bf16.mxu0 0
    %4240 = vmatpush1.bf16.msra.mxu0 %v2921
    %4241 = vmatprep.subr.bf16.mxu0 0
    %4242 = vmatpush1.bf16.msra.mxu0 %v2922
    %4243 = vmatprep.subr.bf16.mxu0 0
    %4244 = vmatpush1.bf16.msra.mxu0 %v2923
    %4245 = vmatprep.subr.bf16.mxu0 0
    %4246 = vmatpush1.bf16.msra.mxu0 %v2924
    %4247 = vmatprep.subr.bf16.mxu0 0
    %4248 = vmatpush1.bf16.msra.mxu0 %v2925
    %4249 = vmatprep.subr.bf16.mxu0 0
    %4250 = vmatpush1.bf16.msra.mxu0 %v2926
    %4251 = vmatprep.subr.bf16.mxu0 0
    %4252 = vmatpush1.bf16.msra.mxu0 %v2927
    %4253 = vmatprep.subr.bf16.mxu0 0
    %4254 = vmatpush1.bf16.msra.mxu0 %v2928
    %4255 = vmatprep.subr.bf16.mxu0 0
    %4256 = vmatpush1.bf16.msra.mxu0 %v2929
    %4257 = vmatprep.mubr.bf16.mxu0 %v1265
    %4258 = vmatmul.mubr.bf16.gmra.mrb[0].mxu0 %v1264
    %v4259 = vpop.f32.mrb[0].mxu0
    %v4260 = vadd.f32 %v4195, %v4259
    %v4261 = vpop.f32.mrb[0].mxu0
    %v4262 = vpop.f32.mrb[0].mxu0
    %v4263 = vadd.f32 %v4198, %v4262
    %v4264 = vpop.f32.mrb[0].mxu0
    %4265 = vmatprep.mubr.bf16.mxu0 %v1301
    %4266 = vmatmul.mubr.bf16.gmra.mrb[0].mxu0 %v1300
    %v4267 = vpop.f32.mrb[0].mxu0
    %v4268 = vadd.f32 %v4203, %v4267
    %v4269 = vpop.f32.mrb[0].mxu0
    %v4270 = vpop.f32.mrb[0].mxu0
    %v4271 = vadd.f32 %v4206, %v4270
    %v4272 = vpop.f32.mrb[0].mxu0
    %4273 = vmatprep.mubr.bf16.mxu0 %v1337
    %4274 = vmatmul.mubr.bf16.gmra.mrb[0].mxu0 %v1336
    %v4275 = vpop.f32.mrb[0].mxu0
    %v4276 = vadd.f32 %v4211, %v4275
    %v4277 = vpop.f32.mrb[0].mxu0
    %v4278 = vpop.f32.mrb[0].mxu0
    %v4279 = vadd.f32 %v4214, %v4278
    %v4280 = vpop.f32.mrb[0].mxu0
    %4281 = vmatprep.mubr.bf16.mxu0 %v1373
    %4282 = vmatmul.mubr.bf16.gmra.mrb[0].mxu0 %v1372
    %v4283 = vpop.f32.mrb[0].mxu0
    %v4284 = vadd.f32 %v4219, %v4283
    %v4285 = vpop.f32.mrb[0].mxu0
    %v4286 = vpop.f32.mrb[0].mxu0
    %v4287 = vadd.f32 %v4222, %v4286
    %v4288 = vpop.f32.mrb[0].mxu0
    %4289 = vdwg.mxu0
    %4290 = vmatprep.subr.bf16.mxu0 0
    %4291 = vmatpush1.bf16.msra.mxu0 %v2930
    %4292 = vmatprep.subr.bf16.mxu0 0
    %4293 = vmatpush1.bf16.msra.mxu0 %v2931
    %4294 = vmatprep.subr.bf16.mxu0 0
    %4295 = vmatpush1.bf16.msra.mxu0 %v2932
    %4296 = vmatprep.subr.bf16.mxu0 0
    %4297 = vmatpush1.bf16.msra.mxu0 %v2933
    %4298 = vmatprep.subr.bf16.mxu0 0
    %4299 = vmatpush1.bf16.msra.mxu0 %v2934
    %4300 = vmatprep.subr.bf16.mxu0 0
    %4301 = vmatpush1.bf16.msra.mxu0 %v2935
    %4302 = vmatprep.subr.bf16.mxu0 0
    %4303 = vmatpush1.bf16.msra.mxu0 %v2936
    %4304 = vmatprep.subr.bf16.mxu0 0
    %4305 = vmatpush1.bf16.msra.mxu0 %v2937
    %4306 = vmatprep.subr.bf16.mxu0 0
    %4307 = vmatpush1.bf16.msra.mxu0 %v2938
    %4308 = vmatprep.subr.bf16.mxu0 0
    %4309 = vmatpush1.bf16.msra.mxu0 %v2939
    %4310 = vmatprep.subr.bf16.mxu0 0
    %4311 = vmatpush1.bf16.msra.mxu0 %v2940
    %4312 = vmatprep.subr.bf16.mxu0 0
    %4313 = vmatpush1.bf16.msra.mxu0 %v2941
    %4314 = vmatprep.subr.bf16.mxu0 0
    %4315 = vmatpush1.bf16.msra.mxu0 %v2942
    %4316 = vmatprep.subr.bf16.mxu0 0
    %4317 = vmatpush1.bf16.msra.mxu0 %v2943
    %4318 = vmatprep.subr.bf16.mxu0 0
    %4319 = vmatpush1.bf16.msra.mxu0 %v2944
    %4320 = vmatprep.subr.bf16.mxu0 0
    %4321 = vmatpush1.bf16.msra.mxu0 %v2945
    %4322 = vmatprep.mubr.bf16.mxu0 %v1267
    %4323 = vmatmul.mubr.bf16.gmra.mrb[0].mxu0 %v1266
    %v4324 = vpop.f32.mrb[0].mxu0
    %v4325 = vadd.f32 %v4260, %v4324
    %v4326 = vpop.f32.mrb[0].mxu0
    %v4327 = vpop.f32.mrb[0].mxu0
    %v4328 = vadd.f32 %v4263, %v4327
    %v4329 = vpop.f32.mrb[0].mxu0
    %4330 = vmatprep.mubr.bf16.mxu0 %v1303
    %4331 = vmatmul.mubr.bf16.gmra.mrb[0].mxu0 %v1302
    %v4332 = vpop.f32.mrb[0].mxu0
    %v4333 = vadd.f32 %v4268, %v4332
    %v4334 = vpop.f32.mrb[0].mxu0
    %v4335 = vpop.f32.mrb[0].mxu0
    %v4336 = vadd.f32 %v4271, %v4335
    %v4337 = vpop.f32.mrb[0].mxu0
    %4338 = vmatprep.mubr.bf16.mxu0 %v1339
    %4339 = vmatmul.mubr.bf16.gmra.mrb[0].mxu0 %v1338
    %v4340 = vpop.f32.mrb[0].mxu0
    %v4341 = vadd.f32 %v4276, %v4340
    %v4342 = vpop.f32.mrb[0].mxu0
    %v4343 = vpop.f32.mrb[0].mxu0
    %v4344 = vadd.f32 %v4279, %v4343
    %v4345 = vpop.f32.mrb[0].mxu0
    %4346 = vmatprep.mubr.bf16.mxu0 %v1375
    %4347 = vmatmul.mubr.bf16.gmra.mrb[0].mxu0 %v1374
    %v4348 = vpop.f32.mrb[0].mxu0
    %v4349 = vadd.f32 %v4284, %v4348
    %v4350 = vpop.f32.mrb[0].mxu0
    %v4351 = vpop.f32.mrb[0].mxu0
    %v4352 = vadd.f32 %v4287, %v4351
    %v4353 = vpop.f32.mrb[0].mxu0
    %4354 = vdwg.mxu0
    %4355 = vmatprep.subr.bf16.mxu0 0
    %4356 = vmatpush1.bf16.msra.mxu0 %v2946
    %4357 = vmatprep.subr.bf16.mxu0 0
    %4358 = vmatpush1.bf16.msra.mxu0 %v2947
    %4359 = vmatprep.subr.bf16.mxu0 0
    %4360 = vmatpush1.bf16.msra.mxu0 %v2948
    %4361 = vmatprep.subr.bf16.mxu0 0
    %4362 = vmatpush1.bf16.msra.mxu0 %v2949
    %4363 = vmatprep.subr.bf16.mxu0 0
    %4364 = vmatpush1.bf16.msra.mxu0 %v2950
    %4365 = vmatprep.subr.bf16.mxu0 0
    %4366 = vmatpush1.bf16.msra.mxu0 %v2951
    %4367 = vmatprep.subr.bf16.mxu0 0
    %4368 = vmatpush1.bf16.msra.mxu0 %v2952
    %4369 = vmatprep.subr.bf16.mxu0 0
    %4370 = vmatpush1.bf16.msra.mxu0 %v2953
    %4371 = vmatprep.subr.bf16.mxu0 0
    %4372 = vmatpush1.bf16.msra.mxu0 %v2954
    %4373 = vmatprep.subr.bf16.mxu0 0
    %4374 = vmatpush1.bf16.msra.mxu0 %v2955
    %4375 = vmatprep.subr.bf16.mxu0 0
    %4376 = vmatpush1.bf16.msra.mxu0 %v2956
    %4377 = vmatprep.subr.bf16.mxu0 0
    %4378 = vmatpush1.bf16.msra.mxu0 %v2957
    %4379 = vmatprep.subr.bf16.mxu0 0
    %4380 = vmatpush1.bf16.msra.mxu0 %v2958
    %4381 = vmatprep.subr.bf16.mxu0 0
    %4382 = vmatpush1.bf16.msra.mxu0 %v2959
    %4383 = vmatprep.subr.bf16.mxu0 0
    %4384 = vmatpush1.bf16.msra.mxu0 %v2960
    %4385 = vmatprep.subr.bf16.mxu0 0
    %4386 = vmatpush1.bf16.msra.mxu0 %v2961
    %4387 = vmatprep.mubr.bf16.mxu0 %v1269
    %4388 = vmatmul.mubr.bf16.gmra.mrb[0].mxu0 %v1268
    %v4389 = vpop.f32.mrb[0].mxu0
    %v4390 = vadd.f32 %v4325, %v4389
    %v4391 = vpop.f32.mrb[0].mxu0
    %v4392 = vpop.f32.mrb[0].mxu0
    %v4393 = vadd.f32 %v4328, %v4392
    %v4394 = vpop.f32.mrb[0].mxu0
    %4395 = vmatprep.mubr.bf16.mxu0 %v1305
    %4396 = vmatmul.mubr.bf16.gmra.mrb[0].mxu0 %v1304
    %v4397 = vpop.f32.mrb[0].mxu0
    %v4398 = vadd.f32 %v4333, %v4397
    %v4399 = vpop.f32.mrb[0].mxu0
    %v4400 = vpop.f32.mrb[0].mxu0
    %v4401 = vadd.f32 %v4336, %v4400
    %v4402 = vpop.f32.mrb[0].mxu0
    %4403 = vmatprep.mubr.bf16.mxu0 %v1341
    %4404 = vmatmul.mubr.bf16.gmra.mrb[0].mxu0 %v1340
    %v4405 = vpop.f32.mrb[0].mxu0
    %v4406 = vadd.f32 %v4341, %v4405
    %v4407 = vpop.f32.mrb[0].mxu0
    %v4408 = vpop.f32.mrb[0].mxu0
    %v4409 = vadd.f32 %v4344, %v4408
    %v4410 = vpop.f32.mrb[0].mxu0
    %4411 = vmatprep.mubr.bf16.mxu0 %v1377
    %4412 = vmatmul.mubr.bf16.gmra.mrb[0].mxu0 %v1376
    %v4413 = vpop.f32.mrb[0].mxu0
    %v4414 = vadd.f32 %v4349, %v4413
    %v4415 = vpop.f32.mrb[0].mxu0
    %v4416 = vpop.f32.mrb[0].mxu0
    %v4417 = vadd.f32 %v4352, %v4416
    %v4418 = vpop.f32.mrb[0].mxu0
    %4419 = vdwg.mxu0
    %v4420 = vmax.f32 %v4390, 0.0
    %v4421 = vmax.f32 %v4393, 0.0
    %v4422 = vmax.f32 %v4398, 0.0
    %v4423 = vmax.f32 %v4401, 0.0
    %v4424 = vmax.f32 %v4406, 0.0
    %v4425 = vmax.f32 %v4409, 0.0
    %v4426 = vmax.f32 %v4414, 0.0
    %v4427 = vmax.f32 %v4417, 0.0
    %v4428 = vld [vmem:[%s3] sm:$0xf]
    %s4429 = scalar_lea.vmem %s3, 4
    %v4430 = vld [vmem:[%s4429] sm:$0xf]
    %v4431 = vld [vmem:[%s4] sm:$0xf]
    %s4432 = scalar_lea.vmem %s4, 4
    %v4433 = vld [vmem:[%s4432] sm:$0xf]
    %4435 = vset.pattern.permute.xlu0 0
    %4436 = vperm.xlu0 %4435, %v4420
    %v4437 = vpop.permute.xlu0 %4436
    %4440 = vset.pattern.permute.xlu0 0
    %4441 = vperm.xlu0 %4440, %v4421
    %v4442 = vpop.permute.xlu0 %4441
    %4445 = vset.pattern.permute.xlu0 0
    %4446 = vperm.xlu0 %4445, %v4422
    %v4447 = vpop.permute.xlu0 %4446
    %4450 = vset.pattern.permute.xlu0 0
    %4451 = vperm.xlu0 %4450, %v4423
    %v4452 = vpop.permute.xlu0 %4451
    %4455 = vset.pattern.permute.xlu0 0
    %4456 = vperm.xlu0 %4455, %v4424
    %v4457 = vpop.permute.xlu0 %4456
    %4460 = vset.pattern.permute.xlu0 0
    %4461 = vperm.xlu0 %4460, %v4425
    %v4462 = vpop.permute.xlu0 %4461
    %4465 = vset.pattern.permute.xlu0 0
    %4466 = vperm.xlu0 %4465, %v4426
    %v4467 = vpop.permute.xlu0 %4466
    %4470 = vset.pattern.permute.xlu0 0
    %4471 = vperm.xlu0 %4470, %v4427
    %v4472 = vpop.permute.xlu0 %4471
    %v4475 = vlaneseq
    %v4476 = vshrl.u32 %v4475, 7
    %v4477 = vsub.s32 0, %v4476
    %v4478 = vrot.slane %v4428, %v4477
    %v4479 = vlaneseq
    %v4480 = vshrl.u32 %v4479, 7
    %v4481 = vsub.s32 1, %v4480
    %v4482 = vrot.slane %v4428, %v4481
    %v4483 = vlaneseq
    %v4484 = vshrl.u32 %v4483, 7
    %v4485 = vsub.s32 2, %v4484
    %v4486 = vrot.slane %v4428, %v4485
    %v4487 = vlaneseq
    %v4488 = vshrl.u32 %v4487, 7
    %v4489 = vsub.s32 3, %v4488
    %v4490 = vrot.slane %v4428, %v4489
    %v4495 = vmul.f32 %v4437, %v4478
    %v4496 = vmul.f32 %v4437, %v4482
    %v4497 = vmul.f32 %v4437, %v4486
    %v4498 = vmul.f32 %v4437, %v4490
    %v4499 = vmul.f32 %v4442, %v4478
    %v4500 = vmul.f32 %v4442, %v4482
    %v4501 = vmul.f32 %v4442, %v4486
    %v4502 = vmul.f32 %v4442, %v4490
    %v4503 = vmul.f32 %v4447, %v4478
    %v4504 = vmul.f32 %v4447, %v4482
    %v4505 = vmul.f32 %v4447, %v4486
    %v4506 = vmul.f32 %v4447, %v4490
    %v4507 = vmul.f32 %v4452, %v4478
    %v4508 = vmul.f32 %v4452, %v4482
    %v4509 = vmul.f32 %v4452, %v4486
    %v4510 = vmul.f32 %v4452, %v4490
    %v4511 = vmul.f32 %v4457, %v4478
    %v4512 = vmul.f32 %v4457, %v4482
    %v4513 = vmul.f32 %v4457, %v4486
    %v4514 = vmul.f32 %v4457, %v4490
    %v4515 = vmul.f32 %v4462, %v4478
    %v4516 = vmul.f32 %v4462, %v4482
    %v4517 = vmul.f32 %v4462, %v4486
    %v4518 = vmul.f32 %v4462, %v4490
    %v4519 = vmul.f32 %v4467, %v4478
    %v4520 = vmul.f32 %v4467, %v4482
    %v4521 = vmul.f32 %v4467, %v4486
    %v4522 = vmul.f32 %v4467, %v4490
    %v4523 = vmul.f32 %v4472, %v4478
    %v4524 = vmul.f32 %v4472, %v4482
    %v4525 = vmul.f32 %v4472, %v4486
    %v4526 = vmul.f32 %v4472, %v4490
    %v4528 = vlaneseq
    %v4529 = vshrl.u32 %v4528, 7
    %v4530 = vsub.s32 0, %v4529
    %v4531 = vrot.slane %v4431, %v4530
    %v4532 = vlaneseq
    %v4533 = vshrl.u32 %v4532, 7
    %v4534 = vsub.s32 1, %v4533
    %v4535 = vrot.slane %v4431, %v4534
    %v4536 = vlaneseq
    %v4537 = vshrl.u32 %v4536, 7
    %v4538 = vsub.s32 2, %v4537
    %v4539 = vrot.slane %v4431, %v4538
    %v4540 = vlaneseq
    %v4541 = vshrl.u32 %v4540, 7
    %v4542 = vsub.s32 3, %v4541
    %v4543 = vrot.slane %v4431, %v4542
    %v4548 = vadd.f32 %v4495, %v4531
    %v4549 = vadd.f32 %v4496, %v4535
    %v4550 = vadd.f32 %v4497, %v4539
    %v4551 = vadd.f32 %v4498, %v4543
    %v4552 = vadd.f32 %v4499, %v4531
    %v4553 = vadd.f32 %v4500, %v4535
    %v4554 = vadd.f32 %v4501, %v4539
    %v4555 = vadd.f32 %v4502, %v4543
    %v4556 = vadd.f32 %v4503, %v4531
    %v4557 = vadd.f32 %v4504, %v4535
    %v4558 = vadd.f32 %v4505, %v4539
    %v4559 = vadd.f32 %v4506, %v4543
    %v4560 = vadd.f32 %v4507, %v4531
    %v4561 = vadd.f32 %v4508, %v4535
    %v4562 = vadd.f32 %v4509, %v4539
    %v4563 = vadd.f32 %v4510, %v4543
    %v4564 = vadd.f32 %v4511, %v4531
    %v4565 = vadd.f32 %v4512, %v4535
    %v4566 = vadd.f32 %v4513, %v4539
    %v4567 = vadd.f32 %v4514, %v4543
    %v4568 = vadd.f32 %v4515, %v4531
    %v4569 = vadd.f32 %v4516, %v4535
    %v4570 = vadd.f32 %v4517, %v4539
    %v4571 = vadd.f32 %v4518, %v4543
    %v4572 = vadd.f32 %v4519, %v4531
    %v4573 = vadd.f32 %v4520, %v4535
    %v4574 = vadd.f32 %v4521, %v4539
    %v4575 = vadd.f32 %v4522, %v4543
    %v4576 = vadd.f32 %v4523, %v4531
    %v4577 = vadd.f32 %v4524, %v4535
    %v4578 = vadd.f32 %v4525, %v4539
    %v4579 = vadd.f32 %v4526, %v4543
    %v4612 = vcombine.low %v4548, %v4549
    %v4613 = vcombine.high %v4548, %v4549
    %v4614 = vcombine.low %v4550, %v4551
    %v4615 = vcombine.high %v4550, %v4551
    %v4617 = vunpack.c.l.s4 1966171168
    %v4618 = vunpack.c.0.s8 %v4617
    %v4619 = vlaneseq
    %v4620 = vshrl.u32 %v4619, 7
    %v4621 = vsub.s32 %v4618, %v4620
    %v4622 = vrot.slane %v4612, %v4621
    %v4624 = vunpack.c.l.s4 1966171168
    %v4625 = vunpack.c.0.s8 %v4624
    %v4626 = vlaneseq
    %v4627 = vshrl.u32 %v4626, 7
    %v4628 = vsub.s32 %v4625, %v4627
    %v4629 = vrot.slane %v4613, %v4628
    %v4631 = vunpack.c.l.s4 1966171168
    %v4632 = vunpack.c.0.s8 %v4631
    %v4633 = vlaneseq
    %v4634 = vshrl.u32 %v4633, 7
    %v4635 = vsub.s32 %v4632, %v4634
    %v4636 = vrot.slane %v4614, %v4635
    %v4638 = vunpack.c.l.s4 1966171168
    %v4639 = vunpack.c.0.s8 %v4638
    %v4640 = vlaneseq
    %v4641 = vshrl.u32 %v4640, 7
    %v4642 = vsub.s32 %v4639, %v4641
    %v4643 = vrot.slane %v4615, %v4642
    %v4644 = vcombine.low %v4622, %v4636
    %v4645 = vcombine.high %v4622, %v4636
    %v4646 = vcombine.low %v4629, %v4643
    %v4647 = vcombine.high %v4629, %v4643
    %v4649 = vunpack.c.l.s4 1966171168
    %v4650 = vunpack.c.0.s8 %v4649
    %v4651 = vlaneseq
    %v4652 = vshrl.u32 %v4651, 7
    %v4653 = vsub.s32 %v4650, %v4652
    %v4654 = vrot.slane %v4644, %v4653
    %v4656 = vunpack.c.l.s4 1966171168
    %v4657 = vunpack.c.0.s8 %v4656
    %v4658 = vlaneseq
    %v4659 = vshrl.u32 %v4658, 7
    %v4660 = vsub.s32 %v4657, %v4659
    %v4661 = vrot.slane %v4646, %v4660
    %v4663 = vunpack.c.l.s4 1966171168
    %v4664 = vunpack.c.0.s8 %v4663
    %v4665 = vlaneseq
    %v4666 = vshrl.u32 %v4665, 7
    %v4667 = vsub.s32 %v4664, %v4666
    %v4668 = vrot.slane %v4645, %v4667
    %v4670 = vunpack.c.l.s4 1966171168
    %v4671 = vunpack.c.0.s8 %v4670
    %v4672 = vlaneseq
    %v4673 = vshrl.u32 %v4672, 7
    %v4674 = vsub.s32 %v4671, %v4673
    %v4675 = vrot.slane %v4647, %v4674
    %v4676 = vcombine.high %v4654, %v4654
    %v4677 = vcombine.high %v4661, %v4661
    %v4678 = vcombine.high %v4668, %v4668
    %v4679 = vcombine.high %v4675, %v4675
    %v4680 = vcombine.low %v4552, %v4553
    %v4681 = vcombine.high %v4552, %v4553
    %v4682 = vcombine.low %v4554, %v4555
    %v4683 = vcombine.high %v4554, %v4555
    %v4685 = vunpack.c.l.s4 1966171168
    %v4686 = vunpack.c.0.s8 %v4685
    %v4687 = vlaneseq
    %v4688 = vshrl.u32 %v4687, 7
    %v4689 = vsub.s32 %v4686, %v4688
    %v4690 = vrot.slane %v4680, %v4689
    %v4692 = vunpack.c.l.s4 1966171168
    %v4693 = vunpack.c.0.s8 %v4692
    %v4694 = vlaneseq
    %v4695 = vshrl.u32 %v4694, 7
    %v4696 = vsub.s32 %v4693, %v4695
    %v4697 = vrot.slane %v4681, %v4696
    %v4699 = vunpack.c.l.s4 1966171168
    %v4700 = vunpack.c.0.s8 %v4699
    %v4701 = vlaneseq
    %v4702 = vshrl.u32 %v4701, 7
    %v4703 = vsub.s32 %v4700, %v4702
    %v4704 = vrot.slane %v4682, %v4703
    %v4706 = vunpack.c.l.s4 1966171168
    %v4707 = vunpack.c.0.s8 %v4706
    %v4708 = vlaneseq
    %v4709 = vshrl.u32 %v4708, 7
    %v4710 = vsub.s32 %v4707, %v4709
    %v4711 = vrot.slane %v4683, %v4710
    %v4712 = vcombine.low %v4690, %v4704
    %v4713 = vcombine.high %v4690, %v4704
    %v4714 = vcombine.low %v4697, %v4711
    %v4715 = vcombine.high %v4697, %v4711
    %v4717 = vunpack.c.l.s4 1966171168
    %v4718 = vunpack.c.0.s8 %v4717
    %v4719 = vlaneseq
    %v4720 = vshrl.u32 %v4719, 7
    %v4721 = vsub.s32 %v4718, %v4720
    %v4722 = vrot.slane %v4712, %v4721
    %v4724 = vunpack.c.l.s4 1966171168
    %v4725 = vunpack.c.0.s8 %v4724
    %v4726 = vlaneseq
    %v4727 = vshrl.u32 %v4726, 7
    %v4728 = vsub.s32 %v4725, %v4727
    %v4729 = vrot.slane %v4714, %v4728
    %v4731 = vunpack.c.l.s4 1966171168
    %v4732 = vunpack.c.0.s8 %v4731
    %v4733 = vlaneseq
    %v4734 = vshrl.u32 %v4733, 7
    %v4735 = vsub.s32 %v4732, %v4734
    %v4736 = vrot.slane %v4713, %v4735
    %v4738 = vunpack.c.l.s4 1966171168
    %v4739 = vunpack.c.0.s8 %v4738
    %v4740 = vlaneseq
    %v4741 = vshrl.u32 %v4740, 7
    %v4742 = vsub.s32 %v4739, %v4741
    %v4743 = vrot.slane %v4715, %v4742
    %v4744 = vcombine.high %v4722, %v4722
    %v4745 = vcombine.high %v4729, %v4729
    %v4746 = vcombine.high %v4736, %v4736
    %v4747 = vcombine.high %v4743, %v4743
    %v4748 = vcombine.low %v4556, %v4557
    %v4749 = vcombine.high %v4556, %v4557
    %v4750 = vcombine.low %v4558, %v4559
    %v4751 = vcombine.high %v4558, %v4559
    %v4753 = vunpack.c.l.s4 1966171168
    %v4754 = vunpack.c.0.s8 %v4753
    %v4755 = vlaneseq
    %v4756 = vshrl.u32 %v4755, 7
    %v4757 = vsub.s32 %v4754, %v4756
    %v4758 = vrot.slane %v4748, %v4757
    %v4760 = vunpack.c.l.s4 1966171168
    %v4761 = vunpack.c.0.s8 %v4760
    %v4762 = vlaneseq
    %v4763 = vshrl.u32 %v4762, 7
    %v4764 = vsub.s32 %v4761, %v4763
    %v4765 = vrot.slane %v4749, %v4764
    %v4767 = vunpack.c.l.s4 1966171168
    %v4768 = vunpack.c.0.s8 %v4767
    %v4769 = vlaneseq
    %v4770 = vshrl.u32 %v4769, 7
    %v4771 = vsub.s32 %v4768, %v4770
    %v4772 = vrot.slane %v4750, %v4771
    %v4774 = vunpack.c.l.s4 1966171168
    %v4775 = vunpack.c.0.s8 %v4774
    %v4776 = vlaneseq
    %v4777 = vshrl.u32 %v4776, 7
    %v4778 = vsub.s32 %v4775, %v4777
    %v4779 = vrot.slane %v4751, %v4778
    %v4780 = vcombine.low %v4758, %v4772
    %v4781 = vcombine.high %v4758, %v4772
    %v4782 = vcombine.low %v4765, %v4779
    %v4783 = vcombine.high %v4765, %v4779
    %v4785 = vunpack.c.l.s4 1966171168
    %v4786 = vunpack.c.0.s8 %v4785
    %v4787 = vlaneseq
    %v4788 = vshrl.u32 %v4787, 7
    %v4789 = vsub.s32 %v4786, %v4788
    %v4790 = vrot.slane %v4780, %v4789
    %v4792 = vunpack.c.l.s4 1966171168
    %v4793 = vunpack.c.0.s8 %v4792
    %v4794 = vlaneseq
    %v4795 = vshrl.u32 %v4794, 7
    %v4796 = vsub.s32 %v4793, %v4795
    %v4797 = vrot.slane %v4782, %v4796
    %v4799 = vunpack.c.l.s4 1966171168
    %v4800 = vunpack.c.0.s8 %v4799
    %v4801 = vlaneseq
    %v4802 = vshrl.u32 %v4801, 7
    %v4803 = vsub.s32 %v4800, %v4802
    %v4804 = vrot.slane %v4781, %v4803
    %v4806 = vunpack.c.l.s4 1966171168
    %v4807 = vunpack.c.0.s8 %v4806
    %v4808 = vlaneseq
    %v4809 = vshrl.u32 %v4808, 7
    %v4810 = vsub.s32 %v4807, %v4809
    %v4811 = vrot.slane %v4783, %v4810
    %v4812 = vcombine.high %v4790, %v4790
    %v4813 = vcombine.high %v4797, %v4797
    %v4814 = vcombine.high %v4804, %v4804
    %v4815 = vcombine.high %v4811, %v4811
    %v4816 = vcombine.low %v4560, %v4561
    %v4817 = vcombine.high %v4560, %v4561
    %v4818 = vcombine.low %v4562, %v4563
    %v4819 = vcombine.high %v4562, %v4563
    %v4821 = vunpack.c.l.s4 1966171168
    %v4822 = vunpack.c.0.s8 %v4821
    %v4823 = vlaneseq
    %v4824 = vshrl.u32 %v4823, 7
    %v4825 = vsub.s32 %v4822, %v4824
    %v4826 = vrot.slane %v4816, %v4825
    %v4828 = vunpack.c.l.s4 1966171168
    %v4829 = vunpack.c.0.s8 %v4828
    %v4830 = vlaneseq
    %v4831 = vshrl.u32 %v4830, 7
    %v4832 = vsub.s32 %v4829, %v4831
    %v4833 = vrot.slane %v4817, %v4832
    %v4835 = vunpack.c.l.s4 1966171168
    %v4836 = vunpack.c.0.s8 %v4835
    %v4837 = vlaneseq
    %v4838 = vshrl.u32 %v4837, 7
    %v4839 = vsub.s32 %v4836, %v4838
    %v4840 = vrot.slane %v4818, %v4839
    %v4842 = vunpack.c.l.s4 1966171168
    %v4843 = vunpack.c.0.s8 %v4842
    %v4844 = vlaneseq
    %v4845 = vshrl.u32 %v4844, 7
    %v4846 = vsub.s32 %v4843, %v4845
    %v4847 = vrot.slane %v4819, %v4846
    %v4848 = vcombine.low %v4826, %v4840
    %v4849 = vcombine.high %v4826, %v4840
    %v4850 = vcombine.low %v4833, %v4847
    %v4851 = vcombine.high %v4833, %v4847
    %v4853 = vunpack.c.l.s4 1966171168
    %v4854 = vunpack.c.0.s8 %v4853
    %v4855 = vlaneseq
    %v4856 = vshrl.u32 %v4855, 7
    %v4857 = vsub.s32 %v4854, %v4856
    %v4858 = vrot.slane %v4848, %v4857
    %v4860 = vunpack.c.l.s4 1966171168
    %v4861 = vunpack.c.0.s8 %v4860
    %v4862 = vlaneseq
    %v4863 = vshrl.u32 %v4862, 7
    %v4864 = vsub.s32 %v4861, %v4863
    %v4865 = vrot.slane %v4850, %v4864
    %v4867 = vunpack.c.l.s4 1966171168
    %v4868 = vunpack.c.0.s8 %v4867
    %v4869 = vlaneseq
    %v4870 = vshrl.u32 %v4869, 7
    %v4871 = vsub.s32 %v4868, %v4870
    %v4872 = vrot.slane %v4849, %v4871
    %v4874 = vunpack.c.l.s4 1966171168
    %v4875 = vunpack.c.0.s8 %v4874
    %v4876 = vlaneseq
    %v4877 = vshrl.u32 %v4876, 7
    %v4878 = vsub.s32 %v4875, %v4877
    %v4879 = vrot.slane %v4851, %v4878
    %v4880 = vcombine.high %v4858, %v4858
    %v4881 = vcombine.high %v4865, %v4865
    %v4882 = vcombine.high %v4872, %v4872
    %v4883 = vcombine.high %v4879, %v4879
    %v4884 = vcombine.low %v4564, %v4565
    %v4885 = vcombine.high %v4564, %v4565
    %v4886 = vcombine.low %v4566, %v4567
    %v4887 = vcombine.high %v4566, %v4567
    %v4889 = vunpack.c.l.s4 1966171168
    %v4890 = vunpack.c.0.s8 %v4889
    %v4891 = vlaneseq
    %v4892 = vshrl.u32 %v4891, 7
    %v4893 = vsub.s32 %v4890, %v4892
    %v4894 = vrot.slane %v4884, %v4893
    %v4896 = vunpack.c.l.s4 1966171168
    %v4897 = vunpack.c.0.s8 %v4896
    %v4898 = vlaneseq
    %v4899 = vshrl.u32 %v4898, 7
    %v4900 = vsub.s32 %v4897, %v4899
    %v4901 = vrot.slane %v4885, %v4900
    %v4903 = vunpack.c.l.s4 1966171168
    %v4904 = vunpack.c.0.s8 %v4903
    %v4905 = vlaneseq
    %v4906 = vshrl.u32 %v4905, 7
    %v4907 = vsub.s32 %v4904, %v4906
    %v4908 = vrot.slane %v4886, %v4907
    %v4910 = vunpack.c.l.s4 1966171168
    %v4911 = vunpack.c.0.s8 %v4910
    %v4912 = vlaneseq
    %v4913 = vshrl.u32 %v4912, 7
    %v4914 = vsub.s32 %v4911, %v4913
    %v4915 = vrot.slane %v4887, %v4914
    %v4916 = vcombine.low %v4894, %v4908
    %v4917 = vcombine.high %v4894, %v4908
    %v4918 = vcombine.low %v4901, %v4915
    %v4919 = vcombine.high %v4901, %v4915
    %v4921 = vunpack.c.l.s4 1966171168
    %v4922 = vunpack.c.0.s8 %v4921
    %v4923 = vlaneseq
    %v4924 = vshrl.u32 %v4923, 7
    %v4925 = vsub.s32 %v4922, %v4924
    %v4926 = vrot.slane %v4916, %v4925
    %v4928 = vunpack.c.l.s4 1966171168
    %v4929 = vunpack.c.0.s8 %v4928
    %v4930 = vlaneseq
    %v4931 = vshrl.u32 %v4930, 7
    %v4932 = vsub.s32 %v4929, %v4931
    %v4933 = vrot.slane %v4918, %v4932
    %v4935 = vunpack.c.l.s4 1966171168
    %v4936 = vunpack.c.0.s8 %v4935
    %v4937 = vlaneseq
    %v4938 = vshrl.u32 %v4937, 7
    %v4939 = vsub.s32 %v4936, %v4938
    %v4940 = vrot.slane %v4917, %v4939
    %v4942 = vunpack.c.l.s4 1966171168
    %v4943 = vunpack.c.0.s8 %v4942
    %v4944 = vlaneseq
    %v4945 = vshrl.u32 %v4944, 7
    %v4946 = vsub.s32 %v4943, %v4945
    %v4947 = vrot.slane %v4919, %v4946
    %v4948 = vcombine.high %v4926, %v4926
    %v4949 = vcombine.high %v4933, %v4933
    %v4950 = vcombine.high %v4940, %v4940
    %v4951 = vcombine.high %v4947, %v4947
    %v4952 = vcombine.low %v4568, %v4569
    %v4953 = vcombine.high %v4568, %v4569
    %v4954 = vcombine.low %v4570, %v4571
    %v4955 = vcombine.high %v4570, %v4571
    %v4957 = vunpack.c.l.s4 1966171168
    %v4958 = vunpack.c.0.s8 %v4957
    %v4959 = vlaneseq
    %v4960 = vshrl.u32 %v4959, 7
    %v4961 = vsub.s32 %v4958, %v4960
    %v4962 = vrot.slane %v4952, %v4961
    %v4964 = vunpack.c.l.s4 1966171168
    %v4965 = vunpack.c.0.s8 %v4964
    %v4966 = vlaneseq
    %v4967 = vshrl.u32 %v4966, 7
    %v4968 = vsub.s32 %v4965, %v4967
    %v4969 = vrot.slane %v4953, %v4968
    %v4971 = vunpack.c.l.s4 1966171168
    %v4972 = vunpack.c.0.s8 %v4971
    %v4973 = vlaneseq
    %v4974 = vshrl.u32 %v4973, 7
    %v4975 = vsub.s32 %v4972, %v4974
    %v4976 = vrot.slane %v4954, %v4975
    %v4978 = vunpack.c.l.s4 1966171168
    %v4979 = vunpack.c.0.s8 %v4978
    %v4980 = vlaneseq
    %v4981 = vshrl.u32 %v4980, 7
    %v4982 = vsub.s32 %v4979, %v4981
    %v4983 = vrot.slane %v4955, %v4982
    %v4984 = vcombine.low %v4962, %v4976
    %v4985 = vcombine.high %v4962, %v4976
    %v4986 = vcombine.low %v4969, %v4983
    %v4987 = vcombine.high %v4969, %v4983
    %v4989 = vunpack.c.l.s4 1966171168
    %v4990 = vunpack.c.0.s8 %v4989
    %v4991 = vlaneseq
    %v4992 = vshrl.u32 %v4991, 7
    %v4993 = vsub.s32 %v4990, %v4992
    %v4994 = vrot.slane %v4984, %v4993
    %v4996 = vunpack.c.l.s4 1966171168
    %v4997 = vunpack.c.0.s8 %v4996
    %v4998 = vlaneseq
    %v4999 = vshrl.u32 %v4998, 7
    %v5000 = vsub.s32 %v4997, %v4999
    %v5001 = vrot.slane %v4986, %v5000
    %v5003 = vunpack.c.l.s4 1966171168
    %v5004 = vunpack.c.0.s8 %v5003
    %v5005 = vlaneseq
    %v5006 = vshrl.u32 %v5005, 7
    %v5007 = vsub.s32 %v5004, %v5006
    %v5008 = vrot.slane %v4985, %v5007
    %v5010 = vunpack.c.l.s4 1966171168
    %v5011 = vunpack.c.0.s8 %v5010
    %v5012 = vlaneseq
    %v5013 = vshrl.u32 %v5012, 7
    %v5014 = vsub.s32 %v5011, %v5013
    %v5015 = vrot.slane %v4987, %v5014
    %v5016 = vcombine.high %v4994, %v4994
    %v5017 = vcombine.high %v5001, %v5001
    %v5018 = vcombine.high %v5008, %v5008
    %v5019 = vcombine.high %v5015, %v5015
    %v5020 = vcombine.low %v4572, %v4573
    %v5021 = vcombine.high %v4572, %v4573
    %v5022 = vcombine.low %v4574, %v4575
    %v5023 = vcombine.high %v4574, %v4575
    %v5025 = vunpack.c.l.s4 1966171168
    %v5026 = vunpack.c.0.s8 %v5025
    %v5027 = vlaneseq
    %v5028 = vshrl.u32 %v5027, 7
    %v5029 = vsub.s32 %v5026, %v5028
    %v5030 = vrot.slane %v5020, %v5029
    %v5032 = vunpack.c.l.s4 1966171168
    %v5033 = vunpack.c.0.s8 %v5032
    %v5034 = vlaneseq
    %v5035 = vshrl.u32 %v5034, 7
    %v5036 = vsub.s32 %v5033, %v5035
    %v5037 = vrot.slane %v5021, %v5036
    %v5039 = vunpack.c.l.s4 1966171168
    %v5040 = vunpack.c.0.s8 %v5039
    %v5041 = vlaneseq
    %v5042 = vshrl.u32 %v5041, 7
    %v5043 = vsub.s32 %v5040, %v5042
    %v5044 = vrot.slane %v5022, %v5043
    %v5046 = vunpack.c.l.s4 1966171168
    %v5047 = vunpack.c.0.s8 %v5046
    %v5048 = vlaneseq
    %v5049 = vshrl.u32 %v5048, 7
    %v5050 = vsub.s32 %v5047, %v5049
    %v5051 = vrot.slane %v5023, %v5050
    %v5052 = vcombine.low %v5030, %v5044
    %v5053 = vcombine.high %v5030, %v5044
    %v5054 = vcombine.low %v5037, %v5051
    %v5055 = vcombine.high %v5037, %v5051
    %v5057 = vunpack.c.l.s4 1966171168
    %v5058 = vunpack.c.0.s8 %v5057
    %v5059 = vlaneseq
    %v5060 = vshrl.u32 %v5059, 7
    %v5061 = vsub.s32 %v5058, %v5060
    %v5062 = vrot.slane %v5052, %v5061
    %v5064 = vunpack.c.l.s4 1966171168
    %v5065 = vunpack.c.0.s8 %v5064
    %v5066 = vlaneseq
    %v5067 = vshrl.u32 %v5066, 7
    %v5068 = vsub.s32 %v5065, %v5067
    %v5069 = vrot.slane %v5054, %v5068
    %v5071 = vunpack.c.l.s4 1966171168
    %v5072 = vunpack.c.0.s8 %v5071
    %v5073 = vlaneseq
    %v5074 = vshrl.u32 %v5073, 7
    %v5075 = vsub.s32 %v5072, %v5074
    %v5076 = vrot.slane %v5053, %v5075
    %v5078 = vunpack.c.l.s4 1966171168
    %v5079 = vunpack.c.0.s8 %v5078
    %v5080 = vlaneseq
    %v5081 = vshrl.u32 %v5080, 7
    %v5082 = vsub.s32 %v5079, %v5081
    %v5083 = vrot.slane %v5055, %v5082
    %v5084 = vcombine.high %v5062, %v5062
    %v5085 = vcombine.high %v5069, %v5069
    %v5086 = vcombine.high %v5076, %v5076
    %v5087 = vcombine.high %v5083, %v5083
    %v5088 = vcombine.low %v4576, %v4577
    %v5089 = vcombine.high %v4576, %v4577
    %v5090 = vcombine.low %v4578, %v4579
    %v5091 = vcombine.high %v4578, %v4579
    %v5093 = vunpack.c.l.s4 1966171168
    %v5094 = vunpack.c.0.s8 %v5093
    %v5095 = vlaneseq
    %v5096 = vshrl.u32 %v5095, 7
    %v5097 = vsub.s32 %v5094, %v5096
    %v5098 = vrot.slane %v5088, %v5097
    %v5100 = vunpack.c.l.s4 1966171168
    %v5101 = vunpack.c.0.s8 %v5100
    %v5102 = vlaneseq
    %v5103 = vshrl.u32 %v5102, 7
    %v5104 = vsub.s32 %v5101, %v5103
    %v5105 = vrot.slane %v5089, %v5104
    %v5107 = vunpack.c.l.s4 1966171168
    %v5108 = vunpack.c.0.s8 %v5107
    %v5109 = vlaneseq
    %v5110 = vshrl.u32 %v5109, 7
    %v5111 = vsub.s32 %v5108, %v5110
    %v5112 = vrot.slane %v5090, %v5111
    %v5114 = vunpack.c.l.s4 1966171168
    %v5115 = vunpack.c.0.s8 %v5114
    %v5116 = vlaneseq
    %v5117 = vshrl.u32 %v5116, 7
    %v5118 = vsub.s32 %v5115, %v5117
    %v5119 = vrot.slane %v5091, %v5118
    %v5120 = vcombine.low %v5098, %v5112
    %v5121 = vcombine.high %v5098, %v5112
    %v5122 = vcombine.low %v5105, %v5119
    %v5123 = vcombine.high %v5105, %v5119
    %v5125 = vunpack.c.l.s4 1966171168
    %v5126 = vunpack.c.0.s8 %v5125
    %v5127 = vlaneseq
    %v5128 = vshrl.u32 %v5127, 7
    %v5129 = vsub.s32 %v5126, %v5128
    %v5130 = vrot.slane %v5120, %v5129
    %v5132 = vunpack.c.l.s4 1966171168
    %v5133 = vunpack.c.0.s8 %v5132
    %v5134 = vlaneseq
    %v5135 = vshrl.u32 %v5134, 7
    %v5136 = vsub.s32 %v5133, %v5135
    %v5137 = vrot.slane %v5122, %v5136
    %v5139 = vunpack.c.l.s4 1966171168
    %v5140 = vunpack.c.0.s8 %v5139
    %v5141 = vlaneseq
    %v5142 = vshrl.u32 %v5141, 7
    %v5143 = vsub.s32 %v5140, %v5142
    %v5144 = vrot.slane %v5121, %v5143
    %v5146 = vunpack.c.l.s4 1966171168
    %v5147 = vunpack.c.0.s8 %v5146
    %v5148 = vlaneseq
    %v5149 = vshrl.u32 %v5148, 7
    %v5150 = vsub.s32 %v5147, %v5149
    %v5151 = vrot.slane %v5123, %v5150
    %v5152 = vcombine.high %v5130, %v5130
    %v5153 = vcombine.high %v5137, %v5137
    %v5154 = vcombine.high %v5144, %v5144
    %v5155 = vcombine.high %v5151, %v5151
    %v5220 = vlaneseq
    %vm5221 = vcmp.ge.s32.totalorder %v5220, 0
    %vm5222 = vcmp.lt.s32.totalorder %v5220, 512
    %vm5223 = vmand %vm5221, %vm5222
    %5224 = vst.msk [vmem:[#allocation2] ss:$2 sm:$0xf] %vm5223, %v4654
    %s5225 = scalar_lea.vmem [#allocation2], 8
    %5226 = vst.msk [vmem:[%s5225] ss:$2 sm:$0xf] %vm5223, %v4668
    %s5227 = scalar_lea.vmem [#allocation2], 16
    %5228 = vst.msk [vmem:[%s5227] ss:$2 sm:$0xf] %vm5223, %v4676
    %s5229 = scalar_lea.vmem [#allocation2], 24
    %5230 = vst.msk [vmem:[%s5229] ss:$2 sm:$0xf] %vm5223, %v4678
    %s5231 = scalar_lea.vmem [#allocation2], 32
    %5232 = vst.msk [vmem:[%s5231] ss:$2 sm:$0xf] %vm5223, %v4661
    %s5233 = scalar_lea.vmem [#allocation2], 40
    %5234 = vst.msk [vmem:[%s5233] ss:$2 sm:$0xf] %vm5223, %v4675
    %s5235 = scalar_lea.vmem [#allocation2], 48
    %5236 = vst.msk [vmem:[%s5235] ss:$2 sm:$0xf] %vm5223, %v4677
    %s5237 = scalar_lea.vmem [#allocation2], 56
    %5238 = vst.msk [vmem:[%s5237] ss:$2 sm:$0xf] %vm5223, %v4679
    %s5239 = scalar_lea.vmem [#allocation2], 64
    %5240 = vst.msk [vmem:[%s5239] ss:$2 sm:$0xf] %vm5223, %v4722
    %s5241 = scalar_lea.vmem [#allocation2], 72
    %5242 = vst.msk [vmem:[%s5241] ss:$2 sm:$0xf] %vm5223, %v4736
    %s5243 = scalar_lea.vmem [#allocation2], 80
    %5244 = vst.msk [vmem:[%s5243] ss:$2 sm:$0xf] %vm5223, %v4744
    %s5245 = scalar_lea.vmem [#allocation2], 88
    %5246 = vst.msk [vmem:[%s5245] ss:$2 sm:$0xf] %vm5223, %v4746
    %s5247 = scalar_lea.vmem [#allocation2], 96
    %5248 = vst.msk [vmem:[%s5247] ss:$2 sm:$0xf] %vm5223, %v4729
    %s5249 = scalar_lea.vmem [#allocation2], 104
    %5250 = vst.msk [vmem:[%s5249] ss:$2 sm:$0xf] %vm5223, %v4743
    %s5251 = scalar_lea.vmem [#allocation2], 112
    %5252 = vst.msk [vmem:[%s5251] ss:$2 sm:$0xf] %vm5223, %v4745
    %s5253 = scalar_lea.vmem [#allocation2], 120
    %5254 = vst.msk [vmem:[%s5253] ss:$2 sm:$0xf] %vm5223, %v4747
    %s5255 = scalar_lea.vmem [#allocation2], 128
    %5256 = vst.msk [vmem:[%s5255] ss:$2 sm:$0xf] %vm5223, %v4790
    %s5257 = scalar_lea.vmem [#allocation2], 136
    %5258 = vst.msk [vmem:[%s5257] ss:$2 sm:$0xf] %vm5223, %v4804
    %s5259 = scalar_lea.vmem [#allocation2], 144
    %5260 = vst.msk [vmem:[%s5259] ss:$2 sm:$0xf] %vm5223, %v4812
    %s5261 = scalar_lea.vmem [#allocation2], 152
    %5262 = vst.msk [vmem:[%s5261] ss:$2 sm:$0xf] %vm5223, %v4814
    %s5263 = scalar_lea.vmem [#allocation2], 160
    %5264 = vst.msk [vmem:[%s5263] ss:$2 sm:$0xf] %vm5223, %v4797
    %s5265 = scalar_lea.vmem [#allocation2], 168
    %5266 = vst.msk [vmem:[%s5265] ss:$2 sm:$0xf] %vm5223, %v4811
    %s5267 = scalar_lea.vmem [#allocation2], 176
    %5268 = vst.msk [vmem:[%s5267] ss:$2 sm:$0xf] %vm5223, %v4813
    %s5269 = scalar_lea.vmem [#allocation2], 184
    %5270 = vst.msk [vmem:[%s5269] ss:$2 sm:$0xf] %vm5223, %v4815
    %s5271 = scalar_lea.vmem [#allocation2], 192
    %5272 = vst.msk [vmem:[%s5271] ss:$2 sm:$0xf] %vm5223, %v4858
    %s5273 = scalar_lea.vmem [#allocation2], 200
    %5274 = vst.msk [vmem:[%s5273] ss:$2 sm:$0xf] %vm5223, %v4872
    %s5275 = scalar_lea.vmem [#allocation2], 208
    %5276 = vst.msk [vmem:[%s5275] ss:$2 sm:$0xf] %vm5223, %v4880
    %s5277 = scalar_lea.vmem [#allocation2], 216
    %5278 = vst.msk [vmem:[%s5277] ss:$2 sm:$0xf] %vm5223, %v4882
    %s5279 = scalar_lea.vmem [#allocation2], 224
    %5280 = vst.msk [vmem:[%s5279] ss:$2 sm:$0xf] %vm5223, %v4865
    %s5281 = scalar_lea.vmem [#allocation2], 232
    %5282 = vst.msk [vmem:[%s5281] ss:$2 sm:$0xf] %vm5223, %v4879
    %s5283 = scalar_lea.vmem [#allocation2], 240
    %5284 = vst.msk [vmem:[%s5283] ss:$2 sm:$0xf] %vm5223, %v4881
    %s5285 = scalar_lea.vmem [#allocation2], 248
    %5286 = vst.msk [vmem:[%s5285] ss:$2 sm:$0xf] %vm5223, %v4883
    %s5287 = scalar_lea.vmem [#allocation2], 256
    %5288 = vst.msk [vmem:[%s5287] ss:$2 sm:$0xf] %vm5223, %v4926
    %s5289 = scalar_lea.vmem [#allocation2], 264
    %5290 = vst.msk [vmem:[%s5289] ss:$2 sm:$0xf] %vm5223, %v4940
    %s5291 = scalar_lea.vmem [#allocation2], 272
    %5292 = vst.msk [vmem:[%s5291] ss:$2 sm:$0xf] %vm5223, %v4948
    %s5293 = scalar_lea.vmem [#allocation2], 280
    %5294 = vst.msk [vmem:[%s5293] ss:$2 sm:$0xf] %vm5223, %v4950
    %s5295 = scalar_lea.vmem [#allocation2], 288
    %5296 = vst.msk [vmem:[%s5295] ss:$2 sm:$0xf] %vm5223, %v4933
    %s5297 = scalar_lea.vmem [#allocation2], 296
    %5298 = vst.msk [vmem:[%s5297] ss:$2 sm:$0xf] %vm5223, %v4947
    %s5299 = scalar_lea.vmem [#allocation2], 304
    %5300 = vst.msk [vmem:[%s5299] ss:$2 sm:$0xf] %vm5223, %v4949
    %s5301 = scalar_lea.vmem [#allocation2], 312
    %5302 = vst.msk [vmem:[%s5301] ss:$2 sm:$0xf] %vm5223, %v4951
    %s5303 = scalar_lea.vmem [#allocation2], 320
    %5304 = vst.msk [vmem:[%s5303] ss:$2 sm:$0xf] %vm5223, %v4994
    %s5305 = scalar_lea.vmem [#allocation2], 328
    %5306 = vst.msk [vmem:[%s5305] ss:$2 sm:$0xf] %vm5223, %v5008
    %s5307 = scalar_lea.vmem [#allocation2], 336
    %5308 = vst.msk [vmem:[%s5307] ss:$2 sm:$0xf] %vm5223, %v5016
    %s5309 = scalar_lea.vmem [#allocation2], 344
    %5310 = vst.msk [vmem:[%s5309] ss:$2 sm:$0xf] %vm5223, %v5018
    %s5311 = scalar_lea.vmem [#allocation2], 352
    %5312 = vst.msk [vmem:[%s5311] ss:$2 sm:$0xf] %vm5223, %v5001
    %s5313 = scalar_lea.vmem [#allocation2], 360
    %5314 = vst.msk [vmem:[%s5313] ss:$2 sm:$0xf] %vm5223, %v5015
    %s5315 = scalar_lea.vmem [#allocation2], 368
    %5316 = vst.msk [vmem:[%s5315] ss:$2 sm:$0xf] %vm5223, %v5017
    %s5317 = scalar_lea.vmem [#allocation2], 376
    %5318 = vst.msk [vmem:[%s5317] ss:$2 sm:$0xf] %vm5223, %v5019
    %s5319 = scalar_lea.vmem [#allocation2], 384
    %5320 = vst.msk [vmem:[%s5319] ss:$2 sm:$0xf] %vm5223, %v5062
    %s5321 = scalar_lea.vmem [#allocation2], 392
    %5322 = vst.msk [vmem:[%s5321] ss:$2 sm:$0xf] %vm5223, %v5076
    %s5323 = scalar_lea.vmem [#allocation2], 400
    %5324 = vst.msk [vmem:[%s5323] ss:$2 sm:$0xf] %vm5223, %v5084
    %s5325 = scalar_lea.vmem [#allocation2], 408
    %5326 = vst.msk [vmem:[%s5325] ss:$2 sm:$0xf] %vm5223, %v5086
    %s5327 = scalar_lea.vmem [#allocation2], 416
    %5328 = vst.msk [vmem:[%s5327] ss:$2 sm:$0xf] %vm5223, %v5069
    %s5329 = scalar_lea.vmem [#allocation2], 424
    %5330 = vst.msk [vmem:[%s5329] ss:$2 sm:$0xf] %vm5223, %v5083
    %s5331 = scalar_lea.vmem [#allocation2], 432
    %5332 = vst.msk [vmem:[%s5331] ss:$2 sm:$0xf] %vm5223, %v5085
    %s5333 = scalar_lea.vmem [#allocation2], 440
    %5334 = vst.msk [vmem:[%s5333] ss:$2 sm:$0xf] %vm5223, %v5087
    %s5335 = scalar_lea.vmem [#allocation2], 448
    %5336 = vst.msk [vmem:[%s5335] ss:$2 sm:$0xf] %vm5223, %v5130
    %s5337 = scalar_lea.vmem [#allocation2], 456
    %5338 = vst.msk [vmem:[%s5337] ss:$2 sm:$0xf] %vm5223, %v5144
    %s5339 = scalar_lea.vmem [#allocation2], 464
    %5340 = vst.msk [vmem:[%s5339] ss:$2 sm:$0xf] %vm5223, %v5152
    %s5341 = scalar_lea.vmem [#allocation2], 472
    %5342 = vst.msk [vmem:[%s5341] ss:$2 sm:$0xf] %vm5223, %v5154
    %s5343 = scalar_lea.vmem [#allocation2], 480
    %5344 = vst.msk [vmem:[%s5343] ss:$2 sm:$0xf] %vm5223, %v5137
    %s5345 = scalar_lea.vmem [#allocation2], 488
    %5346 = vst.msk [vmem:[%s5345] ss:$2 sm:$0xf] %vm5223, %v5151
    %s5347 = scalar_lea.vmem [#allocation2], 496
    %5348 = vst.msk [vmem:[%s5347] ss:$2 sm:$0xf] %vm5223, %v5153
    %s5349 = scalar_lea.vmem [#allocation2], 504
    %5350 = vst.msk [vmem:[%s5349] ss:$2 sm:$0xf] %vm5223, %v5155
    %v5352 = vlaneseq
    %v5353 = vshrl.u32 %v5352, 7
    %v5354 = vsub.s32 0, %v5353
    %v5355 = vrot.slane %v4430, %v5354
    %v5356 = vlaneseq
    %v5357 = vshrl.u32 %v5356, 7
    %v5358 = vsub.s32 1, %v5357
    %v5359 = vrot.slane %v4430, %v5358
    %v5360 = vlaneseq
    %v5361 = vshrl.u32 %v5360, 7
    %v5362 = vsub.s32 2, %v5361
    %v5363 = vrot.slane %v4430, %v5362
    %v5364 = vlaneseq
    %v5365 = vshrl.u32 %v5364, 7
    %v5366 = vsub.s32 3, %v5365
    %v5367 = vrot.slane %v4430, %v5366
    %v5372 = vmul.f32 %v4437, %v5355
    %v5373 = vmul.f32 %v4437, %v5359
    %v5374 = vmul.f32 %v4437, %v5363
    %v5375 = vmul.f32 %v4437, %v5367
    %v5376 = vmul.f32 %v4442, %v5355
    %v5377 = vmul.f32 %v4442, %v5359
    %v5378 = vmul.f32 %v4442, %v5363
    %v5379 = vmul.f32 %v4442, %v5367
    %v5380 = vmul.f32 %v4447, %v5355
    %v5381 = vmul.f32 %v4447, %v5359
    %v5382 = vmul.f32 %v4447, %v5363
    %v5383 = vmul.f32 %v4447, %v5367
    %v5384 = vmul.f32 %v4452, %v5355
    %v5385 = vmul.f32 %v4452, %v5359
    %v5386 = vmul.f32 %v4452, %v5363
    %v5387 = vmul.f32 %v4452, %v5367
    %v5388 = vmul.f32 %v4457, %v5355
    %v5389 = vmul.f32 %v4457, %v5359
    %v5390 = vmul.f32 %v4457, %v5363
    %v5391 = vmul.f32 %v4457, %v5367
    %v5392 = vmul.f32 %v4462, %v5355
    %v5393 = vmul.f32 %v4462, %v5359
    %v5394 = vmul.f32 %v4462, %v5363
    %v5395 = vmul.f32 %v4462, %v5367
    %v5396 = vmul.f32 %v4467, %v5355
    %v5397 = vmul.f32 %v4467, %v5359
    %v5398 = vmul.f32 %v4467, %v5363
    %v5399 = vmul.f32 %v4467, %v5367
    %v5400 = vmul.f32 %v4472, %v5355
    %v5401 = vmul.f32 %v4472, %v5359
    %v5402 = vmul.f32 %v4472, %v5363
    %v5403 = vmul.f32 %v4472, %v5367
    %v5405 = vlaneseq
    %v5406 = vshrl.u32 %v5405, 7
    %v5407 = vsub.s32 0, %v5406
    %v5408 = vrot.slane %v4433, %v5407
    %v5409 = vlaneseq
    %v5410 = vshrl.u32 %v5409, 7
    %v5411 = vsub.s32 1, %v5410
    %v5412 = vrot.slane %v4433, %v5411
    %v5413 = vlaneseq
    %v5414 = vshrl.u32 %v5413, 7
    %v5415 = vsub.s32 2, %v5414
    %v5416 = vrot.slane %v4433, %v5415
    %v5417 = vlaneseq
    %v5418 = vshrl.u32 %v5417, 7
    %v5419 = vsub.s32 3, %v5418
    %v5420 = vrot.slane %v4433, %v5419
    %v5425 = vadd.f32 %v5372, %v5408
    %v5426 = vadd.f32 %v5373, %v5412
    %v5427 = vadd.f32 %v5374, %v5416
    %v5428 = vadd.f32 %v5375, %v5420
    %v5429 = vadd.f32 %v5376, %v5408
    %v5430 = vadd.f32 %v5377, %v5412
    %v5431 = vadd.f32 %v5378, %v5416
    %v5432 = vadd.f32 %v5379, %v5420
    %v5433 = vadd.f32 %v5380, %v5408
    %v5434 = vadd.f32 %v5381, %v5412
    %v5435 = vadd.f32 %v5382, %v5416
    %v5436 = vadd.f32 %v5383, %v5420
    %v5437 = vadd.f32 %v5384, %v5408
    %v5438 = vadd.f32 %v5385, %v5412
    %v5439 = vadd.f32 %v5386, %v5416
    %v5440 = vadd.f32 %v5387, %v5420
    %v5441 = vadd.f32 %v5388, %v5408
    %v5442 = vadd.f32 %v5389, %v5412
    %v5443 = vadd.f32 %v5390, %v5416
    %v5444 = vadd.f32 %v5391, %v5420
    %v5445 = vadd.f32 %v5392, %v5408
    %v5446 = vadd.f32 %v5393, %v5412
    %v5447 = vadd.f32 %v5394, %v5416
    %v5448 = vadd.f32 %v5395, %v5420
    %v5449 = vadd.f32 %v5396, %v5408
    %v5450 = vadd.f32 %v5397, %v5412
    %v5451 = vadd.f32 %v5398, %v5416
    %v5452 = vadd.f32 %v5399, %v5420
    %v5453 = vadd.f32 %v5400, %v5408
    %v5454 = vadd.f32 %v5401, %v5412
    %v5455 = vadd.f32 %v5402, %v5416
    %v5456 = vadd.f32 %v5403, %v5420
    %v5489 = vcombine.low %v5425, %v5426
    %v5490 = vcombine.high %v5425, %v5426
    %v5491 = vcombine.low %v5427, %v5428
    %v5492 = vcombine.high %v5427, %v5428
    %v5494 = vunpack.c.l.s4 1966171168
    %v5495 = vunpack.c.0.s8 %v5494
    %v5496 = vlaneseq
    %v5497 = vshrl.u32 %v5496, 7
    %v5498 = vsub.s32 %v5495, %v5497
    %v5499 = vrot.slane %v5489, %v5498
    %v5501 = vunpack.c.l.s4 1966171168
    %v5502 = vunpack.c.0.s8 %v5501
    %v5503 = vlaneseq
    %v5504 = vshrl.u32 %v5503, 7
    %v5505 = vsub.s32 %v5502, %v5504
    %v5506 = vrot.slane %v5490, %v5505
    %v5508 = vunpack.c.l.s4 1966171168
    %v5509 = vunpack.c.0.s8 %v5508
    %v5510 = vlaneseq
    %v5511 = vshrl.u32 %v5510, 7
    %v5512 = vsub.s32 %v5509, %v5511
    %v5513 = vrot.slane %v5491, %v5512
    %v5515 = vunpack.c.l.s4 1966171168
    %v5516 = vunpack.c.0.s8 %v5515
    %v5517 = vlaneseq
    %v5518 = vshrl.u32 %v5517, 7
    %v5519 = vsub.s32 %v5516, %v5518
    %v5520 = vrot.slane %v5492, %v5519
    %v5521 = vcombine.low %v5499, %v5513
    %v5522 = vcombine.high %v5499, %v5513
    %v5523 = vcombine.low %v5506, %v5520
    %v5524 = vcombine.high %v5506, %v5520
    %v5526 = vunpack.c.l.s4 1966171168
    %v5527 = vunpack.c.0.s8 %v5526
    %v5528 = vlaneseq
    %v5529 = vshrl.u32 %v5528, 7
    %v5530 = vsub.s32 %v5527, %v5529
    %v5531 = vrot.slane %v5521, %v5530
    %v5533 = vunpack.c.l.s4 1966171168
    %v5534 = vunpack.c.0.s8 %v5533
    %v5535 = vlaneseq
    %v5536 = vshrl.u32 %v5535, 7
    %v5537 = vsub.s32 %v5534, %v5536
    %v5538 = vrot.slane %v5523, %v5537
    %v5540 = vunpack.c.l.s4 1966171168
    %v5541 = vunpack.c.0.s8 %v5540
    %v5542 = vlaneseq
    %v5543 = vshrl.u32 %v5542, 7
    %v5544 = vsub.s32 %v5541, %v5543
    %v5545 = vrot.slane %v5522, %v5544
    %v5547 = vunpack.c.l.s4 1966171168
    %v5548 = vunpack.c.0.s8 %v5547
    %v5549 = vlaneseq
    %v5550 = vshrl.u32 %v5549, 7
    %v5551 = vsub.s32 %v5548, %v5550
    %v5552 = vrot.slane %v5524, %v5551
    %v5553 = vcombine.high %v5531, %v5531
    %v5554 = vcombine.high %v5538, %v5538
    %v5555 = vcombine.high %v5545, %v5545
    %v5556 = vcombine.high %v5552, %v5552
    %v5557 = vcombine.low %v5429, %v5430
    %v5558 = vcombine.high %v5429, %v5430
    %v5559 = vcombine.low %v5431, %v5432
    %v5560 = vcombine.high %v5431, %v5432
    %v5562 = vunpack.c.l.s4 1966171168
    %v5563 = vunpack.c.0.s8 %v5562
    %v5564 = vlaneseq
    %v5565 = vshrl.u32 %v5564, 7
    %v5566 = vsub.s32 %v5563, %v5565
    %v5567 = vrot.slane %v5557, %v5566
    %v5569 = vunpack.c.l.s4 1966171168
    %v5570 = vunpack.c.0.s8 %v5569
    %v5571 = vlaneseq
    %v5572 = vshrl.u32 %v5571, 7
    %v5573 = vsub.s32 %v5570, %v5572
    %v5574 = vrot.slane %v5558, %v5573
    %v5576 = vunpack.c.l.s4 1966171168
    %v5577 = vunpack.c.0.s8 %v5576
    %v5578 = vlaneseq
    %v5579 = vshrl.u32 %v5578, 7
    %v5580 = vsub.s32 %v5577, %v5579
    %v5581 = vrot.slane %v5559, %v5580
    %v5583 = vunpack.c.l.s4 1966171168
    %v5584 = vunpack.c.0.s8 %v5583
    %v5585 = vlaneseq
    %v5586 = vshrl.u32 %v5585, 7
    %v5587 = vsub.s32 %v5584, %v5586
    %v5588 = vrot.slane %v5560, %v5587
    %v5589 = vcombine.low %v5567, %v5581
    %v5590 = vcombine.high %v5567, %v5581
    %v5591 = vcombine.low %v5574, %v5588
    %v5592 = vcombine.high %v5574, %v5588
    %v5594 = vunpack.c.l.s4 1966171168
    %v5595 = vunpack.c.0.s8 %v5594
    %v5596 = vlaneseq
    %v5597 = vshrl.u32 %v5596, 7
    %v5598 = vsub.s32 %v5595, %v5597
    %v5599 = vrot.slane %v5589, %v5598
    %v5601 = vunpack.c.l.s4 1966171168
    %v5602 = vunpack.c.0.s8 %v5601
    %v5603 = vlaneseq
    %v5604 = vshrl.u32 %v5603, 7
    %v5605 = vsub.s32 %v5602, %v5604
    %v5606 = vrot.slane %v5591, %v5605
    %v5608 = vunpack.c.l.s4 1966171168
    %v5609 = vunpack.c.0.s8 %v5608
    %v5610 = vlaneseq
    %v5611 = vshrl.u32 %v5610, 7
    %v5612 = vsub.s32 %v5609, %v5611
    %v5613 = vrot.slane %v5590, %v5612
    %v5615 = vunpack.c.l.s4 1966171168
    %v5616 = vunpack.c.0.s8 %v5615
    %v5617 = vlaneseq
    %v5618 = vshrl.u32 %v5617, 7
    %v5619 = vsub.s32 %v5616, %v5618
    %v5620 = vrot.slane %v5592, %v5619
    %v5621 = vcombine.high %v5599, %v5599
    %v5622 = vcombine.high %v5606, %v5606
    %v5623 = vcombine.high %v5613, %v5613
    %v5624 = vcombine.high %v5620, %v5620
    %v5625 = vcombine.low %v5433, %v5434
    %v5626 = vcombine.high %v5433, %v5434
    %v5627 = vcombine.low %v5435, %v5436
    %v5628 = vcombine.high %v5435, %v5436
    %v5630 = vunpack.c.l.s4 1966171168
    %v5631 = vunpack.c.0.s8 %v5630
    %v5632 = vlaneseq
    %v5633 = vshrl.u32 %v5632, 7
    %v5634 = vsub.s32 %v5631, %v5633
    %v5635 = vrot.slane %v5625, %v5634
    %v5637 = vunpack.c.l.s4 1966171168
    %v5638 = vunpack.c.0.s8 %v5637
    %v5639 = vlaneseq
    %v5640 = vshrl.u32 %v5639, 7
    %v5641 = vsub.s32 %v5638, %v5640
    %v5642 = vrot.slane %v5626, %v5641
    %v5644 = vunpack.c.l.s4 1966171168
    %v5645 = vunpack.c.0.s8 %v5644
    %v5646 = vlaneseq
    %v5647 = vshrl.u32 %v5646, 7
    %v5648 = vsub.s32 %v5645, %v5647
    %v5649 = vrot.slane %v5627, %v5648
    %v5651 = vunpack.c.l.s4 1966171168
    %v5652 = vunpack.c.0.s8 %v5651
    %v5653 = vlaneseq
    %v5654 = vshrl.u32 %v5653, 7
    %v5655 = vsub.s32 %v5652, %v5654
    %v5656 = vrot.slane %v5628, %v5655
    %v5657 = vcombine.low %v5635, %v5649
    %v5658 = vcombine.high %v5635, %v5649
    %v5659 = vcombine.low %v5642, %v5656
    %v5660 = vcombine.high %v5642, %v5656
    %v5662 = vunpack.c.l.s4 1966171168
    %v5663 = vunpack.c.0.s8 %v5662
    %v5664 = vlaneseq
    %v5665 = vshrl.u32 %v5664, 7
    %v5666 = vsub.s32 %v5663, %v5665
    %v5667 = vrot.slane %v5657, %v5666
    %v5669 = vunpack.c.l.s4 1966171168
    %v5670 = vunpack.c.0.s8 %v5669
    %v5671 = vlaneseq
    %v5672 = vshrl.u32 %v5671, 7
    %v5673 = vsub.s32 %v5670, %v5672
    %v5674 = vrot.slane %v5659, %v5673
    %v5676 = vunpack.c.l.s4 1966171168
    %v5677 = vunpack.c.0.s8 %v5676
    %v5678 = vlaneseq
    %v5679 = vshrl.u32 %v5678, 7
    %v5680 = vsub.s32 %v5677, %v5679
    %v5681 = vrot.slane %v5658, %v5680
    %v5683 = vunpack.c.l.s4 1966171168
    %v5684 = vunpack.c.0.s8 %v5683
    %v5685 = vlaneseq
    %v5686 = vshrl.u32 %v5685, 7
    %v5687 = vsub.s32 %v5684, %v5686
    %v5688 = vrot.slane %v5660, %v5687
    %v5689 = vcombine.high %v5667, %v5667
    %v5690 = vcombine.high %v5674, %v5674
    %v5691 = vcombine.high %v5681, %v5681
    %v5692 = vcombine.high %v5688, %v5688
    %v5693 = vcombine.low %v5437, %v5438
    %v5694 = vcombine.high %v5437, %v5438
    %v5695 = vcombine.low %v5439, %v5440
    %v5696 = vcombine.high %v5439, %v5440
    %v5698 = vunpack.c.l.s4 1966171168
    %v5699 = vunpack.c.0.s8 %v5698
    %v5700 = vlaneseq
    %v5701 = vshrl.u32 %v5700, 7
    %v5702 = vsub.s32 %v5699, %v5701
    %v5703 = vrot.slane %v5693, %v5702
    %v5705 = vunpack.c.l.s4 1966171168
    %v5706 = vunpack.c.0.s8 %v5705
    %v5707 = vlaneseq
    %v5708 = vshrl.u32 %v5707, 7
    %v5709 = vsub.s32 %v5706, %v5708
    %v5710 = vrot.slane %v5694, %v5709
    %v5712 = vunpack.c.l.s4 1966171168
    %v5713 = vunpack.c.0.s8 %v5712
    %v5714 = vlaneseq
    %v5715 = vshrl.u32 %v5714, 7
    %v5716 = vsub.s32 %v5713, %v5715
    %v5717 = vrot.slane %v5695, %v5716
    %v5719 = vunpack.c.l.s4 1966171168
    %v5720 = vunpack.c.0.s8 %v5719
    %v5721 = vlaneseq
    %v5722 = vshrl.u32 %v5721, 7
    %v5723 = vsub.s32 %v5720, %v5722
    %v5724 = vrot.slane %v5696, %v5723
    %v5725 = vcombine.low %v5703, %v5717
    %v5726 = vcombine.high %v5703, %v5717
    %v5727 = vcombine.low %v5710, %v5724
    %v5728 = vcombine.high %v5710, %v5724
    %v5730 = vunpack.c.l.s4 1966171168
    %v5731 = vunpack.c.0.s8 %v5730
    %v5732 = vlaneseq
    %v5733 = vshrl.u32 %v5732, 7
    %v5734 = vsub.s32 %v5731, %v5733
    %v5735 = vrot.slane %v5725, %v5734
    %v5737 = vunpack.c.l.s4 1966171168
    %v5738 = vunpack.c.0.s8 %v5737
    %v5739 = vlaneseq
    %v5740 = vshrl.u32 %v5739, 7
    %v5741 = vsub.s32 %v5738, %v5740
    %v5742 = vrot.slane %v5727, %v5741
    %v5744 = vunpack.c.l.s4 1966171168
    %v5745 = vunpack.c.0.s8 %v5744
    %v5746 = vlaneseq
    %v5747 = vshrl.u32 %v5746, 7
    %v5748 = vsub.s32 %v5745, %v5747
    %v5749 = vrot.slane %v5726, %v5748
    %v5751 = vunpack.c.l.s4 1966171168
    %v5752 = vunpack.c.0.s8 %v5751
    %v5753 = vlaneseq
    %v5754 = vshrl.u32 %v5753, 7
    %v5755 = vsub.s32 %v5752, %v5754
    %v5756 = vrot.slane %v5728, %v5755
    %v5757 = vcombine.high %v5735, %v5735
    %v5758 = vcombine.high %v5742, %v5742
    %v5759 = vcombine.high %v5749, %v5749
    %v5760 = vcombine.high %v5756, %v5756
    %v5761 = vcombine.low %v5441, %v5442
    %v5762 = vcombine.high %v5441, %v5442
    %v5763 = vcombine.low %v5443, %v5444
    %v5764 = vcombine.high %v5443, %v5444
    %v5766 = vunpack.c.l.s4 1966171168
    %v5767 = vunpack.c.0.s8 %v5766
    %v5768 = vlaneseq
    %v5769 = vshrl.u32 %v5768, 7
    %v5770 = vsub.s32 %v5767, %v5769
    %v5771 = vrot.slane %v5761, %v5770
    %v5773 = vunpack.c.l.s4 1966171168
    %v5774 = vunpack.c.0.s8 %v5773
    %v5775 = vlaneseq
    %v5776 = vshrl.u32 %v5775, 7
    %v5777 = vsub.s32 %v5774, %v5776
    %v5778 = vrot.slane %v5762, %v5777
    %v5780 = vunpack.c.l.s4 1966171168
    %v5781 = vunpack.c.0.s8 %v5780
    %v5782 = vlaneseq
    %v5783 = vshrl.u32 %v5782, 7
    %v5784 = vsub.s32 %v5781, %v5783
    %v5785 = vrot.slane %v5763, %v5784
    %v5787 = vunpack.c.l.s4 1966171168
    %v5788 = vunpack.c.0.s8 %v5787
    %v5789 = vlaneseq
    %v5790 = vshrl.u32 %v5789, 7
    %v5791 = vsub.s32 %v5788, %v5790
    %v5792 = vrot.slane %v5764, %v5791
    %v5793 = vcombine.low %v5771, %v5785
    %v5794 = vcombine.high %v5771, %v5785
    %v5795 = vcombine.low %v5778, %v5792
    %v5796 = vcombine.high %v5778, %v5792
    %v5798 = vunpack.c.l.s4 1966171168
    %v5799 = vunpack.c.0.s8 %v5798
    %v5800 = vlaneseq
    %v5801 = vshrl.u32 %v5800, 7
    %v5802 = vsub.s32 %v5799, %v5801
    %v5803 = vrot.slane %v5793, %v5802
    %v5805 = vunpack.c.l.s4 1966171168
    %v5806 = vunpack.c.0.s8 %v5805
    %v5807 = vlaneseq
    %v5808 = vshrl.u32 %v5807, 7
    %v5809 = vsub.s32 %v5806, %v5808
    %v5810 = vrot.slane %v5795, %v5809
    %v5812 = vunpack.c.l.s4 1966171168
    %v5813 = vunpack.c.0.s8 %v5812
    %v5814 = vlaneseq
    %v5815 = vshrl.u32 %v5814, 7
    %v5816 = vsub.s32 %v5813, %v5815
    %v5817 = vrot.slane %v5794, %v5816
    %v5819 = vunpack.c.l.s4 1966171168
    %v5820 = vunpack.c.0.s8 %v5819
    %v5821 = vlaneseq
    %v5822 = vshrl.u32 %v5821, 7
    %v5823 = vsub.s32 %v5820, %v5822
    %v5824 = vrot.slane %v5796, %v5823
    %v5825 = vcombine.high %v5803, %v5803
    %v5826 = vcombine.high %v5810, %v5810
    %v5827 = vcombine.high %v5817, %v5817
    %v5828 = vcombine.high %v5824, %v5824
    %v5829 = vcombine.low %v5445, %v5446
    %v5830 = vcombine.high %v5445, %v5446
    %v5831 = vcombine.low %v5447, %v5448
    %v5832 = vcombine.high %v5447, %v5448
    %v5834 = vunpack.c.l.s4 1966171168
    %v5835 = vunpack.c.0.s8 %v5834
    %v5836 = vlaneseq
    %v5837 = vshrl.u32 %v5836, 7
    %v5838 = vsub.s32 %v5835, %v5837
    %v5839 = vrot.slane %v5829, %v5838
    %v5841 = vunpack.c.l.s4 1966171168
    %v5842 = vunpack.c.0.s8 %v5841
    %v5843 = vlaneseq
    %v5844 = vshrl.u32 %v5843, 7
    %v5845 = vsub.s32 %v5842, %v5844
    %v5846 = vrot.slane %v5830, %v5845
    %v5848 = vunpack.c.l.s4 1966171168
    %v5849 = vunpack.c.0.s8 %v5848
    %v5850 = vlaneseq
    %v5851 = vshrl.u32 %v5850, 7
    %v5852 = vsub.s32 %v5849, %v5851
    %v5853 = vrot.slane %v5831, %v5852
    %v5855 = vunpack.c.l.s4 1966171168
    %v5856 = vunpack.c.0.s8 %v5855
    %v5857 = vlaneseq
    %v5858 = vshrl.u32 %v5857, 7
    %v5859 = vsub.s32 %v5856, %v5858
    %v5860 = vrot.slane %v5832, %v5859
    %v5861 = vcombine.low %v5839, %v5853
    %v5862 = vcombine.high %v5839, %v5853
    %v5863 = vcombine.low %v5846, %v5860
    %v5864 = vcombine.high %v5846, %v5860
    %v5866 = vunpack.c.l.s4 1966171168
    %v5867 = vunpack.c.0.s8 %v5866
    %v5868 = vlaneseq
    %v5869 = vshrl.u32 %v5868, 7
    %v5870 = vsub.s32 %v5867, %v5869
    %v5871 = vrot.slane %v5861, %v5870
    %v5873 = vunpack.c.l.s4 1966171168
    %v5874 = vunpack.c.0.s8 %v5873
    %v5875 = vlaneseq
    %v5876 = vshrl.u32 %v5875, 7
    %v5877 = vsub.s32 %v5874, %v5876
    %v5878 = vrot.slane %v5863, %v5877
    %v5880 = vunpack.c.l.s4 1966171168
    %v5881 = vunpack.c.0.s8 %v5880
    %v5882 = vlaneseq
    %v5883 = vshrl.u32 %v5882, 7
    %v5884 = vsub.s32 %v5881, %v5883
    %v5885 = vrot.slane %v5862, %v5884
    %v5887 = vunpack.c.l.s4 1966171168
    %v5888 = vunpack.c.0.s8 %v5887
    %v5889 = vlaneseq
    %v5890 = vshrl.u32 %v5889, 7
    %v5891 = vsub.s32 %v5888, %v5890
    %v5892 = vrot.slane %v5864, %v5891
    %v5893 = vcombine.high %v5871, %v5871
    %v5894 = vcombine.high %v5878, %v5878
    %v5895 = vcombine.high %v5885, %v5885
    %v5896 = vcombine.high %v5892, %v5892
    %v5897 = vcombine.low %v5449, %v5450
    %v5898 = vcombine.high %v5449, %v5450
    %v5899 = vcombine.low %v5451, %v5452
    %v5900 = vcombine.high %v5451, %v5452
    %v5902 = vunpack.c.l.s4 1966171168
    %v5903 = vunpack.c.0.s8 %v5902
    %v5904 = vlaneseq
    %v5905 = vshrl.u32 %v5904, 7
    %v5906 = vsub.s32 %v5903, %v5905
    %v5907 = vrot.slane %v5897, %v5906
    %v5909 = vunpack.c.l.s4 1966171168
    %v5910 = vunpack.c.0.s8 %v5909
    %v5911 = vlaneseq
    %v5912 = vshrl.u32 %v5911, 7
    %v5913 = vsub.s32 %v5910, %v5912
    %v5914 = vrot.slane %v5898, %v5913
    %v5916 = vunpack.c.l.s4 1966171168
    %v5917 = vunpack.c.0.s8 %v5916
    %v5918 = vlaneseq
    %v5919 = vshrl.u32 %v5918, 7
    %v5920 = vsub.s32 %v5917, %v5919
    %v5921 = vrot.slane %v5899, %v5920
    %v5923 = vunpack.c.l.s4 1966171168
    %v5924 = vunpack.c.0.s8 %v5923
    %v5925 = vlaneseq
    %v5926 = vshrl.u32 %v5925, 7
    %v5927 = vsub.s32 %v5924, %v5926
    %v5928 = vrot.slane %v5900, %v5927
    %v5929 = vcombine.low %v5907, %v5921
    %v5930 = vcombine.high %v5907, %v5921
    %v5931 = vcombine.low %v5914, %v5928
    %v5932 = vcombine.high %v5914, %v5928
    %v5934 = vunpack.c.l.s4 1966171168
    %v5935 = vunpack.c.0.s8 %v5934
    %v5936 = vlaneseq
    %v5937 = vshrl.u32 %v5936, 7
    %v5938 = vsub.s32 %v5935, %v5937
    %v5939 = vrot.slane %v5929, %v5938
    %v5941 = vunpack.c.l.s4 1966171168
    %v5942 = vunpack.c.0.s8 %v5941
    %v5943 = vlaneseq
    %v5944 = vshrl.u32 %v5943, 7
    %v5945 = vsub.s32 %v5942, %v5944
    %v5946 = vrot.slane %v5931, %v5945
    %v5948 = vunpack.c.l.s4 1966171168
    %v5949 = vunpack.c.0.s8 %v5948
    %v5950 = vlaneseq
    %v5951 = vshrl.u32 %v5950, 7
    %v5952 = vsub.s32 %v5949, %v5951
    %v5953 = vrot.slane %v5930, %v5952
    %v5955 = vunpack.c.l.s4 1966171168
    %v5956 = vunpack.c.0.s8 %v5955
    %v5957 = vlaneseq
    %v5958 = vshrl.u32 %v5957, 7
    %v5959 = vsub.s32 %v5956, %v5958
    %v5960 = vrot.slane %v5932, %v5959
    %v5961 = vcombine.high %v5939, %v5939
    %v5962 = vcombine.high %v5946, %v5946
    %v5963 = vcombine.high %v5953, %v5953
    %v5964 = vcombine.high %v5960, %v5960
    %v5965 = vcombine.low %v5453, %v5454
    %v5966 = vcombine.high %v5453, %v5454
    %v5967 = vcombine.low %v5455, %v5456
    %v5968 = vcombine.high %v5455, %v5456
    %v5970 = vunpack.c.l.s4 1966171168
    %v5971 = vunpack.c.0.s8 %v5970
    %v5972 = vlaneseq
    %v5973 = vshrl.u32 %v5972, 7
    %v5974 = vsub.s32 %v5971, %v5973
    %v5975 = vrot.slane %v5965, %v5974
    %v5977 = vunpack.c.l.s4 1966171168
    %v5978 = vunpack.c.0.s8 %v5977
    %v5979 = vlaneseq
    %v5980 = vshrl.u32 %v5979, 7
    %v5981 = vsub.s32 %v5978, %v5980
    %v5982 = vrot.slane %v5966, %v5981
    %v5984 = vunpack.c.l.s4 1966171168
    %v5985 = vunpack.c.0.s8 %v5984
    %v5986 = vlaneseq
    %v5987 = vshrl.u32 %v5986, 7
    %v5988 = vsub.s32 %v5985, %v5987
    %v5989 = vrot.slane %v5967, %v5988
    %v5991 = vunpack.c.l.s4 1966171168
    %v5992 = vunpack.c.0.s8 %v5991
    %v5993 = vlaneseq
    %v5994 = vshrl.u32 %v5993, 7
    %v5995 = vsub.s32 %v5992, %v5994
    %v5996 = vrot.slane %v5968, %v5995
    %v5997 = vcombine.low %v5975, %v5989
    %v5998 = vcombine.high %v5975, %v5989
    %v5999 = vcombine.low %v5982, %v5996
    %v6000 = vcombine.high %v5982, %v5996
    %v6002 = vunpack.c.l.s4 1966171168
    %v6003 = vunpack.c.0.s8 %v6002
    %v6004 = vlaneseq
    %v6005 = vshrl.u32 %v6004, 7
    %v6006 = vsub.s32 %v6003, %v6005
    %v6007 = vrot.slane %v5997, %v6006
    %v6009 = vunpack.c.l.s4 1966171168
    %v6010 = vunpack.c.0.s8 %v6009
    %v6011 = vlaneseq
    %v6012 = vshrl.u32 %v6011, 7
    %v6013 = vsub.s32 %v6010, %v6012
    %v6014 = vrot.slane %v5999, %v6013
    %v6016 = vunpack.c.l.s4 1966171168
    %v6017 = vunpack.c.0.s8 %v6016
    %v6018 = vlaneseq
    %v6019 = vshrl.u32 %v6018, 7
    %v6020 = vsub.s32 %v6017, %v6019
    %v6021 = vrot.slane %v5998, %v6020
    %v6023 = vunpack.c.l.s4 1966171168
    %v6024 = vunpack.c.0.s8 %v6023
    %v6025 = vlaneseq
    %v6026 = vshrl.u32 %v6025, 7
    %v6027 = vsub.s32 %v6024, %v6026
    %v6028 = vrot.slane %v6000, %v6027
    %v6029 = vcombine.high %v6007, %v6007
    %v6030 = vcombine.high %v6014, %v6014
    %v6031 = vcombine.high %v6021, %v6021
    %v6032 = vcombine.high %v6028, %v6028
    %6097 = vst.msk [vmem:[#allocation3] ss:$2 sm:$0xf] %vm5223, %v5531
    %s6098 = scalar_lea.vmem [#allocation3], 8
    %6099 = vst.msk [vmem:[%s6098] ss:$2 sm:$0xf] %vm5223, %v5545
    %s6100 = scalar_lea.vmem [#allocation3], 16
    %6101 = vst.msk [vmem:[%s6100] ss:$2 sm:$0xf] %vm5223, %v5553
    %s6102 = scalar_lea.vmem [#allocation3], 24
    %6103 = vst.msk [vmem:[%s6102] ss:$2 sm:$0xf] %vm5223, %v5555
    %s6104 = scalar_lea.vmem [#allocation3], 32
    %6105 = vst.msk [vmem:[%s6104] ss:$2 sm:$0xf] %vm5223, %v5538
    %s6106 = scalar_lea.vmem [#allocation3], 40
    %6107 = vst.msk [vmem:[%s6106] ss:$2 sm:$0xf] %vm5223, %v5552
    %s6108 = scalar_lea.vmem [#allocation3], 48
    %6109 = vst.msk [vmem:[%s6108] ss:$2 sm:$0xf] %vm5223, %v5554
    %s6110 = scalar_lea.vmem [#allocation3], 56
    %6111 = vst.msk [vmem:[%s6110] ss:$2 sm:$0xf] %vm5223, %v5556
    %s6112 = scalar_lea.vmem [#allocation3], 64
    %6113 = vst.msk [vmem:[%s6112] ss:$2 sm:$0xf] %vm5223, %v5599
    %s6114 = scalar_lea.vmem [#allocation3], 72
    %6115 = vst.msk [vmem:[%s6114] ss:$2 sm:$0xf] %vm5223, %v5613
    %s6116 = scalar_lea.vmem [#allocation3], 80
    %6117 = vst.msk [vmem:[%s6116] ss:$2 sm:$0xf] %vm5223, %v5621
    %s6118 = scalar_lea.vmem [#allocation3], 88
    %6119 = vst.msk [vmem:[%s6118] ss:$2 sm:$0xf] %vm5223, %v5623
    %s6120 = scalar_lea.vmem [#allocation3], 96
    %6121 = vst.msk [vmem:[%s6120] ss:$2 sm:$0xf] %vm5223, %v5606
    %s6122 = scalar_lea.vmem [#allocation3], 104
    %6123 = vst.msk [vmem:[%s6122] ss:$2 sm:$0xf] %vm5223, %v5620
    %s6124 = scalar_lea.vmem [#allocation3], 112
    %6125 = vst.msk [vmem:[%s6124] ss:$2 sm:$0xf] %vm5223, %v5622
    %s6126 = scalar_lea.vmem [#allocation3], 120
    %6127 = vst.msk [vmem:[%s6126] ss:$2 sm:$0xf] %vm5223, %v5624
    %s6128 = scalar_lea.vmem [#allocation3], 128
    %6129 = vst.msk [vmem:[%s6128] ss:$2 sm:$0xf] %vm5223, %v5667
    %s6130 = scalar_lea.vmem [#allocation3], 136
    %6131 = vst.msk [vmem:[%s6130] ss:$2 sm:$0xf] %vm5223, %v5681
    %s6132 = scalar_lea.vmem [#allocation3], 144
    %6133 = vst.msk [vmem:[%s6132] ss:$2 sm:$0xf] %vm5223, %v5689
    %s6134 = scalar_lea.vmem [#allocation3], 152
    %6135 = vst.msk [vmem:[%s6134] ss:$2 sm:$0xf] %vm5223, %v5691
    %s6136 = scalar_lea.vmem [#allocation3], 160
    %6137 = vst.msk [vmem:[%s6136] ss:$2 sm:$0xf] %vm5223, %v5674
    %s6138 = scalar_lea.vmem [#allocation3], 168
    %6139 = vst.msk [vmem:[%s6138] ss:$2 sm:$0xf] %vm5223, %v5688
    %s6140 = scalar_lea.vmem [#allocation3], 176
    %6141 = vst.msk [vmem:[%s6140] ss:$2 sm:$0xf] %vm5223, %v5690
    %s6142 = scalar_lea.vmem [#allocation3], 184
    %6143 = vst.msk [vmem:[%s6142] ss:$2 sm:$0xf] %vm5223, %v5692
    %s6144 = scalar_lea.vmem [#allocation3], 192
    %6145 = vst.msk [vmem:[%s6144] ss:$2 sm:$0xf] %vm5223, %v5735
    %s6146 = scalar_lea.vmem [#allocation3], 200
    %6147 = vst.msk [vmem:[%s6146] ss:$2 sm:$0xf] %vm5223, %v5749
    %s6148 = scalar_lea.vmem [#allocation3], 208
    %6149 = vst.msk [vmem:[%s6148] ss:$2 sm:$0xf] %vm5223, %v5757
    %s6150 = scalar_lea.vmem [#allocation3], 216
    %6151 = vst.msk [vmem:[%s6150] ss:$2 sm:$0xf] %vm5223, %v5759
    %s6152 = scalar_lea.vmem [#allocation3], 224
    %6153 = vst.msk [vmem:[%s6152] ss:$2 sm:$0xf] %vm5223, %v5742
    %s6154 = scalar_lea.vmem [#allocation3], 232
    %6155 = vst.msk [vmem:[%s6154] ss:$2 sm:$0xf] %vm5223, %v5756
    %s6156 = scalar_lea.vmem [#allocation3], 240
    %6157 = vst.msk [vmem:[%s6156] ss:$2 sm:$0xf] %vm5223, %v5758
    %s6158 = scalar_lea.vmem [#allocation3], 248
    %6159 = vst.msk [vmem:[%s6158] ss:$2 sm:$0xf] %vm5223, %v5760
    %s6160 = scalar_lea.vmem [#allocation3], 256
    %6161 = vst.msk [vmem:[%s6160] ss:$2 sm:$0xf] %vm5223, %v5803
    %s6162 = scalar_lea.vmem [#allocation3], 264
    %6163 = vst.msk [vmem:[%s6162] ss:$2 sm:$0xf] %vm5223, %v5817
    %s6164 = scalar_lea.vmem [#allocation3], 272
    %6165 = vst.msk [vmem:[%s6164] ss:$2 sm:$0xf] %vm5223, %v5825
    %s6166 = scalar_lea.vmem [#allocation3], 280
    %6167 = vst.msk [vmem:[%s6166] ss:$2 sm:$0xf] %vm5223, %v5827
    %s6168 = scalar_lea.vmem [#allocation3], 288
    %6169 = vst.msk [vmem:[%s6168] ss:$2 sm:$0xf] %vm5223, %v5810
    %s6170 = scalar_lea.vmem [#allocation3], 296
    %6171 = vst.msk [vmem:[%s6170] ss:$2 sm:$0xf] %vm5223, %v5824
    %s6172 = scalar_lea.vmem [#allocation3], 304
    %6173 = vst.msk [vmem:[%s6172] ss:$2 sm:$0xf] %vm5223, %v5826
    %s6174 = scalar_lea.vmem [#allocation3], 312
    %6175 = vst.msk [vmem:[%s6174] ss:$2 sm:$0xf] %vm5223, %v5828
    %s6176 = scalar_lea.vmem [#allocation3], 320
    %6177 = vst.msk [vmem:[%s6176] ss:$2 sm:$0xf] %vm5223, %v5871
    %s6178 = scalar_lea.vmem [#allocation3], 328
    %6179 = vst.msk [vmem:[%s6178] ss:$2 sm:$0xf] %vm5223, %v5885
    %s6180 = scalar_lea.vmem [#allocation3], 336
    %6181 = vst.msk [vmem:[%s6180] ss:$2 sm:$0xf] %vm5223, %v5893
    %s6182 = scalar_lea.vmem [#allocation3], 344
    %6183 = vst.msk [vmem:[%s6182] ss:$2 sm:$0xf] %vm5223, %v5895
    %s6184 = scalar_lea.vmem [#allocation3], 352
    %6185 = vst.msk [vmem:[%s6184] ss:$2 sm:$0xf] %vm5223, %v5878
    %s6186 = scalar_lea.vmem [#allocation3], 360
    %6187 = vst.msk [vmem:[%s6186] ss:$2 sm:$0xf] %vm5223, %v5892
    %s6188 = scalar_lea.vmem [#allocation3], 368
    %6189 = vst.msk [vmem:[%s6188] ss:$2 sm:$0xf] %vm5223, %v5894
    %s6190 = scalar_lea.vmem [#allocation3], 376
    %6191 = vst.msk [vmem:[%s6190] ss:$2 sm:$0xf] %vm5223, %v5896
    %s6192 = scalar_lea.vmem [#allocation3], 384
    %6193 = vst.msk [vmem:[%s6192] ss:$2 sm:$0xf] %vm5223, %v5939
    %s6194 = scalar_lea.vmem [#allocation3], 392
    %6195 = vst.msk [vmem:[%s6194] ss:$2 sm:$0xf] %vm5223, %v5953
    %s6196 = scalar_lea.vmem [#allocation3], 400
    %6197 = vst.msk [vmem:[%s6196] ss:$2 sm:$0xf] %vm5223, %v5961
    %s6198 = scalar_lea.vmem [#allocation3], 408
    %6199 = vst.msk [vmem:[%s6198] ss:$2 sm:$0xf] %vm5223, %v5963
    %s6200 = scalar_lea.vmem [#allocation3], 416
    %6201 = vst.msk [vmem:[%s6200] ss:$2 sm:$0xf] %vm5223, %v5946
    %s6202 = scalar_lea.vmem [#allocation3], 424
    %6203 = vst.msk [vmem:[%s6202] ss:$2 sm:$0xf] %vm5223, %v5960
    %s6204 = scalar_lea.vmem [#allocation3], 432
    %6205 = vst.msk [vmem:[%s6204] ss:$2 sm:$0xf] %vm5223, %v5962
    %s6206 = scalar_lea.vmem [#allocation3], 440
    %6207 = vst.msk [vmem:[%s6206] ss:$2 sm:$0xf] %vm5223, %v5964
    %s6208 = scalar_lea.vmem [#allocation3], 448
    %6209 = vst.msk [vmem:[%s6208] ss:$2 sm:$0xf] %vm5223, %v6007
    %s6210 = scalar_lea.vmem [#allocation3], 456
    %6211 = vst.msk [vmem:[%s6210] ss:$2 sm:$0xf] %vm5223, %v6021
    %s6212 = scalar_lea.vmem [#allocation3], 464
    %6213 = vst.msk [vmem:[%s6212] ss:$2 sm:$0xf] %vm5223, %v6029
    %s6214 = scalar_lea.vmem [#allocation3], 472
    %6215 = vst.msk [vmem:[%s6214] ss:$2 sm:$0xf] %vm5223, %v6031
    %s6216 = scalar_lea.vmem [#allocation3], 480
    %6217 = vst.msk [vmem:[%s6216] ss:$2 sm:$0xf] %vm5223, %v6014
    %s6218 = scalar_lea.vmem [#allocation3], 488
    %6219 = vst.msk [vmem:[%s6218] ss:$2 sm:$0xf] %vm5223, %v6028
    %s6220 = scalar_lea.vmem [#allocation3], 496
    %6221 = vst.msk [vmem:[%s6220] ss:$2 sm:$0xf] %vm5223, %v6030
    %s6222 = scalar_lea.vmem [#allocation3], 504
    %6223 = vst.msk [vmem:[%s6222] ss:$2 sm:$0xf] %vm5223, %v6032
    %6224 = vset.pattern.permute.xlu0 1
    %6225 = vperm.xlu0 %6224, %v4420
    %v6226 = vpop.permute.xlu0 %6225
    %6228 = vset.pattern.permute.xlu0 1
    %6229 = vperm.xlu0 %6228, %v4421
    %v6230 = vpop.permute.xlu0 %6229
    %6232 = vset.pattern.permute.xlu0 1
    %6233 = vperm.xlu0 %6232, %v4422
    %v6234 = vpop.permute.xlu0 %6233
    %6236 = vset.pattern.permute.xlu0 1
    %6237 = vperm.xlu0 %6236, %v4423
    %v6238 = vpop.permute.xlu0 %6237
    %6240 = vset.pattern.permute.xlu0 1
    %6241 = vperm.xlu0 %6240, %v4424
    %v6242 = vpop.permute.xlu0 %6241
    %6244 = vset.pattern.permute.xlu0 1
    %6245 = vperm.xlu0 %6244, %v4425
    %v6246 = vpop.permute.xlu0 %6245
    %6248 = vset.pattern.permute.xlu0 1
    %6249 = vperm.xlu0 %6248, %v4426
    %v6250 = vpop.permute.xlu0 %6249
    %6252 = vset.pattern.permute.xlu0 1
    %6253 = vperm.xlu0 %6252, %v4427
    %v6254 = vpop.permute.xlu0 %6253
    %v6256 = vmul.f32 %v6226, %v4478
    %v6257 = vmul.f32 %v6226, %v4482
    %v6258 = vmul.f32 %v6226, %v4486
    %v6259 = vmul.f32 %v6226, %v4490
    %v6260 = vmul.f32 %v6230, %v4478
    %v6261 = vmul.f32 %v6230, %v4482
    %v6262 = vmul.f32 %v6230, %v4486
    %v6263 = vmul.f32 %v6230, %v4490
    %v6264 = vmul.f32 %v6234, %v4478
    %v6265 = vmul.f32 %v6234, %v4482
    %v6266 = vmul.f32 %v6234, %v4486
    %v6267 = vmul.f32 %v6234, %v4490
    %v6268 = vmul.f32 %v6238, %v4478
    %v6269 = vmul.f32 %v6238, %v4482
    %v6270 = vmul.f32 %v6238, %v4486
    %v6271 = vmul.f32 %v6238, %v4490
    %v6272 = vmul.f32 %v6242, %v4478
    %v6273 = vmul.f32 %v6242, %v4482
    %v6274 = vmul.f32 %v6242, %v4486
    %v6275 = vmul.f32 %v6242, %v4490
    %v6276 = vmul.f32 %v6246, %v4478
    %v6277 = vmul.f32 %v6246, %v4482
    %v6278 = vmul.f32 %v6246, %v4486
    %v6279 = vmul.f32 %v6246, %v4490
    %v6280 = vmul.f32 %v6250, %v4478
    %v6281 = vmul.f32 %v6250, %v4482
    %v6282 = vmul.f32 %v6250, %v4486
    %v6283 = vmul.f32 %v6250, %v4490
    %v6284 = vmul.f32 %v6254, %v4478
    %v6285 = vmul.f32 %v6254, %v4482
    %v6286 = vmul.f32 %v6254, %v4486
    %v6287 = vmul.f32 %v6254, %v4490
    %v6288 = vadd.f32 %v6256, %v4531
    %v6289 = vadd.f32 %v6257, %v4535
    %v6290 = vadd.f32 %v6258, %v4539
    %v6291 = vadd.f32 %v6259, %v4543
    %v6292 = vadd.f32 %v6260, %v4531
    %v6293 = vadd.f32 %v6261, %v4535
    %v6294 = vadd.f32 %v6262, %v4539
    %v6295 = vadd.f32 %v6263, %v4543
    %v6296 = vadd.f32 %v6264, %v4531
    %v6297 = vadd.f32 %v6265, %v4535
    %v6298 = vadd.f32 %v6266, %v4539
    %v6299 = vadd.f32 %v6267, %v4543
    %v6300 = vadd.f32 %v6268, %v4531
    %v6301 = vadd.f32 %v6269, %v4535
    %v6302 = vadd.f32 %v6270, %v4539
    %v6303 = vadd.f32 %v6271, %v4543
    %v6304 = vadd.f32 %v6272, %v4531
    %v6305 = vadd.f32 %v6273, %v4535
    %v6306 = vadd.f32 %v6274, %v4539
    %v6307 = vadd.f32 %v6275, %v4543
    %v6308 = vadd.f32 %v6276, %v4531
    %v6309 = vadd.f32 %v6277, %v4535
    %v6310 = vadd.f32 %v6278, %v4539
    %v6311 = vadd.f32 %v6279, %v4543
    %v6312 = vadd.f32 %v6280, %v4531
    %v6313 = vadd.f32 %v6281, %v4535
    %v6314 = vadd.f32 %v6282, %v4539
    %v6315 = vadd.f32 %v6283, %v4543
    %v6316 = vadd.f32 %v6284, %v4531
    %v6317 = vadd.f32 %v6285, %v4535
    %v6318 = vadd.f32 %v6286, %v4539
    %v6319 = vadd.f32 %v6287, %v4543
    %v6352 = vcombine.low %v6288, %v6289
    %v6353 = vcombine.high %v6288, %v6289
    %v6354 = vcombine.low %v6290, %v6291
    %v6355 = vcombine.high %v6290, %v6291
    %v6357 = vunpack.c.l.s4 1966171168
    %v6358 = vunpack.c.0.s8 %v6357
    %v6359 = vlaneseq
    %v6360 = vshrl.u32 %v6359, 7
    %v6361 = vsub.s32 %v6358, %v6360
    %v6362 = vrot.slane %v6352, %v6361
    %v6364 = vunpack.c.l.s4 1966171168
    %v6365 = vunpack.c.0.s8 %v6364
    %v6366 = vlaneseq
    %v6367 = vshrl.u32 %v6366, 7
    %v6368 = vsub.s32 %v6365, %v6367
    %v6369 = vrot.slane %v6353, %v6368
    %v6371 = vunpack.c.l.s4 1966171168
    %v6372 = vunpack.c.0.s8 %v6371
    %v6373 = vlaneseq
    %v6374 = vshrl.u32 %v6373, 7
    %v6375 = vsub.s32 %v6372, %v6374
    %v6376 = vrot.slane %v6354, %v6375
    %v6378 = vunpack.c.l.s4 1966171168
    %v6379 = vunpack.c.0.s8 %v6378
    %v6380 = vlaneseq
    %v6381 = vshrl.u32 %v6380, 7
    %v6382 = vsub.s32 %v6379, %v6381
    %v6383 = vrot.slane %v6355, %v6382
    %v6384 = vcombine.low %v6362, %v6376
    %v6385 = vcombine.high %v6362, %v6376
    %v6386 = vcombine.low %v6369, %v6383
    %v6387 = vcombine.high %v6369, %v6383
    %v6389 = vunpack.c.l.s4 1966171168
    %v6390 = vunpack.c.0.s8 %v6389
    %v6391 = vlaneseq
    %v6392 = vshrl.u32 %v6391, 7
    %v6393 = vsub.s32 %v6390, %v6392
    %v6394 = vrot.slane %v6384, %v6393
    %v6396 = vunpack.c.l.s4 1966171168
    %v6397 = vunpack.c.0.s8 %v6396
    %v6398 = vlaneseq
    %v6399 = vshrl.u32 %v6398, 7
    %v6400 = vsub.s32 %v6397, %v6399
    %v6401 = vrot.slane %v6386, %v6400
    %v6403 = vunpack.c.l.s4 1966171168
    %v6404 = vunpack.c.0.s8 %v6403
    %v6405 = vlaneseq
    %v6406 = vshrl.u32 %v6405, 7
    %v6407 = vsub.s32 %v6404, %v6406
    %v6408 = vrot.slane %v6385, %v6407
    %v6410 = vunpack.c.l.s4 1966171168
    %v6411 = vunpack.c.0.s8 %v6410
    %v6412 = vlaneseq
    %v6413 = vshrl.u32 %v6412, 7
    %v6414 = vsub.s32 %v6411, %v6413
    %v6415 = vrot.slane %v6387, %v6414
    %v6416 = vcombine.high %v6394, %v6394
    %v6417 = vcombine.high %v6401, %v6401
    %v6418 = vcombine.high %v6408, %v6408
    %v6419 = vcombine.high %v6415, %v6415
    %v6420 = vcombine.low %v6292, %v6293
    %v6421 = vcombine.high %v6292, %v6293
    %v6422 = vcombine.low %v6294, %v6295
    %v6423 = vcombine.high %v6294, %v6295
    %v6425 = vunpack.c.l.s4 1966171168
    %v6426 = vunpack.c.0.s8 %v6425
    %v6427 = vlaneseq
    %v6428 = vshrl.u32 %v6427, 7
    %v6429 = vsub.s32 %v6426, %v6428
    %v6430 = vrot.slane %v6420, %v6429
    %v6432 = vunpack.c.l.s4 1966171168
    %v6433 = vunpack.c.0.s8 %v6432
    %v6434 = vlaneseq
    %v6435 = vshrl.u32 %v6434, 7
    %v6436 = vsub.s32 %v6433, %v6435
    %v6437 = vrot.slane %v6421, %v6436
    %v6439 = vunpack.c.l.s4 1966171168
    %v6440 = vunpack.c.0.s8 %v6439
    %v6441 = vlaneseq
    %v6442 = vshrl.u32 %v6441, 7
    %v6443 = vsub.s32 %v6440, %v6442
    %v6444 = vrot.slane %v6422, %v6443
    %v6446 = vunpack.c.l.s4 1966171168
    %v6447 = vunpack.c.0.s8 %v6446
    %v6448 = vlaneseq
    %v6449 = vshrl.u32 %v6448, 7
    %v6450 = vsub.s32 %v6447, %v6449
    %v6451 = vrot.slane %v6423, %v6450
    %v6452 = vcombine.low %v6430, %v6444
    %v6453 = vcombine.high %v6430, %v6444
    %v6454 = vcombine.low %v6437, %v6451
    %v6455 = vcombine.high %v6437, %v6451
    %v6457 = vunpack.c.l.s4 1966171168
    %v6458 = vunpack.c.0.s8 %v6457
    %v6459 = vlaneseq
    %v6460 = vshrl.u32 %v6459, 7
    %v6461 = vsub.s32 %v6458, %v6460
    %v6462 = vrot.slane %v6452, %v6461
    %v6464 = vunpack.c.l.s4 1966171168
    %v6465 = vunpack.c.0.s8 %v6464
    %v6466 = vlaneseq
    %v6467 = vshrl.u32 %v6466, 7
    %v6468 = vsub.s32 %v6465, %v6467
    %v6469 = vrot.slane %v6454, %v6468
    %v6471 = vunpack.c.l.s4 1966171168
    %v6472 = vunpack.c.0.s8 %v6471
    %v6473 = vlaneseq
    %v6474 = vshrl.u32 %v6473, 7
    %v6475 = vsub.s32 %v6472, %v6474
    %v6476 = vrot.slane %v6453, %v6475
    %v6478 = vunpack.c.l.s4 1966171168
    %v6479 = vunpack.c.0.s8 %v6478
    %v6480 = vlaneseq
    %v6481 = vshrl.u32 %v6480, 7
    %v6482 = vsub.s32 %v6479, %v6481
    %v6483 = vrot.slane %v6455, %v6482
    %v6484 = vcombine.high %v6462, %v6462
    %v6485 = vcombine.high %v6469, %v6469
    %v6486 = vcombine.high %v6476, %v6476
    %v6487 = vcombine.high %v6483, %v6483
    %v6488 = vcombine.low %v6296, %v6297
    %v6489 = vcombine.high %v6296, %v6297
    %v6490 = vcombine.low %v6298, %v6299
    %v6491 = vcombine.high %v6298, %v6299
    %v6493 = vunpack.c.l.s4 1966171168
    %v6494 = vunpack.c.0.s8 %v6493
    %v6495 = vlaneseq
    %v6496 = vshrl.u32 %v6495, 7
    %v6497 = vsub.s32 %v6494, %v6496
    %v6498 = vrot.slane %v6488, %v6497
    %v6500 = vunpack.c.l.s4 1966171168
    %v6501 = vunpack.c.0.s8 %v6500
    %v6502 = vlaneseq
    %v6503 = vshrl.u32 %v6502, 7
    %v6504 = vsub.s32 %v6501, %v6503
    %v6505 = vrot.slane %v6489, %v6504
    %v6507 = vunpack.c.l.s4 1966171168
    %v6508 = vunpack.c.0.s8 %v6507
    %v6509 = vlaneseq
    %v6510 = vshrl.u32 %v6509, 7
    %v6511 = vsub.s32 %v6508, %v6510
    %v6512 = vrot.slane %v6490, %v6511
    %v6514 = vunpack.c.l.s4 1966171168
    %v6515 = vunpack.c.0.s8 %v6514
    %v6516 = vlaneseq
    %v6517 = vshrl.u32 %v6516, 7
    %v6518 = vsub.s32 %v6515, %v6517
    %v6519 = vrot.slane %v6491, %v6518
    %v6520 = vcombine.low %v6498, %v6512
    %v6521 = vcombine.high %v6498, %v6512
    %v6522 = vcombine.low %v6505, %v6519
    %v6523 = vcombine.high %v6505, %v6519
    %v6525 = vunpack.c.l.s4 1966171168
    %v6526 = vunpack.c.0.s8 %v6525
    %v6527 = vlaneseq
    %v6528 = vshrl.u32 %v6527, 7
    %v6529 = vsub.s32 %v6526, %v6528
    %v6530 = vrot.slane %v6520, %v6529
    %v6532 = vunpack.c.l.s4 1966171168
    %v6533 = vunpack.c.0.s8 %v6532
    %v6534 = vlaneseq
    %v6535 = vshrl.u32 %v6534, 7
    %v6536 = vsub.s32 %v6533, %v6535
    %v6537 = vrot.slane %v6522, %v6536
    %v6539 = vunpack.c.l.s4 1966171168
    %v6540 = vunpack.c.0.s8 %v6539
    %v6541 = vlaneseq
    %v6542 = vshrl.u32 %v6541, 7
    %v6543 = vsub.s32 %v6540, %v6542
    %v6544 = vrot.slane %v6521, %v6543
    %v6546 = vunpack.c.l.s4 1966171168
    %v6547 = vunpack.c.0.s8 %v6546
    %v6548 = vlaneseq
    %v6549 = vshrl.u32 %v6548, 7
    %v6550 = vsub.s32 %v6547, %v6549
    %v6551 = vrot.slane %v6523, %v6550
    %v6552 = vcombine.high %v6530, %v6530
    %v6553 = vcombine.high %v6537, %v6537
    %v6554 = vcombine.high %v6544, %v6544
    %v6555 = vcombine.high %v6551, %v6551
    %v6556 = vcombine.low %v6300, %v6301
    %v6557 = vcombine.high %v6300, %v6301
    %v6558 = vcombine.low %v6302, %v6303
    %v6559 = vcombine.high %v6302, %v6303
    %v6561 = vunpack.c.l.s4 1966171168
    %v6562 = vunpack.c.0.s8 %v6561
    %v6563 = vlaneseq
    %v6564 = vshrl.u32 %v6563, 7
    %v6565 = vsub.s32 %v6562, %v6564
    %v6566 = vrot.slane %v6556, %v6565
    %v6568 = vunpack.c.l.s4 1966171168
    %v6569 = vunpack.c.0.s8 %v6568
    %v6570 = vlaneseq
    %v6571 = vshrl.u32 %v6570, 7
    %v6572 = vsub.s32 %v6569, %v6571
    %v6573 = vrot.slane %v6557, %v6572
    %v6575 = vunpack.c.l.s4 1966171168
    %v6576 = vunpack.c.0.s8 %v6575
    %v6577 = vlaneseq
    %v6578 = vshrl.u32 %v6577, 7
    %v6579 = vsub.s32 %v6576, %v6578
    %v6580 = vrot.slane %v6558, %v6579
    %v6582 = vunpack.c.l.s4 1966171168
    %v6583 = vunpack.c.0.s8 %v6582
    %v6584 = vlaneseq
    %v6585 = vshrl.u32 %v6584, 7
    %v6586 = vsub.s32 %v6583, %v6585
    %v6587 = vrot.slane %v6559, %v6586
    %v6588 = vcombine.low %v6566, %v6580
    %v6589 = vcombine.high %v6566, %v6580
    %v6590 = vcombine.low %v6573, %v6587
    %v6591 = vcombine.high %v6573, %v6587
    %v6593 = vunpack.c.l.s4 1966171168
    %v6594 = vunpack.c.0.s8 %v6593
    %v6595 = vlaneseq
    %v6596 = vshrl.u32 %v6595, 7
    %v6597 = vsub.s32 %v6594, %v6596
    %v6598 = vrot.slane %v6588, %v6597
    %v6600 = vunpack.c.l.s4 1966171168
    %v6601 = vunpack.c.0.s8 %v6600
    %v6602 = vlaneseq
    %v6603 = vshrl.u32 %v6602, 7
    %v6604 = vsub.s32 %v6601, %v6603
    %v6605 = vrot.slane %v6590, %v6604
    %v6607 = vunpack.c.l.s4 1966171168
    %v6608 = vunpack.c.0.s8 %v6607
    %v6609 = vlaneseq
    %v6610 = vshrl.u32 %v6609, 7
    %v6611 = vsub.s32 %v6608, %v6610
    %v6612 = vrot.slane %v6589, %v6611
    %v6614 = vunpack.c.l.s4 1966171168
    %v6615 = vunpack.c.0.s8 %v6614
    %v6616 = vlaneseq
    %v6617 = vshrl.u32 %v6616, 7
    %v6618 = vsub.s32 %v6615, %v6617
    %v6619 = vrot.slane %v6591, %v6618
    %v6620 = vcombine.high %v6598, %v6598
    %v6621 = vcombine.high %v6605, %v6605
    %v6622 = vcombine.high %v6612, %v6612
    %v6623 = vcombine.high %v6619, %v6619
    %v6624 = vcombine.low %v6304, %v6305
    %v6625 = vcombine.high %v6304, %v6305
    %v6626 = vcombine.low %v6306, %v6307
    %v6627 = vcombine.high %v6306, %v6307
    %v6629 = vunpack.c.l.s4 1966171168
    %v6630 = vunpack.c.0.s8 %v6629
    %v6631 = vlaneseq
    %v6632 = vshrl.u32 %v6631, 7
    %v6633 = vsub.s32 %v6630, %v6632
    %v6634 = vrot.slane %v6624, %v6633
    %v6636 = vunpack.c.l.s4 1966171168
    %v6637 = vunpack.c.0.s8 %v6636
    %v6638 = vlaneseq
    %v6639 = vshrl.u32 %v6638, 7
    %v6640 = vsub.s32 %v6637, %v6639
    %v6641 = vrot.slane %v6625, %v6640
    %v6643 = vunpack.c.l.s4 1966171168
    %v6644 = vunpack.c.0.s8 %v6643
    %v6645 = vlaneseq
    %v6646 = vshrl.u32 %v6645, 7
    %v6647 = vsub.s32 %v6644, %v6646
    %v6648 = vrot.slane %v6626, %v6647
    %v6650 = vunpack.c.l.s4 1966171168
    %v6651 = vunpack.c.0.s8 %v6650
    %v6652 = vlaneseq
    %v6653 = vshrl.u32 %v6652, 7
    %v6654 = vsub.s32 %v6651, %v6653
    %v6655 = vrot.slane %v6627, %v6654
    %v6656 = vcombine.low %v6634, %v6648
    %v6657 = vcombine.high %v6634, %v6648
    %v6658 = vcombine.low %v6641, %v6655
    %v6659 = vcombine.high %v6641, %v6655
    %v6661 = vunpack.c.l.s4 1966171168
    %v6662 = vunpack.c.0.s8 %v6661
    %v6663 = vlaneseq
    %v6664 = vshrl.u32 %v6663, 7
    %v6665 = vsub.s32 %v6662, %v6664
    %v6666 = vrot.slane %v6656, %v6665
    %v6668 = vunpack.c.l.s4 1966171168
    %v6669 = vunpack.c.0.s8 %v6668
    %v6670 = vlaneseq
    %v6671 = vshrl.u32 %v6670, 7
    %v6672 = vsub.s32 %v6669, %v6671
    %v6673 = vrot.slane %v6658, %v6672
    %v6675 = vunpack.c.l.s4 1966171168
    %v6676 = vunpack.c.0.s8 %v6675
    %v6677 = vlaneseq
    %v6678 = vshrl.u32 %v6677, 7
    %v6679 = vsub.s32 %v6676, %v6678
    %v6680 = vrot.slane %v6657, %v6679
    %v6682 = vunpack.c.l.s4 1966171168
    %v6683 = vunpack.c.0.s8 %v6682
    %v6684 = vlaneseq
    %v6685 = vshrl.u32 %v6684, 7
    %v6686 = vsub.s32 %v6683, %v6685
    %v6687 = vrot.slane %v6659, %v6686
    %v6688 = vcombine.high %v6666, %v6666
    %v6689 = vcombine.high %v6673, %v6673
    %v6690 = vcombine.high %v6680, %v6680
    %v6691 = vcombine.high %v6687, %v6687
    %v6692 = vcombine.low %v6308, %v6309
    %v6693 = vcombine.high %v6308, %v6309
    %v6694 = vcombine.low %v6310, %v6311
    %v6695 = vcombine.high %v6310, %v6311
    %v6697 = vunpack.c.l.s4 1966171168
    %v6698 = vunpack.c.0.s8 %v6697
    %v6699 = vlaneseq
    %v6700 = vshrl.u32 %v6699, 7
    %v6701 = vsub.s32 %v6698, %v6700
    %v6702 = vrot.slane %v6692, %v6701
    %v6704 = vunpack.c.l.s4 1966171168
    %v6705 = vunpack.c.0.s8 %v6704
    %v6706 = vlaneseq
    %v6707 = vshrl.u32 %v6706, 7
    %v6708 = vsub.s32 %v6705, %v6707
    %v6709 = vrot.slane %v6693, %v6708
    %v6711 = vunpack.c.l.s4 1966171168
    %v6712 = vunpack.c.0.s8 %v6711
    %v6713 = vlaneseq
    %v6714 = vshrl.u32 %v6713, 7
    %v6715 = vsub.s32 %v6712, %v6714
    %v6716 = vrot.slane %v6694, %v6715
    %v6718 = vunpack.c.l.s4 1966171168
    %v6719 = vunpack.c.0.s8 %v6718
    %v6720 = vlaneseq
    %v6721 = vshrl.u32 %v6720, 7
    %v6722 = vsub.s32 %v6719, %v6721
    %v6723 = vrot.slane %v6695, %v6722
    %v6724 = vcombine.low %v6702, %v6716
    %v6725 = vcombine.high %v6702, %v6716
    %v6726 = vcombine.low %v6709, %v6723
    %v6727 = vcombine.high %v6709, %v6723
    %v6729 = vunpack.c.l.s4 1966171168
    %v6730 = vunpack.c.0.s8 %v6729
    %v6731 = vlaneseq
    %v6732 = vshrl.u32 %v6731, 7
    %v6733 = vsub.s32 %v6730, %v6732
    %v6734 = vrot.slane %v6724, %v6733
    %v6736 = vunpack.c.l.s4 1966171168
    %v6737 = vunpack.c.0.s8 %v6736
    %v6738 = vlaneseq
    %v6739 = vshrl.u32 %v6738, 7
    %v6740 = vsub.s32 %v6737, %v6739
    %v6741 = vrot.slane %v6726, %v6740
    %v6743 = vunpack.c.l.s4 1966171168
    %v6744 = vunpack.c.0.s8 %v6743
    %v6745 = vlaneseq
    %v6746 = vshrl.u32 %v6745, 7
    %v6747 = vsub.s32 %v6744, %v6746
    %v6748 = vrot.slane %v6725, %v6747
    %v6750 = vunpack.c.l.s4 1966171168
    %v6751 = vunpack.c.0.s8 %v6750
    %v6752 = vlaneseq
    %v6753 = vshrl.u32 %v6752, 7
    %v6754 = vsub.s32 %v6751, %v6753
    %v6755 = vrot.slane %v6727, %v6754
    %v6756 = vcombine.high %v6734, %v6734
    %v6757 = vcombine.high %v6741, %v6741
    %v6758 = vcombine.high %v6748, %v6748
    %v6759 = vcombine.high %v6755, %v6755
    %v6760 = vcombine.low %v6312, %v6313
    %v6761 = vcombine.high %v6312, %v6313
    %v6762 = vcombine.low %v6314, %v6315
    %v6763 = vcombine.high %v6314, %v6315
    %v6765 = vunpack.c.l.s4 1966171168
    %v6766 = vunpack.c.0.s8 %v6765
    %v6767 = vlaneseq
    %v6768 = vshrl.u32 %v6767, 7
    %v6769 = vsub.s32 %v6766, %v6768
    %v6770 = vrot.slane %v6760, %v6769
    %v6772 = vunpack.c.l.s4 1966171168
    %v6773 = vunpack.c.0.s8 %v6772
    %v6774 = vlaneseq
    %v6775 = vshrl.u32 %v6774, 7
    %v6776 = vsub.s32 %v6773, %v6775
    %v6777 = vrot.slane %v6761, %v6776
    %v6779 = vunpack.c.l.s4 1966171168
    %v6780 = vunpack.c.0.s8 %v6779
    %v6781 = vlaneseq
    %v6782 = vshrl.u32 %v6781, 7
    %v6783 = vsub.s32 %v6780, %v6782
    %v6784 = vrot.slane %v6762, %v6783
    %v6786 = vunpack.c.l.s4 1966171168
    %v6787 = vunpack.c.0.s8 %v6786
    %v6788 = vlaneseq
    %v6789 = vshrl.u32 %v6788, 7
    %v6790 = vsub.s32 %v6787, %v6789
    %v6791 = vrot.slane %v6763, %v6790
    %v6792 = vcombine.low %v6770, %v6784
    %v6793 = vcombine.high %v6770, %v6784
    %v6794 = vcombine.low %v6777, %v6791
    %v6795 = vcombine.high %v6777, %v6791
    %v6797 = vunpack.c.l.s4 1966171168
    %v6798 = vunpack.c.0.s8 %v6797
    %v6799 = vlaneseq
    %v6800 = vshrl.u32 %v6799, 7
    %v6801 = vsub.s32 %v6798, %v6800
    %v6802 = vrot.slane %v6792, %v6801
    %v6804 = vunpack.c.l.s4 1966171168
    %v6805 = vunpack.c.0.s8 %v6804
    %v6806 = vlaneseq
    %v6807 = vshrl.u32 %v6806, 7
    %v6808 = vsub.s32 %v6805, %v6807
    %v6809 = vrot.slane %v6794, %v6808
    %v6811 = vunpack.c.l.s4 1966171168
    %v6812 = vunpack.c.0.s8 %v6811
    %v6813 = vlaneseq
    %v6814 = vshrl.u32 %v6813, 7
    %v6815 = vsub.s32 %v6812, %v6814
    %v6816 = vrot.slane %v6793, %v6815
    %v6818 = vunpack.c.l.s4 1966171168
    %v6819 = vunpack.c.0.s8 %v6818
    %v6820 = vlaneseq
    %v6821 = vshrl.u32 %v6820, 7
    %v6822 = vsub.s32 %v6819, %v6821
    %v6823 = vrot.slane %v6795, %v6822
    %v6824 = vcombine.high %v6802, %v6802
    %v6825 = vcombine.high %v6809, %v6809
    %v6826 = vcombine.high %v6816, %v6816
    %v6827 = vcombine.high %v6823, %v6823
    %v6828 = vcombine.low %v6316, %v6317
    %v6829 = vcombine.high %v6316, %v6317
    %v6830 = vcombine.low %v6318, %v6319
    %v6831 = vcombine.high %v6318, %v6319
    %v6833 = vunpack.c.l.s4 1966171168
    %v6834 = vunpack.c.0.s8 %v6833
    %v6835 = vlaneseq
    %v6836 = vshrl.u32 %v6835, 7
    %v6837 = vsub.s32 %v6834, %v6836
    %v6838 = vrot.slane %v6828, %v6837
    %v6840 = vunpack.c.l.s4 1966171168
    %v6841 = vunpack.c.0.s8 %v6840
    %v6842 = vlaneseq
    %v6843 = vshrl.u32 %v6842, 7
    %v6844 = vsub.s32 %v6841, %v6843
    %v6845 = vrot.slane %v6829, %v6844
    %v6847 = vunpack.c.l.s4 1966171168
    %v6848 = vunpack.c.0.s8 %v6847
    %v6849 = vlaneseq
    %v6850 = vshrl.u32 %v6849, 7
    %v6851 = vsub.s32 %v6848, %v6850
    %v6852 = vrot.slane %v6830, %v6851
    %v6854 = vunpack.c.l.s4 1966171168
    %v6855 = vunpack.c.0.s8 %v6854
    %v6856 = vlaneseq
    %v6857 = vshrl.u32 %v6856, 7
    %v6858 = vsub.s32 %v6855, %v6857
    %v6859 = vrot.slane %v6831, %v6858
    %v6860 = vcombine.low %v6838, %v6852
    %v6861 = vcombine.high %v6838, %v6852
    %v6862 = vcombine.low %v6845, %v6859
    %v6863 = vcombine.high %v6845, %v6859
    %v6865 = vunpack.c.l.s4 1966171168
    %v6866 = vunpack.c.0.s8 %v6865
    %v6867 = vlaneseq
    %v6868 = vshrl.u32 %v6867, 7
    %v6869 = vsub.s32 %v6866, %v6868
    %v6870 = vrot.slane %v6860, %v6869
    %v6872 = vunpack.c.l.s4 1966171168
    %v6873 = vunpack.c.0.s8 %v6872
    %v6874 = vlaneseq
    %v6875 = vshrl.u32 %v6874, 7
    %v6876 = vsub.s32 %v6873, %v6875
    %v6877 = vrot.slane %v6862, %v6876
    %v6879 = vunpack.c.l.s4 1966171168
    %v6880 = vunpack.c.0.s8 %v6879
    %v6881 = vlaneseq
    %v6882 = vshrl.u32 %v6881, 7
    %v6883 = vsub.s32 %v6880, %v6882
    %v6884 = vrot.slane %v6861, %v6883
    %v6886 = vunpack.c.l.s4 1966171168
    %v6887 = vunpack.c.0.s8 %v6886
    %v6888 = vlaneseq
    %v6889 = vshrl.u32 %v6888, 7
    %v6890 = vsub.s32 %v6887, %v6889
    %v6891 = vrot.slane %v6863, %v6890
    %v6892 = vcombine.high %v6870, %v6870
    %v6893 = vcombine.high %v6877, %v6877
    %v6894 = vcombine.high %v6884, %v6884
    %v6895 = vcombine.high %v6891, %v6891
    %s6960 = scalar_lea.vmem [#allocation2], 1
    %6961 = vst.msk [vmem:[%s6960] ss:$2 sm:$0xf] %vm5223, %v6394
    %s6962 = scalar_lea.vmem [#allocation2], 9
    %6963 = vst.msk [vmem:[%s6962] ss:$2 sm:$0xf] %vm5223, %v6408
    %s6964 = scalar_lea.vmem [#allocation2], 17
    %6965 = vst.msk [vmem:[%s6964] ss:$2 sm:$0xf] %vm5223, %v6416
    %s6966 = scalar_lea.vmem [#allocation2], 25
    %6967 = vst.msk [vmem:[%s6966] ss:$2 sm:$0xf] %vm5223, %v6418
    %s6968 = scalar_lea.vmem [#allocation2], 33
    %6969 = vst.msk [vmem:[%s6968] ss:$2 sm:$0xf] %vm5223, %v6401
    %s6970 = scalar_lea.vmem [#allocation2], 41
    %6971 = vst.msk [vmem:[%s6970] ss:$2 sm:$0xf] %vm5223, %v6415
    %s6972 = scalar_lea.vmem [#allocation2], 49
    %6973 = vst.msk [vmem:[%s6972] ss:$2 sm:$0xf] %vm5223, %v6417
    %s6974 = scalar_lea.vmem [#allocation2], 57
    %6975 = vst.msk [vmem:[%s6974] ss:$2 sm:$0xf] %vm5223, %v6419
    %s6976 = scalar_lea.vmem [#allocation2], 65
    %6977 = vst.msk [vmem:[%s6976] ss:$2 sm:$0xf] %vm5223, %v6462
    %s6978 = scalar_lea.vmem [#allocation2], 73
    %6979 = vst.msk [vmem:[%s6978] ss:$2 sm:$0xf] %vm5223, %v6476
    %s6980 = scalar_lea.vmem [#allocation2], 81
    %6981 = vst.msk [vmem:[%s6980] ss:$2 sm:$0xf] %vm5223, %v6484
    %s6982 = scalar_lea.vmem [#allocation2], 89
    %6983 = vst.msk [vmem:[%s6982] ss:$2 sm:$0xf] %vm5223, %v6486
    %s6984 = scalar_lea.vmem [#allocation2], 97
    %6985 = vst.msk [vmem:[%s6984] ss:$2 sm:$0xf] %vm5223, %v6469
    %s6986 = scalar_lea.vmem [#allocation2], 105
    %6987 = vst.msk [vmem:[%s6986] ss:$2 sm:$0xf] %vm5223, %v6483
    %s6988 = scalar_lea.vmem [#allocation2], 113
    %6989 = vst.msk [vmem:[%s6988] ss:$2 sm:$0xf] %vm5223, %v6485
    %s6990 = scalar_lea.vmem [#allocation2], 121
    %6991 = vst.msk [vmem:[%s6990] ss:$2 sm:$0xf] %vm5223, %v6487
    %s6992 = scalar_lea.vmem [#allocation2], 129
    %6993 = vst.msk [vmem:[%s6992] ss:$2 sm:$0xf] %vm5223, %v6530
    %s6994 = scalar_lea.vmem [#allocation2], 137
    %6995 = vst.msk [vmem:[%s6994] ss:$2 sm:$0xf] %vm5223, %v6544
    %s6996 = scalar_lea.vmem [#allocation2], 145
    %6997 = vst.msk [vmem:[%s6996] ss:$2 sm:$0xf] %vm5223, %v6552
    %s6998 = scalar_lea.vmem [#allocation2], 153
    %6999 = vst.msk [vmem:[%s6998] ss:$2 sm:$0xf] %vm5223, %v6554
    %s7000 = scalar_lea.vmem [#allocation2], 161
    %7001 = vst.msk [vmem:[%s7000] ss:$2 sm:$0xf] %vm5223, %v6537
    %s7002 = scalar_lea.vmem [#allocation2], 169
    %7003 = vst.msk [vmem:[%s7002] ss:$2 sm:$0xf] %vm5223, %v6551
    %s7004 = scalar_lea.vmem [#allocation2], 177
    %7005 = vst.msk [vmem:[%s7004] ss:$2 sm:$0xf] %vm5223, %v6553
    %s7006 = scalar_lea.vmem [#allocation2], 185
    %7007 = vst.msk [vmem:[%s7006] ss:$2 sm:$0xf] %vm5223, %v6555
    %s7008 = scalar_lea.vmem [#allocation2], 193
    %7009 = vst.msk [vmem:[%s7008] ss:$2 sm:$0xf] %vm5223, %v6598
    %s7010 = scalar_lea.vmem [#allocation2], 201
    %7011 = vst.msk [vmem:[%s7010] ss:$2 sm:$0xf] %vm5223, %v6612
    %s7012 = scalar_lea.vmem [#allocation2], 209
    %7013 = vst.msk [vmem:[%s7012] ss:$2 sm:$0xf] %vm5223, %v6620
    %s7014 = scalar_lea.vmem [#allocation2], 217
    %7015 = vst.msk [vmem:[%s7014] ss:$2 sm:$0xf] %vm5223, %v6622
    %s7016 = scalar_lea.vmem [#allocation2], 225
    %7017 = vst.msk [vmem:[%s7016] ss:$2 sm:$0xf] %vm5223, %v6605
    %s7018 = scalar_lea.vmem [#allocation2], 233
    %7019 = vst.msk [vmem:[%s7018] ss:$2 sm:$0xf] %vm5223, %v6619
    %s7020 = scalar_lea.vmem [#allocation2], 241
    %7021 = vst.msk [vmem:[%s7020] ss:$2 sm:$0xf] %vm5223, %v6621
    %s7022 = scalar_lea.vmem [#allocation2], 249
    %7023 = vst.msk [vmem:[%s7022] ss:$2 sm:$0xf] %vm5223, %v6623
    %s7024 = scalar_lea.vmem [#allocation2], 257
    %7025 = vst.msk [vmem:[%s7024] ss:$2 sm:$0xf] %vm5223, %v6666
    %s7026 = scalar_lea.vmem [#allocation2], 265
    %7027 = vst.msk [vmem:[%s7026] ss:$2 sm:$0xf] %vm5223, %v6680
    %s7028 = scalar_lea.vmem [#allocation2], 273
    %7029 = vst.msk [vmem:[%s7028] ss:$2 sm:$0xf] %vm5223, %v6688
    %s7030 = scalar_lea.vmem [#allocation2], 281
    %7031 = vst.msk [vmem:[%s7030] ss:$2 sm:$0xf] %vm5223, %v6690
    %s7032 = scalar_lea.vmem [#allocation2], 289
    %7033 = vst.msk [vmem:[%s7032] ss:$2 sm:$0xf] %vm5223, %v6673
    %s7034 = scalar_lea.vmem [#allocation2], 297
    %7035 = vst.msk [vmem:[%s7034] ss:$2 sm:$0xf] %vm5223, %v6687
    %s7036 = scalar_lea.vmem [#allocation2], 305
    %7037 = vst.msk [vmem:[%s7036] ss:$2 sm:$0xf] %vm5223, %v6689
    %s7038 = scalar_lea.vmem [#allocation2], 313
    %7039 = vst.msk [vmem:[%s7038] ss:$2 sm:$0xf] %vm5223, %v6691
    %s7040 = scalar_lea.vmem [#allocation2], 321
    %7041 = vst.msk [vmem:[%s7040] ss:$2 sm:$0xf] %vm5223, %v6734
    %s7042 = scalar_lea.vmem [#allocation2], 329
    %7043 = vst.msk [vmem:[%s7042] ss:$2 sm:$0xf] %vm5223, %v6748
    %s7044 = scalar_lea.vmem [#allocation2], 337
    %7045 = vst.msk [vmem:[%s7044] ss:$2 sm:$0xf] %vm5223, %v6756
    %s7046 = scalar_lea.vmem [#allocation2], 345
    %7047 = vst.msk [vmem:[%s7046] ss:$2 sm:$0xf] %vm5223, %v6758
    %s7048 = scalar_lea.vmem [#allocation2], 353
    %7049 = vst.msk [vmem:[%s7048] ss:$2 sm:$0xf] %vm5223, %v6741
    %s7050 = scalar_lea.vmem [#allocation2], 361
    %7051 = vst.msk [vmem:[%s7050] ss:$2 sm:$0xf] %vm5223, %v6755
    %s7052 = scalar_lea.vmem [#allocation2], 369
    %7053 = vst.msk [vmem:[%s7052] ss:$2 sm:$0xf] %vm5223, %v6757
    %s7054 = scalar_lea.vmem [#allocation2], 377
    %7055 = vst.msk [vmem:[%s7054] ss:$2 sm:$0xf] %vm5223, %v6759
    %s7056 = scalar_lea.vmem [#allocation2], 385
    %7057 = vst.msk [vmem:[%s7056] ss:$2 sm:$0xf] %vm5223, %v6802
    %s7058 = scalar_lea.vmem [#allocation2], 393
    %7059 = vst.msk [vmem:[%s7058] ss:$2 sm:$0xf] %vm5223, %v6816
    %s7060 = scalar_lea.vmem [#allocation2], 401
    %7061 = vst.msk [vmem:[%s7060] ss:$2 sm:$0xf] %vm5223, %v6824
    %s7062 = scalar_lea.vmem [#allocation2], 409
    %7063 = vst.msk [vmem:[%s7062] ss:$2 sm:$0xf] %vm5223, %v6826
    %s7064 = scalar_lea.vmem [#allocation2], 417
    %7065 = vst.msk [vmem:[%s7064] ss:$2 sm:$0xf] %vm5223, %v6809
    %s7066 = scalar_lea.vmem [#allocation2], 425
    %7067 = vst.msk [vmem:[%s7066] ss:$2 sm:$0xf] %vm5223, %v6823
    %s7068 = scalar_lea.vmem [#allocation2], 433
    %7069 = vst.msk [vmem:[%s7068] ss:$2 sm:$0xf] %vm5223, %v6825
    %s7070 = scalar_lea.vmem [#allocation2], 441
    %7071 = vst.msk [vmem:[%s7070] ss:$2 sm:$0xf] %vm5223, %v6827
    %s7072 = scalar_lea.vmem [#allocation2], 449
    %7073 = vst.msk [vmem:[%s7072] ss:$2 sm:$0xf] %vm5223, %v6870
    %s7074 = scalar_lea.vmem [#allocation2], 457
    %7075 = vst.msk [vmem:[%s7074] ss:$2 sm:$0xf] %vm5223, %v6884
    %s7076 = scalar_lea.vmem [#allocation2], 465
    %7077 = vst.msk [vmem:[%s7076] ss:$2 sm:$0xf] %vm5223, %v6892
    %s7078 = scalar_lea.vmem [#allocation2], 473
    %7079 = vst.msk [vmem:[%s7078] ss:$2 sm:$0xf] %vm5223, %v6894
    %s7080 = scalar_lea.vmem [#allocation2], 481
    %7081 = vst.msk [vmem:[%s7080] ss:$2 sm:$0xf] %vm5223, %v6877
    %s7082 = scalar_lea.vmem [#allocation2], 489
    %7083 = vst.msk [vmem:[%s7082] ss:$2 sm:$0xf] %vm5223, %v6891
    %s7084 = scalar_lea.vmem [#allocation2], 497
    %7085 = vst.msk [vmem:[%s7084] ss:$2 sm:$0xf] %vm5223, %v6893
    %s7086 = scalar_lea.vmem [#allocation2], 505
    %7087 = vst.msk [vmem:[%s7086] ss:$2 sm:$0xf] %vm5223, %v6895
    %v7088 = vmul.f32 %v6226, %v5355
    %v7089 = vmul.f32 %v6226, %v5359
    %v7090 = vmul.f32 %v6226, %v5363
    %v7091 = vmul.f32 %v6226, %v5367
    %v7092 = vmul.f32 %v6230, %v5355
    %v7093 = vmul.f32 %v6230, %v5359
    %v7094 = vmul.f32 %v6230, %v5363
    %v7095 = vmul.f32 %v6230, %v5367
    %v7096 = vmul.f32 %v6234, %v5355
    %v7097 = vmul.f32 %v6234, %v5359
    %v7098 = vmul.f32 %v6234, %v5363
    %v7099 = vmul.f32 %v6234, %v5367
    %v7100 = vmul.f32 %v6238, %v5355
    %v7101 = vmul.f32 %v6238, %v5359
    %v7102 = vmul.f32 %v6238, %v5363
    %v7103 = vmul.f32 %v6238, %v5367
    %v7104 = vmul.f32 %v6242, %v5355
    %v7105 = vmul.f32 %v6242, %v5359
    %v7106 = vmul.f32 %v6242, %v5363
    %v7107 = vmul.f32 %v6242, %v5367
    %v7108 = vmul.f32 %v6246, %v5355
    %v7109 = vmul.f32 %v6246, %v5359
    %v7110 = vmul.f32 %v6246, %v5363
    %v7111 = vmul.f32 %v6246, %v5367
    %v7112 = vmul.f32 %v6250, %v5355
    %v7113 = vmul.f32 %v6250, %v5359
    %v7114 = vmul.f32 %v6250, %v5363
    %v7115 = vmul.f32 %v6250, %v5367
    %v7116 = vmul.f32 %v6254, %v5355
    %v7117 = vmul.f32 %v6254, %v5359
    %v7118 = vmul.f32 %v6254, %v5363
    %v7119 = vmul.f32 %v6254, %v5367
    %v7120 = vadd.f32 %v7088, %v5408
    %v7121 = vadd.f32 %v7089, %v5412
    %v7122 = vadd.f32 %v7090, %v5416
    %v7123 = vadd.f32 %v7091, %v5420
    %v7124 = vadd.f32 %v7092, %v5408
    %v7125 = vadd.f32 %v7093, %v5412
    %v7126 = vadd.f32 %v7094, %v5416
    %v7127 = vadd.f32 %v7095, %v5420
    %v7128 = vadd.f32 %v7096, %v5408
    %v7129 = vadd.f32 %v7097, %v5412
    %v7130 = vadd.f32 %v7098, %v5416
    %v7131 = vadd.f32 %v7099, %v5420
    %v7132 = vadd.f32 %v7100, %v5408
    %v7133 = vadd.f32 %v7101, %v5412
    %v7134 = vadd.f32 %v7102, %v5416
    %v7135 = vadd.f32 %v7103, %v5420
    %v7136 = vadd.f32 %v7104, %v5408
    %v7137 = vadd.f32 %v7105, %v5412
    %v7138 = vadd.f32 %v7106, %v5416
    %v7139 = vadd.f32 %v7107, %v5420
    %v7140 = vadd.f32 %v7108, %v5408
    %v7141 = vadd.f32 %v7109, %v5412
    %v7142 = vadd.f32 %v7110, %v5416
    %v7143 = vadd.f32 %v7111, %v5420
    %v7144 = vadd.f32 %v7112, %v5408
    %v7145 = vadd.f32 %v7113, %v5412
    %v7146 = vadd.f32 %v7114, %v5416
    %v7147 = vadd.f32 %v7115, %v5420
    %v7148 = vadd.f32 %v7116, %v5408
    %v7149 = vadd.f32 %v7117, %v5412
    %v7150 = vadd.f32 %v7118, %v5416
    %v7151 = vadd.f32 %v7119, %v5420
    %v7184 = vcombine.low %v7120, %v7121
    %v7185 = vcombine.high %v7120, %v7121
    %v7186 = vcombine.low %v7122, %v7123
    %v7187 = vcombine.high %v7122, %v7123
    %v7189 = vunpack.c.l.s4 1966171168
    %v7190 = vunpack.c.0.s8 %v7189
    %v7191 = vlaneseq
    %v7192 = vshrl.u32 %v7191, 7
    %v7193 = vsub.s32 %v7190, %v7192
    %v7194 = vrot.slane %v7184, %v7193
    %v7196 = vunpack.c.l.s4 1966171168
    %v7197 = vunpack.c.0.s8 %v7196
    %v7198 = vlaneseq
    %v7199 = vshrl.u32 %v7198, 7
    %v7200 = vsub.s32 %v7197, %v7199
    %v7201 = vrot.slane %v7185, %v7200
    %v7203 = vunpack.c.l.s4 1966171168
    %v7204 = vunpack.c.0.s8 %v7203
    %v7205 = vlaneseq
    %v7206 = vshrl.u32 %v7205, 7
    %v7207 = vsub.s32 %v7204, %v7206
    %v7208 = vrot.slane %v7186, %v7207
    %v7210 = vunpack.c.l.s4 1966171168
    %v7211 = vunpack.c.0.s8 %v7210
    %v7212 = vlaneseq
    %v7213 = vshrl.u32 %v7212, 7
    %v7214 = vsub.s32 %v7211, %v7213
    %v7215 = vrot.slane %v7187, %v7214
    %v7216 = vcombine.low %v7194, %v7208
    %v7217 = vcombine.high %v7194, %v7208
    %v7218 = vcombine.low %v7201, %v7215
    %v7219 = vcombine.high %v7201, %v7215
    %v7221 = vunpack.c.l.s4 1966171168
    %v7222 = vunpack.c.0.s8 %v7221
    %v7223 = vlaneseq
    %v7224 = vshrl.u32 %v7223, 7
    %v7225 = vsub.s32 %v7222, %v7224
    %v7226 = vrot.slane %v7216, %v7225
    %v7228 = vunpack.c.l.s4 1966171168
    %v7229 = vunpack.c.0.s8 %v7228
    %v7230 = vlaneseq
    %v7231 = vshrl.u32 %v7230, 7
    %v7232 = vsub.s32 %v7229, %v7231
    %v7233 = vrot.slane %v7218, %v7232
    %v7235 = vunpack.c.l.s4 1966171168
    %v7236 = vunpack.c.0.s8 %v7235
    %v7237 = vlaneseq
    %v7238 = vshrl.u32 %v7237, 7
    %v7239 = vsub.s32 %v7236, %v7238
    %v7240 = vrot.slane %v7217, %v7239
    %v7242 = vunpack.c.l.s4 1966171168
    %v7243 = vunpack.c.0.s8 %v7242
    %v7244 = vlaneseq
    %v7245 = vshrl.u32 %v7244, 7
    %v7246 = vsub.s32 %v7243, %v7245
    %v7247 = vrot.slane %v7219, %v7246
    %v7248 = vcombine.high %v7226, %v7226
    %v7249 = vcombine.high %v7233, %v7233
    %v7250 = vcombine.high %v7240, %v7240
    %v7251 = vcombine.high %v7247, %v7247
    %v7252 = vcombine.low %v7124, %v7125
    %v7253 = vcombine.high %v7124, %v7125
    %v7254 = vcombine.low %v7126, %v7127
    %v7255 = vcombine.high %v7126, %v7127
    %v7257 = vunpack.c.l.s4 1966171168
    %v7258 = vunpack.c.0.s8 %v7257
    %v7259 = vlaneseq
    %v7260 = vshrl.u32 %v7259, 7
    %v7261 = vsub.s32 %v7258, %v7260
    %v7262 = vrot.slane %v7252, %v7261
    %v7264 = vunpack.c.l.s4 1966171168
    %v7265 = vunpack.c.0.s8 %v7264
    %v7266 = vlaneseq
    %v7267 = vshrl.u32 %v7266, 7
    %v7268 = vsub.s32 %v7265, %v7267
    %v7269 = vrot.slane %v7253, %v7268
    %v7271 = vunpack.c.l.s4 1966171168
    %v7272 = vunpack.c.0.s8 %v7271
    %v7273 = vlaneseq
    %v7274 = vshrl.u32 %v7273, 7
    %v7275 = vsub.s32 %v7272, %v7274
    %v7276 = vrot.slane %v7254, %v7275
    %v7278 = vunpack.c.l.s4 1966171168
    %v7279 = vunpack.c.0.s8 %v7278
    %v7280 = vlaneseq
    %v7281 = vshrl.u32 %v7280, 7
    %v7282 = vsub.s32 %v7279, %v7281
    %v7283 = vrot.slane %v7255, %v7282
    %v7284 = vcombine.low %v7262, %v7276
    %v7285 = vcombine.high %v7262, %v7276
    %v7286 = vcombine.low %v7269, %v7283
    %v7287 = vcombine.high %v7269, %v7283
    %v7289 = vunpack.c.l.s4 1966171168
    %v7290 = vunpack.c.0.s8 %v7289
    %v7291 = vlaneseq
    %v7292 = vshrl.u32 %v7291, 7
    %v7293 = vsub.s32 %v7290, %v7292
    %v7294 = vrot.slane %v7284, %v7293
    %v7296 = vunpack.c.l.s4 1966171168
    %v7297 = vunpack.c.0.s8 %v7296
    %v7298 = vlaneseq
    %v7299 = vshrl.u32 %v7298, 7
    %v7300 = vsub.s32 %v7297, %v7299
    %v7301 = vrot.slane %v7286, %v7300
    %v7303 = vunpack.c.l.s4 1966171168
    %v7304 = vunpack.c.0.s8 %v7303
    %v7305 = vlaneseq
    %v7306 = vshrl.u32 %v7305, 7
    %v7307 = vsub.s32 %v7304, %v7306
    %v7308 = vrot.slane %v7285, %v7307
    %v7310 = vunpack.c.l.s4 1966171168
    %v7311 = vunpack.c.0.s8 %v7310
    %v7312 = vlaneseq
    %v7313 = vshrl.u32 %v7312, 7
    %v7314 = vsub.s32 %v7311, %v7313
    %v7315 = vrot.slane %v7287, %v7314
    %v7316 = vcombine.high %v7294, %v7294
    %v7317 = vcombine.high %v7301, %v7301
    %v7318 = vcombine.high %v7308, %v7308
    %v7319 = vcombine.high %v7315, %v7315
    %v7320 = vcombine.low %v7128, %v7129
    %v7321 = vcombine.high %v7128, %v7129
    %v7322 = vcombine.low %v7130, %v7131
    %v7323 = vcombine.high %v7130, %v7131
    %v7325 = vunpack.c.l.s4 1966171168
    %v7326 = vunpack.c.0.s8 %v7325
    %v7327 = vlaneseq
    %v7328 = vshrl.u32 %v7327, 7
    %v7329 = vsub.s32 %v7326, %v7328
    %v7330 = vrot.slane %v7320, %v7329
    %v7332 = vunpack.c.l.s4 1966171168
    %v7333 = vunpack.c.0.s8 %v7332
    %v7334 = vlaneseq
    %v7335 = vshrl.u32 %v7334, 7
    %v7336 = vsub.s32 %v7333, %v7335
    %v7337 = vrot.slane %v7321, %v7336
    %v7339 = vunpack.c.l.s4 1966171168
    %v7340 = vunpack.c.0.s8 %v7339
    %v7341 = vlaneseq
    %v7342 = vshrl.u32 %v7341, 7
    %v7343 = vsub.s32 %v7340, %v7342
    %v7344 = vrot.slane %v7322, %v7343
    %v7346 = vunpack.c.l.s4 1966171168
    %v7347 = vunpack.c.0.s8 %v7346
    %v7348 = vlaneseq
    %v7349 = vshrl.u32 %v7348, 7
    %v7350 = vsub.s32 %v7347, %v7349
    %v7351 = vrot.slane %v7323, %v7350
    %v7352 = vcombine.low %v7330, %v7344
    %v7353 = vcombine.high %v7330, %v7344
    %v7354 = vcombine.low %v7337, %v7351
    %v7355 = vcombine.high %v7337, %v7351
    %v7357 = vunpack.c.l.s4 1966171168
    %v7358 = vunpack.c.0.s8 %v7357
    %v7359 = vlaneseq
    %v7360 = vshrl.u32 %v7359, 7
    %v7361 = vsub.s32 %v7358, %v7360
    %v7362 = vrot.slane %v7352, %v7361
    %v7364 = vunpack.c.l.s4 1966171168
    %v7365 = vunpack.c.0.s8 %v7364
    %v7366 = vlaneseq
    %v7367 = vshrl.u32 %v7366, 7
    %v7368 = vsub.s32 %v7365, %v7367
    %v7369 = vrot.slane %v7354, %v7368
    %v7371 = vunpack.c.l.s4 1966171168
    %v7372 = vunpack.c.0.s8 %v7371
    %v7373 = vlaneseq
    %v7374 = vshrl.u32 %v7373, 7
    %v7375 = vsub.s32 %v7372, %v7374
    %v7376 = vrot.slane %v7353, %v7375
    %v7378 = vunpack.c.l.s4 1966171168
    %v7379 = vunpack.c.0.s8 %v7378
    %v7380 = vlaneseq
    %v7381 = vshrl.u32 %v7380, 7
    %v7382 = vsub.s32 %v7379, %v7381
    %v7383 = vrot.slane %v7355, %v7382
    %v7384 = vcombine.high %v7362, %v7362
    %v7385 = vcombine.high %v7369, %v7369
    %v7386 = vcombine.high %v7376, %v7376
    %v7387 = vcombine.high %v7383, %v7383
    %v7388 = vcombine.low %v7132, %v7133
    %v7389 = vcombine.high %v7132, %v7133
    %v7390 = vcombine.low %v7134, %v7135
    %v7391 = vcombine.high %v7134, %v7135
    %v7393 = vunpack.c.l.s4 1966171168
    %v7394 = vunpack.c.0.s8 %v7393
    %v7395 = vlaneseq
    %v7396 = vshrl.u32 %v7395, 7
    %v7397 = vsub.s32 %v7394, %v7396
    %v7398 = vrot.slane %v7388, %v7397
    %v7400 = vunpack.c.l.s4 1966171168
    %v7401 = vunpack.c.0.s8 %v7400
    %v7402 = vlaneseq
    %v7403 = vshrl.u32 %v7402, 7
    %v7404 = vsub.s32 %v7401, %v7403
    %v7405 = vrot.slane %v7389, %v7404
    %v7407 = vunpack.c.l.s4 1966171168
    %v7408 = vunpack.c.0.s8 %v7407
    %v7409 = vlaneseq
    %v7410 = vshrl.u32 %v7409, 7
    %v7411 = vsub.s32 %v7408, %v7410
    %v7412 = vrot.slane %v7390, %v7411
    %v7414 = vunpack.c.l.s4 1966171168
    %v7415 = vunpack.c.0.s8 %v7414
    %v7416 = vlaneseq
    %v7417 = vshrl.u32 %v7416, 7
    %v7418 = vsub.s32 %v7415, %v7417
    %v7419 = vrot.slane %v7391, %v7418
    %v7420 = vcombine.low %v7398, %v7412
    %v7421 = vcombine.high %v7398, %v7412
    %v7422 = vcombine.low %v7405, %v7419
    %v7423 = vcombine.high %v7405, %v7419
    %v7425 = vunpack.c.l.s4 1966171168
    %v7426 = vunpack.c.0.s8 %v7425
    %v7427 = vlaneseq
    %v7428 = vshrl.u32 %v7427, 7
    %v7429 = vsub.s32 %v7426, %v7428
    %v7430 = vrot.slane %v7420, %v7429
    %v7432 = vunpack.c.l.s4 1966171168
    %v7433 = vunpack.c.0.s8 %v7432
    %v7434 = vlaneseq
    %v7435 = vshrl.u32 %v7434, 7
    %v7436 = vsub.s32 %v7433, %v7435
    %v7437 = vrot.slane %v7422, %v7436
    %v7439 = vunpack.c.l.s4 1966171168
    %v7440 = vunpack.c.0.s8 %v7439
    %v7441 = vlaneseq
    %v7442 = vshrl.u32 %v7441, 7
    %v7443 = vsub.s32 %v7440, %v7442
    %v7444 = vrot.slane %v7421, %v7443
    %v7446 = vunpack.c.l.s4 1966171168
    %v7447 = vunpack.c.0.s8 %v7446
    %v7448 = vlaneseq
    %v7449 = vshrl.u32 %v7448, 7
    %v7450 = vsub.s32 %v7447, %v7449
    %v7451 = vrot.slane %v7423, %v7450
    %v7452 = vcombine.high %v7430, %v7430
    %v7453 = vcombine.high %v7437, %v7437
    %v7454 = vcombine.high %v7444, %v7444
    %v7455 = vcombine.high %v7451, %v7451
    %v7456 = vcombine.low %v7136, %v7137
    %v7457 = vcombine.high %v7136, %v7137
    %v7458 = vcombine.low %v7138, %v7139
    %v7459 = vcombine.high %v7138, %v7139
    %v7461 = vunpack.c.l.s4 1966171168
    %v7462 = vunpack.c.0.s8 %v7461
    %v7463 = vlaneseq
    %v7464 = vshrl.u32 %v7463, 7
    %v7465 = vsub.s32 %v7462, %v7464
    %v7466 = vrot.slane %v7456, %v7465
    %v7468 = vunpack.c.l.s4 1966171168
    %v7469 = vunpack.c.0.s8 %v7468
    %v7470 = vlaneseq
    %v7471 = vshrl.u32 %v7470, 7
    %v7472 = vsub.s32 %v7469, %v7471
    %v7473 = vrot.slane %v7457, %v7472
    %v7475 = vunpack.c.l.s4 1966171168
    %v7476 = vunpack.c.0.s8 %v7475
    %v7477 = vlaneseq
    %v7478 = vshrl.u32 %v7477, 7
    %v7479 = vsub.s32 %v7476, %v7478
    %v7480 = vrot.slane %v7458, %v7479
    %v7482 = vunpack.c.l.s4 1966171168
    %v7483 = vunpack.c.0.s8 %v7482
    %v7484 = vlaneseq
    %v7485 = vshrl.u32 %v7484, 7
    %v7486 = vsub.s32 %v7483, %v7485
    %v7487 = vrot.slane %v7459, %v7486
    %v7488 = vcombine.low %v7466, %v7480
    %v7489 = vcombine.high %v7466, %v7480
    %v7490 = vcombine.low %v7473, %v7487
    %v7491 = vcombine.high %v7473, %v7487
    %v7493 = vunpack.c.l.s4 1966171168
    %v7494 = vunpack.c.0.s8 %v7493
    %v7495 = vlaneseq
    %v7496 = vshrl.u32 %v7495, 7
    %v7497 = vsub.s32 %v7494, %v7496
    %v7498 = vrot.slane %v7488, %v7497
    %v7500 = vunpack.c.l.s4 1966171168
    %v7501 = vunpack.c.0.s8 %v7500
    %v7502 = vlaneseq
    %v7503 = vshrl.u32 %v7502, 7
    %v7504 = vsub.s32 %v7501, %v7503
    %v7505 = vrot.slane %v7490, %v7504
    %v7507 = vunpack.c.l.s4 1966171168
    %v7508 = vunpack.c.0.s8 %v7507
    %v7509 = vlaneseq
    %v7510 = vshrl.u32 %v7509, 7
    %v7511 = vsub.s32 %v7508, %v7510
    %v7512 = vrot.slane %v7489, %v7511
    %v7514 = vunpack.c.l.s4 1966171168
    %v7515 = vunpack.c.0.s8 %v7514
    %v7516 = vlaneseq
    %v7517 = vshrl.u32 %v7516, 7
    %v7518 = vsub.s32 %v7515, %v7517
    %v7519 = vrot.slane %v7491, %v7518
    %v7520 = vcombine.high %v7498, %v7498
    %v7521 = vcombine.high %v7505, %v7505
    %v7522 = vcombine.high %v7512, %v7512
    %v7523 = vcombine.high %v7519, %v7519
    %v7524 = vcombine.low %v7140, %v7141
    %v7525 = vcombine.high %v7140, %v7141
    %v7526 = vcombine.low %v7142, %v7143
    %v7527 = vcombine.high %v7142, %v7143
    %v7529 = vunpack.c.l.s4 1966171168
    %v7530 = vunpack.c.0.s8 %v7529
    %v7531 = vlaneseq
    %v7532 = vshrl.u32 %v7531, 7
    %v7533 = vsub.s32 %v7530, %v7532
    %v7534 = vrot.slane %v7524, %v7533
    %v7536 = vunpack.c.l.s4 1966171168
    %v7537 = vunpack.c.0.s8 %v7536
    %v7538 = vlaneseq
    %v7539 = vshrl.u32 %v7538, 7
    %v7540 = vsub.s32 %v7537, %v7539
    %v7541 = vrot.slane %v7525, %v7540
    %v7543 = vunpack.c.l.s4 1966171168
    %v7544 = vunpack.c.0.s8 %v7543
    %v7545 = vlaneseq
    %v7546 = vshrl.u32 %v7545, 7
    %v7547 = vsub.s32 %v7544, %v7546
    %v7548 = vrot.slane %v7526, %v7547
    %v7550 = vunpack.c.l.s4 1966171168
    %v7551 = vunpack.c.0.s8 %v7550
    %v7552 = vlaneseq
    %v7553 = vshrl.u32 %v7552, 7
    %v7554 = vsub.s32 %v7551, %v7553
    %v7555 = vrot.slane %v7527, %v7554
    %v7556 = vcombine.low %v7534, %v7548
    %v7557 = vcombine.high %v7534, %v7548
    %v7558 = vcombine.low %v7541, %v7555
    %v7559 = vcombine.high %v7541, %v7555
    %v7561 = vunpack.c.l.s4 1966171168
    %v7562 = vunpack.c.0.s8 %v7561
    %v7563 = vlaneseq
    %v7564 = vshrl.u32 %v7563, 7
    %v7565 = vsub.s32 %v7562, %v7564
    %v7566 = vrot.slane %v7556, %v7565
    %v7568 = vunpack.c.l.s4 1966171168
    %v7569 = vunpack.c.0.s8 %v7568
    %v7570 = vlaneseq
    %v7571 = vshrl.u32 %v7570, 7
    %v7572 = vsub.s32 %v7569, %v7571
    %v7573 = vrot.slane %v7558, %v7572
    %v7575 = vunpack.c.l.s4 1966171168
    %v7576 = vunpack.c.0.s8 %v7575
    %v7577 = vlaneseq
    %v7578 = vshrl.u32 %v7577, 7
    %v7579 = vsub.s32 %v7576, %v7578
    %v7580 = vrot.slane %v7557, %v7579
    %v7582 = vunpack.c.l.s4 1966171168
    %v7583 = vunpack.c.0.s8 %v7582
    %v7584 = vlaneseq
    %v7585 = vshrl.u32 %v7584, 7
    %v7586 = vsub.s32 %v7583, %v7585
    %v7587 = vrot.slane %v7559, %v7586
    %v7588 = vcombine.high %v7566, %v7566
    %v7589 = vcombine.high %v7573, %v7573
    %v7590 = vcombine.high %v7580, %v7580
    %v7591 = vcombine.high %v7587, %v7587
    %v7592 = vcombine.low %v7144, %v7145
    %v7593 = vcombine.high %v7144, %v7145
    %v7594 = vcombine.low %v7146, %v7147
    %v7595 = vcombine.high %v7146, %v7147
    %v7597 = vunpack.c.l.s4 1966171168
    %v7598 = vunpack.c.0.s8 %v7597
    %v7599 = vlaneseq
    %v7600 = vshrl.u32 %v7599, 7
    %v7601 = vsub.s32 %v7598, %v7600
    %v7602 = vrot.slane %v7592, %v7601
    %v7604 = vunpack.c.l.s4 1966171168
    %v7605 = vunpack.c.0.s8 %v7604
    %v7606 = vlaneseq
    %v7607 = vshrl.u32 %v7606, 7
    %v7608 = vsub.s32 %v7605, %v7607
    %v7609 = vrot.slane %v7593, %v7608
    %v7611 = vunpack.c.l.s4 1966171168
    %v7612 = vunpack.c.0.s8 %v7611
    %v7613 = vlaneseq
    %v7614 = vshrl.u32 %v7613, 7
    %v7615 = vsub.s32 %v7612, %v7614
    %v7616 = vrot.slane %v7594, %v7615
    %v7618 = vunpack.c.l.s4 1966171168
    %v7619 = vunpack.c.0.s8 %v7618
    %v7620 = vlaneseq
    %v7621 = vshrl.u32 %v7620, 7
    %v7622 = vsub.s32 %v7619, %v7621
    %v7623 = vrot.slane %v7595, %v7622
    %v7624 = vcombine.low %v7602, %v7616
    %v7625 = vcombine.high %v7602, %v7616
    %v7626 = vcombine.low %v7609, %v7623
    %v7627 = vcombine.high %v7609, %v7623
    %v7629 = vunpack.c.l.s4 1966171168
    %v7630 = vunpack.c.0.s8 %v7629
    %v7631 = vlaneseq
    %v7632 = vshrl.u32 %v7631, 7
    %v7633 = vsub.s32 %v7630, %v7632
    %v7634 = vrot.slane %v7624, %v7633
    %v7636 = vunpack.c.l.s4 1966171168
    %v7637 = vunpack.c.0.s8 %v7636
    %v7638 = vlaneseq
    %v7639 = vshrl.u32 %v7638, 7
    %v7640 = vsub.s32 %v7637, %v7639
    %v7641 = vrot.slane %v7626, %v7640
    %v7643 = vunpack.c.l.s4 1966171168
    %v7644 = vunpack.c.0.s8 %v7643
    %v7645 = vlaneseq
    %v7646 = vshrl.u32 %v7645, 7
    %v7647 = vsub.s32 %v7644, %v7646
    %v7648 = vrot.slane %v7625, %v7647
    %v7650 = vunpack.c.l.s4 1966171168
    %v7651 = vunpack.c.0.s8 %v7650
    %v7652 = vlaneseq
    %v7653 = vshrl.u32 %v7652, 7
    %v7654 = vsub.s32 %v7651, %v7653
    %v7655 = vrot.slane %v7627, %v7654
    %v7656 = vcombine.high %v7634, %v7634
    %v7657 = vcombine.high %v7641, %v7641
    %v7658 = vcombine.high %v7648, %v7648
    %v7659 = vcombine.high %v7655, %v7655
    %v7660 = vcombine.low %v7148, %v7149
    %v7661 = vcombine.high %v7148, %v7149
    %v7662 = vcombine.low %v7150, %v7151
    %v7663 = vcombine.high %v7150, %v7151
    %v7665 = vunpack.c.l.s4 1966171168
    %v7666 = vunpack.c.0.s8 %v7665
    %v7667 = vlaneseq
    %v7668 = vshrl.u32 %v7667, 7
    %v7669 = vsub.s32 %v7666, %v7668
    %v7670 = vrot.slane %v7660, %v7669
    %v7672 = vunpack.c.l.s4 1966171168
    %v7673 = vunpack.c.0.s8 %v7672
    %v7674 = vlaneseq
    %v7675 = vshrl.u32 %v7674, 7
    %v7676 = vsub.s32 %v7673, %v7675
    %v7677 = vrot.slane %v7661, %v7676
    %v7679 = vunpack.c.l.s4 1966171168
    %v7680 = vunpack.c.0.s8 %v7679
    %v7681 = vlaneseq
    %v7682 = vshrl.u32 %v7681, 7
    %v7683 = vsub.s32 %v7680, %v7682
    %v7684 = vrot.slane %v7662, %v7683
    %v7686 = vunpack.c.l.s4 1966171168
    %v7687 = vunpack.c.0.s8 %v7686
    %v7688 = vlaneseq
    %v7689 = vshrl.u32 %v7688, 7
    %v7690 = vsub.s32 %v7687, %v7689
    %v7691 = vrot.slane %v7663, %v7690
    %v7692 = vcombine.low %v7670, %v7684
    %v7693 = vcombine.high %v7670, %v7684
    %v7694 = vcombine.low %v7677, %v7691
    %v7695 = vcombine.high %v7677, %v7691
    %v7697 = vunpack.c.l.s4 1966171168
    %v7698 = vunpack.c.0.s8 %v7697
    %v7699 = vlaneseq
    %v7700 = vshrl.u32 %v7699, 7
    %v7701 = vsub.s32 %v7698, %v7700
    %v7702 = vrot.slane %v7692, %v7701
    %v7704 = vunpack.c.l.s4 1966171168
    %v7705 = vunpack.c.0.s8 %v7704
    %v7706 = vlaneseq
    %v7707 = vshrl.u32 %v7706, 7
    %v7708 = vsub.s32 %v7705, %v7707
    %v7709 = vrot.slane %v7694, %v7708
    %v7711 = vunpack.c.l.s4 1966171168
    %v7712 = vunpack.c.0.s8 %v7711
    %v7713 = vlaneseq
    %v7714 = vshrl.u32 %v7713, 7
    %v7715 = vsub.s32 %v7712, %v7714
    %v7716 = vrot.slane %v7693, %v7715
    %v7718 = vunpack.c.l.s4 1966171168
    %v7719 = vunpack.c.0.s8 %v7718
    %v7720 = vlaneseq
    %v7721 = vshrl.u32 %v7720, 7
    %v7722 = vsub.s32 %v7719, %v7721
    %v7723 = vrot.slane %v7695, %v7722
    %v7724 = vcombine.high %v7702, %v7702
    %v7725 = vcombine.high %v7709, %v7709
    %v7726 = vcombine.high %v7716, %v7716
    %v7727 = vcombine.high %v7723, %v7723
    %s7792 = scalar_lea.vmem [#allocation3], 1
    %7793 = vst.msk [vmem:[%s7792] ss:$2 sm:$0xf] %vm5223, %v7226
    %s7794 = scalar_lea.vmem [#allocation3], 9
    %7795 = vst.msk [vmem:[%s7794] ss:$2 sm:$0xf] %vm5223, %v7240
    %s7796 = scalar_lea.vmem [#allocation3], 17
    %7797 = vst.msk [vmem:[%s7796] ss:$2 sm:$0xf] %vm5223, %v7248
    %s7798 = scalar_lea.vmem [#allocation3], 25
    %7799 = vst.msk [vmem:[%s7798] ss:$2 sm:$0xf] %vm5223, %v7250
    %s7800 = scalar_lea.vmem [#allocation3], 33
    %7801 = vst.msk [vmem:[%s7800] ss:$2 sm:$0xf] %vm5223, %v7233
    %s7802 = scalar_lea.vmem [#allocation3], 41
    %7803 = vst.msk [vmem:[%s7802] ss:$2 sm:$0xf] %vm5223, %v7247
    %s7804 = scalar_lea.vmem [#allocation3], 49
    %7805 = vst.msk [vmem:[%s7804] ss:$2 sm:$0xf] %vm5223, %v7249
    %s7806 = scalar_lea.vmem [#allocation3], 57
    %7807 = vst.msk [vmem:[%s7806] ss:$2 sm:$0xf] %vm5223, %v7251
    %s7808 = scalar_lea.vmem [#allocation3], 65
    %7809 = vst.msk [vmem:[%s7808] ss:$2 sm:$0xf] %vm5223, %v7294
    %s7810 = scalar_lea.vmem [#allocation3], 73
    %7811 = vst.msk [vmem:[%s7810] ss:$2 sm:$0xf] %vm5223, %v7308
    %s7812 = scalar_lea.vmem [#allocation3], 81
    %7813 = vst.msk [vmem:[%s7812] ss:$2 sm:$0xf] %vm5223, %v7316
    %s7814 = scalar_lea.vmem [#allocation3], 89
    %7815 = vst.msk [vmem:[%s7814] ss:$2 sm:$0xf] %vm5223, %v7318
    %s7816 = scalar_lea.vmem [#allocation3], 97
    %7817 = vst.msk [vmem:[%s7816] ss:$2 sm:$0xf] %vm5223, %v7301
    %s7818 = scalar_lea.vmem [#allocation3], 105
    %7819 = vst.msk [vmem:[%s7818] ss:$2 sm:$0xf] %vm5223, %v7315
    %s7820 = scalar_lea.vmem [#allocation3], 113
    %7821 = vst.msk [vmem:[%s7820] ss:$2 sm:$0xf] %vm5223, %v7317
    %s7822 = scalar_lea.vmem [#allocation3], 121
    %7823 = vst.msk [vmem:[%s7822] ss:$2 sm:$0xf] %vm5223, %v7319
    %s7824 = scalar_lea.vmem [#allocation3], 129
    %7825 = vst.msk [vmem:[%s7824] ss:$2 sm:$0xf] %vm5223, %v7362
    %s7826 = scalar_lea.vmem [#allocation3], 137
    %7827 = vst.msk [vmem:[%s7826] ss:$2 sm:$0xf] %vm5223, %v7376
    %s7828 = scalar_lea.vmem [#allocation3], 145
    %7829 = vst.msk [vmem:[%s7828] ss:$2 sm:$0xf] %vm5223, %v7384
    %s7830 = scalar_lea.vmem [#allocation3], 153
    %7831 = vst.msk [vmem:[%s7830] ss:$2 sm:$0xf] %vm5223, %v7386
    %s7832 = scalar_lea.vmem [#allocation3], 161
    %7833 = vst.msk [vmem:[%s7832] ss:$2 sm:$0xf] %vm5223, %v7369
    %s7834 = scalar_lea.vmem [#allocation3], 169
    %7835 = vst.msk [vmem:[%s7834] ss:$2 sm:$0xf] %vm5223, %v7383
    %s7836 = scalar_lea.vmem [#allocation3], 177
    %7837 = vst.msk [vmem:[%s7836] ss:$2 sm:$0xf] %vm5223, %v7385
    %s7838 = scalar_lea.vmem [#allocation3], 185
    %7839 = vst.msk [vmem:[%s7838] ss:$2 sm:$0xf] %vm5223, %v7387
    %s7840 = scalar_lea.vmem [#allocation3], 193
    %7841 = vst.msk [vmem:[%s7840] ss:$2 sm:$0xf] %vm5223, %v7430
    %s7842 = scalar_lea.vmem [#allocation3], 201
    %7843 = vst.msk [vmem:[%s7842] ss:$2 sm:$0xf] %vm5223, %v7444
    %s7844 = scalar_lea.vmem [#allocation3], 209
    %7845 = vst.msk [vmem:[%s7844] ss:$2 sm:$0xf] %vm5223, %v7452
    %s7846 = scalar_lea.vmem [#allocation3], 217
    %7847 = vst.msk [vmem:[%s7846] ss:$2 sm:$0xf] %vm5223, %v7454
    %s7848 = scalar_lea.vmem [#allocation3], 225
    %7849 = vst.msk [vmem:[%s7848] ss:$2 sm:$0xf] %vm5223, %v7437
    %s7850 = scalar_lea.vmem [#allocation3], 233
    %7851 = vst.msk [vmem:[%s7850] ss:$2 sm:$0xf] %vm5223, %v7451
    %s7852 = scalar_lea.vmem [#allocation3], 241
    %7853 = vst.msk [vmem:[%s7852] ss:$2 sm:$0xf] %vm5223, %v7453
    %s7854 = scalar_lea.vmem [#allocation3], 249
    %7855 = vst.msk [vmem:[%s7854] ss:$2 sm:$0xf] %vm5223, %v7455
    %s7856 = scalar_lea.vmem [#allocation3], 257
    %7857 = vst.msk [vmem:[%s7856] ss:$2 sm:$0xf] %vm5223, %v7498
    %s7858 = scalar_lea.vmem [#allocation3], 265
    %7859 = vst.msk [vmem:[%s7858] ss:$2 sm:$0xf] %vm5223, %v7512
    %s7860 = scalar_lea.vmem [#allocation3], 273
    %7861 = vst.msk [vmem:[%s7860] ss:$2 sm:$0xf] %vm5223, %v7520
    %s7862 = scalar_lea.vmem [#allocation3], 281
    %7863 = vst.msk [vmem:[%s7862] ss:$2 sm:$0xf] %vm5223, %v7522
    %s7864 = scalar_lea.vmem [#allocation3], 289
    %7865 = vst.msk [vmem:[%s7864] ss:$2 sm:$0xf] %vm5223, %v7505
    %s7866 = scalar_lea.vmem [#allocation3], 297
    %7867 = vst.msk [vmem:[%s7866] ss:$2 sm:$0xf] %vm5223, %v7519
    %s7868 = scalar_lea.vmem [#allocation3], 305
    %7869 = vst.msk [vmem:[%s7868] ss:$2 sm:$0xf] %vm5223, %v7521
    %s7870 = scalar_lea.vmem [#allocation3], 313
    %7871 = vst.msk [vmem:[%s7870] ss:$2 sm:$0xf] %vm5223, %v7523
    %s7872 = scalar_lea.vmem [#allocation3], 321
    %7873 = vst.msk [vmem:[%s7872] ss:$2 sm:$0xf] %vm5223, %v7566
    %s7874 = scalar_lea.vmem [#allocation3], 329
    %7875 = vst.msk [vmem:[%s7874] ss:$2 sm:$0xf] %vm5223, %v7580
    %s7876 = scalar_lea.vmem [#allocation3], 337
    %7877 = vst.msk [vmem:[%s7876] ss:$2 sm:$0xf] %vm5223, %v7588
    %s7878 = scalar_lea.vmem [#allocation3], 345
    %7879 = vst.msk [vmem:[%s7878] ss:$2 sm:$0xf] %vm5223, %v7590
    %s7880 = scalar_lea.vmem [#allocation3], 353
    %7881 = vst.msk [vmem:[%s7880] ss:$2 sm:$0xf] %vm5223, %v7573
    %s7882 = scalar_lea.vmem [#allocation3], 361
    %7883 = vst.msk [vmem:[%s7882] ss:$2 sm:$0xf] %vm5223, %v7587
    %s7884 = scalar_lea.vmem [#allocation3], 369
    %7885 = vst.msk [vmem:[%s7884] ss:$2 sm:$0xf] %vm5223, %v7589
    %s7886 = scalar_lea.vmem [#allocation3], 377
    %7887 = vst.msk [vmem:[%s7886] ss:$2 sm:$0xf] %vm5223, %v7591
    %s7888 = scalar_lea.vmem [#allocation3], 385
    %7889 = vst.msk [vmem:[%s7888] ss:$2 sm:$0xf] %vm5223, %v7634
    %s7890 = scalar_lea.vmem [#allocation3], 393
    %7891 = vst.msk [vmem:[%s7890] ss:$2 sm:$0xf] %vm5223, %v7648
    %s7892 = scalar_lea.vmem [#allocation3], 401
    %7893 = vst.msk [vmem:[%s7892] ss:$2 sm:$0xf] %vm5223, %v7656
    %s7894 = scalar_lea.vmem [#allocation3], 409
    %7895 = vst.msk [vmem:[%s7894] ss:$2 sm:$0xf] %vm5223, %v7658
    %s7896 = scalar_lea.vmem [#allocation3], 417
    %7897 = vst.msk [vmem:[%s7896] ss:$2 sm:$0xf] %vm5223, %v7641
    %s7898 = scalar_lea.vmem [#allocation3], 425
    %7899 = vst.msk [vmem:[%s7898] ss:$2 sm:$0xf] %vm5223, %v7655
    %s7900 = scalar_lea.vmem [#allocation3], 433
    %7901 = vst.msk [vmem:[%s7900] ss:$2 sm:$0xf] %vm5223, %v7657
    %s7902 = scalar_lea.vmem [#allocation3], 441
    %7903 = vst.msk [vmem:[%s7902] ss:$2 sm:$0xf] %vm5223, %v7659
    %s7904 = scalar_lea.vmem [#allocation3], 449
    %7905 = vst.msk [vmem:[%s7904] ss:$2 sm:$0xf] %vm5223, %v7702
    %s7906 = scalar_lea.vmem [#allocation3], 457
    %7907 = vst.msk [vmem:[%s7906] ss:$2 sm:$0xf] %vm5223, %v7716
    %s7908 = scalar_lea.vmem [#allocation3], 465
    %7909 = vst.msk [vmem:[%s7908] ss:$2 sm:$0xf] %vm5223, %v7724
    %s7910 = scalar_lea.vmem [#allocation3], 473
    %7911 = vst.msk [vmem:[%s7910] ss:$2 sm:$0xf] %vm5223, %v7726
    %s7912 = scalar_lea.vmem [#allocation3], 481
    %7913 = vst.msk [vmem:[%s7912] ss:$2 sm:$0xf] %vm5223, %v7709
    %s7914 = scalar_lea.vmem [#allocation3], 489
    %7915 = vst.msk [vmem:[%s7914] ss:$2 sm:$0xf] %vm5223, %v7723
    %s7916 = scalar_lea.vmem [#allocation3], 497
    %7917 = vst.msk [vmem:[%s7916] ss:$2 sm:$0xf] %vm5223, %v7725
    %s7918 = scalar_lea.vmem [#allocation3], 505
    %7919 = vst.msk [vmem:[%s7918] ss:$2 sm:$0xf] %vm5223, %v7727
    %v7920 = vld [vmem:[%s5] sm:$0xff]
    %v7921 = vld [vmem:[%s5 + $0x8] sm:$0xff]
    %v7922 = vld [vmem:[%s5 + $0x10] sm:$0xff]
    %v7923 = vld [vmem:[%s5 + $0x18] sm:$0xff]
    %v7924 = vld [vmem:[%s5 + $0x20] sm:$0xff]
    %v7925 = vld [vmem:[%s5 + $0x28] sm:$0xff]
    %v7926 = vld [vmem:[%s5 + $0x30] sm:$0xff]
    %v7927 = vld [vmem:[%s5 + $0x38] sm:$0xff]
    %v7928 = vld [vmem:[%s5 + $0x40] sm:$0xff]
    %v7929 = vld [vmem:[%s5 + $0x48] sm:$0xff]
    %v7930 = vld [vmem:[%s5 + $0x50] sm:$0xff]
    %v7931 = vld [vmem:[%s5 + $0x58] sm:$0xff]
    %v7932 = vld [vmem:[%s5 + $0x60] sm:$0xff]
    %v7933 = vld [vmem:[%s5 + $0x68] sm:$0xff]
    %v7934 = vld [vmem:[%s5 + $0x70] sm:$0xff]
    %v7935 = vld [vmem:[%s5 + $0x78] sm:$0xff]
    %v7936 = vld [vmem:[%s5 + $0x80] sm:$0xff]
    %v7937 = vld [vmem:[%s5 + $0x88] sm:$0xff]
    %v7938 = vld [vmem:[%s5 + $0x90] sm:$0xff]
    %v7939 = vld [vmem:[%s5 + $0x98] sm:$0xff]
    %v7940 = vld [vmem:[%s5 + $0xa0] sm:$0xff]
    %v7941 = vld [vmem:[%s5 + $0xa8] sm:$0xff]
    %v7942 = vld [vmem:[%s5 + $0xb0] sm:$0xff]
    %v7943 = vld [vmem:[%s5 + $0xb8] sm:$0xff]
    %v7944 = vld [vmem:[%s5 + $0xc0] sm:$0xff]
    %v7945 = vld [vmem:[%s5 + $0xc8] sm:$0xff]
    %v7946 = vld [vmem:[%s5 + $0xd0] sm:$0xff]
    %v7947 = vld [vmem:[%s5 + $0xd8] sm:$0xff]
    %v7948 = vld [vmem:[%s5 + $0xe0] sm:$0xff]
    %v7949 = vld [vmem:[%s5 + $0xe8] sm:$0xff]
    %v7950 = vld [vmem:[%s5 + $0xf0] sm:$0xff]
    %v7951 = vld [vmem:[%s5 + $0xf8] sm:$0xff]
    %v7952 = vld [vmem:[%s6] sm:$0xff]
    %v7953 = vld [vmem:[%s6 + $0x8] sm:$0xff]
    %v7954 = vld [vmem:[%s6 + $0x10] sm:$0xff]
    %v7955 = vld [vmem:[%s6 + $0x18] sm:$0xff]
    %v7956 = vld [vmem:[%s6 + $0x20] sm:$0xff]
    %v7957 = vld [vmem:[%s6 + $0x28] sm:$0xff]
    %v7958 = vld [vmem:[%s6 + $0x30] sm:$0xff]
    %v7959 = vld [vmem:[%s6 + $0x38] sm:$0xff]
    %v7960 = vld [vmem:[%s6 + $0x40] sm:$0xff]
    %v7961 = vld [vmem:[%s6 + $0x48] sm:$0xff]
    %v7962 = vld [vmem:[%s6 + $0x50] sm:$0xff]
    %v7963 = vld [vmem:[%s6 + $0x58] sm:$0xff]
    %v7964 = vld [vmem:[%s6 + $0x60] sm:$0xff]
    %v7965 = vld [vmem:[%s6 + $0x68] sm:$0xff]
    %v7966 = vld [vmem:[%s6 + $0x70] sm:$0xff]
    %v7967 = vld [vmem:[%s6 + $0x78] sm:$0xff]
    %v7968 = vld [vmem:[%s6 + $0x80] sm:$0xff]
    %v7969 = vld [vmem:[%s6 + $0x88] sm:$0xff]
    %v7970 = vld [vmem:[%s6 + $0x90] sm:$0xff]
    %v7971 = vld [vmem:[%s6 + $0x98] sm:$0xff]
    %v7972 = vld [vmem:[%s6 + $0xa0] sm:$0xff]
    %v7973 = vld [vmem:[%s6 + $0xa8] sm:$0xff]
    %v7974 = vld [vmem:[%s6 + $0xb0] sm:$0xff]
    %v7975 = vld [vmem:[%s6 + $0xb8] sm:$0xff]
    %v7976 = vld [vmem:[%s6 + $0xc0] sm:$0xff]
    %v7977 = vld [vmem:[%s6 + $0xc8] sm:$0xff]
    %v7978 = vld [vmem:[%s6 + $0xd0] sm:$0xff]
    %v7979 = vld [vmem:[%s6 + $0xd8] sm:$0xff]
    %v7980 = vld [vmem:[%s6 + $0xe0] sm:$0xff]
    %v7981 = vld [vmem:[%s6 + $0xe8] sm:$0xff]
    %v7982 = vld [vmem:[%s6 + $0xf0] sm:$0xff]
    %v7983 = vld [vmem:[%s6 + $0xf8] sm:$0xff]
    loop: start=0, step=1, limit=16
    $region38: #{model_vad_forward.5} parent=1 // loop_pre_header
      _
    $region39: #{model_vad_forward.5} parent=1 // loop_header
      %s7985 = sphi 0, %s7989
      %p7986 = scmp.ge.s32.totalorder %s7985, 16
      %v7990 = vphi 0.0, %v9252
      %v7991 = vphi 0.0, %v9250
      %v7992 = vphi 0.0, %v9385
      %v7993 = vphi 0.0, %v9383
    $region40: #{model_vad_forward.5} parent=1 // loop_header_branch
      %7988 = sbr.rel (%p7986) target = $region44
    $region41: #{model_vad_forward.5} parent=1 // loop_body
      %s7994 = smul.u32 %s7985, 4
      %v7995 = vpack.c.bf16 %v7990, %v7990
      %v7996 = vpack.c.bf16 %v7992, %v7992
      %s7997 = smul.u32 %s7994, 4
      %s7998 = smul.addr %s7997, 2
      %s7999 = scalar_lea.vmem [#allocation2], %s7998
      %v8000 = vld [vmem:[%s7999] sm:$0xff]
      %v8033 = vunpack.c.l.b16 %v7920
      %v8034 = vunpack.c.h.b16 %v7920
      %v8035 = vunpack.c.l.b16 %v7921
      %v8036 = vunpack.c.h.b16 %v7921
      %v8037 = vunpack.c.l.b16 %v7922
      %v8038 = vunpack.c.h.b16 %v7922
      %v8039 = vunpack.c.l.b16 %v7923
      %v8040 = vunpack.c.h.b16 %v7923
      %v8041 = vunpack.c.l.b16 %v7924
      %v8042 = vunpack.c.h.b16 %v7924
      %v8043 = vunpack.c.l.b16 %v7925
      %v8044 = vunpack.c.h.b16 %v7925
      %v8045 = vunpack.c.l.b16 %v7926
      %v8046 = vunpack.c.h.b16 %v7926
      %v8047 = vunpack.c.l.b16 %v7927
      %v8048 = vunpack.c.h.b16 %v7927
      %v8049 = vunpack.c.l.b16 %v7928
      %v8050 = vunpack.c.h.b16 %v7928
      %v8051 = vunpack.c.l.b16 %v7929
      %v8052 = vunpack.c.h.b16 %v7929
      %v8053 = vunpack.c.l.b16 %v7930
      %v8054 = vunpack.c.h.b16 %v7930
      %v8055 = vunpack.c.l.b16 %v7931
      %v8056 = vunpack.c.h.b16 %v7931
      %v8057 = vunpack.c.l.b16 %v7932
      %v8058 = vunpack.c.h.b16 %v7932
      %v8059 = vunpack.c.l.b16 %v7933
      %v8060 = vunpack.c.h.b16 %v7933
      %v8061 = vunpack.c.l.b16 %v7934
      %v8062 = vunpack.c.h.b16 %v7934
      %v8063 = vunpack.c.l.b16 %v7935
      %v8064 = vunpack.c.h.b16 %v7935
      %v8065 = vunpack.c.l.b16 %v7936
      %v8066 = vunpack.c.h.b16 %v7936
      %v8067 = vunpack.c.l.b16 %v7937
      %v8068 = vunpack.c.h.b16 %v7937
      %v8069 = vunpack.c.l.b16 %v7938
      %v8070 = vunpack.c.h.b16 %v7938
      %v8071 = vunpack.c.l.b16 %v7939
      %v8072 = vunpack.c.h.b16 %v7939
      %v8073 = vunpack.c.l.b16 %v7940
      %v8074 = vunpack.c.h.b16 %v7940
      %v8075 = vunpack.c.l.b16 %v7941
      %v8076 = vunpack.c.h.b16 %v7941
      %v8077 = vunpack.c.l.b16 %v7942
      %v8078 = vunpack.c.h.b16 %v7942
      %v8079 = vunpack.c.l.b16 %v7943
      %v8080 = vunpack.c.h.b16 %v7943
      %v8081 = vunpack.c.l.b16 %v7944
      %v8082 = vunpack.c.h.b16 %v7944
      %v8083 = vunpack.c.l.b16 %v7945
      %v8084 = vunpack.c.h.b16 %v7945
      %v8085 = vunpack.c.l.b16 %v7946
      %v8086 = vunpack.c.h.b16 %v7946
      %v8087 = vunpack.c.l.b16 %v7947
      %v8088 = vunpack.c.h.b16 %v7947
      %v8089 = vunpack.c.l.b16 %v7948
      %v8090 = vunpack.c.h.b16 %v7948
      %v8091 = vunpack.c.l.b16 %v7949
      %v8092 = vunpack.c.h.b16 %v7949
      %v8093 = vunpack.c.l.b16 %v7950
      %v8094 = vunpack.c.h.b16 %v7950
      %v8095 = vunpack.c.l.b16 %v7951
      %v8096 = vunpack.c.h.b16 %v7951
      %v8097 = vpack.c.b16 %v8037, %v8033
      %v8098 = vpack.c.b16 %v8038, %v8034
      %v8099 = vpack.c.b16 %v8039, %v8035
      %v8100 = vpack.c.b16 %v8040, %v8036
      %v8101 = vpack.c.b16 %v8045, %v8041
      %v8102 = vpack.c.b16 %v8046, %v8042
      %v8103 = vpack.c.b16 %v8047, %v8043
      %v8104 = vpack.c.b16 %v8048, %v8044
      %v8105 = vpack.c.b16 %v8053, %v8049
      %v8106 = vpack.c.b16 %v8054, %v8050
      %v8107 = vpack.c.b16 %v8055, %v8051
      %v8108 = vpack.c.b16 %v8056, %v8052
      %v8109 = vpack.c.b16 %v8061, %v8057
      %v8110 = vpack.c.b16 %v8062, %v8058
      %v8111 = vpack.c.b16 %v8063, %v8059
      %v8112 = vpack.c.b16 %v8064, %v8060
      %v8113 = vpack.c.b16 %v8069, %v8065
      %v8114 = vpack.c.b16 %v8070, %v8066
      %v8115 = vpack.c.b16 %v8071, %v8067
      %v8116 = vpack.c.b16 %v8072, %v8068
      %v8117 = vpack.c.b16 %v8077, %v8073
      %v8118 = vpack.c.b16 %v8078, %v8074
      %v8119 = vpack.c.b16 %v8079, %v8075
      %v8120 = vpack.c.b16 %v8080, %v8076
      %v8121 = vpack.c.b16 %v8085, %v8081
      %v8122 = vpack.c.b16 %v8086, %v8082
      %v8123 = vpack.c.b16 %v8087, %v8083
      %v8124 = vpack.c.b16 %v8088, %v8084
      %v8125 = vpack.c.b16 %v8093, %v8089
      %v8126 = vpack.c.b16 %v8094, %v8090
      %v8127 = vpack.c.b16 %v8095, %v8091
      %v8128 = vpack.c.b16 %v8096, %v8092
      %v8162 = vcombine.high %v8000, %v8000
      %v8164 = vunpack.c.l.s4 1983009808
      %v8165 = vunpack.c.0.s8 %v8164
      %v8166 = vlaneseq
      %v8167 = vshrl.u32 %v8166, 7
      %v8168 = vsub.s32 %v8165, %v8167
      %v8169 = vrot.slane %v8000, %v8168
      %v8171 = vunpack.c.l.s4 1983009808
      %v8172 = vunpack.c.0.s8 %v8171
      %v8173 = vlaneseq
      %v8174 = vshrl.u32 %v8173, 7
      %v8175 = vsub.s32 %v8172, %v8174
      %v8176 = vrot.slane %v8162, %v8175
      %v8177 = vcombine.high %v8169, %v8169
      %v8178 = vcombine.high %v8176, %v8176
      %8183 = vmatprep.subr.bf16.mxu0 %v8098
      %8184 = vmatpush1.bf16.msra.mxu0 %v8097
      %8185 = vmatprep.subr.bf16.mxu0 %v8102
      %8186 = vmatpush1.bf16.msra.mxu0 %v8101
      %8187 = vmatprep.subr.bf16.mxu0 %v8106
      %8188 = vmatpush1.bf16.msra.mxu0 %v8105
      %8189 = vmatprep.subr.bf16.mxu0 %v8110
      %8190 = vmatpush1.bf16.msra.mxu0 %v8109
      %8191 = vmatprep.subr.bf16.mxu0 %v8114
      %8192 = vmatpush1.bf16.msra.mxu0 %v8113
      %8193 = vmatprep.subr.bf16.mxu0 %v8118
      %8194 = vmatpush1.bf16.msra.mxu0 %v8117
      %8195 = vmatprep.subr.bf16.mxu0 %v8122
      %8196 = vmatpush1.bf16.msra.mxu0 %v8121
      %8197 = vmatprep.subr.bf16.mxu0 %v8126
      %8198 = vmatpush1.bf16.msra.mxu0 %v8125
      %8199 = vmatprep.subr.bf16.mxu0 0
      %8200 = vmatpush1.bf16.msra.mxu0 0
      %8201 = vmatprep.subr.bf16.mxu0 0
      %8202 = vmatpush1.bf16.msra.mxu0 0
      %8203 = vmatprep.subr.bf16.mxu0 0
      %8204 = vmatpush1.bf16.msra.mxu0 0
      %8205 = vmatprep.subr.bf16.mxu0 0
      %8206 = vmatpush1.bf16.msra.mxu0 0
      %8207 = vmatprep.subr.bf16.mxu0 0
      %8208 = vmatpush1.bf16.msra.mxu0 0
      %8209 = vmatprep.subr.bf16.mxu0 0
      %8210 = vmatpush1.bf16.msra.mxu0 0
      %8211 = vmatprep.subr.bf16.mxu0 0
      %8212 = vmatpush1.bf16.msra.mxu0 0
      %8213 = vmatprep.subr.bf16.mxu0 0
      %8214 = vmatpush1.bf16.msra.mxu0 0
      %8215 = vmatprep.mubr.bf16.mxu0 0
      %8216 = vmatmul.mubr.bf16.gmra.mrb[0].mxu0 %v7995
      %v8217 = vpop.f32.mrb[0].mxu0
      %v8218 = vadd.f32 %v8169, %v8217
      %v8219 = vpop.f32.mrb[0].mxu0
      %v8220 = vadd.f32 %v8177, %v8219
      %v8221 = vpop.f32.mrb[0].mxu0
      %v8222 = vpop.f32.mrb[0].mxu0
      %8223 = vdwg.mxu0
      %8224 = vmatprep.subr.bf16.mxu0 %v8100
      %8225 = vmatpush1.bf16.msra.mxu0 %v8099
      %8226 = vmatprep.subr.bf16.mxu0 %v8104
      %8227 = vmatpush1.bf16.msra.mxu0 %v8103
      %8228 = vmatprep.subr.bf16.mxu0 %v8108
      %8229 = vmatpush1.bf16.msra.mxu0 %v8107
      %8230 = vmatprep.subr.bf16.mxu0 %v8112
      %8231 = vmatpush1.bf16.msra.mxu0 %v8111
      %8232 = vmatprep.subr.bf16.mxu0 %v8116
      %8233 = vmatpush1.bf16.msra.mxu0 %v8115
      %8234 = vmatprep.subr.bf16.mxu0 %v8120
      %8235 = vmatpush1.bf16.msra.mxu0 %v8119
      %8236 = vmatprep.subr.bf16.mxu0 %v8124
      %8237 = vmatpush1.bf16.msra.mxu0 %v8123
      %8238 = vmatprep.subr.bf16.mxu0 %v8128
      %8239 = vmatpush1.bf16.msra.mxu0 %v8127
      %8240 = vmatprep.subr.bf16.mxu0 0
      %8241 = vmatpush1.bf16.msra.mxu0 0
      %8242 = vmatprep.subr.bf16.mxu0 0
      %8243 = vmatpush1.bf16.msra.mxu0 0
      %8244 = vmatprep.subr.bf16.mxu0 0
      %8245 = vmatpush1.bf16.msra.mxu0 0
      %8246 = vmatprep.subr.bf16.mxu0 0
      %8247 = vmatpush1.bf16.msra.mxu0 0
      %8248 = vmatprep.subr.bf16.mxu0 0
      %8249 = vmatpush1.bf16.msra.mxu0 0
      %8250 = vmatprep.subr.bf16.mxu0 0
      %8251 = vmatpush1.bf16.msra.mxu0 0
      %8252 = vmatprep.subr.bf16.mxu0 0
      %8253 = vmatpush1.bf16.msra.mxu0 0
      %8254 = vmatprep.subr.bf16.mxu0 0
      %8255 = vmatpush1.bf16.msra.mxu0 0
      %8256 = vmatprep.mubr.bf16.mxu0 0
      %8257 = vmatmul.mubr.bf16.gmra.mrb[0].mxu0 %v7995
      %v8258 = vpop.f32.mrb[0].mxu0
      %v8259 = vadd.f32 %v8176, %v8258
      %v8260 = vpop.f32.mrb[0].mxu0
      %v8261 = vadd.f32 %v8178, %v8260
      %v8262 = vpop.f32.mrb[0].mxu0
      %v8263 = vpop.f32.mrb[0].mxu0
      %8264 = vdwg.mxu0
      %v8265 = vxor.u32 %v8218, 2147483648
      %v8266 = vmul.f32 %v8265, 1.442695
      %v8267 = vpow.pop %v8266
      %v8268 = vadd.f32 %v8267, 1.0
      %v8269 = vrcp.pop %v8268
      %v8270 = vmul.f32 1.0, %v8269
      %v8271 = vxor.u32 %v8220, 2147483648
      %v8272 = vmul.f32 %v8271, 1.442695
      %v8273 = vpow.pop %v8272
      %v8274 = vadd.f32 %v8273, 1.0
      %v8275 = vrcp.pop %v8274
      %v8276 = vmul.f32 1.0, %v8275
      %v8277 = vtanh.pop %v8259
      %v8278 = vxor.u32 %v8261, 2147483648
      %v8279 = vmul.f32 %v8278, 1.442695
      %v8280 = vpow.pop %v8279
      %v8281 = vadd.f32 %v8280, 1.0
      %v8282 = vrcp.pop %v8281
      %v8283 = vmul.f32 1.0, %v8282
      %v8284 = vmul.f32 %v8276, %v7991
      %v8285 = vmul.f32 %v8270, %v8277
      %v8286 = vadd.f32 %v8284, %v8285
      %v8287 = vtanh.pop %v8286
      %v8288 = vmul.f32 %v8283, %v8287
      %s8289 = ssub.s32 63, %s7994
      %s8290 = smul.u32 %s8289, 4
      %s8291 = smul.addr %s8290, 2
      %s8292 = scalar_lea.vmem [#allocation3], %s8291
      %v8293 = vld [vmem:[%s8292] sm:$0xff]
      %v8326 = vunpack.c.l.b16 %v7952
      %v8327 = vunpack.c.h.b16 %v7952
      %v8328 = vunpack.c.l.b16 %v7953
      %v8329 = vunpack.c.h.b16 %v7953
      %v8330 = vunpack.c.l.b16 %v7954
      %v8331 = vunpack.c.h.b16 %v7954
      %v8332 = vunpack.c.l.b16 %v7955
      %v8333 = vunpack.c.h.b16 %v7955
      %v8334 = vunpack.c.l.b16 %v7956
      %v8335 = vunpack.c.h.b16 %v7956
      %v8336 = vunpack.c.l.b16 %v7957
      %v8337 = vunpack.c.h.b16 %v7957
      %v8338 = vunpack.c.l.b16 %v7958
      %v8339 = vunpack.c.h.b16 %v7958
      %v8340 = vunpack.c.l.b16 %v7959
      %v8341 = vunpack.c.h.b16 %v7959
      %v8342 = vunpack.c.l.b16 %v7960
      %v8343 = vunpack.c.h.b16 %v7960
      %v8344 = vunpack.c.l.b16 %v7961
      %v8345 = vunpack.c.h.b16 %v7961
      %v8346 = vunpack.c.l.b16 %v7962
      %v8347 = vunpack.c.h.b16 %v7962
      %v8348 = vunpack.c.l.b16 %v7963
      %v8349 = vunpack.c.h.b16 %v7963
      %v8350 = vunpack.c.l.b16 %v7964
      %v8351 = vunpack.c.h.b16 %v7964
      %v8352 = vunpack.c.l.b16 %v7965
      %v8353 = vunpack.c.h.b16 %v7965
      %v8354 = vunpack.c.l.b16 %v7966
      %v8355 = vunpack.c.h.b16 %v7966
      %v8356 = vunpack.c.l.b16 %v7967
      %v8357 = vunpack.c.h.b16 %v7967
      %v8358 = vunpack.c.l.b16 %v7968
      %v8359 = vunpack.c.h.b16 %v7968
      %v8360 = vunpack.c.l.b16 %v7969
      %v8361 = vunpack.c.h.b16 %v7969
      %v8362 = vunpack.c.l.b16 %v7970
      %v8363 = vunpack.c.h.b16 %v7970
      %v8364 = vunpack.c.l.b16 %v7971
      %v8365 = vunpack.c.h.b16 %v7971
      %v8366 = vunpack.c.l.b16 %v7972
      %v8367 = vunpack.c.h.b16 %v7972
      %v8368 = vunpack.c.l.b16 %v7973
      %v8369 = vunpack.c.h.b16 %v7973
      %v8370 = vunpack.c.l.b16 %v7974
      %v8371 = vunpack.c.h.b16 %v7974
      %v8372 = vunpack.c.l.b16 %v7975
      %v8373 = vunpack.c.h.b16 %v7975
      %v8374 = vunpack.c.l.b16 %v7976
      %v8375 = vunpack.c.h.b16 %v7976
      %v8376 = vunpack.c.l.b16 %v7977
      %v8377 = vunpack.c.h.b16 %v7977
      %v8378 = vunpack.c.l.b16 %v7978
      %v8379 = vunpack.c.h.b16 %v7978
      %v8380 = vunpack.c.l.b16 %v7979
      %v8381 = vunpack.c.h.b16 %v7979
      %v8382 = vunpack.c.l.b16 %v7980
      %v8383 = vunpack.c.h.b16 %v7980
      %v8384 = vunpack.c.l.b16 %v7981
      %v8385 = vunpack.c.h.b16 %v7981
      %v8386 = vunpack.c.l.b16 %v7982
      %v8387 = vunpack.c.h.b16 %v7982
      %v8388 = vunpack.c.l.b16 %v7983
      %v8389 = vunpack.c.h.b16 %v7983
      %v8390 = vpack.c.b16 %v8330, %v8326
      %v8391 = vpack.c.b16 %v8331, %v8327
      %v8392 = vpack.c.b16 %v8332, %v8328
      %v8393 = vpack.c.b16 %v8333, %v8329
      %v8394 = vpack.c.b16 %v8338, %v8334
      %v8395 = vpack.c.b16 %v8339, %v8335
      %v8396 = vpack.c.b16 %v8340, %v8336
      %v8397 = vpack.c.b16 %v8341, %v8337
      %v8398 = vpack.c.b16 %v8346, %v8342
      %v8399 = vpack.c.b16 %v8347, %v8343
      %v8400 = vpack.c.b16 %v8348, %v8344
      %v8401 = vpack.c.b16 %v8349, %v8345
      %v8402 = vpack.c.b16 %v8354, %v8350
      %v8403 = vpack.c.b16 %v8355, %v8351
      %v8404 = vpack.c.b16 %v8356, %v8352
      %v8405 = vpack.c.b16 %v8357, %v8353
      %v8406 = vpack.c.b16 %v8362, %v8358
      %v8407 = vpack.c.b16 %v8363, %v8359
      %v8408 = vpack.c.b16 %v8364, %v8360
      %v8409 = vpack.c.b16 %v8365, %v8361
      %v8410 = vpack.c.b16 %v8370, %v8366
      %v8411 = vpack.c.b16 %v8371, %v8367
      %v8412 = vpack.c.b16 %v8372, %v8368
      %v8413 = vpack.c.b16 %v8373, %v8369
      %v8414 = vpack.c.b16 %v8378, %v8374
      %v8415 = vpack.c.b16 %v8379, %v8375
      %v8416 = vpack.c.b16 %v8380, %v8376
      %v8417 = vpack.c.b16 %v8381, %v8377
      %v8418 = vpack.c.b16 %v8386, %v8382
      %v8419 = vpack.c.b16 %v8387, %v8383
      %v8420 = vpack.c.b16 %v8388, %v8384
      %v8421 = vpack.c.b16 %v8389, %v8385
      %v8455 = vcombine.high %v8293, %v8293
      %v8457 = vunpack.c.l.s4 1983009808
      %v8458 = vunpack.c.0.s8 %v8457
      %v8459 = vlaneseq
      %v8460 = vshrl.u32 %v8459, 7
      %v8461 = vsub.s32 %v8458, %v8460
      %v8462 = vrot.slane %v8293, %v8461
      %v8464 = vunpack.c.l.s4 1983009808
      %v8465 = vunpack.c.0.s8 %v8464
      %v8466 = vlaneseq
      %v8467 = vshrl.u32 %v8466, 7
      %v8468 = vsub.s32 %v8465, %v8467
      %v8469 = vrot.slane %v8455, %v8468
      %v8470 = vcombine.high %v8462, %v8462
      %v8471 = vcombine.high %v8469, %v8469
      %8476 = vmatprep.subr.bf16.mxu0 %v8391
      %8477 = vmatpush1.bf16.msra.mxu0 %v8390
      %8478 = vmatprep.subr.bf16.mxu0 %v8395
      %8479 = vmatpush1.bf16.msra.mxu0 %v8394
      %8480 = vmatprep.subr.bf16.mxu0 %v8399
      %8481 = vmatpush1.bf16.msra.mxu0 %v8398
      %8482 = vmatprep.subr.bf16.mxu0 %v8403
      %8483 = vmatpush1.bf16.msra.mxu0 %v8402
      %8484 = vmatprep.subr.bf16.mxu0 %v8407
      %8485 = vmatpush1.bf16.msra.mxu0 %v8406
      %8486 = vmatprep.subr.bf16.mxu0 %v8411
      %8487 = vmatpush1.bf16.msra.mxu0 %v8410
      %8488 = vmatprep.subr.bf16.mxu0 %v8415
      %8489 = vmatpush1.bf16.msra.mxu0 %v8414
      %8490 = vmatprep.subr.bf16.mxu0 %v8419
      %8491 = vmatpush1.bf16.msra.mxu0 %v8418
      %8492 = vmatprep.subr.bf16.mxu0 0
      %8493 = vmatpush1.bf16.msra.mxu0 0
      %8494 = vmatprep.subr.bf16.mxu0 0
      %8495 = vmatpush1.bf16.msra.mxu0 0
      %8496 = vmatprep.subr.bf16.mxu0 0
      %8497 = vmatpush1.bf16.msra.mxu0 0
      %8498 = vmatprep.subr.bf16.mxu0 0
      %8499 = vmatpush1.bf16.msra.mxu0 0
      %8500 = vmatprep.subr.bf16.mxu0 0
      %8501 = vmatpush1.bf16.msra.mxu0 0
      %8502 = vmatprep.subr.bf16.mxu0 0
      %8503 = vmatpush1.bf16.msra.mxu0 0
      %8504 = vmatprep.subr.bf16.mxu0 0
      %8505 = vmatpush1.bf16.msra.mxu0 0
      %8506 = vmatprep.subr.bf16.mxu0 0
      %8507 = vmatpush1.bf16.msra.mxu0 0
      %8508 = vmatprep.mubr.bf16.mxu0 0
      %8509 = vmatmul.mubr.bf16.gmra.mrb[0].mxu0 %v7996
      %v8510 = vpop.f32.mrb[0].mxu0
      %v8511 = vadd.f32 %v8462, %v8510
      %v8512 = vpop.f32.mrb[0].mxu0
      %v8513 = vadd.f32 %v8470, %v8512
      %v8514 = vpop.f32.mrb[0].mxu0
      %v8515 = vpop.f32.mrb[0].mxu0
      %8516 = vdwg.mxu0
      %8517 = vmatprep.subr.bf16.mxu0 %v8393
      %8518 = vmatpush1.bf16.msra.mxu0 %v8392
      %8519 = vmatprep.subr.bf16.mxu0 %v8397
      %8520 = vmatpush1.bf16.msra.mxu0 %v8396
      %8521 = vmatprep.subr.bf16.mxu0 %v8401
      %8522 = vmatpush1.bf16.msra.mxu0 %v8400
      %8523 = vmatprep.subr.bf16.mxu0 %v8405
      %8524 = vmatpush1.bf16.msra.mxu0 %v8404
      %8525 = vmatprep.subr.bf16.mxu0 %v8409
      %8526 = vmatpush1.bf16.msra.mxu0 %v8408
      %8527 = vmatprep.subr.bf16.mxu0 %v8413
      %8528 = vmatpush1.bf16.msra.mxu0 %v8412
      %8529 = vmatprep.subr.bf16.mxu0 %v8417
      %8530 = vmatpush1.bf16.msra.mxu0 %v8416
      %8531 = vmatprep.subr.bf16.mxu0 %v8421
      %8532 = vmatpush1.bf16.msra.mxu0 %v8420
      %8533 = vmatprep.subr.bf16.mxu0 0
      %8534 = vmatpush1.bf16.msra.mxu0 0
      %8535 = vmatprep.subr.bf16.mxu0 0
      %8536 = vmatpush1.bf16.msra.mxu0 0
      %8537 = vmatprep.subr.bf16.mxu0 0
      %8538 = vmatpush1.bf16.msra.mxu0 0
      %8539 = vmatprep.subr.bf16.mxu0 0
      %8540 = vmatpush1.bf16.msra.mxu0 0
      %8541 = vmatprep.subr.bf16.mxu0 0
      %8542 = vmatpush1.bf16.msra.mxu0 0
      %8543 = vmatprep.subr.bf16.mxu0 0
      %8544 = vmatpush1.bf16.msra.mxu0 0
      %8545 = vmatprep.subr.bf16.mxu0 0
      %8546 = vmatpush1.bf16.msra.mxu0 0
      %8547 = vmatprep.subr.bf16.mxu0 0
      %8548 = vmatpush1.bf16.msra.mxu0 0
      %8549 = vmatprep.mubr.bf16.mxu0 0
      %8550 = vmatmul.mubr.bf16.gmra.mrb[0].mxu0 %v7996
      %v8551 = vpop.f32.mrb[0].mxu0
      %v8552 = vadd.f32 %v8469, %v8551
      %v8553 = vpop.f32.mrb[0].mxu0
      %v8554 = vadd.f32 %v8471, %v8553
      %v8555 = vpop.f32.mrb[0].mxu0
      %v8556 = vpop.f32.mrb[0].mxu0
      %8557 = vdwg.mxu0
      %v8558 = vxor.u32 %v8511, 2147483648
      %v8559 = vmul.f32 %v8558, 1.442695
      %v8560 = vpow.pop %v8559
      %v8561 = vadd.f32 %v8560, 1.0
      %v8562 = vrcp.pop %v8561
      %v8563 = vmul.f32 1.0, %v8562
      %v8564 = vxor.u32 %v8513, 2147483648
      %v8565 = vmul.f32 %v8564, 1.442695
      %v8566 = vpow.pop %v8565
      %v8567 = vadd.f32 %v8566, 1.0
      %v8568 = vrcp.pop %v8567
      %v8569 = vmul.f32 1.0, %v8568
      %v8570 = vtanh.pop %v8552
      %v8571 = vxor.u32 %v8554, 2147483648
      %v8572 = vmul.f32 %v8571, 1.442695
      %v8573 = vpow.pop %v8572
      %v8574 = vadd.f32 %v8573, 1.0
      %v8575 = vrcp.pop %v8574
      %v8576 = vmul.f32 1.0, %v8575
      %v8577 = vmul.f32 %v8569, %v7993
      %v8578 = vmul.f32 %v8563, %v8570
      %v8579 = vadd.f32 %v8577, %v8578
      %v8580 = vtanh.pop %v8579
      %v8581 = vmul.f32 %v8576, %v8580
      %s8582 = sadd.s32 %s7994, 1
      %v8583 = vpack.c.bf16 %v8288, %v8288
      %v8584 = vpack.c.bf16 %v8581, %v8581
      %s8585 = smul.u32 %s8582, 4
      %s8586 = smul.addr %s8585, 2
      %s8587 = scalar_lea.vmem [#allocation2], %s8586
      %v8588 = vld [vmem:[%s8587] sm:$0xff]
      %v8590 = vcombine.high %v8588, %v8588
      %v8592 = vunpack.c.l.s4 1983009808
      %v8593 = vunpack.c.0.s8 %v8592
      %v8594 = vlaneseq
      %v8595 = vshrl.u32 %v8594, 7
      %v8596 = vsub.s32 %v8593, %v8595
      %v8597 = vrot.slane %v8588, %v8596
      %v8599 = vunpack.c.l.s4 1983009808
      %v8600 = vunpack.c.0.s8 %v8599
      %v8601 = vlaneseq
      %v8602 = vshrl.u32 %v8601, 7
      %v8603 = vsub.s32 %v8600, %v8602
      %v8604 = vrot.slane %v8590, %v8603
      %v8605 = vcombine.high %v8597, %v8597
      %v8606 = vcombine.high %v8604, %v8604
      %8611 = vmatprep.subr.bf16.mxu0 %v8098
      %8612 = vmatpush1.bf16.msra.mxu0 %v8097
      %8613 = vmatprep.subr.bf16.mxu0 %v8102
      %8614 = vmatpush1.bf16.msra.mxu0 %v8101
      %8615 = vmatprep.subr.bf16.mxu0 %v8106
      %8616 = vmatpush1.bf16.msra.mxu0 %v8105
      %8617 = vmatprep.subr.bf16.mxu0 %v8110
      %8618 = vmatpush1.bf16.msra.mxu0 %v8109
      %8619 = vmatprep.subr.bf16.mxu0 %v8114
      %8620 = vmatpush1.bf16.msra.mxu0 %v8113
      %8621 = vmatprep.subr.bf16.mxu0 %v8118
      %8622 = vmatpush1.bf16.msra.mxu0 %v8117
      %8623 = vmatprep.subr.bf16.mxu0 %v8122
      %8624 = vmatpush1.bf16.msra.mxu0 %v8121
      %8625 = vmatprep.subr.bf16.mxu0 %v8126
      %8626 = vmatpush1.bf16.msra.mxu0 %v8125
      %8627 = vmatprep.subr.bf16.mxu0 0
      %8628 = vmatpush1.bf16.msra.mxu0 0
      %8629 = vmatprep.subr.bf16.mxu0 0
      %8630 = vmatpush1.bf16.msra.mxu0 0
      %8631 = vmatprep.subr.bf16.mxu0 0
      %8632 = vmatpush1.bf16.msra.mxu0 0
      %8633 = vmatprep.subr.bf16.mxu0 0
      %8634 = vmatpush1.bf16.msra.mxu0 0
      %8635 = vmatprep.subr.bf16.mxu0 0
      %8636 = vmatpush1.bf16.msra.mxu0 0
      %8637 = vmatprep.subr.bf16.mxu0 0
      %8638 = vmatpush1.bf16.msra.mxu0 0
      %8639 = vmatprep.subr.bf16.mxu0 0
      %8640 = vmatpush1.bf16.msra.mxu0 0
      %8641 = vmatprep.subr.bf16.mxu0 0
      %8642 = vmatpush1.bf16.msra.mxu0 0
      %8643 = vmatprep.mubr.bf16.mxu0 0
      %8644 = vmatmul.mubr.bf16.gmra.mrb[0].mxu0 %v8583
      %v8645 = vpop.f32.mrb[0].mxu0
      %v8646 = vadd.f32 %v8597, %v8645
      %v8647 = vpop.f32.mrb[0].mxu0
      %v8648 = vadd.f32 %v8605, %v8647
      %v8649 = vpop.f32.mrb[0].mxu0
      %v8650 = vpop.f32.mrb[0].mxu0
      %8651 = vdwg.mxu0
      %8652 = vmatprep.subr.bf16.mxu0 %v8100
      %8653 = vmatpush1.bf16.msra.mxu0 %v8099
      %8654 = vmatprep.subr.bf16.mxu0 %v8104
      %8655 = vmatpush1.bf16.msra.mxu0 %v8103
      %8656 = vmatprep.subr.bf16.mxu0 %v8108
      %8657 = vmatpush1.bf16.msra.mxu0 %v8107
      %8658 = vmatprep.subr.bf16.mxu0 %v8112
      %8659 = vmatpush1.bf16.msra.mxu0 %v8111
      %8660 = vmatprep.subr.bf16.mxu0 %v8116
      %8661 = vmatpush1.bf16.msra.mxu0 %v8115
      %8662 = vmatprep.subr.bf16.mxu0 %v8120
      %8663 = vmatpush1.bf16.msra.mxu0 %v8119
      %8664 = vmatprep.subr.bf16.mxu0 %v8124
      %8665 = vmatpush1.bf16.msra.mxu0 %v8123
      %8666 = vmatprep.subr.bf16.mxu0 %v8128
      %8667 = vmatpush1.bf16.msra.mxu0 %v8127
      %8668 = vmatprep.subr.bf16.mxu0 0
      %8669 = vmatpush1.bf16.msra.mxu0 0
      %8670 = vmatprep.subr.bf16.mxu0 0
      %8671 = vmatpush1.bf16.msra.mxu0 0
      %8672 = vmatprep.subr.bf16.mxu0 0
      %8673 = vmatpush1.bf16.msra.mxu0 0
      %8674 = vmatprep.subr.bf16.mxu0 0
      %8675 = vmatpush1.bf16.msra.mxu0 0
      %8676 = vmatprep.subr.bf16.mxu0 0
      %8677 = vmatpush1.bf16.msra.mxu0 0
      %8678 = vmatprep.subr.bf16.mxu0 0
      %8679 = vmatpush1.bf16.msra.mxu0 0
      %8680 = vmatprep.subr.bf16.mxu0 0
      %8681 = vmatpush1.bf16.msra.mxu0 0
      %8682 = vmatprep.subr.bf16.mxu0 0
      %8683 = vmatpush1.bf16.msra.mxu0 0
      %8684 = vmatprep.mubr.bf16.mxu0 0
      %8685 = vmatmul.mubr.bf16.gmra.mrb[0].mxu0 %v8583
      %v8686 = vpop.f32.mrb[0].mxu0
      %v8687 = vadd.f32 %v8604, %v8686
      %v8688 = vpop.f32.mrb[0].mxu0
      %v8689 = vadd.f32 %v8606, %v8688
      %v8690 = vpop.f32.mrb[0].mxu0
      %v8691 = vpop.f32.mrb[0].mxu0
      %8692 = vdwg.mxu0
      %v8693 = vxor.u32 %v8646, 2147483648
      %v8694 = vmul.f32 %v8693, 1.442695
      %v8695 = vpow.pop %v8694
      %v8696 = vadd.f32 %v8695, 1.0
      %v8697 = vrcp.pop %v8696
      %v8698 = vmul.f32 1.0, %v8697
      %v8699 = vxor.u32 %v8648, 2147483648
      %v8700 = vmul.f32 %v8699, 1.442695
      %v8701 = vpow.pop %v8700
      %v8702 = vadd.f32 %v8701, 1.0
      %v8703 = vrcp.pop %v8702
      %v8704 = vmul.f32 1.0, %v8703
      %v8705 = vtanh.pop %v8687
      %v8706 = vxor.u32 %v8689, 2147483648
      %v8707 = vmul.f32 %v8706, 1.442695
      %v8708 = vpow.pop %v8707
      %v8709 = vadd.f32 %v8708, 1.0
      %v8710 = vrcp.pop %v8709
      %v8711 = vmul.f32 1.0, %v8710
      %v8712 = vmul.f32 %v8704, %v8286
      %v8713 = vmul.f32 %v8698, %v8705
      %v8714 = vadd.f32 %v8712, %v8713
      %v8715 = vtanh.pop %v8714
      %v8716 = vmul.f32 %v8711, %v8715
      %s8717 = ssub.s32 62, %s7994
      %s8718 = smul.u32 %s8717, 4
      %s8719 = smul.addr %s8718, 2
      %s8720 = scalar_lea.vmem [#allocation3], %s8719
      %v8721 = vld [vmem:[%s8720] sm:$0xff]
      %v8723 = vcombine.high %v8721, %v8721
      %v8725 = vunpack.c.l.s4 1983009808
      %v8726 = vunpack.c.0.s8 %v8725
      %v8727 = vlaneseq
      %v8728 = vshrl.u32 %v8727, 7
      %v8729 = vsub.s32 %v8726, %v8728
      %v8730 = vrot.slane %v8721, %v8729
      %v8732 = vunpack.c.l.s4 1983009808
      %v8733 = vunpack.c.0.s8 %v8732
      %v8734 = vlaneseq
      %v8735 = vshrl.u32 %v8734, 7
      %v8736 = vsub.s32 %v8733, %v8735
      %v8737 = vrot.slane %v8723, %v8736
      %v8738 = vcombine.high %v8730, %v8730
      %v8739 = vcombine.high %v8737, %v8737
      %8744 = vmatprep.subr.bf16.mxu0 %v8391
      %8745 = vmatpush1.bf16.msra.mxu0 %v8390
      %8746 = vmatprep.subr.bf16.mxu0 %v8395
      %8747 = vmatpush1.bf16.msra.mxu0 %v8394
      %8748 = vmatprep.subr.bf16.mxu0 %v8399
      %8749 = vmatpush1.bf16.msra.mxu0 %v8398
      %8750 = vmatprep.subr.bf16.mxu0 %v8403
      %8751 = vmatpush1.bf16.msra.mxu0 %v8402
      %8752 = vmatprep.subr.bf16.mxu0 %v8407
      %8753 = vmatpush1.bf16.msra.mxu0 %v8406
      %8754 = vmatprep.subr.bf16.mxu0 %v8411
      %8755 = vmatpush1.bf16.msra.mxu0 %v8410
      %8756 = vmatprep.subr.bf16.mxu0 %v8415
      %8757 = vmatpush1.bf16.msra.mxu0 %v8414
      %8758 = vmatprep.subr.bf16.mxu0 %v8419
      %8759 = vmatpush1.bf16.msra.mxu0 %v8418
      %8760 = vmatprep.subr.bf16.mxu0 0
      %8761 = vmatpush1.bf16.msra.mxu0 0
      %8762 = vmatprep.subr.bf16.mxu0 0
      %8763 = vmatpush1.bf16.msra.mxu0 0
      %8764 = vmatprep.subr.bf16.mxu0 0
      %8765 = vmatpush1.bf16.msra.mxu0 0
      %8766 = vmatprep.subr.bf16.mxu0 0
      %8767 = vmatpush1.bf16.msra.mxu0 0
      %8768 = vmatprep.subr.bf16.mxu0 0
      %8769 = vmatpush1.bf16.msra.mxu0 0
      %8770 = vmatprep.subr.bf16.mxu0 0
      %8771 = vmatpush1.bf16.msra.mxu0 0
      %8772 = vmatprep.subr.bf16.mxu0 0
      %8773 = vmatpush1.bf16.msra.mxu0 0
      %8774 = vmatprep.subr.bf16.mxu0 0
      %8775 = vmatpush1.bf16.msra.mxu0 0
      %8776 = vmatprep.mubr.bf16.mxu0 0
      %8777 = vmatmul.mubr.bf16.gmra.mrb[0].mxu0 %v8584
      %v8778 = vpop.f32.mrb[0].mxu0
      %v8779 = vadd.f32 %v8730, %v8778
      %v8780 = vpop.f32.mrb[0].mxu0
      %v8781 = vadd.f32 %v8738, %v8780
      %v8782 = vpop.f32.mrb[0].mxu0
      %v8783 = vpop.f32.mrb[0].mxu0
      %8784 = vdwg.mxu0
      %8785 = vmatprep.subr.bf16.mxu0 %v8393
      %8786 = vmatpush1.bf16.msra.mxu0 %v8392
      %8787 = vmatprep.subr.bf16.mxu0 %v8397
      %8788 = vmatpush1.bf16.msra.mxu0 %v8396
      %8789 = vmatprep.subr.bf16.mxu0 %v8401
      %8790 = vmatpush1.bf16.msra.mxu0 %v8400
      %8791 = vmatprep.subr.bf16.mxu0 %v8405
      %8792 = vmatpush1.bf16.msra.mxu0 %v8404
      %8793 = vmatprep.subr.bf16.mxu0 %v8409
      %8794 = vmatpush1.bf16.msra.mxu0 %v8408
      %8795 = vmatprep.subr.bf16.mxu0 %v8413
      %8796 = vmatpush1.bf16.msra.mxu0 %v8412
      %8797 = vmatprep.subr.bf16.mxu0 %v8417
      %8798 = vmatpush1.bf16.msra.mxu0 %v8416
      %8799 = vmatprep.subr.bf16.mxu0 %v8421
      %8800 = vmatpush1.bf16.msra.mxu0 %v8420
      %8801 = vmatprep.subr.bf16.mxu0 0
      %8802 = vmatpush1.bf16.msra.mxu0 0
      %8803 = vmatprep.subr.bf16.mxu0 0
      %8804 = vmatpush1.bf16.msra.mxu0 0
      %8805 = vmatprep.subr.bf16.mxu0 0
      %8806 = vmatpush1.bf16.msra.mxu0 0
      %8807 = vmatprep.subr.bf16.mxu0 0
      %8808 = vmatpush1.bf16.msra.mxu0 0
      %8809 = vmatprep.subr.bf16.mxu0 0
      %8810 = vmatpush1.bf16.msra.mxu0 0
      %8811 = vmatprep.subr.bf16.mxu0 0
      %8812 = vmatpush1.bf16.msra.mxu0 0
      %8813 = vmatprep.subr.bf16.mxu0 0
      %8814 = vmatpush1.bf16.msra.mxu0 0
      %8815 = vmatprep.subr.bf16.mxu0 0
      %8816 = vmatpush1.bf16.msra.mxu0 0
      %8817 = vmatprep.mubr.bf16.mxu0 0
      %8818 = vmatmul.mubr.bf16.gmra.mrb[0].mxu0 %v8584
      %v8819 = vpop.f32.mrb[0].mxu0
      %v8820 = vadd.f32 %v8737, %v8819
      %v8821 = vpop.f32.mrb[0].mxu0
      %v8822 = vadd.f32 %v8739, %v8821
      %v8823 = vpop.f32.mrb[0].mxu0
      %v8824 = vpop.f32.mrb[0].mxu0
      %8825 = vdwg.mxu0
      %v8826 = vxor.u32 %v8779, 2147483648
      %v8827 = vmul.f32 %v8826, 1.442695
      %v8828 = vpow.pop %v8827
      %v8829 = vadd.f32 %v8828, 1.0
      %v8830 = vrcp.pop %v8829
      %v8831 = vmul.f32 1.0, %v8830
      %v8832 = vxor.u32 %v8781, 2147483648
      %v8833 = vmul.f32 %v8832, 1.442695
      %v8834 = vpow.pop %v8833
      %v8835 = vadd.f32 %v8834, 1.0
      %v8836 = vrcp.pop %v8835
      %v8837 = vmul.f32 1.0, %v8836
      %v8838 = vtanh.pop %v8820
      %v8839 = vxor.u32 %v8822, 2147483648
      %v8840 = vmul.f32 %v8839, 1.442695
      %v8841 = vpow.pop %v8840
      %v8842 = vadd.f32 %v8841, 1.0
      %v8843 = vrcp.pop %v8842
      %v8844 = vmul.f32 1.0, %v8843
      %v8845 = vmul.f32 %v8837, %v8579
      %v8846 = vmul.f32 %v8831, %v8838
      %v8847 = vadd.f32 %v8845, %v8846
      %v8848 = vtanh.pop %v8847
      %v8849 = vmul.f32 %v8844, %v8848
      %s8850 = sadd.s32 %s7994, 2
      %v8851 = vpack.c.bf16 %v8716, %v8716
      %v8852 = vpack.c.bf16 %v8849, %v8849
      %s8853 = smul.u32 %s8850, 4
      %s8854 = smul.addr %s8853, 2
      %s8855 = scalar_lea.vmem [#allocation2], %s8854
      %v8856 = vld [vmem:[%s8855] sm:$0xff]
      %v8858 = vcombine.high %v8856, %v8856
      %v8860 = vunpack.c.l.s4 1983009808
      %v8861 = vunpack.c.0.s8 %v8860
      %v8862 = vlaneseq
      %v8863 = vshrl.u32 %v8862, 7
      %v8864 = vsub.s32 %v8861, %v8863
      %v8865 = vrot.slane %v8856, %v8864
      %v8867 = vunpack.c.l.s4 1983009808
      %v8868 = vunpack.c.0.s8 %v8867
      %v8869 = vlaneseq
      %v8870 = vshrl.u32 %v8869, 7
      %v8871 = vsub.s32 %v8868, %v8870
      %v8872 = vrot.slane %v8858, %v8871
      %v8873 = vcombine.high %v8865, %v8865
      %v8874 = vcombine.high %v8872, %v8872
      %8879 = vmatprep.subr.bf16.mxu0 %v8098
      %8880 = vmatpush1.bf16.msra.mxu0 %v8097
      %8881 = vmatprep.subr.bf16.mxu0 %v8102
      %8882 = vmatpush1.bf16.msra.mxu0 %v8101
      %8883 = vmatprep.subr.bf16.mxu0 %v8106
      %8884 = vmatpush1.bf16.msra.mxu0 %v8105
      %8885 = vmatprep.subr.bf16.mxu0 %v8110
      %8886 = vmatpush1.bf16.msra.mxu0 %v8109
      %8887 = vmatprep.subr.bf16.mxu0 %v8114
      %8888 = vmatpush1.bf16.msra.mxu0 %v8113
      %8889 = vmatprep.subr.bf16.mxu0 %v8118
      %8890 = vmatpush1.bf16.msra.mxu0 %v8117
      %8891 = vmatprep.subr.bf16.mxu0 %v8122
      %8892 = vmatpush1.bf16.msra.mxu0 %v8121
      %8893 = vmatprep.subr.bf16.mxu0 %v8126
      %8894 = vmatpush1.bf16.msra.mxu0 %v8125
      %8895 = vmatprep.subr.bf16.mxu0 0
      %8896 = vmatpush1.bf16.msra.mxu0 0
      %8897 = vmatprep.subr.bf16.mxu0 0
      %8898 = vmatpush1.bf16.msra.mxu0 0
      %8899 = vmatprep.subr.bf16.mxu0 0
      %8900 = vmatpush1.bf16.msra.mxu0 0
      %8901 = vmatprep.subr.bf16.mxu0 0
      %8902 = vmatpush1.bf16.msra.mxu0 0
      %8903 = vmatprep.subr.bf16.mxu0 0
      %8904 = vmatpush1.bf16.msra.mxu0 0
      %8905 = vmatprep.subr.bf16.mxu0 0
      %8906 = vmatpush1.bf16.msra.mxu0 0
      %8907 = vmatprep.subr.bf16.mxu0 0
      %8908 = vmatpush1.bf16.msra.mxu0 0
      %8909 = vmatprep.subr.bf16.mxu0 0
      %8910 = vmatpush1.bf16.msra.mxu0 0
      %8911 = vmatprep.mubr.bf16.mxu0 0
      %8912 = vmatmul.mubr.bf16.gmra.mrb[0].mxu0 %v8851
      %v8913 = vpop.f32.mrb[0].mxu0
      %v8914 = vadd.f32 %v8865, %v8913
      %v8915 = vpop.f32.mrb[0].mxu0
      %v8916 = vadd.f32 %v8873, %v8915
      %v8917 = vpop.f32.mrb[0].mxu0
      %v8918 = vpop.f32.mrb[0].mxu0
      %8919 = vdwg.mxu0
      %8920 = vmatprep.subr.bf16.mxu0 %v8100
      %8921 = vmatpush1.bf16.msra.mxu0 %v8099
      %8922 = vmatprep.subr.bf16.mxu0 %v8104
      %8923 = vmatpush1.bf16.msra.mxu0 %v8103
      %8924 = vmatprep.subr.bf16.mxu0 %v8108
      %8925 = vmatpush1.bf16.msra.mxu0 %v8107
      %8926 = vmatprep.subr.bf16.mxu0 %v8112
      %8927 = vmatpush1.bf16.msra.mxu0 %v8111
      %8928 = vmatprep.subr.bf16.mxu0 %v8116
      %8929 = vmatpush1.bf16.msra.mxu0 %v8115
      %8930 = vmatprep.subr.bf16.mxu0 %v8120
      %8931 = vmatpush1.bf16.msra.mxu0 %v8119
      %8932 = vmatprep.subr.bf16.mxu0 %v8124
      %8933 = vmatpush1.bf16.msra.mxu0 %v8123
      %8934 = vmatprep.subr.bf16.mxu0 %v8128
      %8935 = vmatpush1.bf16.msra.mxu0 %v8127
      %8936 = vmatprep.subr.bf16.mxu0 0
      %8937 = vmatpush1.bf16.msra.mxu0 0
      %8938 = vmatprep.subr.bf16.mxu0 0
      %8939 = vmatpush1.bf16.msra.mxu0 0
      %8940 = vmatprep.subr.bf16.mxu0 0
      %8941 = vmatpush1.bf16.msra.mxu0 0
      %8942 = vmatprep.subr.bf16.mxu0 0
      %8943 = vmatpush1.bf16.msra.mxu0 0
      %8944 = vmatprep.subr.bf16.mxu0 0
      %8945 = vmatpush1.bf16.msra.mxu0 0
      %8946 = vmatprep.subr.bf16.mxu0 0
      %8947 = vmatpush1.bf16.msra.mxu0 0
      %8948 = vmatprep.subr.bf16.mxu0 0
      %8949 = vmatpush1.bf16.msra.mxu0 0
      %8950 = vmatprep.subr.bf16.mxu0 0
      %8951 = vmatpush1.bf16.msra.mxu0 0
      %8952 = vmatprep.mubr.bf16.mxu0 0
      %8953 = vmatmul.mubr.bf16.gmra.mrb[0].mxu0 %v8851
      %v8954 = vpop.f32.mrb[0].mxu0
      %v8955 = vadd.f32 %v8872, %v8954
      %v8956 = vpop.f32.mrb[0].mxu0
      %v8957 = vadd.f32 %v8874, %v8956
      %v8958 = vpop.f32.mrb[0].mxu0
      %v8959 = vpop.f32.mrb[0].mxu0
      %8960 = vdwg.mxu0
      %v8961 = vxor.u32 %v8914, 2147483648
      %v8962 = vmul.f32 %v8961, 1.442695
      %v8963 = vpow.pop %v8962
      %v8964 = vadd.f32 %v8963, 1.0
      %v8965 = vrcp.pop %v8964
      %v8966 = vmul.f32 1.0, %v8965
      %v8967 = vxor.u32 %v8916, 2147483648
      %v8968 = vmul.f32 %v8967, 1.442695
      %v8969 = vpow.pop %v8968
      %v8970 = vadd.f32 %v8969, 1.0
      %v8971 = vrcp.pop %v8970
      %v8972 = vmul.f32 1.0, %v8971
      %v8973 = vtanh.pop %v8955
      %v8974 = vxor.u32 %v8957, 2147483648
      %v8975 = vmul.f32 %v8974, 1.442695
      %v8976 = vpow.pop %v8975
      %v8977 = vadd.f32 %v8976, 1.0
      %v8978 = vrcp.pop %v8977
      %v8979 = vmul.f32 1.0, %v8978
      %v8980 = vmul.f32 %v8972, %v8714
      %v8981 = vmul.f32 %v8966, %v8973
      %v8982 = vadd.f32 %v8980, %v8981
      %v8983 = vtanh.pop %v8982
      %v8984 = vmul.f32 %v8979, %v8983
      %s8985 = ssub.s32 61, %s7994
      %s8986 = smul.u32 %s8985, 4
      %s8987 = smul.addr %s8986, 2
      %s8988 = scalar_lea.vmem [#allocation3], %s8987
      %v8989 = vld [vmem:[%s8988] sm:$0xff]
      %v8991 = vcombine.high %v8989, %v8989
      %v8993 = vunpack.c.l.s4 1983009808
      %v8994 = vunpack.c.0.s8 %v8993
      %v8995 = vlaneseq
      %v8996 = vshrl.u32 %v8995, 7
      %v8997 = vsub.s32 %v8994, %v8996
      %v8998 = vrot.slane %v8989, %v8997
      %v9000 = vunpack.c.l.s4 1983009808
      %v9001 = vunpack.c.0.s8 %v9000
      %v9002 = vlaneseq
      %v9003 = vshrl.u32 %v9002, 7
      %v9004 = vsub.s32 %v9001, %v9003
      %v9005 = vrot.slane %v8991, %v9004
      %v9006 = vcombine.high %v8998, %v8998
      %v9007 = vcombine.high %v9005, %v9005
      %9012 = vmatprep.subr.bf16.mxu0 %v8391
      %9013 = vmatpush1.bf16.msra.mxu0 %v8390
      %9014 = vmatprep.subr.bf16.mxu0 %v8395
      %9015 = vmatpush1.bf16.msra.mxu0 %v8394
      %9016 = vmatprep.subr.bf16.mxu0 %v8399
      %9017 = vmatpush1.bf16.msra.mxu0 %v8398
      %9018 = vmatprep.subr.bf16.mxu0 %v8403
      %9019 = vmatpush1.bf16.msra.mxu0 %v8402
      %9020 = vmatprep.subr.bf16.mxu0 %v8407
      %9021 = vmatpush1.bf16.msra.mxu0 %v8406
      %9022 = vmatprep.subr.bf16.mxu0 %v8411
      %9023 = vmatpush1.bf16.msra.mxu0 %v8410
      %9024 = vmatprep.subr.bf16.mxu0 %v8415
      %9025 = vmatpush1.bf16.msra.mxu0 %v8414
      %9026 = vmatprep.subr.bf16.mxu0 %v8419
      %9027 = vmatpush1.bf16.msra.mxu0 %v8418
      %9028 = vmatprep.subr.bf16.mxu0 0
      %9029 = vmatpush1.bf16.msra.mxu0 0
      %9030 = vmatprep.subr.bf16.mxu0 0
      %9031 = vmatpush1.bf16.msra.mxu0 0
      %9032 = vmatprep.subr.bf16.mxu0 0
      %9033 = vmatpush1.bf16.msra.mxu0 0
      %9034 = vmatprep.subr.bf16.mxu0 0
      %9035 = vmatpush1.bf16.msra.mxu0 0
      %9036 = vmatprep.subr.bf16.mxu0 0
      %9037 = vmatpush1.bf16.msra.mxu0 0
      %9038 = vmatprep.subr.bf16.mxu0 0
      %9039 = vmatpush1.bf16.msra.mxu0 0
      %9040 = vmatprep.subr.bf16.mxu0 0
      %9041 = vmatpush1.bf16.msra.mxu0 0
      %9042 = vmatprep.subr.bf16.mxu0 0
      %9043 = vmatpush1.bf16.msra.mxu0 0
      %9044 = vmatprep.mubr.bf16.mxu0 0
      %9045 = vmatmul.mubr.bf16.gmra.mrb[0].mxu0 %v8852
      %v9046 = vpop.f32.mrb[0].mxu0
      %v9047 = vadd.f32 %v8998, %v9046
      %v9048 = vpop.f32.mrb[0].mxu0
      %v9049 = vadd.f32 %v9006, %v9048
      %v9050 = vpop.f32.mrb[0].mxu0
      %v9051 = vpop.f32.mrb[0].mxu0
      %9052 = vdwg.mxu0
      %9053 = vmatprep.subr.bf16.mxu0 %v8393
      %9054 = vmatpush1.bf16.msra.mxu0 %v8392
      %9055 = vmatprep.subr.bf16.mxu0 %v8397
      %9056 = vmatpush1.bf16.msra.mxu0 %v8396
      %9057 = vmatprep.subr.bf16.mxu0 %v8401
      %9058 = vmatpush1.bf16.msra.mxu0 %v8400
      %9059 = vmatprep.subr.bf16.mxu0 %v8405
      %9060 = vmatpush1.bf16.msra.mxu0 %v8404
      %9061 = vmatprep.subr.bf16.mxu0 %v8409
      %9062 = vmatpush1.bf16.msra.mxu0 %v8408
      %9063 = vmatprep.subr.bf16.mxu0 %v8413
      %9064 = vmatpush1.bf16.msra.mxu0 %v8412
      %9065 = vmatprep.subr.bf16.mxu0 %v8417
      %9066 = vmatpush1.bf16.msra.mxu0 %v8416
      %9067 = vmatprep.subr.bf16.mxu0 %v8421
      %9068 = vmatpush1.bf16.msra.mxu0 %v8420
      %9069 = vmatprep.subr.bf16.mxu0 0
      %9070 = vmatpush1.bf16.msra.mxu0 0
      %9071 = vmatprep.subr.bf16.mxu0 0
      %9072 = vmatpush1.bf16.msra.mxu0 0
      %9073 = vmatprep.subr.bf16.mxu0 0
      %9074 = vmatpush1.bf16.msra.mxu0 0
      %9075 = vmatprep.subr.bf16.mxu0 0
      %9076 = vmatpush1.bf16.msra.mxu0 0
      %9077 = vmatprep.subr.bf16.mxu0 0
      %9078 = vmatpush1.bf16.msra.mxu0 0
      %9079 = vmatprep.subr.bf16.mxu0 0
      %9080 = vmatpush1.bf16.msra.mxu0 0
      %9081 = vmatprep.subr.bf16.mxu0 0
      %9082 = vmatpush1.bf16.msra.mxu0 0
      %9083 = vmatprep.subr.bf16.mxu0 0
      %9084 = vmatpush1.bf16.msra.mxu0 0
      %9085 = vmatprep.mubr.bf16.mxu0 0
      %9086 = vmatmul.mubr.bf16.gmra.mrb[0].mxu0 %v8852
      %v9087 = vpop.f32.mrb[0].mxu0
      %v9088 = vadd.f32 %v9005, %v9087
      %v9089 = vpop.f32.mrb[0].mxu0
      %v9090 = vadd.f32 %v9007, %v9089
      %v9091 = vpop.f32.mrb[0].mxu0
      %v9092 = vpop.f32.mrb[0].mxu0
      %9093 = vdwg.mxu0
      %v9094 = vxor.u32 %v9047, 2147483648
      %v9095 = vmul.f32 %v9094, 1.442695
      %v9096 = vpow.pop %v9095
      %v9097 = vadd.f32 %v9096, 1.0
      %v9098 = vrcp.pop %v9097
      %v9099 = vmul.f32 1.0, %v9098
      %v9100 = vxor.u32 %v9049, 2147483648
      %v9101 = vmul.f32 %v9100, 1.442695
      %v9102 = vpow.pop %v9101
      %v9103 = vadd.f32 %v9102, 1.0
      %v9104 = vrcp.pop %v9103
      %v9105 = vmul.f32 1.0, %v9104
      %v9106 = vtanh.pop %v9088
      %v9107 = vxor.u32 %v9090, 2147483648
      %v9108 = vmul.f32 %v9107, 1.442695
      %v9109 = vpow.pop %v9108
      %v9110 = vadd.f32 %v9109, 1.0
      %v9111 = vrcp.pop %v9110
      %v9112 = vmul.f32 1.0, %v9111
      %v9113 = vmul.f32 %v9105, %v8847
      %v9114 = vmul.f32 %v9099, %v9106
      %v9115 = vadd.f32 %v9113, %v9114
      %v9116 = vtanh.pop %v9115
      %v9117 = vmul.f32 %v9112, %v9116
      %s9118 = sadd.s32 %s7994, 3
      %v9119 = vpack.c.bf16 %v8984, %v8984
      %v9120 = vpack.c.bf16 %v9117, %v9117
      %s9121 = smul.u32 %s9118, 4
      %s9122 = smul.addr %s9121, 2
      %s9123 = scalar_lea.vmem [#allocation2], %s9122
      %v9124 = vld [vmem:[%s9123] sm:$0xff]
      %v9126 = vcombine.high %v9124, %v9124
      %v9128 = vunpack.c.l.s4 1983009808
      %v9129 = vunpack.c.0.s8 %v9128
      %v9130 = vlaneseq
      %v9131 = vshrl.u32 %v9130, 7
      %v9132 = vsub.s32 %v9129, %v9131
      %v9133 = vrot.slane %v9124, %v9132
      %v9135 = vunpack.c.l.s4 1983009808
      %v9136 = vunpack.c.0.s8 %v9135
      %v9137 = vlaneseq
      %v9138 = vshrl.u32 %v9137, 7
      %v9139 = vsub.s32 %v9136, %v9138
      %v9140 = vrot.slane %v9126, %v9139
      %v9141 = vcombine.high %v9133, %v9133
      %v9142 = vcombine.high %v9140, %v9140
      %9147 = vmatprep.subr.bf16.mxu0 %v8098
      %9148 = vmatpush1.bf16.msra.mxu0 %v8097
      %9149 = vmatprep.subr.bf16.mxu0 %v8102
      %9150 = vmatpush1.bf16.msra.mxu0 %v8101
      %9151 = vmatprep.subr.bf16.mxu0 %v8106
      %9152 = vmatpush1.bf16.msra.mxu0 %v8105
      %9153 = vmatprep.subr.bf16.mxu0 %v8110
      %9154 = vmatpush1.bf16.msra.mxu0 %v8109
      %9155 = vmatprep.subr.bf16.mxu0 %v8114
      %9156 = vmatpush1.bf16.msra.mxu0 %v8113
      %9157 = vmatprep.subr.bf16.mxu0 %v8118
      %9158 = vmatpush1.bf16.msra.mxu0 %v8117
      %9159 = vmatprep.subr.bf16.mxu0 %v8122
      %9160 = vmatpush1.bf16.msra.mxu0 %v8121
      %9161 = vmatprep.subr.bf16.mxu0 %v8126
      %9162 = vmatpush1.bf16.msra.mxu0 %v8125
      %9163 = vmatprep.subr.bf16.mxu0 0
      %9164 = vmatpush1.bf16.msra.mxu0 0
      %9165 = vmatprep.subr.bf16.mxu0 0
      %9166 = vmatpush1.bf16.msra.mxu0 0
      %9167 = vmatprep.subr.bf16.mxu0 0
      %9168 = vmatpush1.bf16.msra.mxu0 0
      %9169 = vmatprep.subr.bf16.mxu0 0
      %9170 = vmatpush1.bf16.msra.mxu0 0
      %9171 = vmatprep.subr.bf16.mxu0 0
      %9172 = vmatpush1.bf16.msra.mxu0 0
      %9173 = vmatprep.subr.bf16.mxu0 0
      %9174 = vmatpush1.bf16.msra.mxu0 0
      %9175 = vmatprep.subr.bf16.mxu0 0
      %9176 = vmatpush1.bf16.msra.mxu0 0
      %9177 = vmatprep.subr.bf16.mxu0 0
      %9178 = vmatpush1.bf16.msra.mxu0 0
      %9179 = vmatprep.mubr.bf16.mxu0 0
      %9180 = vmatmul.mubr.bf16.gmra.mrb[0].mxu0 %v9119
      %v9181 = vpop.f32.mrb[0].mxu0
      %v9182 = vadd.f32 %v9133, %v9181
      %v9183 = vpop.f32.mrb[0].mxu0
      %v9184 = vadd.f32 %v9141, %v9183
      %v9185 = vpop.f32.mrb[0].mxu0
      %v9186 = vpop.f32.mrb[0].mxu0
      %9187 = vdwg.mxu0
      %9188 = vmatprep.subr.bf16.mxu0 %v8100
      %9189 = vmatpush1.bf16.msra.mxu0 %v8099
      %9190 = vmatprep.subr.bf16.mxu0 %v8104
      %9191 = vmatpush1.bf16.msra.mxu0 %v8103
      %9192 = vmatprep.subr.bf16.mxu0 %v8108
      %9193 = vmatpush1.bf16.msra.mxu0 %v8107
      %9194 = vmatprep.subr.bf16.mxu0 %v8112
      %9195 = vmatpush1.bf16.msra.mxu0 %v8111
      %9196 = vmatprep.subr.bf16.mxu0 %v8116
      %9197 = vmatpush1.bf16.msra.mxu0 %v8115
      %9198 = vmatprep.subr.bf16.mxu0 %v8120
      %9199 = vmatpush1.bf16.msra.mxu0 %v8119
      %9200 = vmatprep.subr.bf16.mxu0 %v8124
      %9201 = vmatpush1.bf16.msra.mxu0 %v8123
      %9202 = vmatprep.subr.bf16.mxu0 %v8128
      %9203 = vmatpush1.bf16.msra.mxu0 %v8127
      %9204 = vmatprep.subr.bf16.mxu0 0
      %9205 = vmatpush1.bf16.msra.mxu0 0
      %9206 = vmatprep.subr.bf16.mxu0 0
      %9207 = vmatpush1.bf16.msra.mxu0 0
      %9208 = vmatprep.subr.bf16.mxu0 0
      %9209 = vmatpush1.bf16.msra.mxu0 0
      %9210 = vmatprep.subr.bf16.mxu0 0
      %9211 = vmatpush1.bf16.msra.mxu0 0
      %9212 = vmatprep.subr.bf16.mxu0 0
      %9213 = vmatpush1.bf16.msra.mxu0 0
      %9214 = vmatprep.subr.bf16.mxu0 0
      %9215 = vmatpush1.bf16.msra.mxu0 0
      %9216 = vmatprep.subr.bf16.mxu0 0
      %9217 = vmatpush1.bf16.msra.mxu0 0
      %9218 = vmatprep.subr.bf16.mxu0 0
      %9219 = vmatpush1.bf16.msra.mxu0 0
      %9220 = vmatprep.mubr.bf16.mxu0 0
      %9221 = vmatmul.mubr.bf16.gmra.mrb[0].mxu0 %v9119
      %v9222 = vpop.f32.mrb[0].mxu0
      %v9223 = vadd.f32 %v9140, %v9222
      %v9224 = vpop.f32.mrb[0].mxu0
      %v9225 = vadd.f32 %v9142, %v9224
      %v9226 = vpop.f32.mrb[0].mxu0
      %v9227 = vpop.f32.mrb[0].mxu0
      %9228 = vdwg.mxu0
      %v9229 = vxor.u32 %v9182, 2147483648
      %v9230 = vmul.f32 %v9229, 1.442695
      %v9231 = vpow.pop %v9230
      %v9232 = vadd.f32 %v9231, 1.0
      %v9233 = vrcp.pop %v9232
      %v9234 = vmul.f32 1.0, %v9233
      %v9235 = vxor.u32 %v9184, 2147483648
      %v9236 = vmul.f32 %v9235, 1.442695
      %v9237 = vpow.pop %v9236
      %v9238 = vadd.f32 %v9237, 1.0
      %v9239 = vrcp.pop %v9238
      %v9240 = vmul.f32 1.0, %v9239
      %v9241 = vtanh.pop %v9223
      %v9242 = vxor.u32 %v9225, 2147483648
      %v9243 = vmul.f32 %v9242, 1.442695
      %v9244 = vpow.pop %v9243
      %v9245 = vadd.f32 %v9244, 1.0
      %v9246 = vrcp.pop %v9245
      %v9247 = vmul.f32 1.0, %v9246
      %v9248 = vmul.f32 %v9240, %v8982
      %v9249 = vmul.f32 %v9234, %v9241
      %v9250 = vadd.f32 %v9248, %v9249
      %v9251 = vtanh.pop %v9250
      %v9252 = vmul.f32 %v9247, %v9251
      %s9253 = ssub.s32 60, %s7994
      %s9254 = smul.u32 %s9253, 4
      %s9255 = smul.addr %s9254, 2
      %s9256 = scalar_lea.vmem [#allocation3], %s9255
      %v9257 = vld [vmem:[%s9256] sm:$0xff]
      %v9259 = vcombine.high %v9257, %v9257
      %v9261 = vunpack.c.l.s4 1983009808
      %v9262 = vunpack.c.0.s8 %v9261
      %v9263 = vlaneseq
      %v9264 = vshrl.u32 %v9263, 7
      %v9265 = vsub.s32 %v9262, %v9264
      %v9266 = vrot.slane %v9257, %v9265
      %v9268 = vunpack.c.l.s4 1983009808
      %v9269 = vunpack.c.0.s8 %v9268
      %v9270 = vlaneseq
      %v9271 = vshrl.u32 %v9270, 7
      %v9272 = vsub.s32 %v9269, %v9271
      %v9273 = vrot.slane %v9259, %v9272
      %v9274 = vcombine.high %v9266, %v9266
      %v9275 = vcombine.high %v9273, %v9273
      %9280 = vmatprep.subr.bf16.mxu0 %v8391
      %9281 = vmatpush1.bf16.msra.mxu0 %v8390
      %9282 = vmatprep.subr.bf16.mxu0 %v8395
      %9283 = vmatpush1.bf16.msra.mxu0 %v8394
      %9284 = vmatprep.subr.bf16.mxu0 %v8399
      %9285 = vmatpush1.bf16.msra.mxu0 %v8398
      %9286 = vmatprep.subr.bf16.mxu0 %v8403
      %9287 = vmatpush1.bf16.msra.mxu0 %v8402
      %9288 = vmatprep.subr.bf16.mxu0 %v8407
      %9289 = vmatpush1.bf16.msra.mxu0 %v8406
      %9290 = vmatprep.subr.bf16.mxu0 %v8411
      %9291 = vmatpush1.bf16.msra.mxu0 %v8410
      %9292 = vmatprep.subr.bf16.mxu0 %v8415
      %9293 = vmatpush1.bf16.msra.mxu0 %v8414
      %9294 = vmatprep.subr.bf16.mxu0 %v8419
      %9295 = vmatpush1.bf16.msra.mxu0 %v8418
      %9296 = vmatprep.subr.bf16.mxu0 0
      %9297 = vmatpush1.bf16.msra.mxu0 0
      %9298 = vmatprep.subr.bf16.mxu0 0
      %9299 = vmatpush1.bf16.msra.mxu0 0
      %9300 = vmatprep.subr.bf16.mxu0 0
      %9301 = vmatpush1.bf16.msra.mxu0 0
      %9302 = vmatprep.subr.bf16.mxu0 0
      %9303 = vmatpush1.bf16.msra.mxu0 0
      %9304 = vmatprep.subr.bf16.mxu0 0
      %9305 = vmatpush1.bf16.msra.mxu0 0
      %9306 = vmatprep.subr.bf16.mxu0 0
      %9307 = vmatpush1.bf16.msra.mxu0 0
      %9308 = vmatprep.subr.bf16.mxu0 0
      %9309 = vmatpush1.bf16.msra.mxu0 0
      %9310 = vmatprep.subr.bf16.mxu0 0
      %9311 = vmatpush1.bf16.msra.mxu0 0
      %9312 = vmatprep.mubr.bf16.mxu0 0
      %9313 = vmatmul.mubr.bf16.gmra.mrb[0].mxu0 %v9120
      %v9314 = vpop.f32.mrb[0].mxu0
      %v9315 = vadd.f32 %v9266, %v9314
      %v9316 = vpop.f32.mrb[0].mxu0
      %v9317 = vadd.f32 %v9274, %v9316
      %v9318 = vpop.f32.mrb[0].mxu0
      %v9319 = vpop.f32.mrb[0].mxu0
      %9320 = vdwg.mxu0
      %9321 = vmatprep.subr.bf16.mxu0 %v8393
      %9322 = vmatpush1.bf16.msra.mxu0 %v8392
      %9323 = vmatprep.subr.bf16.mxu0 %v8397
      %9324 = vmatpush1.bf16.msra.mxu0 %v8396
      %9325 = vmatprep.subr.bf16.mxu0 %v8401
      %9326 = vmatpush1.bf16.msra.mxu0 %v8400
      %9327 = vmatprep.subr.bf16.mxu0 %v8405
      %9328 = vmatpush1.bf16.msra.mxu0 %v8404
      %9329 = vmatprep.subr.bf16.mxu0 %v8409
      %9330 = vmatpush1.bf16.msra.mxu0 %v8408
      %9331 = vmatprep.subr.bf16.mxu0 %v8413
      %9332 = vmatpush1.bf16.msra.mxu0 %v8412
      %9333 = vmatprep.subr.bf16.mxu0 %v8417
      %9334 = vmatpush1.bf16.msra.mxu0 %v8416
      %9335 = vmatprep.subr.bf16.mxu0 %v8421
      %9336 = vmatpush1.bf16.msra.mxu0 %v8420
      %9337 = vmatprep.subr.bf16.mxu0 0
      %9338 = vmatpush1.bf16.msra.mxu0 0
      %9339 = vmatprep.subr.bf16.mxu0 0
      %9340 = vmatpush1.bf16.msra.mxu0 0
      %9341 = vmatprep.subr.bf16.mxu0 0
      %9342 = vmatpush1.bf16.msra.mxu0 0
      %9343 = vmatprep.subr.bf16.mxu0 0
      %9344 = vmatpush1.bf16.msra.mxu0 0
      %9345 = vmatprep.subr.bf16.mxu0 0
      %9346 = vmatpush1.bf16.msra.mxu0 0
      %9347 = vmatprep.subr.bf16.mxu0 0
      %9348 = vmatpush1.bf16.msra.mxu0 0
      %9349 = vmatprep.subr.bf16.mxu0 0
      %9350 = vmatpush1.bf16.msra.mxu0 0
      %9351 = vmatprep.subr.bf16.mxu0 0
      %9352 = vmatpush1.bf16.msra.mxu0 0
      %9353 = vmatprep.mubr.bf16.mxu0 0
      %9354 = vmatmul.mubr.bf16.gmra.mrb[0].mxu0 %v9120
      %v9355 = vpop.f32.mrb[0].mxu0
      %v9356 = vadd.f32 %v9273, %v9355
      %v9357 = vpop.f32.mrb[0].mxu0
      %v9358 = vadd.f32 %v9275, %v9357
      %v9359 = vpop.f32.mrb[0].mxu0
      %v9360 = vpop.f32.mrb[0].mxu0
      %9361 = vdwg.mxu0
      %v9362 = vxor.u32 %v9315, 2147483648
      %v9363 = vmul.f32 %v9362, 1.442695
      %v9364 = vpow.pop %v9363
      %v9365 = vadd.f32 %v9364, 1.0
      %v9366 = vrcp.pop %v9365
      %v9367 = vmul.f32 1.0, %v9366
      %v9368 = vxor.u32 %v9317, 2147483648
      %v9369 = vmul.f32 %v9368, 1.442695
      %v9370 = vpow.pop %v9369
      %v9371 = vadd.f32 %v9370, 1.0
      %v9372 = vrcp.pop %v9371
      %v9373 = vmul.f32 1.0, %v9372
      %v9374 = vtanh.pop %v9356
      %v9375 = vxor.u32 %v9358, 2147483648
      %v9376 = vmul.f32 %v9375, 1.442695
      %v9377 = vpow.pop %v9376
      %v9378 = vadd.f32 %v9377, 1.0
      %v9379 = vrcp.pop %v9378
      %v9380 = vmul.f32 1.0, %v9379
      %v9381 = vmul.f32 %v9373, %v9115
      %v9382 = vmul.f32 %v9367, %v9374
      %v9383 = vadd.f32 %v9381, %v9382
      %v9384 = vtanh.pop %v9383
      %v9385 = vmul.f32 %v9380, %v9384
    $region42: #{model_vad_forward.5} parent=1 // loop_footer
      %s7989 = sadd.s32 1, %s7985
    $region43: #{model_vad_forward.5} parent=1 // loop_footer_branch
      %7984 = sbr.rel target = $region39
    $region44: #{model_vad_forward.5} parent=1 // loop_exit
      _
    %v9386 = vld [vmem:[%s7] sm:$0xff]
    %v9387 = vld [vmem:[%s7 + $0x8] sm:$0xff]
    %v9388 = vld [vmem:[%s7 + $0x10] sm:$0xff]
    %v9389 = vld [vmem:[%s7 + $0x18] sm:$0xff]
    %v9390 = vld [vmem:[%s7 + $0x20] sm:$0xff]
    %v9391 = vld [vmem:[%s7 + $0x28] sm:$0xff]
    %v9392 = vld [vmem:[%s7 + $0x30] sm:$0xff]
    %v9393 = vld [vmem:[%s7 + $0x38] sm:$0xff]
    %v9394 = vld [vmem:[%s7 + $0x40] sm:$0xff]
    %v9395 = vld [vmem:[%s7 + $0x48] sm:$0xff]
    %v9396 = vld [vmem:[%s7 + $0x50] sm:$0xff]
    %v9397 = vld [vmem:[%s7 + $0x58] sm:$0xff]
    %v9398 = vld [vmem:[%s7 + $0x60] sm:$0xff]
    %v9399 = vld [vmem:[%s7 + $0x68] sm:$0xff]
    %v9400 = vld [vmem:[%s7 + $0x70] sm:$0xff]
    %v9401 = vld [vmem:[%s7 + $0x78] sm:$0xff]
    %v9402 = vld [vmem:[%s7 + $0x80] sm:$0xff]
    %v9403 = vld [vmem:[%s7 + $0x88] sm:$0xff]
    %v9404 = vld [vmem:[%s7 + $0x90] sm:$0xff]
    %v9405 = vld [vmem:[%s7 + $0x98] sm:$0xff]
    %v9406 = vld [vmem:[%s7 + $0xa0] sm:$0xff]
    %v9407 = vld [vmem:[%s7 + $0xa8] sm:$0xff]
    %v9408 = vld [vmem:[%s7 + $0xb0] sm:$0xff]
    %v9409 = vld [vmem:[%s7 + $0xb8] sm:$0xff]
    %v9410 = vld [vmem:[%s7 + $0xc0] sm:$0xff]
    %v9411 = vld [vmem:[%s7 + $0xc8] sm:$0xff]
    %v9412 = vld [vmem:[%s7 + $0xd0] sm:$0xff]
    %v9413 = vld [vmem:[%s7 + $0xd8] sm:$0xff]
    %v9414 = vld [vmem:[%s7 + $0xe0] sm:$0xff]
    %v9415 = vld [vmem:[%s7 + $0xe8] sm:$0xff]
    %v9416 = vld [vmem:[%s7 + $0xf0] sm:$0xff]
    %v9417 = vld [vmem:[%s7 + $0xf8] sm:$0xff]
    %v9418 = vld [vmem:[%s8] sm:$0x1]
    %v9420 = vlaneseq
    %v9421 = vshrl.u32 %v9420, 7
    %v9422 = vsub.s32 0, %v9421
    %v9423 = vrot.slane %v9418, %v9422
    %9425 = vmatprep.subr.mxu0 0.0
    %9426 = vmatpush1.msra.mxu0 %v9386
    %9427 = vmatprep.subr.mxu0 0.0
    %9428 = vmatpush1.msra.mxu0 %v9387
    %9429 = vmatprep.subr.mxu0 0.0
    %9430 = vmatpush1.msra.mxu0 %v9388
    %9431 = vmatprep.subr.mxu0 0.0
    %9432 = vmatpush1.msra.mxu0 %v9389
    %9433 = vmatprep.subr.mxu0 0.0
    %9434 = vmatpush1.msra.mxu0 %v9390
    %9435 = vmatprep.subr.mxu0 0.0
    %9436 = vmatpush1.msra.mxu0 %v9391
    %9437 = vmatprep.subr.mxu0 0.0
    %9438 = vmatpush1.msra.mxu0 %v9392
    %9439 = vmatprep.subr.mxu0 0.0
    %9440 = vmatpush1.msra.mxu0 %v9393
    %9441 = vmatprep.subr.mxu0 0.0
    %9442 = vmatpush1.msra.mxu0 %v9394
    %9443 = vmatprep.subr.mxu0 0.0
    %9444 = vmatpush1.msra.mxu0 %v9395
    %9445 = vmatprep.subr.mxu0 0.0
    %9446 = vmatpush1.msra.mxu0 %v9396
    %9447 = vmatprep.subr.mxu0 0.0
    %9448 = vmatpush1.msra.mxu0 %v9397
    %9449 = vmatprep.subr.mxu0 0.0
    %9450 = vmatpush1.msra.mxu0 %v9398
    %9451 = vmatprep.subr.mxu0 0.0
    %9452 = vmatpush1.msra.mxu0 %v9399
    %9453 = vmatprep.subr.mxu0 0.0
    %9454 = vmatpush1.msra.mxu0 %v9400
    %9455 = vmatprep.subr.mxu0 0.0
    %9456 = vmatpush1.msra.mxu0 %v9401
    %9457 = vmatprep.subr.mxu0 0.0
    %9458 = vmatpush1.msra.mxu0 %v9402
    %9459 = vmatprep.subr.mxu0 0.0
    %9460 = vmatpush1.msra.mxu0 %v9403
    %9461 = vmatprep.subr.mxu0 0.0
    %9462 = vmatpush1.msra.mxu0 %v9404
    %9463 = vmatprep.subr.mxu0 0.0
    %9464 = vmatpush1.msra.mxu0 %v9405
    %9465 = vmatprep.subr.mxu0 0.0
    %9466 = vmatpush1.msra.mxu0 %v9406
    %9467 = vmatprep.subr.mxu0 0.0
    %9468 = vmatpush1.msra.mxu0 %v9407
    %9469 = vmatprep.subr.mxu0 0.0
    %9470 = vmatpush1.msra.mxu0 %v9408
    %9471 = vmatprep.subr.mxu0 0.0
    %9472 = vmatpush1.msra.mxu0 %v9409
    %9473 = vmatprep.subr.mxu0 0.0
    %9474 = vmatpush1.msra.mxu0 %v9410
    %9475 = vmatprep.subr.mxu0 0.0
    %9476 = vmatpush1.msra.mxu0 %v9411
    %9477 = vmatprep.subr.mxu0 0.0
    %9478 = vmatpush1.msra.mxu0 %v9412
    %9479 = vmatprep.subr.mxu0 0.0
    %9480 = vmatpush1.msra.mxu0 %v9413
    %9481 = vmatprep.subr.mxu0 0.0
    %9482 = vmatpush1.msra.mxu0 %v9414
    %9483 = vmatprep.subr.mxu0 0.0
    %9484 = vmatpush1.msra.mxu0 %v9415
    %9485 = vmatprep.subr.mxu0 0.0
    %9486 = vmatpush1.msra.mxu0 %v9416
    %9487 = vmatprep.subr.mxu0 0.0
    %9488 = vmatpush1.msra.mxu0 %v9417
    %9489 = vmatprep.mubr.f32.mxu0 %v7992
    %9490 = vmatmul.mubr.f32.gmra.mrb[0].mxu0 %v7990
    %v9491 = vpop.f32.mrb[0].mxu0
    %v9492 = vadd.f32 %v9423, %v9491
    %v9493 = vpop.f32.mrb[0].mxu0
    %9494 = vdwg.mxu0
    %vm9495 = vcmask 9216
    %v9496 = vsel %vm9495, %v9492, -inf
    %9497 = vmax.xlane.f32.xlu0 %v9496
    %v9498 = vpop.xlane.xlu0 %9497
    %v9499 = vsub.f32 %v9492, %v9498
    %v9500 = vmul.f32 %v9499, 1.442695
    %v9501 = vpow.pop %v9500
    %v9502 = vsel %vm9495, %v9501, 0.0
    %9503 = vadd.xlane.f32.xlu0 %v9502
    %v9504 = vpop.xlane.xlu0 %9503
    %v9505 = vrcp.pop %v9504
    %v9506 = vmul.f32 %v9501, %v9505
    %9507 = vst.msk [vmem:[#allocation4] sm:$0x3] %vm9495, %v9506
    // Predicated region
    $region45: #{model_vad_forward.5} parent=1 // pred_check
      _
    $region46: #{model_vad_forward.5} parent=1 // pred_check_branch
      %9509 = sbr.rel (0) target = $region48
    $region47: #{model_vad_forward.5} parent=1 // pred_region
      %s9511 = ssub.s32 32, 32
      %9512 = vsyncadd [#allocation5], %s9511
      %s9514 = sshll.u32 [#allocation4], 4
      %s9515 = int_to_ptr.vmem [resolvable:$true] %s9514
      %9517 = dma.vmem_to_hbm [thread:$0]  %s9515, 32, %s9, [#allocation5]
    $region48: #{model_vad_forward.5} parent=1 // pred_fallthru
      _
    // Predicated region
    $region49: #{model_vad_forward.5} parent=1 // pred_check
      _
    $region50: #{model_vad_forward.5} parent=1 // pred_check_branch
      %9519 = sbr.rel (0) target = $region52
    $region51: #{model_vad_forward.5} parent=1 // pred_region
      %9520 = dma.done [#allocation5], 32
    $region52: #{model_vad_forward.5} parent=1 // pred_fallthru
      _
    %9521 = vsyncpa [#allocation5], 1

</llo_original>
